<compile_context>
chip_gen: v7x
topology: tpu7x:2x2x1
jax: 0.10.0
libtpu: 0.0.40
codegen_flags: <defaults>
</compile_context>

<pallas_src>
import numpy as np
import jax
import jax.numpy as jnp
from jax.experimental import pallas as pl
from jax.experimental.pallas import tpu as pltpu

BN_EPS = 1e-5


# ----------------------------------------------------------------------------
# Trace-time index plumbing (numpy constants): im2col gathers & pool matrix
# ----------------------------------------------------------------------------
def _taps(W):
    dy, dx = np.meshgrid(np.arange(3), np.arange(3), indexing="ij")
    return (dy * W + dx).reshape(1, 9)


def _im2col_valid_idx(H, W):
    """Row-gather indices for a 3x3 VALID conv on an HxW map flattened to H*W
    rows; output anchors in row-major order.  Shape (Ho*Wo, 9)."""
    Ho, Wo = H - 2, W - 2
    i, j = np.meshgrid(np.arange(Ho), np.arange(Wo), indexing="ij")
    anchors = (i * W + j).reshape(-1, 1)
    return (anchors + _taps(W)).astype(np.int32)


def _im2col_pool_idx(H, W):
    """Same, but only the conv anchors consumed by a following 2x2/stride-2
    max-pool, permuted into the 4 pooling-parity groups (each padded to a
    multiple of 8 rows with duplicated finite anchors).  The max-pool then is
    an elementwise max over the 4 contiguous groups."""
    Ho, Wo = H - 2, W - 2
    Hp, Wp = Ho // 2, Wo // 2
    g = Hp * Wp
    gp = ((g + 7) // 8) * 8
    taps = _taps(W)
    groups = []
    for p in (0, 1):
        for q in (0, 1):
            aa = 2 * np.arange(Hp)[:, None] + p
            bb = 2 * np.arange(Wp)[None, :] + q
            rows = (aa * W + bb).reshape(-1, 1) + taps            # (g, 9)
            pad = np.repeat(rows[-1:], gp - g, axis=0)            # finite dups
            groups.append(np.concatenate([rows, pad], axis=0))
    return np.concatenate(groups, axis=0).astype(np.int32), gp, Hp, Wp


def _avgpool_matrix(n_img, h, w, k, stride):
    """0/1 summing matrix mapping the (n_img*h*w, C) conv4 output rows to the
    pooled rows (tiny: ~1% of the conv4 FLOPs)."""
    po, qo = (h - k) // stride + 1, (w - k) // stride + 1
    m = np.zeros((n_img * po * qo, n_img * h * w), np.float32)
    for n in range(n_img):
        for oi in range(po):
            for oj in range(qo):
                r = (n * po + oi) * qo + oj
                for di in range(k):
                    cols = (n * h * w + (oi * stride + di) * w
                            + oj * stride + np.arange(k))
                    m[r, cols] = 1.0
    return m, po, qo


# ----------------------------------------------------------------------------
# Pallas kernels
# ----------------------------------------------------------------------------
def _conv_block(slab, w, bias, scale, shift, *, apply_bn, pool_groups=1,
                group_rows=0, out_rows=None):
    """[BN(prev)+ReLU] -> 3x3 conv as ONE (R, 9*Cin)@(9*Cin, Cout) MXU matmul
    -> [2x2/2 maxpool as an elementwise max over the 4 parity groups].

    slab:  (N, R, K) im2col slab, one image per grid step (K = 9*Cin).
    w:     (K, Cout), bias: (1, Cout) f32, scale/shift: (1, K) f32 (tiled).
    """
    N, R, K = slab.shape
    Cout = w.shape[1]
    out_rows = R if out_rows is None else out_rows
    mm_dtype = w.dtype

    def kernel(s_ref, w_ref, b_ref, sc_ref, sh_ref, o_ref):
        xs = s_ref[0]                                             # (R, K)
        if apply_bn:
            xs = jnp.maximum(
                xs.astype(jnp.float32) * sc_ref[...] + sh_ref[...], 0.0
            ).astype(mm_dtype)
        y = jnp.dot(xs, w_ref[...], preferred_element_type=jnp.float32)
        if pool_groups == 4:
            g = group_rows
            y = jnp.maximum(jnp.maximum(y[0:g], y[g:2 * g]),
                            jnp.maximum(y[2 * g:3 * g], y[3 * g:4 * g]))
        if out_rows != y.shape[0]:
            y = y[:out_rows]                                      # drop pad rows
        o_ref[0] = y + b_ref[...]

    grid_spec = pltpu.PrefetchScalarGridSpec(
        num_scalar_prefetch=0,
        grid=(N,),
        in_specs=[
            pl.BlockSpec((1, R, K), lambda n: (n, 0, 0)),         # im2col slab
            pl.BlockSpec((K, Cout), lambda n: (0, 0)),            # folded weights
            pl.BlockSpec((1, Cout), lambda n: (0, 0)),            # bias
            pl.BlockSpec((1, K), lambda n: (0, 0)),               # bn scale
            pl.BlockSpec((1, K), lambda n: (0, 0)),               # bn shift
        ],
        out_specs=pl.BlockSpec((1, out_rows, Cout), lambda n: (n, 0, 0)),
    )
    return pl.pallas_call(
        kernel,
        out_shape=jax.ShapeDtypeStruct((N, out_rows, Cout), jnp.float32),
        grid_spec=grid_spec,
        compiler_params=pltpu.CompilerParams(
            dimension_semantics=("parallel",)),                   # v7x megacore
    )(slab, w, bias, scale, shift)


def _tail_block(slab, w, bias, scale, shift, pool_mat, *, inv_area):
    """Fused whole-batch tail: BN3+ReLU -> conv4 (one matmul) + bias ->
    BN4 (batch stats computed in-kernel) -> ReLU -> AvgPool2d (tiny pooling
    matmul).  Single grid step; everything stays resident in VMEM."""
    R, K = slab.shape
    Cout = w.shape[1]
    Nout = pool_mat.shape[0]
    mm_dtype = w.dtype

    def kernel(s_ref, w_ref, b_ref, sc_ref, sh_ref, pm_ref, o_ref):
        xs = jnp.maximum(
            s_ref[...].astype(jnp.float32) * sc_ref[...] + sh_ref[...], 0.0
        ).astype(mm_dtype)
        y = jnp.dot(xs, w_ref[...],
                    preferred_element_type=jnp.float32) + b_ref[...]   # (R, Cout)
        mu = jnp.mean(y, axis=0, keepdims=True)                   # BN4 batch stats
        var = jnp.mean(jnp.square(y - mu), axis=0, keepdims=True)
        a = jnp.maximum((y - mu) * jax.lax.rsqrt(var + BN_EPS), 0.0)
        o_ref[...] = jnp.dot(pm_ref[...], a,
                             preferred_element_type=jnp.float32) * inv_area

    grid_spec = pltpu.PrefetchScalarGridSpec(
        num_scalar_prefetch=0,
        grid=(1,),
        in_specs=[
            pl.BlockSpec((R, K), lambda i: (0, 0)),
            pl.BlockSpec((K, Cout), lambda i: (0, 0)),
            pl.BlockSpec((1, Cout), lambda i: (0, 0)),
            pl.BlockSpec((1, K), lambda i: (0, 0)),
            pl.BlockSpec((1, K), lambda i: (0, 0)),
            pl.BlockSpec((Nout, R), lambda i: (0, 0)),
        ],
        out_specs=pl.BlockSpec((Nout, Cout), lambda i: (0, 0)),
    )
    return pl.pallas_call(
        kernel,
        out_shape=jax.ShapeDtypeStruct((Nout, Cout), jnp.float32),
        grid_spec=grid_spec,
        compiler_params=pltpu.CompilerParams(dimension_semantics=("arbitrary",)),
    )(slab, w, bias, scale, shift, pool_mat)


# ----------------------------------------------------------------------------
# Glue: training-mode BN batch statistics (tiny cross-batch reductions)
# ----------------------------------------------------------------------------
def _bn_scale_shift(y):
    mean = jnp.mean(y, axis=tuple(range(y.ndim - 1)))
    var = jnp.var(y, axis=tuple(range(y.ndim - 1)))        # biased, like PyTorch
    scale = jax.lax.rsqrt(var + BN_EPS)
    return scale, -mean * scale


def _tile_bn(scale, shift, taps=9):
    return (jnp.tile(scale, taps).reshape(1, -1),
            jnp.tile(shift, taps).reshape(1, -1))


# ----------------------------------------------------------------------------
# Parameters (deterministic init, PyTorch Conv2d shapes + folded im2col form)
# ----------------------------------------------------------------------------
def init_params(key):
    params = {}
    chans = [(3, 64), (64, 64), (64, 64), (64, 64)]
    for i, (cin, cout) in enumerate(chans):
        key, k1, k2 = jax.random.split(key, 3)
        bound = 1.0 / np.sqrt(cin * 9)
        w = jax.random.uniform(k1, (cout, cin, 3, 3), jnp.float32, -bound, bound)
        bvec = jax.random.uniform(k2, (cout,), jnp.float32, -bound, bound)
        params[f"conv{i + 1}_w"] = w                      # OIHW (reference path)
        params[f"conv{i + 1}_b"] = bvec
        wk = jnp.transpose(w, (2, 3, 1, 0))               # (ky, kx, Cin, Cout)
        if i == 0:
            wk = jnp.pad(wk, ((0, 0), (0, 0), (0, 8 - cin), (0, 0)))
        # big layers 1-2: bf16 MXU operands; tiny tail layers 3-4: keep f32
        mm_dtype = jnp.bfloat16 if i < 2 else jnp.float32
        params[f"w{i + 1}"] = wk.reshape(-1, cout).astype(mm_dtype)
        params[f"b{i + 1}"] = bvec.reshape(1, cout)
    return params


# ----------------------------------------------------------------------------
# MetaRN.forward  (repnet / Naive path)
# ----------------------------------------------------------------------------
def metarn_forward(support_x, support_y, query_x, query_y, params):
    del support_y, query_y                      # unused by MetaRN.forward repnet
    x = jnp.concatenate([support_x, query_x], axis=1)     # (b, setsz+qsz, 3, H, W)
    b, s, c, H, W = x.shape
    N = b * s
    # TODO(synk): original module feeds a 5-D tensor straight into Conv2d;
    # flatten the set dim (the obvious intent) before the conv stack.
    x = x.reshape(N, c, H, W)
    x = jnp.transpose(x, (0, 2, 3, 1)).reshape(N, H * W, c).astype(jnp.float32)

    # trace-time gather indices (host-side im2col layout plumbing, zero FLOPs)
    idx1, g1, H2, _ = _im2col_pool_idx(H, W)              # conv1 + maxpool2
    idx2, g2, H3, _ = _im2col_pool_idx(H2, H2)            # conv2 + maxpool2
    idx3 = _im2col_valid_idx(H3, H3)                      # conv3
    H4 = H3 - 2
    idx4 = _im2col_valid_idx(H4, H4)                      # conv4
    H5 = H4 - 2
    pool_mat, Po, Qo = _avgpool_matrix(N, H5, H5, 5, 5)   # AvgPool2d(5,5)

    # ---- block 1: conv1 (3->64) + maxpool2 (no BN on the raw input) ----
    Cp = 8                                                # pad channels 3 -> 8
    xp = jnp.pad(x, ((0, 0), (0, 0), (0, Cp - c)))
    slab1 = xp[:, jnp.asarray(idx1), :].reshape(N, 4 * g1, 9 * Cp)
    slab1 = slab1.astype(params["w1"].dtype)
    ones1 = jnp.ones((1, 9 * Cp), jnp.float32)
    zeros1 = jnp.zeros((1, 9 * Cp), jnp.float32)
    y1 = _conv_block(slab1, params["w1"], params["b1"], ones1, zeros1,
                     apply_bn=False, pool_groups=4, group_rows=g1,
                     out_rows=H2 * H2)                    # (N, 23*23, 64)

    # ---- block 2: bn1 + relu -> conv2 + maxpool2 ----
    sc1, sh1 = _tile_bn(*_bn_scale_shift(y1))
    slab2 = y1[:, jnp.asarray(idx2), :].reshape(N, 4 * g2, 576)
    slab2 = slab2.astype(params["w2"].dtype)
    y2 = _conv_block(slab2, params["w2"], params["b2"], sc1, sh1,
                     apply_bn=True, pool_groups=4, group_rows=g2,
                     out_rows=H3 * H3)                    # (N, 10*10, 64)

    # ---- block 3: bn2 + relu -> conv3 (whole batch, single matmul) ----
    sc2, sh2 = _tile_bn(*_bn_scale_shift(y2))
    L3 = H4 * H4
    slab3 = y2[:, jnp.asarray(idx3), :].reshape(1, N * L3, 576)
    slab3 = slab3.astype(params["w3"].dtype)
    y3 = _conv_block(slab3, params["w3"], params["b3"], sc2, sh2,
                     apply_bn=True)                       # (1, N*64, 64)
    y3 = y3.reshape(N, L3, 64)

    # ---- fused tail: bn3+relu -> conv4 -> bn4 (in-kernel stats) -> relu
    #      -> AvgPool2d(5,5)  (whole batch, single grid step) ----
    sc3, sh3 = _tile_bn(*_bn_scale_shift(y3))
    L4 = H5 * H5
    slab4 = y3[:, jnp.asarray(idx4), :].reshape(N * L4, 576)
    slab4 = slab4.astype(params["w4"].dtype)
    out = _tail_block(slab4, params["w4"], params["b4"], sc3, sh3,
                      jnp.asarray(pool_mat), inv_area=1.0 / 25.0)  # (N*Po*Qo, 64)

    out = out.reshape(N, Po, Qo, 64)
    return jnp.transpose(out, (0, 3, 1, 2))               # NCHW: (N, 64, Po, Qo)


# ----------------------------------------------------------------------------
# Pure-JAX reference (for validation only)
# ----------------------------------------------------------------------------
def reference_forward(support_x, query_x, params):
    x = jnp.concatenate([support_x, query_x], axis=1)
    b, s, c, H, W = x.shape
    x = x.reshape(b * s, c, H, W).astype(jnp.float32)

    def conv(x, w, bias):
        y = jax.lax.conv_general_dilated(
            x, w, (1, 1), "VALID",
            dimension_numbers=("NCHW", "OIHW", "NCHW"),
            precision=jax.lax.Precision.HIGHEST)
        return y + bias.reshape(1, -1, 1, 1)

    def maxpool2(x):
        return jax.lax.reduce_window(x, -jnp.inf, jax.lax.max,
                                     (1, 1, 2, 2), (1, 1, 2, 2), "VALID")

    def bn(x):
        mean = jnp.mean(x, axis=(0, 2, 3), keepdims=True)
        var = jnp.var(x, axis=(0, 2, 3), keepdims=True)
        return (x - mean) / jnp.sqrt(var + BN_EPS)

    relu = lambda v: jnp.maximum(v, 0.0)

    def avgpool5(x):
        s_ = jax.lax.reduce_window(x, 0.0, jax.lax.add,
                                   (1, 1, 5, 5), (1, 1, 5, 5), "VALID")
        return s_ / 25.0

    x = relu(bn(maxpool2(conv(x, params["conv1_w"], params["conv1_b"]))))
    x = relu(bn(maxpool2(conv(x, params["conv2_w"], params["conv2_b"]))))
    x = relu(bn(conv(x, params["conv3_w"], params["conv3_b"])))
    x = relu(bn(conv(x, params["conv4_w"], params["conv4_b"])))
    return avgpool5(x)


if __name__ == "__main__":
    key = jax.random.PRNGKey(0)
    kp, ks, kq = jax.random.split(key, 3)
    params = init_params(kp)

    b, setsz, querysz, C, H, W = 2, 2, 2, 3, 48, 48
    support_x = jax.random.normal(ks, (b, setsz, C, H, W), jnp.float32)
    query_x = jax.random.normal(kq, (b, querysz, C, H, W), jnp.float32)
    support_y = jnp.zeros((b, setsz), jnp.int32)
    query_y = jnp.zeros((b, querysz), jnp.int32)

    fwd = jax.jit(metarn_forward)
    out = jax.block_until_ready(fwd(support_x, support_y, query_x, query_y, params))

    ref = reference_forward(support_x, query_x, params)
    assert out.shape == ref.shape == (b * (setsz + querysz), 64, 1, 1)
    err = float(jnp.max(jnp.abs(out - ref)))
    assert np.isfinite(err) and err < 5e-2, f"mismatch vs reference: {err}"
    print("KERNEL_OK")
</pallas_src>

<mosaic_0001>
module attributes {stable_mosaic.version = 11 : i64} {
  func.func @kernel(%arg0: i32, %arg1: memref<1x2144x72xbf16, #tpu.memory_space<vmem>>, %arg2: memref<72x64xbf16, #tpu.memory_space<vmem>>, %arg3: memref<1x64xf32, #tpu.memory_space<vmem>>, %arg4: memref<1x72xf32, #tpu.memory_space<vmem>>, %arg5: memref<1x72xf32, #tpu.memory_space<vmem>>, %arg6: memref<1x529x64xf32, #tpu.memory_space<vmem>>) attributes {dimension_semantics = [#tpu.dimension_semantics<parallel>], iteration_bounds = array<i64: 8>, scalar_prefetch = 0 : i64, scratch_operands = 0 : i64, tpu.core_type = #tpu.core_type<tc>, window_params = [{transform_indices = @transform_0, window_bounds = array<i64: 1, 2144, 72>}, {pipeline_mode = #tpu.pipeline_mode<synchronous>, transform_indices = @transform_1, window_bounds = array<i64: 72, 64>}, {pipeline_mode = #tpu.pipeline_mode<synchronous>, transform_indices = @transform_2, window_bounds = array<i64: 1, 64>}, {pipeline_mode = #tpu.pipeline_mode<synchronous>, transform_indices = @transform_3, window_bounds = array<i64: 1, 72>}, {pipeline_mode = #tpu.pipeline_mode<synchronous>, transform_indices = @transform_4, window_bounds = array<i64: 1, 72>}, {transform_indices = @transform_5, window_bounds = array<i64: 1, 529, 64>}]} {
    %c0 = arith.constant 0 : index
    %c0_0 = arith.constant 0 : index
    %c0_1 = arith.constant 0 : index
    %0 = vector.load %arg1[%c0, %c0_0, %c0_1] : memref<1x2144x72xbf16, #tpu.memory_space<vmem>>, vector<1x2144x72xbf16>
    %1 = vector.shape_cast %0 : vector<1x2144x72xbf16> to vector<2144x72xbf16>
    %c0_2 = arith.constant 0 : index
    %c0_3 = arith.constant 0 : index
    %2 = vector.load %arg2[%c0_2, %c0_3] : memref<72x64xbf16, #tpu.memory_space<vmem>>, vector<72x64xbf16>
    %cst = arith.constant dense<0.000000e+00> : vector<2144x64xf32>
    %3 = tpu.matmul %1, %2, %cst {dimension_numbers = #tpu.dot_dimension_numbers<[1], [0], [0], [1], [0, 0, 1, 1], [], []>} : vector<2144x72xbf16>, vector<72x64xbf16>, vector<2144x64xf32> -> vector<2144x64xf32>
    %4 = vector.extract_strided_slice %3 {offsets = [0, 0], sizes = [536, 64], strides = [1, 1]} : vector<2144x64xf32> to vector<536x64xf32>
    %5 = vector.extract_strided_slice %3 {offsets = [536, 0], sizes = [536, 64], strides = [1, 1]} : vector<2144x64xf32> to vector<536x64xf32>
    %6 = arith.maximumf %4, %5 : vector<536x64xf32>
    %7 = vector.extract_strided_slice %3 {offsets = [1072, 0], sizes = [536, 64], strides = [1, 1]} : vector<2144x64xf32> to vector<536x64xf32>
    %8 = vector.extract_strided_slice %3 {offsets = [1608, 0], sizes = [536, 64], strides = [1, 1]} : vector<2144x64xf32> to vector<536x64xf32>
    %9 = arith.maximumf %7, %8 : vector<536x64xf32>
    %10 = arith.maximumf %6, %9 : vector<536x64xf32>
    %11 = vector.extract_strided_slice %10 {offsets = [0, 0], sizes = [529, 64], strides = [1, 1]} : vector<536x64xf32> to vector<529x64xf32>
    %c0_4 = arith.constant 0 : index
    %c0_5 = arith.constant 0 : index
    %12 = vector.load %arg3[%c0_4, %c0_5] : memref<1x64xf32, #tpu.memory_space<vmem>>, vector<1x64xf32>
    %13 = vector.broadcast %12 : vector<1x64xf32> to vector<529x64xf32>
    %14 = arith.addf %11, %13 : vector<529x64xf32>
    %c0_6 = arith.constant 0 : index
    %c0_7 = arith.constant 0 : index
    %c0_8 = arith.constant 0 : index
    %15 = vector.load %arg6[%c0_6, %c0_7, %c0_8] : memref<1x529x64xf32, #tpu.memory_space<vmem>>, vector<1x529x64xf32>
    %16 = vector.shape_cast %15 : vector<1x529x64xf32> to vector<529x64xf32>
    %17 = vector.shape_cast %14 : vector<529x64xf32> to vector<1x529x64xf32>
    tpu.vector_store %arg6[%c0_6, %c0_7, %c0_8], %17 {strides = array<i32>} : memref<1x529x64xf32, #tpu.memory_space<vmem>>, vector<1x529x64xf32>,
    return
  }
  func.func @transform_0(%arg0: i32) -> (i32, i32, i32) {
    %c0_i32 = arith.constant 0 : i32
    %c0_i32_0 = arith.constant 0 : i32
    %c0_i32_1 = arith.constant 0 : i32
    return %arg0, %c0_i32, %c0_i32_0 : i32, i32, i32
  }
  func.func @transform_1(%arg0: i32) -> (i32, i32) {
    %c0_i32 = arith.constant 0 : i32
    %c0_i32_0 = arith.constant 0 : i32
    %c0_i32_1 = arith.constant 0 : i32
    return %c0_i32, %c0_i32_0 : i32, i32
  }
  func.func @transform_2(%arg0: i32) -> (i32, i32) {
    %c0_i32 = arith.constant 0 : i32
    %c0_i32_0 = arith.constant 0 : i32
    %c0_i32_1 = arith.constant 0 : i32
    return %c0_i32, %c0_i32_0 : i32, i32
  }
  func.func @transform_3(%arg0: i32) -> (i32, i32) {
    %c0_i32 = arith.constant 0 : i32
    %c0_i32_0 = arith.constant 0 : i32
    %c0_i32_1 = arith.constant 0 : i32
    return %c0_i32, %c0_i32_0 : i32, i32
  }
  func.func @transform_4(%arg0: i32) -> (i32, i32) {
    %c0_i32 = arith.constant 0 : i32
    %c0_i32_0 = arith.constant 0 : i32
    %c0_i32_1 = arith.constant 0 : i32
    return %c0_i32, %c0_i32_0 : i32, i32
  }
  func.func @transform_5(%arg0: i32) -> (i32, i32, i32) {
    %c0_i32 = arith.constant 0 : i32
    %c0_i32_0 = arith.constant 0 : i32
    %c0_i32_1 = arith.constant 0 : i32
    return %arg0, %c0_i32, %c0_i32_0 : i32, i32, i32
  }
}

module attributes {stable_mosaic.version = 11 : i64} {
  func.func @kernel(%arg0: i32, %arg1: memref<1x416x576xbf16, #tpu.memory_space<vmem>>, %arg2: memref<576x64xbf16, #tpu.memory_space<vmem>>, %arg3: memref<1x64xf32, #tpu.memory_space<vmem>>, %arg4: memref<1x576xf32, #tpu.memory_space<vmem>>, %arg5: memref<1x576xf32, #tpu.memory_space<vmem>>, %arg6: memref<1x100x64xf32, #tpu.memory_space<vmem>>) attributes {dimension_semantics = [#tpu.dimension_semantics<parallel>], iteration_bounds = array<i64: 8>, scalar_prefetch = 0 : i64, scratch_operands = 0 : i64, tpu.core_type = #tpu.core_type<tc>, window_params = [{transform_indices = @transform_0, window_bounds = array<i64: 1, 416, 576>}, {pipeline_mode = #tpu.pipeline_mode<synchronous>, transform_indices = @transform_1, window_bounds = array<i64: 576, 64>}, {pipeline_mode = #tpu.pipeline_mode<synchronous>, transform_indices = @transform_2, window_bounds = array<i64: 1, 64>}, {pipeline_mode = #tpu.pipeline_mode<synchronous>, transform_indices = @transform_3, window_bounds = array<i64: 1, 576>}, {pipeline_mode = #tpu.pipeline_mode<synchronous>, transform_indices = @transform_4, window_bounds = array<i64: 1, 576>}, {transform_indices = @transform_5, window_bounds = array<i64: 1, 100, 64>}]} {
    %c0 = arith.constant 0 : index
    %c0_0 = arith.constant 0 : index
    %c0_1 = arith.constant 0 : index
    %0 = vector.load %arg1[%c0, %c0_0, %c0_1] : memref<1x416x576xbf16, #tpu.memory_space<vmem>>, vector<1x416x576xbf16>
    %1 = vector.shape_cast %0 : vector<1x416x576xbf16> to vector<416x576xbf16>
    %2 = arith.extf %1 : vector<416x576xbf16> to vector<416x576xf32>
    %c0_2 = arith.constant 0 : index
    %c0_3 = arith.constant 0 : index
    %3 = vector.load %arg4[%c0_2, %c0_3] : memref<1x576xf32, #tpu.memory_space<vmem>>, vector<1x576xf32>
    %4 = vector.broadcast %3 : vector<1x576xf32> to vector<416x576xf32>
    %5 = arith.mulf %2, %4 : vector<416x576xf32>
    %c0_4 = arith.constant 0 : index
    %c0_5 = arith.constant 0 : index
    %6 = vector.load %arg5[%c0_4, %c0_5] : memref<1x576xf32, #tpu.memory_space<vmem>>, vector<1x576xf32>
    %7 = vector.broadcast %6 : vector<1x576xf32> to vector<416x576xf32>
    %8 = arith.addf %5, %7 : vector<416x576xf32>
    %cst = arith.constant 0.000000e+00 : f32
    %9 = vector.broadcast %cst : f32 to vector<416x576xf32>
    %10 = arith.maximumf %8, %9 : vector<416x576xf32>
    %11 = arith.truncf %10 : vector<416x576xf32> to vector<416x576xbf16>
    %c0_6 = arith.constant 0 : index
    %c0_7 = arith.constant 0 : index
    %12 = vector.load %arg2[%c0_6, %c0_7] : memref<576x64xbf16, #tpu.memory_space<vmem>>, vector<576x64xbf16>
    %cst_8 = arith.constant dense<0.000000e+00> : vector<416x64xf32>
    %13 = tpu.matmul %11, %12, %cst_8 {dimension_numbers = #tpu.dot_dimension_numbers<[1], [0], [0], [1], [0, 0, 1, 1], [], []>} : vector<416x576xbf16>, vector<576x64xbf16>, vector<416x64xf32> -> vector<416x64xf32>
    %14 = vector.extract_strided_slice %13 {offsets = [0, 0], sizes = [104, 64], strides = [1, 1]} : vector<416x64xf32> to vector<104x64xf32>
    %15 = vector.extract_strided_slice %13 {offsets = [104, 0], sizes = [104, 64], strides = [1, 1]} : vector<416x64xf32> to vector<104x64xf32>
    %16 = arith.maximumf %14, %15 : vector<104x64xf32>
    %17 = vector.extract_strided_slice %13 {offsets = [208, 0], sizes = [104, 64], strides = [1, 1]} : vector<416x64xf32> to vector<104x64xf32>
    %18 = vector.extract_strided_slice %13 {offsets = [312, 0], sizes = [104, 64], strides = [1, 1]} : vector<416x64xf32> to vector<104x64xf32>
    %19 = arith.maximumf %17, %18 : vector<104x64xf32>
    %20 = arith.maximumf %16, %19 : vector<104x64xf32>
    %21 = vector.extract_strided_slice %20 {offsets = [0, 0], sizes = [100, 64], strides = [1, 1]} : vector<104x64xf32> to vector<100x64xf32>
    %c0_9 = arith.constant 0 : index
    %c0_10 = arith.constant 0 : index
    %22 = vector.load %arg3[%c0_9, %c0_10] : memref<1x64xf32, #tpu.memory_space<vmem>>, vector<1x64xf32>
    %23 = vector.broadcast %22 : vector<1x64xf32> to vector<100x64xf32>
    %24 = arith.addf %21, %23 : vector<100x64xf32>
    %c0_11 = arith.constant 0 : index
    %c0_12 = arith.constant 0 : index
    %c0_13 = arith.constant 0 : index
    %25 = vector.load %arg6[%c0_11, %c0_12, %c0_13] : memref<1x100x64xf32, #tpu.memory_space<vmem>>, vector<1x100x64xf32>
    %26 = vector.shape_cast %25 : vector<1x100x64xf32> to vector<100x64xf32>
    %27 = vector.shape_cast %24 : vector<100x64xf32> to vector<1x100x64xf32>
    tpu.vector_store %arg6[%c0_11, %c0_12, %c0_13], %27 {strides = array<i32>} : memref<1x100x64xf32, #tpu.memory_space<vmem>>, vector<1x100x64xf32>,
    return
  }
  func.func @transform_0(%arg0: i32) -> (i32, i32, i32) {
    %c0_i32 = arith.constant 0 : i32
    %c0_i32_0 = arith.constant 0 : i32
    %c0_i32_1 = arith.constant 0 : i32
    return %arg0, %c0_i32, %c0_i32_0 : i32, i32, i32
  }
  func.func @transform_1(%arg0: i32) -> (i32, i32) {
    %c0_i32 = arith.constant 0 : i32
    %c0_i32_0 = arith.constant 0 : i32
    %c0_i32_1 = arith.constant 0 : i32
    return %c0_i32, %c0_i32_0 : i32, i32
  }
  func.func @transform_2(%arg0: i32) -> (i32, i32) {
    %c0_i32 = arith.constant 0 : i32
    %c0_i32_0 = arith.constant 0 : i32
    %c0_i32_1 = arith.constant 0 : i32
    return %c0_i32, %c0_i32_0 : i32, i32
  }
  func.func @transform_3(%arg0: i32) -> (i32, i32) {
    %c0_i32 = arith.constant 0 : i32
    %c0_i32_0 = arith.constant 0 : i32
    %c0_i32_1 = arith.constant 0 : i32
    return %c0_i32, %c0_i32_0 : i32, i32
  }
  func.func @transform_4(%arg0: i32) -> (i32, i32) {
    %c0_i32 = arith.constant 0 : i32
    %c0_i32_0 = arith.constant 0 : i32
    %c0_i32_1 = arith.constant 0 : i32
    return %c0_i32, %c0_i32_0 : i32, i32
  }
  func.func @transform_5(%arg0: i32) -> (i32, i32, i32) {
    %c0_i32 = arith.constant 0 : i32
    %c0_i32_0 = arith.constant 0 : i32
    %c0_i32_1 = arith.constant 0 : i32
    return %arg0, %c0_i32, %c0_i32_0 : i32, i32, i32
  }
}

module attributes {stable_mosaic.version = 11 : i64} {
  func.func @kernel(%arg0: i32, %arg1: memref<1x512x576xf32, #tpu.memory_space<vmem>>, %arg2: memref<576x64xf32, #tpu.memory_space<vmem>>, %arg3: memref<1x64xf32, #tpu.memory_space<vmem>>, %arg4: memref<1x576xf32, #tpu.memory_space<vmem>>, %arg5: memref<1x576xf32, #tpu.memory_space<vmem>>, %arg6: memref<1x512x64xf32, #tpu.memory_space<vmem>>) attributes {dimension_semantics = [#tpu.dimension_semantics<parallel>], iteration_bounds = array<i64: 1>, scalar_prefetch = 0 : i64, scratch_operands = 0 : i64, tpu.core_type = #tpu.core_type<tc>, window_params = [{transform_indices = @transform_0, window_bounds = array<i64: 1, 512, 576>}, {pipeline_mode = #tpu.pipeline_mode<synchronous>, transform_indices = @transform_1, window_bounds = array<i64: 576, 64>}, {pipeline_mode = #tpu.pipeline_mode<synchronous>, transform_indices = @transform_2, window_bounds = array<i64: 1, 64>}, {pipeline_mode = #tpu.pipeline_mode<synchronous>, transform_indices = @transform_3, window_bounds = array<i64: 1, 576>}, {pipeline_mode = #tpu.pipeline_mode<synchronous>, transform_indices = @transform_4, window_bounds = array<i64: 1, 576>}, {transform_indices = @transform_5, window_bounds = array<i64: 1, 512, 64>}]} {
    %c0 = arith.constant 0 : index
    %c0_0 = arith.constant 0 : index
    %c0_1 = arith.constant 0 : index
    %0 = vector.load %arg1[%c0, %c0_0, %c0_1] : memref<1x512x576xf32, #tpu.memory_space<vmem>>, vector<1x512x576xf32>
    %1 = vector.shape_cast %0 : vector<1x512x576xf32> to vector<512x576xf32>
    %c0_2 = arith.constant 0 : index
    %c0_3 = arith.constant 0 : index
    %2 = vector.load %arg4[%c0_2, %c0_3] : memref<1x576xf32, #tpu.memory_space<vmem>>, vector<1x576xf32>
    %3 = vector.broadcast %2 : vector<1x576xf32> to vector<512x576xf32>
    %4 = arith.mulf %1, %3 : vector<512x576xf32>
    %c0_4 = arith.constant 0 : index
    %c0_5 = arith.constant 0 : index
    %5 = vector.load %arg5[%c0_4, %c0_5] : memref<1x576xf32, #tpu.memory_space<vmem>>, vector<1x576xf32>
    %6 = vector.broadcast %5 : vector<1x576xf32> to vector<512x576xf32>
    %7 = arith.addf %4, %6 : vector<512x576xf32>
    %cst = arith.constant 0.000000e+00 : f32
    %8 = vector.broadcast %cst : f32 to vector<512x576xf32>
    %9 = arith.maximumf %7, %8 : vector<512x576xf32>
    %c0_6 = arith.constant 0 : index
    %c0_7 = arith.constant 0 : index
    %10 = vector.load %arg2[%c0_6, %c0_7] : memref<576x64xf32, #tpu.memory_space<vmem>>, vector<576x64xf32>
    %cst_8 = arith.constant dense<0.000000e+00> : vector<512x64xf32>
    %11 = tpu.matmul %9, %10, %cst_8 {dimension_numbers = #tpu.dot_dimension_numbers<[1], [0], [0], [1], [0, 0, 1, 1], [], []>} : vector<512x576xf32>, vector<576x64xf32>, vector<512x64xf32> -> vector<512x64xf32>
    %c0_9 = arith.constant 0 : index
    %c0_10 = arith.constant 0 : index
    %12 = vector.load %arg3[%c0_9, %c0_10] : memref<1x64xf32, #tpu.memory_space<vmem>>, vector<1x64xf32>
    %13 = vector.broadcast %12 : vector<1x64xf32> to vector<512x64xf32>
    %14 = arith.addf %11, %13 : vector<512x64xf32>
    %c0_11 = arith.constant 0 : index
    %c0_12 = arith.constant 0 : index
    %c0_13 = arith.constant 0 : index
    %15 = vector.load %arg6[%c0_11, %c0_12, %c0_13] : memref<1x512x64xf32, #tpu.memory_space<vmem>>, vector<1x512x64xf32>
    %16 = vector.shape_cast %15 : vector<1x512x64xf32> to vector<512x64xf32>
    %17 = vector.shape_cast %14 : vector<512x64xf32> to vector<1x512x64xf32>
    tpu.vector_store %arg6[%c0_11, %c0_12, %c0_13], %17 {strides = array<i32>} : memref<1x512x64xf32, #tpu.memory_space<vmem>>, vector<1x512x64xf32>,
    return
  }
  func.func @transform_0(%arg0: i32) -> (i32, i32, i32) {
    %c0_i32 = arith.constant 0 : i32
    %c0_i32_0 = arith.constant 0 : i32
    %c0_i32_1 = arith.constant 0 : i32
    return %arg0, %c0_i32, %c0_i32_0 : i32, i32, i32
  }
  func.func @transform_1(%arg0: i32) -> (i32, i32) {
    %c0_i32 = arith.constant 0 : i32
    %c0_i32_0 = arith.constant 0 : i32
    %c0_i32_1 = arith.constant 0 : i32
    return %c0_i32, %c0_i32_0 : i32, i32
  }
  func.func @transform_2(%arg0: i32) -> (i32, i32) {
    %c0_i32 = arith.constant 0 : i32
    %c0_i32_0 = arith.constant 0 : i32
    %c0_i32_1 = arith.constant 0 : i32
    return %c0_i32, %c0_i32_0 : i32, i32
  }
  func.func @transform_3(%arg0: i32) -> (i32, i32) {
    %c0_i32 = arith.constant 0 : i32
    %c0_i32_0 = arith.constant 0 : i32
    %c0_i32_1 = arith.constant 0 : i32
    return %c0_i32, %c0_i32_0 : i32, i32
  }
  func.func @transform_4(%arg0: i32) -> (i32, i32) {
    %c0_i32 = arith.constant 0 : i32
    %c0_i32_0 = arith.constant 0 : i32
    %c0_i32_1 = arith.constant 0 : i32
    return %c0_i32, %c0_i32_0 : i32, i32
  }
  func.func @transform_5(%arg0: i32) -> (i32, i32, i32) {
    %c0_i32 = arith.constant 0 : i32
    %c0_i32_0 = arith.constant 0 : i32
    %c0_i32_1 = arith.constant 0 : i32
    return %arg0, %c0_i32, %c0_i32_0 : i32, i32, i32
  }
}

module attributes {stable_mosaic.version = 11 : i64} {
  func.func @kernel(%arg0: i32, %arg1: memref<288x576xf32, #tpu.memory_space<vmem>>, %arg2: memref<576x64xf32, #tpu.memory_space<vmem>>, %arg3: memref<1x64xf32, #tpu.memory_space<vmem>>, %arg4: memref<1x576xf32, #tpu.memory_space<vmem>>, %arg5: memref<1x576xf32, #tpu.memory_space<vmem>>, %arg6: memref<8x288xf32, #tpu.memory_space<vmem>>, %arg7: memref<8x64xf32, #tpu.memory_space<vmem>>) attributes {dimension_semantics = [#tpu.dimension_semantics<arbitrary>], iteration_bounds = array<i64: 1>, scalar_prefetch = 0 : i64, scratch_operands = 0 : i64, tpu.core_type = #tpu.core_type<tc>, window_params = [{pipeline_mode = #tpu.pipeline_mode<synchronous>, transform_indices = @transform_0, window_bounds = array<i64: 288, 576>}, {pipeline_mode = #tpu.pipeline_mode<synchronous>, transform_indices = @transform_1, window_bounds = array<i64: 576, 64>}, {pipeline_mode = #tpu.pipeline_mode<synchronous>, transform_indices = @transform_2, window_bounds = array<i64: 1, 64>}, {pipeline_mode = #tpu.pipeline_mode<synchronous>, transform_indices = @transform_3, window_bounds = array<i64: 1, 576>}, {pipeline_mode = #tpu.pipeline_mode<synchronous>, transform_indices = @transform_4, window_bounds = array<i64: 1, 576>}, {pipeline_mode = #tpu.pipeline_mode<synchronous>, transform_indices = @transform_5, window_bounds = array<i64: 8, 288>}, {pipeline_mode = #tpu.pipeline_mode<synchronous>, transform_indices = @transform_6, window_bounds = array<i64: 8, 64>}]} {
    %c0 = arith.constant 0 : index
    %c0_0 = arith.constant 0 : index
    %0 = vector.load %arg1[%c0, %c0_0] : memref<288x576xf32, #tpu.memory_space<vmem>>, vector<288x576xf32>
    %c0_1 = arith.constant 0 : index
    %c0_2 = arith.constant 0 : index
    %1 = vector.load %arg4[%c0_1, %c0_2] : memref<1x576xf32, #tpu.memory_space<vmem>>, vector<1x576xf32>
    %2 = vector.broadcast %1 : vector<1x576xf32> to vector<288x576xf32>
    %3 = arith.mulf %0, %2 : vector<288x576xf32>
    %c0_3 = arith.constant 0 : index
    %c0_4 = arith.constant 0 : index
    %4 = vector.load %arg5[%c0_3, %c0_4] : memref<1x576xf32, #tpu.memory_space<vmem>>, vector<1x576xf32>
    %5 = vector.broadcast %4 : vector<1x576xf32> to vector<288x576xf32>
    %6 = arith.addf %3, %5 : vector<288x576xf32>
    %cst = arith.constant 0.000000e+00 : f32
    %7 = vector.broadcast %cst : f32 to vector<288x576xf32>
    %8 = arith.maximumf %6, %7 : vector<288x576xf32>
    %c0_5 = arith.constant 0 : index
    %c0_6 = arith.constant 0 : index
    %9 = vector.load %arg2[%c0_5, %c0_6] : memref<576x64xf32, #tpu.memory_space<vmem>>, vector<576x64xf32>
    %cst_7 = arith.constant dense<0.000000e+00> : vector<288x64xf32>
    %10 = tpu.matmul %8, %9, %cst_7 {dimension_numbers = #tpu.dot_dimension_numbers<[1], [0], [0], [1], [0, 0, 1, 1], [], []>} : vector<288x576xf32>, vector<576x64xf32>, vector<288x64xf32> -> vector<288x64xf32>
    %c0_8 = arith.constant 0 : index
    %c0_9 = arith.constant 0 : index
    %11 = vector.load %arg3[%c0_8, %c0_9] : memref<1x64xf32, #tpu.memory_space<vmem>>, vector<1x64xf32>
    %12 = vector.broadcast %11 : vector<1x64xf32> to vector<288x64xf32>
    %13 = arith.addf %10, %12 : vector<288x64xf32>
    %cst_10 = arith.constant dense<0.000000e+00> : vector<64xf32>
    %14 = vector.multi_reduction <add>, %13, %cst_10 [0] : vector<288x64xf32> to vector<64xf32>
    %15 = vector.shape_cast %14 : vector<64xf32> to vector<1x64xf32>
    %cst_11 = arith.constant 2.880000e+02 : f32
    %16 = vector.broadcast %cst_11 : f32 to vector<1x64xf32>
    %17 = arith.divf %15, %16 : vector<1x64xf32>
    %18 = vector.broadcast %17 : vector<1x64xf32> to vector<288x64xf32>
    %19 = arith.subf %13, %18 : vector<288x64xf32>
    %20 = arith.mulf %19, %19 : vector<288x64xf32>
    %cst_12 = arith.constant dense<0.000000e+00> : vector<64xf32>
    %21 = vector.multi_reduction <add>, %20, %cst_12 [0] : vector<288x64xf32> to vector<64xf32>
    %22 = vector.shape_cast %21 : vector<64xf32> to vector<1x64xf32>
    %cst_13 = arith.constant 2.880000e+02 : f32
    %23 = vector.broadcast %cst_13 : f32 to vector<1x64xf32>
    %24 = arith.divf %22, %23 : vector<1x64xf32>
    %25 = vector.broadcast %17 : vector<1x64xf32> to vector<288x64xf32>
    %26 = arith.subf %13, %25 : vector<288x64xf32>
    %cst_14 = arith.constant 9.99999974E-6 : f32
    %27 = vector.broadcast %cst_14 : f32 to vector<1x64xf32>
    %28 = arith.addf %24, %27 : vector<1x64xf32>
    %29 = math.rsqrt %28 : vector<1x64xf32>
    %30 = vector.broadcast %29 : vector<1x64xf32> to vector<288x64xf32>
    %31 = arith.mulf %26, %30 : vector<288x64xf32>
    %cst_15 = arith.constant 0.000000e+00 : f32
    %32 = vector.broadcast %cst_15 : f32 to vector<288x64xf32>
    %33 = arith.maximumf %31, %32 : vector<288x64xf32>
    %c0_16 = arith.constant 0 : index
    %c0_17 = arith.constant 0 : index
    %34 = vector.load %arg6[%c0_16, %c0_17] : memref<8x288xf32, #tpu.memory_space<vmem>>, vector<8x288xf32>
    %cst_18 = arith.constant dense<0.000000e+00> : vector<8x64xf32>
    %35 = tpu.matmul %34, %33, %cst_18 {dimension_numbers = #tpu.dot_dimension_numbers<[1], [0], [0], [1], [0, 0, 1, 1], [], []>} : vector<8x288xf32>, vector<288x64xf32>, vector<8x64xf32> -> vector<8x64xf32>
    %cst_19 = arith.constant 4.000000e-02 : f32
    %36 = vector.broadcast %cst_19 : f32 to vector<8x64xf32>
    %37 = arith.mulf %35, %36 : vector<8x64xf32>
    %c0_20 = arith.constant 0 : index
    %c0_21 = arith.constant 0 : index
    %38 = vector.load %arg7[%c0_20, %c0_21] : memref<8x64xf32, #tpu.memory_space<vmem>>, vector<8x64xf32>
    tpu.vector_store %arg7[%c0_20, %c0_21], %37 {strides = array<i32>} : memref<8x64xf32, #tpu.memory_space<vmem>>, vector<8x64xf32>,
    return
  }
  func.func @transform_0(%arg0: i32) -> (i32, i32) {
    %c0_i32 = arith.constant 0 : i32
    %c0_i32_0 = arith.constant 0 : i32
    %c0_i32_1 = arith.constant 0 : i32
    return %c0_i32, %c0_i32_0 : i32, i32
  }
  func.func @transform_1(%arg0: i32) -> (i32, i32) {
    %c0_i32 = arith.constant 0 : i32
    %c0_i32_0 = arith.constant 0 : i32
    %c0_i32_1 = arith.constant 0 : i32
    return %c0_i32, %c0_i32_0 : i32, i32
  }
  func.func @transform_2(%arg0: i32) -> (i32, i32) {
    %c0_i32 = arith.constant 0 : i32
    %c0_i32_0 = arith.constant 0 : i32
    %c0_i32_1 = arith.constant 0 : i32
    return %c0_i32, %c0_i32_0 : i32, i32
  }
  func.func @transform_3(%arg0: i32) -> (i32, i32) {
    %c0_i32 = arith.constant 0 : i32
    %c0_i32_0 = arith.constant 0 : i32
    %c0_i32_1 = arith.constant 0 : i32
    return %c0_i32, %c0_i32_0 : i32, i32
  }
  func.func @transform_4(%arg0: i32) -> (i32, i32) {
    %c0_i32 = arith.constant 0 : i32
    %c0_i32_0 = arith.constant 0 : i32
    %c0_i32_1 = arith.constant 0 : i32
    return %c0_i32, %c0_i32_0 : i32, i32
  }
  func.func @transform_5(%arg0: i32) -> (i32, i32) {
    %c0_i32 = arith.constant 0 : i32
    %c0_i32_0 = arith.constant 0 : i32
    %c0_i32_1 = arith.constant 0 : i32
    return %c0_i32, %c0_i32_0 : i32, i32
  }
  func.func @transform_6(%arg0: i32) -> (i32, i32) {
    %c0_i32 = arith.constant 0 : i32
    %c0_i32_0 = arith.constant 0 : i32
    %c0_i32_1 = arith.constant 0 : i32
    return %c0_i32, %c0_i32_0 : i32, i32
  }
}

</mosaic_0001>

<llo_original>
// kernel: metarn_forward.4
$region0: #{metarn_forward.4}
  #allocation0 [shape = 'u32[]', space=smem, size = 0x4, offset = 0x4, fixed_abs, tag = 'smem constant byte address 0x4 - core index']
  #allocation1 [shape = 'u32[144,128]{1,0:T(1,128)}', space=vmem, size = 0x12000, scoped, tag = 'internal scratch']
  %s0 = inlined_call_operand.vmem [shape: bf16[8,2144,72], index: 0, kind: input, shape index: {}]
  %s1 = inlined_call_operand.vmem [shape: bf16[72,64], index: 1, kind: input, shape index: {}]
  %s2 = inlined_call_operand.vmem [shape: f32[1,64], index: 2, kind: input, shape index: {}]
  %s3 = inlined_call_operand.vmem [shape: f32[1,72], index: 3, kind: input, shape index: {}]
  %s4 = inlined_call_operand.vmem [shape: f32[1,72], index: 4, kind: input, shape index: {}]
  %s5 = inlined_call_operand.vmem [shape: f32[8,529,64], index: 5, kind: output, shape index: {}]
  %s6 = sld [smem:[#allocation0]]
  $region53: #{metarn_forward.4} parent=0
    _
  %s8 = ssub.s32 1, %s6
  %s9 = scalar_select 0, %s8, %s6
  loop: start=0, step=1, limit=10
  $region2: #{metarn_forward.4} parent=0 // loop_pre_header
    _
  $region3: #{metarn_forward.4} parent=0 // loop_header
    %s11 = sphi 0, %s15
    %p12 = scmp.ge.s32.totalorder %s11, 10
    %s21 = sphi 0, %s23
    %s24 = sphi 0, %s21
    %s25 = sphi 0, %s24
    %s41 = sphi 0, %s25
    %s45 = sphi 0, %s45
    %s47 = sphi 0, %s45
    %s48 = sphi 0, %s47
    %s62 = sphi 0, %s48
    %s66 = sphi 0, %s66
    %s68 = sphi 0, %s66
    %s69 = sphi 0, %s68
    %s83 = sphi 0, %s69
    %s87 = sphi 0, %s87
    %s89 = sphi 0, %s87
    %s90 = sphi 0, %s89
    %s104 = sphi 0, %s90
    %s108 = sphi 0, %s108
    %s110 = sphi 0, %s108
    %s111 = sphi 0, %s110
    %s125 = sphi 0, %s111
    %s131 = sphi 0, %s133
    %s134 = sphi 0, %s131
    %s135 = sphi 0, %s134
    %s151 = sphi 0, %s135
  $region4: #{metarn_forward.4} parent=0 // loop_header_branch
    %14 = sbr.rel (%p12) target = $region8
  $region5: #{metarn_forward.4} parent=0 // loop_body
    %s16 = ssub.s32 %s11, 1
    %s17 = ssub.s32 %s11, 2
    %s18 = sadd.s32 %s11, 1
    %s19 = ssub.s32 %s11, %s18
    %p20 = scmp.eq.s32.totalorder %s19, 0
    %s22 = sadd.s32 %s21, 1
    %s23 = scalar_select %p20, %s21, %s22
    %p26 = pneg %p20
    %p27 = scmp.eq.s32.totalorder %s11, 7
    %p28 = por %p26, %p27
    %p29 = scmp.ne.s32.totalorder %s21, %s24
    %p30 = scmp.eq.s32.totalorder %s11, 0
    %p31 = por %p29, %p30
    %p32 = scmp.ne.s32.totalorder %s21, %s24
    %p33 = scmp.eq.s32.totalorder %s16, 7
    %p34 = por %p32, %p33
    %p35 = scmp.ne.s32.totalorder %s24, %s25
    %p36 = scmp.eq.s32.totalorder %s16, 0
    %p37 = por %p35, %p36
    %p38 = scmp.ne.s32.totalorder %s24, %s25
    %p39 = scmp.eq.s32.totalorder %s17, 7
    %p40 = por %p38, %p39
    %p42 = scmp.ne.s32.totalorder %s25, %s41
    %p43 = scmp.eq.s32.totalorder %s17, 0
    %p44 = por %p42, %p43
    %s46 = sadd.s32 %s45, 1
    %p49 = scmp.eq.s32.totalorder %s11, 7
    %p50 = scmp.ne.s32.totalorder %s45, %s47
    %p51 = scmp.eq.s32.totalorder %s11, 0
    %p52 = por %p50, %p51
    %p53 = scmp.ne.s32.totalorder %s45, %s47
    %p54 = scmp.eq.s32.totalorder %s16, 7
    %p55 = por %p53, %p54
    %p56 = scmp.ne.s32.totalorder %s47, %s48
    %p57 = scmp.eq.s32.totalorder %s16, 0
    %p58 = por %p56, %p57
    %p59 = scmp.ne.s32.totalorder %s47, %s48
    %p60 = scmp.eq.s32.totalorder %s17, 7
    %p61 = por %p59, %p60
    %p63 = scmp.ne.s32.totalorder %s48, %s62
    %p64 = scmp.eq.s32.totalorder %s17, 0
    %p65 = por %p63, %p64
    %s67 = sadd.s32 %s66, 1
    %p70 = scmp.eq.s32.totalorder %s11, 7
    %p71 = scmp.ne.s32.totalorder %s66, %s68
    %p72 = scmp.eq.s32.totalorder %s11, 0
    %p73 = por %p71, %p72
    %p74 = scmp.ne.s32.totalorder %s66, %s68
    %p75 = scmp.eq.s32.totalorder %s16, 7
    %p76 = por %p74, %p75
    %p77 = scmp.ne.s32.totalorder %s68, %s69
    %p78 = scmp.eq.s32.totalorder %s16, 0
    %p79 = por %p77, %p78
    %p80 = scmp.ne.s32.totalorder %s68, %s69
    %p81 = scmp.eq.s32.totalorder %s17, 7
    %p82 = por %p80, %p81
    %p84 = scmp.ne.s32.totalorder %s69, %s83
    %p85 = scmp.eq.s32.totalorder %s17, 0
    %p86 = por %p84, %p85
    %s88 = sadd.s32 %s87, 1
    %p91 = scmp.eq.s32.totalorder %s11, 7
    %p92 = scmp.ne.s32.totalorder %s87, %s89
    %p93 = scmp.eq.s32.totalorder %s11, 0
    %p94 = por %p92, %p93
    %p95 = scmp.ne.s32.totalorder %s87, %s89
    %p96 = scmp.eq.s32.totalorder %s16, 7
    %p97 = por %p95, %p96
    %p98 = scmp.ne.s32.totalorder %s89, %s90
    %p99 = scmp.eq.s32.totalorder %s16, 0
    %p100 = por %p98, %p99
    %p101 = scmp.ne.s32.totalorder %s89, %s90
    %p102 = scmp.eq.s32.totalorder %s17, 7
    %p103 = por %p101, %p102
    %p105 = scmp.ne.s32.totalorder %s90, %s104
    %p106 = scmp.eq.s32.totalorder %s17, 0
    %p107 = por %p105, %p106
    %s109 = sadd.s32 %s108, 1
    %p112 = scmp.eq.s32.totalorder %s11, 7
    %p113 = scmp.ne.s32.totalorder %s108, %s110
    %p114 = scmp.eq.s32.totalorder %s11, 0
    %p115 = por %p113, %p114
    %p116 = scmp.ne.s32.totalorder %s108, %s110
    %p117 = scmp.eq.s32.totalorder %s16, 7
    %p118 = por %p116, %p117
    %p119 = scmp.ne.s32.totalorder %s110, %s111
    %p120 = scmp.eq.s32.totalorder %s16, 0
    %p121 = por %p119, %p120
    %p122 = scmp.ne.s32.totalorder %s110, %s111
    %p123 = scmp.eq.s32.totalorder %s17, 7
    %p124 = por %p122, %p123
    %p126 = scmp.ne.s32.totalorder %s111, %s125
    %p127 = scmp.eq.s32.totalorder %s17, 0
    %p128 = por %p126, %p127
    %s129 = ssub.s32 %s11, %s18
    %p130 = scmp.eq.s32.totalorder %s129, 0
    %s132 = sadd.s32 %s131, 1
    %s133 = scalar_select %p130, %s131, %s132
    %p136 = pneg %p130
    %p137 = scmp.eq.s32.totalorder %s11, 7
    %p138 = por %p136, %p137
    %p139 = scmp.ne.s32.totalorder %s131, %s134
    %p140 = scmp.eq.s32.totalorder %s11, 0
    %p141 = por %p139, %p140
    %p142 = scmp.ne.s32.totalorder %s131, %s134
    %p143 = scmp.eq.s32.totalorder %s16, 7
    %p144 = por %p142, %p143
    %p145 = scmp.ne.s32.totalorder %s134, %s135
    %p146 = scmp.eq.s32.totalorder %s16, 0
    %p147 = por %p145, %p146
    %p148 = scmp.ne.s32.totalorder %s134, %s135
    %p149 = scmp.eq.s32.totalorder %s17, 7
    %p150 = por %p148, %p149
    %p152 = scmp.ne.s32.totalorder %s135, %s151
    %p153 = scmp.eq.s32.totalorder %s17, 0
    %p154 = por %p152, %p153
    %p155 = scmp.le.s32.totalorder 1, %s11
    %p156 = scmp.lt.s32.totalorder %s11, 9
    %p157 = pnand %p155, %p156
    %p158 = pneg %p157
    // Predicated region
    $region9: #{metarn_forward.4} parent=5 // pred_check
      _
    $region10: #{metarn_forward.4} parent=5 // pred_check_branch
      %160 = sbr.rel (%p157) target = $region12
    $region11: #{metarn_forward.4} parent=5 // pred_region
      %s161 = ssub.s32 %s11, 1
      // Predicated region
      $region13: #{metarn_forward.4} parent=11 // pred_check
        %p162 = pneg %p58
      $region14: #{metarn_forward.4} parent=11 // pred_check_branch
        %164 = sbr.rel (%p162) target = $region16
      $region15: #{metarn_forward.4} parent=11 // pred_region
        _
      $region16: #{metarn_forward.4} parent=11 // pred_fallthru
        _
      // Predicated region
      $region17: #{metarn_forward.4} parent=11 // pred_check
        %p165 = pneg %p79
      $region18: #{metarn_forward.4} parent=11 // pred_check_branch
        %167 = sbr.rel (%p165) target = $region20
      $region19: #{metarn_forward.4} parent=11 // pred_region
        _
      $region20: #{metarn_forward.4} parent=11 // pred_fallthru
        _
      // Predicated region
      $region21: #{metarn_forward.4} parent=11 // pred_check
        %p168 = pneg %p100
      $region22: #{metarn_forward.4} parent=11 // pred_check_branch
        %170 = sbr.rel (%p168) target = $region24
      $region23: #{metarn_forward.4} parent=11 // pred_region
        _
      $region24: #{metarn_forward.4} parent=11 // pred_fallthru
        _
      // Predicated region
      $region25: #{metarn_forward.4} parent=11 // pred_check
        %p171 = pneg %p121
      $region26: #{metarn_forward.4} parent=11 // pred_check_branch
        %173 = sbr.rel (%p171) target = $region28
      $region27: #{metarn_forward.4} parent=11 // pred_region
        _
      $region28: #{metarn_forward.4} parent=11 // pred_fallthru
        _
    $region12: #{metarn_forward.4} parent=5 // pred_fallthru
      _
    %p174 = scmp.lt.s32.totalorder %s11, 8
    // Predicated region
    $region29: #{metarn_forward.4} parent=5 // pred_check
      %p175 = pneg %p174
    $region30: #{metarn_forward.4} parent=5 // pred_check_branch
      %177 = sbr.rel (%p175) target = $region32
    $region31: #{metarn_forward.4} parent=5 // pred_region
      // Predicated region
      $region33: #{metarn_forward.4} parent=31 // pred_check
        %p178 = pneg %p31
      $region34: #{metarn_forward.4} parent=31 // pred_check_branch
        %180 = sbr.rel (%p178) target = $region36
      $region35: #{metarn_forward.4} parent=31 // pred_region
        %p181 = scmp.lt.s32.totalorder %s11, 7
        %s182 = scalar_select %p181, %s11, 7
        %s183 = smul.addr %s182, 268
        %s184 = smul.addr %s183, 4
        %s185 = scalar_lea.vmem %s0, %s184
      $region36: #{metarn_forward.4} parent=31 // pred_fallthru
        _
    $region32: #{metarn_forward.4} parent=5 // pred_fallthru
      _
    %p186 = scmp.le.s32.totalorder 1, %s11
    %p187 = scmp.lt.s32.totalorder %s11, 9
    %p188 = pnand %p186, %p187
    %p189 = pneg %p188
    // Predicated region
    $region37: #{metarn_forward.4} parent=5 // pred_check
      _
    $region38: #{metarn_forward.4} parent=5 // pred_check_branch
      %191 = sbr.rel (%p188) target = $region40
    $region39: #{metarn_forward.4} parent=5 // pred_region
      %s192 = ssub.s32 %s11, 1
      %p193 = scmp.lt.s32.totalorder %s16, 7
      %s194 = scalar_select %p193, %s16, 7
      %s195 = smul.addr %s194, 268
      %s196 = smul.addr %s195, 4
      %s197 = scalar_lea.vmem %s0, %s196
      %p198 = pneg %p37
      %p199 = pneg %p34
      %p200 = pneg %p58
      %p201 = pneg %p55
      %p202 = pneg %p79
      %p203 = pneg %p76
      %p204 = pneg %p100
      %p205 = pneg %p97
      %p206 = pneg %p121
      %p207 = pneg %p118
      %p208 = pneg %p147
      %p209 = pneg %p144
      %p210 = scmp.lt.s32.totalorder %s16, 7
      %s211 = scalar_select %p210, %s16, 7
      %s212 = smul.addr %s211, 67
      %s213 = smul.addr %s212, 8
      %s214 = scalar_lea.vmem %s5, %s213
      %p215 = scmp.lt.s32.totalorder %s16, 7
      %s216 = scalar_select %p215, %s16, 7
      %s217 = smul.addr %s216, 268
      %s218 = smul.addr %s217, 4
      %s219 = scalar_lea.vmem %s0, %s218
      %p220 = scmp.lt.s32.totalorder %s16, 7
      %s221 = scalar_select %p220, %s16, 7
      %s222 = smul.addr %s221, 67
      %s223 = smul.addr %s222, 8
      %s224 = scalar_lea.vmem %s5, %s223
      %v226 = vld [vmem:[%s219] sm:$0xf]
      %v227 = vld [vmem:[%s219 + $0x4] sm:$0xf]
      %v228 = vld [vmem:[%s219 + $0x8] sm:$0xf]
      %v229 = vld [vmem:[%s219 + $0xc] sm:$0xf]
      %v230 = vld [vmem:[%s219 + $0x10] sm:$0xf]
      %v231 = vld [vmem:[%s219 + $0x14] sm:$0xf]
      %v232 = vld [vmem:[%s219 + $0x18] sm:$0xf]
      %v233 = vld [vmem:[%s219 + $0x1c] sm:$0xf]
      %v234 = vld [vmem:[%s219 + $0x20] sm:$0xf]
      %v235 = vld [vmem:[%s219 + $0x24] sm:$0xf]
      %v236 = vld [vmem:[%s219 + $0x28] sm:$0xf]
      %v237 = vld [vmem:[%s219 + $0x2c] sm:$0xf]
      %v238 = vld [vmem:[%s219 + $0x30] sm:$0xf]
      %v239 = vld [vmem:[%s219 + $0x34] sm:$0xf]
      %v240 = vld [vmem:[%s219 + $0x38] sm:$0xf]
      %v241 = vld [vmem:[%s219 + $0x3c] sm:$0xf]
      %v242 = vld [vmem:[%s219 + $0x40] sm:$0xf]
      %v243 = vld [vmem:[%s219 + $0x44] sm:$0xf]
      %v244 = vld [vmem:[%s219 + $0x48] sm:$0xf]
      %v245 = vld [vmem:[%s219 + $0x4c] sm:$0xf]
      %v246 = vld [vmem:[%s219 + $0x50] sm:$0xf]
      %v247 = vld [vmem:[%s219 + $0x54] sm:$0xf]
      %v248 = vld [vmem:[%s219 + $0x58] sm:$0xf]
      %v249 = vld [vmem:[%s219 + $0x5c] sm:$0xf]
      %v250 = vld [vmem:[%s219 + $0x60] sm:$0xf]
      %v251 = vld [vmem:[%s219 + $0x64] sm:$0xf]
      %v252 = vld [vmem:[%s219 + $0x68] sm:$0xf]
      %v253 = vld [vmem:[%s219 + $0x6c] sm:$0xf]
      %v254 = vld [vmem:[%s219 + $0x70] sm:$0xf]
      %v255 = vld [vmem:[%s219 + $0x74] sm:$0xf]
      %v256 = vld [vmem:[%s219 + $0x78] sm:$0xf]
      %v257 = vld [vmem:[%s219 + $0x7c] sm:$0xf]
      %v258 = vld [vmem:[%s219 + $0x80] sm:$0xf]
      %v259 = vld [vmem:[%s219 + $0x84] sm:$0xf]
      %v260 = vld [vmem:[%s219 + $0x88] sm:$0xf]
      %v261 = vld [vmem:[%s219 + $0x8c] sm:$0xf]
      %v262 = vld [vmem:[%s219 + $0x90] sm:$0xf]
      %v263 = vld [vmem:[%s219 + $0x94] sm:$0xf]
      %v264 = vld [vmem:[%s219 + $0x98] sm:$0xf]
      %v265 = vld [vmem:[%s219 + $0x9c] sm:$0xf]
      %v266 = vld [vmem:[%s219 + $0xa0] sm:$0xf]
      %v267 = vld [vmem:[%s219 + $0xa4] sm:$0xf]
      %v268 = vld [vmem:[%s219 + $0xa8] sm:$0xf]
      %v269 = vld [vmem:[%s219 + $0xac] sm:$0xf]
      %v270 = vld [vmem:[%s219 + $0xb0] sm:$0xf]
      %v271 = vld [vmem:[%s219 + $0xb4] sm:$0xf]
      %v272 = vld [vmem:[%s219 + $0xb8] sm:$0xf]
      %v273 = vld [vmem:[%s219 + $0xbc] sm:$0xf]
      %v274 = vld [vmem:[%s219 + $0xc0] sm:$0xf]
      %v275 = vld [vmem:[%s219 + $0xc4] sm:$0xf]
      %v276 = vld [vmem:[%s219 + $0xc8] sm:$0xf]
      %v277 = vld [vmem:[%s219 + $0xcc] sm:$0xf]
      %v278 = vld [vmem:[%s219 + $0xd0] sm:$0xf]
      %v279 = vld [vmem:[%s219 + $0xd4] sm:$0xf]
      %v280 = vld [vmem:[%s219 + $0xd8] sm:$0xf]
      %v281 = vld [vmem:[%s219 + $0xdc] sm:$0xf]
      %v282 = vld [vmem:[%s219 + $0xe0] sm:$0xf]
      %v283 = vld [vmem:[%s219 + $0xe4] sm:$0xf]
      %v284 = vld [vmem:[%s219 + $0xe8] sm:$0xf]
      %v285 = vld [vmem:[%s219 + $0xec] sm:$0xf]
      %v286 = vld [vmem:[%s219 + $0xf0] sm:$0xf]
      %v287 = vld [vmem:[%s219 + $0xf4] sm:$0xf]
      %v288 = vld [vmem:[%s219 + $0xf8] sm:$0xf]
      %v289 = vld [vmem:[%s219 + $0xfc] sm:$0xf]
      %v290 = vld [vmem:[%s219 + $0x100] sm:$0xf]
      %v291 = vld [vmem:[%s219 + $0x104] sm:$0xf]
      %v292 = vld [vmem:[%s219 + $0x108] sm:$0xf]
      %v293 = vld [vmem:[%s219 + $0x10c] sm:$0xf]
      %v294 = vld [vmem:[%s219 + $0x110] sm:$0xf]
      %v295 = vld [vmem:[%s219 + $0x114] sm:$0xf]
      %v296 = vld [vmem:[%s219 + $0x118] sm:$0xf]
      %v297 = vld [vmem:[%s219 + $0x11c] sm:$0xf]
      %v298 = vld [vmem:[%s219 + $0x120] sm:$0xf]
      %v299 = vld [vmem:[%s219 + $0x124] sm:$0xf]
      %v300 = vld [vmem:[%s219 + $0x128] sm:$0xf]
      %v301 = vld [vmem:[%s219 + $0x12c] sm:$0xf]
      %v302 = vld [vmem:[%s219 + $0x130] sm:$0xf]
      %v303 = vld [vmem:[%s219 + $0x134] sm:$0xf]
      %v304 = vld [vmem:[%s219 + $0x138] sm:$0xf]
      %v305 = vld [vmem:[%s219 + $0x13c] sm:$0xf]
      %v306 = vld [vmem:[%s219 + $0x140] sm:$0xf]
      %v307 = vld [vmem:[%s219 + $0x144] sm:$0xf]
      %v308 = vld [vmem:[%s219 + $0x148] sm:$0xf]
      %v309 = vld [vmem:[%s219 + $0x14c] sm:$0xf]
      %v310 = vld [vmem:[%s219 + $0x150] sm:$0xf]
      %v311 = vld [vmem:[%s219 + $0x154] sm:$0xf]
      %v312 = vld [vmem:[%s219 + $0x158] sm:$0xf]
      %v313 = vld [vmem:[%s219 + $0x15c] sm:$0xf]
      %v314 = vld [vmem:[%s219 + $0x160] sm:$0xf]
      %v315 = vld [vmem:[%s219 + $0x164] sm:$0xf]
      %v316 = vld [vmem:[%s219 + $0x168] sm:$0xf]
      %v317 = vld [vmem:[%s219 + $0x16c] sm:$0xf]
      %v318 = vld [vmem:[%s219 + $0x170] sm:$0xf]
      %v319 = vld [vmem:[%s219 + $0x174] sm:$0xf]
      %v320 = vld [vmem:[%s219 + $0x178] sm:$0xf]
      %v321 = vld [vmem:[%s219 + $0x17c] sm:$0xf]
      %v322 = vld [vmem:[%s219 + $0x180] sm:$0xf]
      %v323 = vld [vmem:[%s219 + $0x184] sm:$0xf]
      %v324 = vld [vmem:[%s219 + $0x188] sm:$0xf]
      %v325 = vld [vmem:[%s219 + $0x18c] sm:$0xf]
      %v326 = vld [vmem:[%s219 + $0x190] sm:$0xf]
      %v327 = vld [vmem:[%s219 + $0x194] sm:$0xf]
      %v328 = vld [vmem:[%s219 + $0x198] sm:$0xf]
      %v329 = vld [vmem:[%s219 + $0x19c] sm:$0xf]
      %v330 = vld [vmem:[%s219 + $0x1a0] sm:$0xf]
      %v331 = vld [vmem:[%s219 + $0x1a4] sm:$0xf]
      %v332 = vld [vmem:[%s219 + $0x1a8] sm:$0xf]
      %v333 = vld [vmem:[%s219 + $0x1ac] sm:$0xf]
      %v334 = vld [vmem:[%s219 + $0x1b0] sm:$0xf]
      %v335 = vld [vmem:[%s219 + $0x1b4] sm:$0xf]
      %v336 = vld [vmem:[%s219 + $0x1b8] sm:$0xf]
      %v337 = vld [vmem:[%s219 + $0x1bc] sm:$0xf]
      %v338 = vld [vmem:[%s219 + $0x1c0] sm:$0xf]
      %v339 = vld [vmem:[%s219 + $0x1c4] sm:$0xf]
      %v340 = vld [vmem:[%s219 + $0x1c8] sm:$0xf]
      %v341 = vld [vmem:[%s219 + $0x1cc] sm:$0xf]
      %v342 = vld [vmem:[%s219 + $0x1d0] sm:$0xf]
      %v343 = vld [vmem:[%s219 + $0x1d4] sm:$0xf]
      %v344 = vld [vmem:[%s219 + $0x1d8] sm:$0xf]
      %v345 = vld [vmem:[%s219 + $0x1dc] sm:$0xf]
      %v346 = vld [vmem:[%s219 + $0x1e0] sm:$0xf]
      %v347 = vld [vmem:[%s219 + $0x1e4] sm:$0xf]
      %v348 = vld [vmem:[%s219 + $0x1e8] sm:$0xf]
      %v349 = vld [vmem:[%s219 + $0x1ec] sm:$0xf]
      %v350 = vld [vmem:[%s219 + $0x1f0] sm:$0xf]
      %v351 = vld [vmem:[%s219 + $0x1f4] sm:$0xf]
      %v352 = vld [vmem:[%s219 + $0x1f8] sm:$0xf]
      %v353 = vld [vmem:[%s219 + $0x1fc] sm:$0xf]
      %v354 = vld [vmem:[%s219 + $0x200] sm:$0xf]
      %v355 = vld [vmem:[%s219 + $0x204] sm:$0xf]
      %v356 = vld [vmem:[%s219 + $0x208] sm:$0xf]
      %v357 = vld [vmem:[%s219 + $0x20c] sm:$0xf]
      %v358 = vld [vmem:[%s219 + $0x210] sm:$0xf]
      %v359 = vld [vmem:[%s219 + $0x214] sm:$0xf]
      %v360 = vld [vmem:[%s219 + $0x218] sm:$0xf]
      %v361 = vld [vmem:[%s219 + $0x21c] sm:$0xf]
      %v362 = vld [vmem:[%s219 + $0x220] sm:$0xf]
      %v363 = vld [vmem:[%s219 + $0x224] sm:$0xf]
      %v364 = vld [vmem:[%s219 + $0x228] sm:$0xf]
      %v365 = vld [vmem:[%s219 + $0x22c] sm:$0xf]
      %v366 = vld [vmem:[%s219 + $0x230] sm:$0xf]
      %v367 = vld [vmem:[%s219 + $0x234] sm:$0xf]
      %v368 = vld [vmem:[%s219 + $0x238] sm:$0xf]
      %v369 = vld [vmem:[%s219 + $0x23c] sm:$0xf]
      %v370 = vld [vmem:[%s219 + $0x240] sm:$0xf]
      %v371 = vld [vmem:[%s219 + $0x244] sm:$0xf]
      %v372 = vld [vmem:[%s219 + $0x248] sm:$0xf]
      %v373 = vld [vmem:[%s219 + $0x24c] sm:$0xf]
      %v374 = vld [vmem:[%s219 + $0x250] sm:$0xf]
      %v375 = vld [vmem:[%s219 + $0x254] sm:$0xf]
      %v376 = vld [vmem:[%s219 + $0x258] sm:$0xf]
      %v377 = vld [vmem:[%s219 + $0x25c] sm:$0xf]
      %v378 = vld [vmem:[%s219 + $0x260] sm:$0xf]
      %v379 = vld [vmem:[%s219 + $0x264] sm:$0xf]
      %v380 = vld [vmem:[%s219 + $0x268] sm:$0xf]
      %v381 = vld [vmem:[%s219 + $0x26c] sm:$0xf]
      %v382 = vld [vmem:[%s219 + $0x270] sm:$0xf]
      %v383 = vld [vmem:[%s219 + $0x274] sm:$0xf]
      %v384 = vld [vmem:[%s219 + $0x278] sm:$0xf]
      %v385 = vld [vmem:[%s219 + $0x27c] sm:$0xf]
      %v386 = vld [vmem:[%s219 + $0x280] sm:$0xf]
      %v387 = vld [vmem:[%s219 + $0x284] sm:$0xf]
      %v388 = vld [vmem:[%s219 + $0x288] sm:$0xf]
      %v389 = vld [vmem:[%s219 + $0x28c] sm:$0xf]
      %v390 = vld [vmem:[%s219 + $0x290] sm:$0xf]
      %v391 = vld [vmem:[%s219 + $0x294] sm:$0xf]
      %v392 = vld [vmem:[%s219 + $0x298] sm:$0xf]
      %v393 = vld [vmem:[%s219 + $0x29c] sm:$0xf]
      %v394 = vld [vmem:[%s219 + $0x2a0] sm:$0xf]
      %v395 = vld [vmem:[%s219 + $0x2a4] sm:$0xf]
      %v396 = vld [vmem:[%s219 + $0x2a8] sm:$0xf]
      %v397 = vld [vmem:[%s219 + $0x2ac] sm:$0xf]
      %v398 = vld [vmem:[%s219 + $0x2b0] sm:$0xf]
      %v399 = vld [vmem:[%s219 + $0x2b4] sm:$0xf]
      %v400 = vld [vmem:[%s219 + $0x2b8] sm:$0xf]
      %v401 = vld [vmem:[%s219 + $0x2bc] sm:$0xf]
      %v402 = vld [vmem:[%s219 + $0x2c0] sm:$0xf]
      %v403 = vld [vmem:[%s219 + $0x2c4] sm:$0xf]
      %v404 = vld [vmem:[%s219 + $0x2c8] sm:$0xf]
      %v405 = vld [vmem:[%s219 + $0x2cc] sm:$0xf]
      %v406 = vld [vmem:[%s219 + $0x2d0] sm:$0xf]
      %v407 = vld [vmem:[%s219 + $0x2d4] sm:$0xf]
      %v408 = vld [vmem:[%s219 + $0x2d8] sm:$0xf]
      %v409 = vld [vmem:[%s219 + $0x2dc] sm:$0xf]
      %v410 = vld [vmem:[%s219 + $0x2e0] sm:$0xf]
      %v411 = vld [vmem:[%s219 + $0x2e4] sm:$0xf]
      %v412 = vld [vmem:[%s219 + $0x2e8] sm:$0xf]
      %v413 = vld [vmem:[%s219 + $0x2ec] sm:$0xf]
      %v414 = vld [vmem:[%s219 + $0x2f0] sm:$0xf]
      %v415 = vld [vmem:[%s219 + $0x2f4] sm:$0xf]
      %v416 = vld [vmem:[%s219 + $0x2f8] sm:$0xf]
      %v417 = vld [vmem:[%s219 + $0x2fc] sm:$0xf]
      %v418 = vld [vmem:[%s219 + $0x300] sm:$0xf]
      %v419 = vld [vmem:[%s219 + $0x304] sm:$0xf]
      %v420 = vld [vmem:[%s219 + $0x308] sm:$0xf]
      %v421 = vld [vmem:[%s219 + $0x30c] sm:$0xf]
      %v422 = vld [vmem:[%s219 + $0x310] sm:$0xf]
      %v423 = vld [vmem:[%s219 + $0x314] sm:$0xf]
      %v424 = vld [vmem:[%s219 + $0x318] sm:$0xf]
      %v425 = vld [vmem:[%s219 + $0x31c] sm:$0xf]
      %v426 = vld [vmem:[%s219 + $0x320] sm:$0xf]
      %v427 = vld [vmem:[%s219 + $0x324] sm:$0xf]
      %v428 = vld [vmem:[%s219 + $0x328] sm:$0xf]
      %v429 = vld [vmem:[%s219 + $0x32c] sm:$0xf]
      %v430 = vld [vmem:[%s219 + $0x330] sm:$0xf]
      %v431 = vld [vmem:[%s219 + $0x334] sm:$0xf]
      %v432 = vld [vmem:[%s219 + $0x338] sm:$0xf]
      %v433 = vld [vmem:[%s219 + $0x33c] sm:$0xf]
      %v434 = vld [vmem:[%s219 + $0x340] sm:$0xf]
      %v435 = vld [vmem:[%s219 + $0x344] sm:$0xf]
      %v436 = vld [vmem:[%s219 + $0x348] sm:$0xf]
      %v437 = vld [vmem:[%s219 + $0x34c] sm:$0xf]
      %v438 = vld [vmem:[%s219 + $0x350] sm:$0xf]
      %v439 = vld [vmem:[%s219 + $0x354] sm:$0xf]
      %v440 = vld [vmem:[%s219 + $0x358] sm:$0xf]
      %v441 = vld [vmem:[%s219 + $0x35c] sm:$0xf]
      %v442 = vld [vmem:[%s219 + $0x360] sm:$0xf]
      %v443 = vld [vmem:[%s219 + $0x364] sm:$0xf]
      %v444 = vld [vmem:[%s219 + $0x368] sm:$0xf]
      %v445 = vld [vmem:[%s219 + $0x36c] sm:$0xf]
      %v446 = vld [vmem:[%s219 + $0x370] sm:$0xf]
      %v447 = vld [vmem:[%s219 + $0x374] sm:$0xf]
      %v448 = vld [vmem:[%s219 + $0x378] sm:$0xf]
      %v449 = vld [vmem:[%s219 + $0x37c] sm:$0xf]
      %v450 = vld [vmem:[%s219 + $0x380] sm:$0xf]
      %v451 = vld [vmem:[%s219 + $0x384] sm:$0xf]
      %v452 = vld [vmem:[%s219 + $0x388] sm:$0xf]
      %v453 = vld [vmem:[%s219 + $0x38c] sm:$0xf]
      %v454 = vld [vmem:[%s219 + $0x390] sm:$0xf]
      %v455 = vld [vmem:[%s219 + $0x394] sm:$0xf]
      %v456 = vld [vmem:[%s219 + $0x398] sm:$0xf]
      %v457 = vld [vmem:[%s219 + $0x39c] sm:$0xf]
      %v458 = vld [vmem:[%s219 + $0x3a0] sm:$0xf]
      %v459 = vld [vmem:[%s219 + $0x3a4] sm:$0xf]
      %v460 = vld [vmem:[%s219 + $0x3a8] sm:$0xf]
      %v461 = vld [vmem:[%s219 + $0x3ac] sm:$0xf]
      %v462 = vld [vmem:[%s219 + $0x3b0] sm:$0xf]
      %v463 = vld [vmem:[%s219 + $0x3b4] sm:$0xf]
      %v464 = vld [vmem:[%s219 + $0x3b8] sm:$0xf]
      %v465 = vld [vmem:[%s219 + $0x3bc] sm:$0xf]
      %v466 = vld [vmem:[%s219 + $0x3c0] sm:$0xf]
      %v467 = vld [vmem:[%s219 + $0x3c4] sm:$0xf]
      %v468 = vld [vmem:[%s219 + $0x3c8] sm:$0xf]
      %v469 = vld [vmem:[%s219 + $0x3cc] sm:$0xf]
      %v470 = vld [vmem:[%s219 + $0x3d0] sm:$0xf]
      %v471 = vld [vmem:[%s219 + $0x3d4] sm:$0xf]
      %v472 = vld [vmem:[%s219 + $0x3d8] sm:$0xf]
      %v473 = vld [vmem:[%s219 + $0x3dc] sm:$0xf]
      %v474 = vld [vmem:[%s219 + $0x3e0] sm:$0xf]
      %v475 = vld [vmem:[%s219 + $0x3e4] sm:$0xf]
      %v476 = vld [vmem:[%s219 + $0x3e8] sm:$0xf]
      %v477 = vld [vmem:[%s219 + $0x3ec] sm:$0xf]
      %v478 = vld [vmem:[%s219 + $0x3f0] sm:$0xf]
      %v479 = vld [vmem:[%s219 + $0x3f4] sm:$0xf]
      %v480 = vld [vmem:[%s219 + $0x3f8] sm:$0xf]
      %v481 = vld [vmem:[%s219 + $0x3fc] sm:$0xf]
      %v482 = vld [vmem:[%s219 + $0x400] sm:$0xf]
      %v483 = vld [vmem:[%s219 + $0x404] sm:$0xf]
      %v484 = vld [vmem:[%s219 + $0x408] sm:$0xf]
      %v485 = vld [vmem:[%s219 + $0x40c] sm:$0xf]
      %v486 = vld [vmem:[%s219 + $0x410] sm:$0xf]
      %v487 = vld [vmem:[%s219 + $0x414] sm:$0xf]
      %v488 = vld [vmem:[%s219 + $0x418] sm:$0xf]
      %v489 = vld [vmem:[%s219 + $0x41c] sm:$0xf]
      %v490 = vld [vmem:[%s219 + $0x420] sm:$0xf]
      %v491 = vld [vmem:[%s219 + $0x424] sm:$0xf]
      %v492 = vld [vmem:[%s219 + $0x428] sm:$0xf]
      %v493 = vld [vmem:[%s219 + $0x42c] sm:$0xf]
      %v494 = vld [vmem:[%s1] sm:$0xf]
      %v495 = vld [vmem:[%s1 + $0x4] sm:$0xf]
      %v496 = vld [vmem:[%s1 + $0x8] sm:$0xf]
      %v497 = vld [vmem:[%s1 + $0xc] sm:$0xf]
      %v498 = vld [vmem:[%s1 + $0x10] sm:$0xf]
      %v499 = vld [vmem:[%s1 + $0x14] sm:$0xf]
      %v500 = vld [vmem:[%s1 + $0x18] sm:$0xf]
      %v501 = vld [vmem:[%s1 + $0x1c] sm:$0xf]
      %v502 = vld [vmem:[%s1 + $0x20] sm:$0xf]
      %v771 = vunpack.c.l.b16 %v226
      %v772 = vunpack.c.l.b16 %v227
      %v773 = vunpack.c.l.b16 %v228
      %v774 = vunpack.c.l.b16 %v229
      %v775 = vunpack.c.l.b16 %v230
      %v776 = vunpack.c.l.b16 %v231
      %v777 = vunpack.c.l.b16 %v232
      %v778 = vunpack.c.l.b16 %v233
      %v779 = vunpack.c.l.b16 %v234
      %v780 = vunpack.c.l.b16 %v235
      %v781 = vunpack.c.l.b16 %v236
      %v782 = vunpack.c.l.b16 %v237
      %v783 = vunpack.c.l.b16 %v238
      %v784 = vunpack.c.l.b16 %v239
      %v785 = vunpack.c.l.b16 %v240
      %v786 = vunpack.c.l.b16 %v241
      %v787 = vunpack.c.l.b16 %v242
      %v788 = vunpack.c.l.b16 %v243
      %v789 = vunpack.c.l.b16 %v244
      %v790 = vunpack.c.l.b16 %v245
      %v791 = vunpack.c.l.b16 %v246
      %v792 = vunpack.c.l.b16 %v247
      %v793 = vunpack.c.l.b16 %v248
      %v794 = vunpack.c.l.b16 %v249
      %v795 = vunpack.c.l.b16 %v250
      %v796 = vunpack.c.l.b16 %v251
      %v797 = vunpack.c.l.b16 %v252
      %v798 = vunpack.c.l.b16 %v253
      %v799 = vunpack.c.l.b16 %v254
      %v800 = vunpack.c.l.b16 %v255
      %v801 = vunpack.c.l.b16 %v256
      %v802 = vunpack.c.l.b16 %v257
      %v803 = vunpack.c.l.b16 %v258
      %v804 = vunpack.c.l.b16 %v259
      %v805 = vunpack.c.l.b16 %v260
      %v806 = vunpack.c.l.b16 %v261
      %v807 = vunpack.c.l.b16 %v262
      %v808 = vunpack.c.l.b16 %v263
      %v809 = vunpack.c.l.b16 %v264
      %v810 = vunpack.c.l.b16 %v265
      %v811 = vunpack.c.l.b16 %v266
      %v812 = vunpack.c.l.b16 %v267
      %v813 = vunpack.c.l.b16 %v268
      %v814 = vunpack.c.l.b16 %v269
      %v815 = vunpack.c.l.b16 %v270
      %v816 = vunpack.c.l.b16 %v271
      %v817 = vunpack.c.l.b16 %v272
      %v818 = vunpack.c.l.b16 %v273
      %v819 = vunpack.c.l.b16 %v274
      %v820 = vunpack.c.l.b16 %v275
      %v821 = vunpack.c.l.b16 %v276
      %v822 = vunpack.c.l.b16 %v277
      %v823 = vunpack.c.l.b16 %v278
      %v824 = vunpack.c.l.b16 %v279
      %v825 = vunpack.c.l.b16 %v280
      %v826 = vunpack.c.l.b16 %v281
      %v827 = vunpack.c.l.b16 %v282
      %v828 = vunpack.c.l.b16 %v283
      %v829 = vunpack.c.l.b16 %v284
      %v830 = vunpack.c.l.b16 %v285
      %v831 = vunpack.c.l.b16 %v286
      %v832 = vunpack.c.l.b16 %v287
      %v833 = vunpack.c.l.b16 %v288
      %v834 = vunpack.c.l.b16 %v289
      %v835 = vunpack.c.l.b16 %v290
      %v836 = vunpack.c.l.b16 %v291
      %v837 = vunpack.c.l.b16 %v292
      %v838 = vunpack.c.l.b16 %v293
      %v839 = vunpack.c.l.b16 %v294
      %v840 = vunpack.c.l.b16 %v295
      %v841 = vunpack.c.l.b16 %v296
      %v842 = vunpack.c.l.b16 %v297
      %v843 = vunpack.c.l.b16 %v298
      %v844 = vunpack.c.l.b16 %v299
      %v845 = vunpack.c.l.b16 %v300
      %v846 = vunpack.c.l.b16 %v301
      %v847 = vunpack.c.l.b16 %v302
      %v848 = vunpack.c.l.b16 %v303
      %v849 = vunpack.c.l.b16 %v304
      %v850 = vunpack.c.l.b16 %v305
      %v851 = vunpack.c.l.b16 %v306
      %v852 = vunpack.c.l.b16 %v307
      %v853 = vunpack.c.l.b16 %v308
      %v854 = vunpack.c.l.b16 %v309
      %v855 = vunpack.c.l.b16 %v310
      %v856 = vunpack.c.l.b16 %v311
      %v857 = vunpack.c.l.b16 %v312
      %v858 = vunpack.c.l.b16 %v313
      %v859 = vunpack.c.l.b16 %v314
      %v860 = vunpack.c.l.b16 %v315
      %v861 = vunpack.c.l.b16 %v316
      %v862 = vunpack.c.l.b16 %v317
      %v863 = vunpack.c.l.b16 %v318
      %v864 = vunpack.c.l.b16 %v319
      %v865 = vunpack.c.l.b16 %v320
      %v866 = vunpack.c.l.b16 %v321
      %v867 = vunpack.c.l.b16 %v322
      %v868 = vunpack.c.l.b16 %v323
      %v869 = vunpack.c.l.b16 %v324
      %v870 = vunpack.c.l.b16 %v325
      %v871 = vunpack.c.l.b16 %v326
      %v872 = vunpack.c.l.b16 %v327
      %v873 = vunpack.c.l.b16 %v328
      %v874 = vunpack.c.l.b16 %v329
      %v875 = vunpack.c.l.b16 %v330
      %v876 = vunpack.c.l.b16 %v331
      %v877 = vunpack.c.l.b16 %v332
      %v878 = vunpack.c.l.b16 %v333
      %v879 = vunpack.c.l.b16 %v334
      %v880 = vunpack.c.l.b16 %v335
      %v881 = vunpack.c.l.b16 %v336
      %v882 = vunpack.c.l.b16 %v337
      %v883 = vunpack.c.l.b16 %v338
      %v884 = vunpack.c.l.b16 %v339
      %v885 = vunpack.c.l.b16 %v340
      %v886 = vunpack.c.l.b16 %v341
      %v887 = vunpack.c.l.b16 %v342
      %v888 = vunpack.c.l.b16 %v343
      %v889 = vunpack.c.l.b16 %v344
      %v890 = vunpack.c.l.b16 %v345
      %v891 = vunpack.c.l.b16 %v346
      %v892 = vunpack.c.l.b16 %v347
      %v893 = vunpack.c.l.b16 %v348
      %v894 = vunpack.c.l.b16 %v349
      %v895 = vunpack.c.l.b16 %v350
      %v896 = vunpack.c.l.b16 %v351
      %v897 = vunpack.c.l.b16 %v352
      %v898 = vunpack.c.l.b16 %v353
      %v899 = vunpack.c.l.b16 %v354
      %v900 = vunpack.c.l.b16 %v355
      %v901 = vunpack.c.l.b16 %v356
      %v902 = vunpack.c.l.b16 %v357
      %v903 = vunpack.c.l.b16 %v358
      %v904 = vunpack.c.l.b16 %v359
      %v905 = vunpack.c.l.b16 %v360
      %v906 = vunpack.c.l.b16 %v361
      %v907 = vunpack.c.l.b16 %v362
      %v908 = vunpack.c.l.b16 %v363
      %v909 = vunpack.c.l.b16 %v364
      %v910 = vunpack.c.l.b16 %v365
      %v911 = vunpack.c.l.b16 %v366
      %v912 = vunpack.c.l.b16 %v367
      %v913 = vunpack.c.l.b16 %v368
      %v914 = vunpack.c.l.b16 %v369
      %v915 = vunpack.c.l.b16 %v370
      %v916 = vunpack.c.l.b16 %v371
      %v917 = vunpack.c.l.b16 %v372
      %v918 = vunpack.c.l.b16 %v373
      %v919 = vunpack.c.l.b16 %v374
      %v920 = vunpack.c.l.b16 %v375
      %v921 = vunpack.c.l.b16 %v376
      %v922 = vunpack.c.l.b16 %v377
      %v923 = vunpack.c.l.b16 %v378
      %v924 = vunpack.c.l.b16 %v379
      %v925 = vunpack.c.l.b16 %v380
      %v926 = vunpack.c.l.b16 %v381
      %v927 = vunpack.c.l.b16 %v382
      %v928 = vunpack.c.l.b16 %v383
      %v929 = vunpack.c.l.b16 %v384
      %v930 = vunpack.c.l.b16 %v385
      %v931 = vunpack.c.l.b16 %v386
      %v932 = vunpack.c.l.b16 %v387
      %v933 = vunpack.c.l.b16 %v388
      %v934 = vunpack.c.l.b16 %v389
      %v935 = vunpack.c.l.b16 %v390
      %v936 = vunpack.c.l.b16 %v391
      %v937 = vunpack.c.l.b16 %v392
      %v938 = vunpack.c.l.b16 %v393
      %v939 = vunpack.c.l.b16 %v394
      %v940 = vunpack.c.l.b16 %v395
      %v941 = vunpack.c.l.b16 %v396
      %v942 = vunpack.c.l.b16 %v397
      %v943 = vunpack.c.l.b16 %v398
      %v944 = vunpack.c.l.b16 %v399
      %v945 = vunpack.c.l.b16 %v400
      %v946 = vunpack.c.l.b16 %v401
      %v947 = vunpack.c.l.b16 %v402
      %v948 = vunpack.c.l.b16 %v403
      %v949 = vunpack.c.l.b16 %v404
      %v950 = vunpack.c.l.b16 %v405
      %v951 = vunpack.c.l.b16 %v406
      %v952 = vunpack.c.l.b16 %v407
      %v953 = vunpack.c.l.b16 %v408
      %v954 = vunpack.c.l.b16 %v409
      %v955 = vunpack.c.l.b16 %v410
      %v956 = vunpack.c.l.b16 %v411
      %v957 = vunpack.c.l.b16 %v412
      %v958 = vunpack.c.l.b16 %v413
      %v959 = vunpack.c.l.b16 %v414
      %v960 = vunpack.c.l.b16 %v415
      %v961 = vunpack.c.l.b16 %v416
      %v962 = vunpack.c.l.b16 %v417
      %v963 = vunpack.c.l.b16 %v418
      %v964 = vunpack.c.l.b16 %v419
      %v965 = vunpack.c.l.b16 %v420
      %v966 = vunpack.c.l.b16 %v421
      %v967 = vunpack.c.l.b16 %v422
      %v968 = vunpack.c.l.b16 %v423
      %v969 = vunpack.c.l.b16 %v424
      %v970 = vunpack.c.l.b16 %v425
      %v971 = vunpack.c.l.b16 %v426
      %v972 = vunpack.c.l.b16 %v427
      %v973 = vunpack.c.l.b16 %v428
      %v974 = vunpack.c.l.b16 %v429
      %v975 = vunpack.c.l.b16 %v430
      %v976 = vunpack.c.l.b16 %v431
      %v977 = vunpack.c.l.b16 %v432
      %v978 = vunpack.c.l.b16 %v433
      %v979 = vunpack.c.l.b16 %v434
      %v980 = vunpack.c.l.b16 %v435
      %v981 = vunpack.c.l.b16 %v436
      %v982 = vunpack.c.l.b16 %v437
      %v983 = vunpack.c.l.b16 %v438
      %v984 = vunpack.c.l.b16 %v439
      %v985 = vunpack.c.l.b16 %v440
      %v986 = vunpack.c.l.b16 %v441
      %v987 = vunpack.c.l.b16 %v442
      %v988 = vunpack.c.l.b16 %v443
      %v989 = vunpack.c.l.b16 %v444
      %v990 = vunpack.c.l.b16 %v445
      %v991 = vunpack.c.l.b16 %v446
      %v992 = vunpack.c.l.b16 %v447
      %v993 = vunpack.c.l.b16 %v448
      %v994 = vunpack.c.l.b16 %v449
      %v995 = vunpack.c.l.b16 %v450
      %v996 = vunpack.c.l.b16 %v451
      %v997 = vunpack.c.l.b16 %v452
      %v998 = vunpack.c.l.b16 %v453
      %v999 = vunpack.c.l.b16 %v454
      %v1000 = vunpack.c.l.b16 %v455
      %v1001 = vunpack.c.l.b16 %v456
      %v1002 = vunpack.c.l.b16 %v457
      %v1003 = vunpack.c.l.b16 %v458
      %v1004 = vunpack.c.l.b16 %v459
      %v1005 = vunpack.c.l.b16 %v460
      %v1006 = vunpack.c.l.b16 %v461
      %v1007 = vunpack.c.l.b16 %v462
      %v1008 = vunpack.c.l.b16 %v463
      %v1009 = vunpack.c.l.b16 %v464
      %v1010 = vunpack.c.l.b16 %v465
      %v1011 = vunpack.c.l.b16 %v466
      %v1012 = vunpack.c.l.b16 %v467
      %v1013 = vunpack.c.l.b16 %v468
      %v1014 = vunpack.c.l.b16 %v469
      %v1015 = vunpack.c.l.b16 %v470
      %v1016 = vunpack.c.l.b16 %v471
      %v1017 = vunpack.c.l.b16 %v472
      %v1018 = vunpack.c.l.b16 %v473
      %v1019 = vunpack.c.l.b16 %v474
      %v1020 = vunpack.c.l.b16 %v475
      %v1021 = vunpack.c.l.b16 %v476
      %v1022 = vunpack.c.l.b16 %v477
      %v1023 = vunpack.c.l.b16 %v478
      %v1024 = vunpack.c.l.b16 %v479
      %v1025 = vunpack.c.l.b16 %v480
      %v1026 = vunpack.c.l.b16 %v481
      %v1027 = vunpack.c.l.b16 %v482
      %v1028 = vunpack.c.l.b16 %v483
      %v1029 = vunpack.c.l.b16 %v484
      %v1030 = vunpack.c.l.b16 %v485
      %v1031 = vunpack.c.l.b16 %v486
      %v1032 = vunpack.c.l.b16 %v487
      %v1033 = vunpack.c.l.b16 %v488
      %v1034 = vunpack.c.l.b16 %v489
      %v1035 = vunpack.c.l.b16 %v490
      %v1036 = vunpack.c.l.b16 %v491
      %v1037 = vunpack.c.l.b16 %v492
      %v1038 = vunpack.c.l.b16 %v493
      %v1039 = vpack.c.b16 %v772, %v771
      %v1040 = vpack.c.b16 %v774, %v773
      %v1041 = vpack.c.b16 %v776, %v775
      %v1042 = vpack.c.b16 %v778, %v777
      %v1043 = vpack.c.b16 %v780, %v779
      %v1044 = vpack.c.b16 %v782, %v781
      %v1045 = vpack.c.b16 %v784, %v783
      %v1046 = vpack.c.b16 %v786, %v785
      %v1047 = vpack.c.b16 %v788, %v787
      %v1048 = vpack.c.b16 %v790, %v789
      %v1049 = vpack.c.b16 %v792, %v791
      %v1050 = vpack.c.b16 %v794, %v793
      %v1051 = vpack.c.b16 %v796, %v795
      %v1052 = vpack.c.b16 %v798, %v797
      %v1053 = vpack.c.b16 %v800, %v799
      %v1054 = vpack.c.b16 %v802, %v801
      %v1055 = vpack.c.b16 %v804, %v803
      %v1056 = vpack.c.b16 %v806, %v805
      %v1057 = vpack.c.b16 %v808, %v807
      %v1058 = vpack.c.b16 %v810, %v809
      %v1059 = vpack.c.b16 %v812, %v811
      %v1060 = vpack.c.b16 %v814, %v813
      %v1061 = vpack.c.b16 %v816, %v815
      %v1062 = vpack.c.b16 %v818, %v817
      %v1063 = vpack.c.b16 %v820, %v819
      %v1064 = vpack.c.b16 %v822, %v821
      %v1065 = vpack.c.b16 %v824, %v823
      %v1066 = vpack.c.b16 %v826, %v825
      %v1067 = vpack.c.b16 %v828, %v827
      %v1068 = vpack.c.b16 %v830, %v829
      %v1069 = vpack.c.b16 %v832, %v831
      %v1070 = vpack.c.b16 %v834, %v833
      %v1071 = vpack.c.b16 %v836, %v835
      %v1072 = vpack.c.b16 %v838, %v837
      %v1073 = vpack.c.b16 %v840, %v839
      %v1074 = vpack.c.b16 %v842, %v841
      %v1075 = vpack.c.b16 %v844, %v843
      %v1076 = vpack.c.b16 %v846, %v845
      %v1077 = vpack.c.b16 %v848, %v847
      %v1078 = vpack.c.b16 %v850, %v849
      %v1079 = vpack.c.b16 %v852, %v851
      %v1080 = vpack.c.b16 %v854, %v853
      %v1081 = vpack.c.b16 %v856, %v855
      %v1082 = vpack.c.b16 %v858, %v857
      %v1083 = vpack.c.b16 %v860, %v859
      %v1084 = vpack.c.b16 %v862, %v861
      %v1085 = vpack.c.b16 %v864, %v863
      %v1086 = vpack.c.b16 %v866, %v865
      %v1087 = vpack.c.b16 %v868, %v867
      %v1088 = vpack.c.b16 %v870, %v869
      %v1089 = vpack.c.b16 %v872, %v871
      %v1090 = vpack.c.b16 %v874, %v873
      %v1091 = vpack.c.b16 %v876, %v875
      %v1092 = vpack.c.b16 %v878, %v877
      %v1093 = vpack.c.b16 %v880, %v879
      %v1094 = vpack.c.b16 %v882, %v881
      %v1095 = vpack.c.b16 %v884, %v883
      %v1096 = vpack.c.b16 %v886, %v885
      %v1097 = vpack.c.b16 %v888, %v887
      %v1098 = vpack.c.b16 %v890, %v889
      %v1099 = vpack.c.b16 %v892, %v891
      %v1100 = vpack.c.b16 %v894, %v893
      %v1101 = vpack.c.b16 %v896, %v895
      %v1102 = vpack.c.b16 %v898, %v897
      %v1103 = vpack.c.b16 %v900, %v899
      %v1104 = vpack.c.b16 %v902, %v901
      %v1105 = vpack.c.b16 %v904, %v903
      %v1106 = vpack.c.b16 %v906, %v905
      %v1107 = vpack.c.b16 %v908, %v907
      %v1108 = vpack.c.b16 %v910, %v909
      %v1109 = vpack.c.b16 %v912, %v911
      %v1110 = vpack.c.b16 %v914, %v913
      %v1111 = vpack.c.b16 %v916, %v915
      %v1112 = vpack.c.b16 %v918, %v917
      %v1113 = vpack.c.b16 %v920, %v919
      %v1114 = vpack.c.b16 %v922, %v921
      %v1115 = vpack.c.b16 %v924, %v923
      %v1116 = vpack.c.b16 %v926, %v925
      %v1117 = vpack.c.b16 %v928, %v927
      %v1118 = vpack.c.b16 %v930, %v929
      %v1119 = vpack.c.b16 %v932, %v931
      %v1120 = vpack.c.b16 %v934, %v933
      %v1121 = vpack.c.b16 %v936, %v935
      %v1122 = vpack.c.b16 %v938, %v937
      %v1123 = vpack.c.b16 %v940, %v939
      %v1124 = vpack.c.b16 %v942, %v941
      %v1125 = vpack.c.b16 %v944, %v943
      %v1126 = vpack.c.b16 %v946, %v945
      %v1127 = vpack.c.b16 %v948, %v947
      %v1128 = vpack.c.b16 %v950, %v949
      %v1129 = vpack.c.b16 %v952, %v951
      %v1130 = vpack.c.b16 %v954, %v953
      %v1131 = vpack.c.b16 %v956, %v955
      %v1132 = vpack.c.b16 %v958, %v957
      %v1133 = vpack.c.b16 %v960, %v959
      %v1134 = vpack.c.b16 %v962, %v961
      %v1135 = vpack.c.b16 %v964, %v963
      %v1136 = vpack.c.b16 %v966, %v965
      %v1137 = vpack.c.b16 %v968, %v967
      %v1138 = vpack.c.b16 %v970, %v969
      %v1139 = vpack.c.b16 %v972, %v971
      %v1140 = vpack.c.b16 %v974, %v973
      %v1141 = vpack.c.b16 %v976, %v975
      %v1142 = vpack.c.b16 %v978, %v977
      %v1143 = vpack.c.b16 %v980, %v979
      %v1144 = vpack.c.b16 %v982, %v981
      %v1145 = vpack.c.b16 %v984, %v983
      %v1146 = vpack.c.b16 %v986, %v985
      %v1147 = vpack.c.b16 %v988, %v987
      %v1148 = vpack.c.b16 %v990, %v989
      %v1149 = vpack.c.b16 %v992, %v991
      %v1150 = vpack.c.b16 %v994, %v993
      %v1151 = vpack.c.b16 %v996, %v995
      %v1152 = vpack.c.b16 %v998, %v997
      %v1153 = vpack.c.b16 %v1000, %v999
      %v1154 = vpack.c.b16 %v1002, %v1001
      %v1155 = vpack.c.b16 %v1004, %v1003
      %v1156 = vpack.c.b16 %v1006, %v1005
      %v1157 = vpack.c.b16 %v1008, %v1007
      %v1158 = vpack.c.b16 %v1010, %v1009
      %v1159 = vpack.c.b16 %v1012, %v1011
      %v1160 = vpack.c.b16 %v1014, %v1013
      %v1161 = vpack.c.b16 %v1016, %v1015
      %v1162 = vpack.c.b16 %v1018, %v1017
      %v1163 = vpack.c.b16 %v1020, %v1019
      %v1164 = vpack.c.b16 %v1022, %v1021
      %v1165 = vpack.c.b16 %v1024, %v1023
      %v1166 = vpack.c.b16 %v1026, %v1025
      %v1167 = vpack.c.b16 %v1028, %v1027
      %v1168 = vpack.c.b16 %v1030, %v1029
      %v1169 = vpack.c.b16 %v1032, %v1031
      %v1170 = vpack.c.b16 %v1034, %v1033
      %v1171 = vpack.c.b16 %v1036, %v1035
      %v1172 = vpack.c.b16 %v1038, %v1037
      %v1182 = vunpack.c.l.b16 %v494
      %v1183 = vunpack.c.l.b16 %v495
      %v1184 = vunpack.c.l.b16 %v496
      %v1185 = vunpack.c.l.b16 %v497
      %v1186 = vunpack.c.l.b16 %v498
      %v1187 = vunpack.c.l.b16 %v499
      %v1188 = vunpack.c.l.b16 %v500
      %v1189 = vunpack.c.l.b16 %v501
      %v1190 = vunpack.c.l.b16 %v502
      %v1191 = vpack.c.b16 %v1183, %v1182
      %v1192 = vpack.c.b16 %v1185, %v1184
      %v1193 = vpack.c.b16 %v1187, %v1186
      %v1194 = vpack.c.b16 %v1189, %v1188
      %v1195 = vpack.c.b16 %v1190, %v1190
      %vm1200 = vcmask 588800
      %v1202 = vsel %vm1200, %v1039, 0
      %v1205 = vsel %vm1200, %v1040, 0
      %v1208 = vsel %vm1200, %v1041, 0
      %v1211 = vsel %vm1200, %v1042, 0
      %v1214 = vsel %vm1200, %v1043, 0
      %v1217 = vsel %vm1200, %v1044, 0
      %v1220 = vsel %vm1200, %v1045, 0
      %v1223 = vsel %vm1200, %v1046, 0
      %v1226 = vsel %vm1200, %v1047, 0
      %v1229 = vsel %vm1200, %v1048, 0
      %v1232 = vsel %vm1200, %v1049, 0
      %v1235 = vsel %vm1200, %v1050, 0
      %v1238 = vsel %vm1200, %v1051, 0
      %v1241 = vsel %vm1200, %v1052, 0
      %v1244 = vsel %vm1200, %v1053, 0
      %v1247 = vsel %vm1200, %v1054, 0
      %v1250 = vsel %vm1200, %v1055, 0
      %v1253 = vsel %vm1200, %v1056, 0
      %v1256 = vsel %vm1200, %v1057, 0
      %v1259 = vsel %vm1200, %v1058, 0
      %v1262 = vsel %vm1200, %v1059, 0
      %v1265 = vsel %vm1200, %v1060, 0
      %v1268 = vsel %vm1200, %v1061, 0
      %v1271 = vsel %vm1200, %v1062, 0
      %v1274 = vsel %vm1200, %v1063, 0
      %v1277 = vsel %vm1200, %v1064, 0
      %v1280 = vsel %vm1200, %v1065, 0
      %v1283 = vsel %vm1200, %v1066, 0
      %v1286 = vsel %vm1200, %v1067, 0
      %v1289 = vsel %vm1200, %v1068, 0
      %v1292 = vsel %vm1200, %v1069, 0
      %v1295 = vsel %vm1200, %v1070, 0
      %v1298 = vsel %vm1200, %v1071, 0
      %v1301 = vsel %vm1200, %v1072, 0
      %v1304 = vsel %vm1200, %v1073, 0
      %v1307 = vsel %vm1200, %v1074, 0
      %v1310 = vsel %vm1200, %v1075, 0
      %v1313 = vsel %vm1200, %v1076, 0
      %v1316 = vsel %vm1200, %v1077, 0
      %v1319 = vsel %vm1200, %v1078, 0
      %v1322 = vsel %vm1200, %v1079, 0
      %v1325 = vsel %vm1200, %v1080, 0
      %v1328 = vsel %vm1200, %v1081, 0
      %v1331 = vsel %vm1200, %v1082, 0
      %v1334 = vsel %vm1200, %v1083, 0
      %v1337 = vsel %vm1200, %v1084, 0
      %v1340 = vsel %vm1200, %v1085, 0
      %v1343 = vsel %vm1200, %v1086, 0
      %v1346 = vsel %vm1200, %v1087, 0
      %v1349 = vsel %vm1200, %v1088, 0
      %v1352 = vsel %vm1200, %v1089, 0
      %v1355 = vsel %vm1200, %v1090, 0
      %v1358 = vsel %vm1200, %v1091, 0
      %v1361 = vsel %vm1200, %v1092, 0
      %v1364 = vsel %vm1200, %v1093, 0
      %v1367 = vsel %vm1200, %v1094, 0
      %v1370 = vsel %vm1200, %v1095, 0
      %v1373 = vsel %vm1200, %v1096, 0
      %v1376 = vsel %vm1200, %v1097, 0
      %v1379 = vsel %vm1200, %v1098, 0
      %v1382 = vsel %vm1200, %v1099, 0
      %v1385 = vsel %vm1200, %v1100, 0
      %v1388 = vsel %vm1200, %v1101, 0
      %v1391 = vsel %vm1200, %v1102, 0
      %v1394 = vsel %vm1200, %v1103, 0
      %v1397 = vsel %vm1200, %v1104, 0
      %v1400 = vsel %vm1200, %v1105, 0
      %v1403 = vsel %vm1200, %v1106, 0
      %v1406 = vsel %vm1200, %v1107, 0
      %v1409 = vsel %vm1200, %v1108, 0
      %v1412 = vsel %vm1200, %v1109, 0
      %v1415 = vsel %vm1200, %v1110, 0
      %v1418 = vsel %vm1200, %v1111, 0
      %v1421 = vsel %vm1200, %v1112, 0
      %v1424 = vsel %vm1200, %v1113, 0
      %v1427 = vsel %vm1200, %v1114, 0
      %v1430 = vsel %vm1200, %v1115, 0
      %v1433 = vsel %vm1200, %v1116, 0
      %v1436 = vsel %vm1200, %v1117, 0
      %v1439 = vsel %vm1200, %v1118, 0
      %v1442 = vsel %vm1200, %v1119, 0
      %v1445 = vsel %vm1200, %v1120, 0
      %v1448 = vsel %vm1200, %v1121, 0
      %v1451 = vsel %vm1200, %v1122, 0
      %v1454 = vsel %vm1200, %v1123, 0
      %v1457 = vsel %vm1200, %v1124, 0
      %v1460 = vsel %vm1200, %v1125, 0
      %v1463 = vsel %vm1200, %v1126, 0
      %v1466 = vsel %vm1200, %v1127, 0
      %v1469 = vsel %vm1200, %v1128, 0
      %v1472 = vsel %vm1200, %v1129, 0
      %v1475 = vsel %vm1200, %v1130, 0
      %v1478 = vsel %vm1200, %v1131, 0
      %v1481 = vsel %vm1200, %v1132, 0
      %v1484 = vsel %vm1200, %v1133, 0
      %v1487 = vsel %vm1200, %v1134, 0
      %v1490 = vsel %vm1200, %v1135, 0
      %v1493 = vsel %vm1200, %v1136, 0
      %v1496 = vsel %vm1200, %v1137, 0
      %v1499 = vsel %vm1200, %v1138, 0
      %v1502 = vsel %vm1200, %v1139, 0
      %v1505 = vsel %vm1200, %v1140, 0
      %v1508 = vsel %vm1200, %v1141, 0
      %v1511 = vsel %vm1200, %v1142, 0
      %v1514 = vsel %vm1200, %v1143, 0
      %v1517 = vsel %vm1200, %v1144, 0
      %v1520 = vsel %vm1200, %v1145, 0
      %v1523 = vsel %vm1200, %v1146, 0
      %v1526 = vsel %vm1200, %v1147, 0
      %v1529 = vsel %vm1200, %v1148, 0
      %v1532 = vsel %vm1200, %v1149, 0
      %v1535 = vsel %vm1200, %v1150, 0
      %v1538 = vsel %vm1200, %v1151, 0
      %v1541 = vsel %vm1200, %v1152, 0
      %v1544 = vsel %vm1200, %v1153, 0
      %v1547 = vsel %vm1200, %v1154, 0
      %v1550 = vsel %vm1200, %v1155, 0
      %v1553 = vsel %vm1200, %v1156, 0
      %v1556 = vsel %vm1200, %v1157, 0
      %v1559 = vsel %vm1200, %v1158, 0
      %v1562 = vsel %vm1200, %v1159, 0
      %v1565 = vsel %vm1200, %v1160, 0
      %v1568 = vsel %vm1200, %v1161, 0
      %v1571 = vsel %vm1200, %v1162, 0
      %v1574 = vsel %vm1200, %v1163, 0
      %v1577 = vsel %vm1200, %v1164, 0
      %v1580 = vsel %vm1200, %v1165, 0
      %v1583 = vsel %vm1200, %v1166, 0
      %v1586 = vsel %vm1200, %v1167, 0
      %v1589 = vsel %vm1200, %v1168, 0
      %v1592 = vsel %vm1200, %v1169, 0
      %v1595 = vsel %vm1200, %v1170, 0
      %v1598 = vsel %vm1200, %v1171, 0
      %v1601 = vsel %vm1200, %v1172, 0
      %vm1603 = vcmask 1043456
      %v1605 = vsel %vm1603, %v1195, 0
      %1607 = vmatprep.subr.bf16.mxu0 0
      %1608 = vmatpush1.bf16.msra.mxu0 %v1191
      %1609 = vmatprep.subr.bf16.mxu0 0
      %1610 = vmatpush1.bf16.msra.mxu0 %v1192
      %1611 = vmatprep.subr.bf16.mxu0 0
      %1612 = vmatpush1.bf16.msra.mxu0 %v1193
      %1613 = vmatprep.subr.bf16.mxu0 0
      %1614 = vmatpush1.bf16.msra.mxu0 %v1194
      %1615 = vmatprep.subr.bf16.mxu0 0
      %1616 = vmatpush1.bf16.msra.mxu0 %v1605
      %1617 = vmatprep.subr.bf16.mxu0 0
      %1618 = vmatpush1.bf16.msra.mxu0 0
      %1619 = vmatprep.subr.bf16.mxu0 0
      %1620 = vmatpush1.bf16.msra.mxu0 0
      %1621 = vmatprep.subr.bf16.mxu0 0
      %1622 = vmatpush1.bf16.msra.mxu0 0
      %1623 = vmatprep.subr.bf16.mxu0 0
      %1624 = vmatpush1.bf16.msra.mxu0 0
      %1625 = vmatprep.subr.bf16.mxu0 0
      %1626 = vmatpush1.bf16.msra.mxu0 0
      %1627 = vmatprep.subr.bf16.mxu0 0
      %1628 = vmatpush1.bf16.msra.mxu0 0
      %1629 = vmatprep.subr.bf16.mxu0 0
      %1630 = vmatpush1.bf16.msra.mxu0 0
      %1631 = vmatprep.subr.bf16.mxu0 0
      %1632 = vmatpush1.bf16.msra.mxu0 0
      %1633 = vmatprep.subr.bf16.mxu0 0
      %1634 = vmatpush1.bf16.msra.mxu0 0
      %1635 = vmatprep.subr.bf16.mxu0 0
      %1636 = vmatpush1.bf16.msra.mxu0 0
      %1637 = vmatprep.subr.bf16.mxu0 0
      %1638 = vmatpush1.bf16.msra.mxu0 0
      %1639 = vmatprep.mubr.bf16.mxu0 0
      %1640 = vmatmul.mubr.bf16.gmra.mrb[0].mxu0 %v1202
      %v1641 = vpop.f32.mrb[0].mxu0
      %v1642 = vadd.f32 0.0, %v1641
      %v1643 = vpop.f32.mrb[0].mxu0
      %v1644 = vpop.f32.mrb[0].mxu0
      %v1645 = vadd.f32 0.0, %v1644
      %v1646 = vpop.f32.mrb[0].mxu0
      %1647 = vmatprep.mubr.bf16.mxu0 0
      %1648 = vmatmul.mubr.bf16.gmra.mrb[0].mxu0 %v1205
      %v1649 = vpop.f32.mrb[0].mxu0
      %v1650 = vadd.f32 0.0, %v1649
      %v1651 = vpop.f32.mrb[0].mxu0
      %v1652 = vpop.f32.mrb[0].mxu0
      %v1653 = vadd.f32 0.0, %v1652
      %v1654 = vpop.f32.mrb[0].mxu0
      %1655 = vmatprep.mubr.bf16.mxu0 0
      %1656 = vmatmul.mubr.bf16.gmra.mrb[0].mxu0 %v1208
      %v1657 = vpop.f32.mrb[0].mxu0
      %v1658 = vadd.f32 0.0, %v1657
      %v1659 = vpop.f32.mrb[0].mxu0
      %v1660 = vpop.f32.mrb[0].mxu0
      %v1661 = vadd.f32 0.0, %v1660
      %v1662 = vpop.f32.mrb[0].mxu0
      %1663 = vmatprep.mubr.bf16.mxu0 0
      %1664 = vmatmul.mubr.bf16.gmra.mrb[0].mxu0 %v1211
      %v1665 = vpop.f32.mrb[0].mxu0
      %v1666 = vadd.f32 0.0, %v1665
      %v1667 = vpop.f32.mrb[0].mxu0
      %v1668 = vpop.f32.mrb[0].mxu0
      %v1669 = vadd.f32 0.0, %v1668
      %v1670 = vpop.f32.mrb[0].mxu0
      %1671 = vmatprep.mubr.bf16.mxu0 0
      %1672 = vmatmul.mubr.bf16.gmra.mrb[0].mxu0 %v1214
      %v1673 = vpop.f32.mrb[0].mxu0
      %v1674 = vadd.f32 0.0, %v1673
      %v1675 = vpop.f32.mrb[0].mxu0
      %v1676 = vpop.f32.mrb[0].mxu0
      %v1677 = vadd.f32 0.0, %v1676
      %v1678 = vpop.f32.mrb[0].mxu0
      %1679 = vmatprep.mubr.bf16.mxu0 0
      %1680 = vmatmul.mubr.bf16.gmra.mrb[0].mxu0 %v1217
      %v1681 = vpop.f32.mrb[0].mxu0
      %v1682 = vadd.f32 0.0, %v1681
      %v1683 = vpop.f32.mrb[0].mxu0
      %v1684 = vpop.f32.mrb[0].mxu0
      %v1685 = vadd.f32 0.0, %v1684
      %v1686 = vpop.f32.mrb[0].mxu0
      %1687 = vmatprep.mubr.bf16.mxu0 0
      %1688 = vmatmul.mubr.bf16.gmra.mrb[0].mxu0 %v1220
      %v1689 = vpop.f32.mrb[0].mxu0
      %v1690 = vadd.f32 0.0, %v1689
      %v1691 = vpop.f32.mrb[0].mxu0
      %v1692 = vpop.f32.mrb[0].mxu0
      %v1693 = vadd.f32 0.0, %v1692
      %v1694 = vpop.f32.mrb[0].mxu0
      %1695 = vmatprep.mubr.bf16.mxu0 0
      %1696 = vmatmul.mubr.bf16.gmra.mrb[0].mxu0 %v1223
      %v1697 = vpop.f32.mrb[0].mxu0
      %v1698 = vadd.f32 0.0, %v1697
      %v1699 = vpop.f32.mrb[0].mxu0
      %v1700 = vpop.f32.mrb[0].mxu0
      %v1701 = vadd.f32 0.0, %v1700
      %v1702 = vpop.f32.mrb[0].mxu0
      %1703 = vmatprep.mubr.bf16.mxu0 0
      %1704 = vmatmul.mubr.bf16.gmra.mrb[0].mxu0 %v1226
      %v1705 = vpop.f32.mrb[0].mxu0
      %v1706 = vadd.f32 0.0, %v1705
      %v1707 = vpop.f32.mrb[0].mxu0
      %v1708 = vpop.f32.mrb[0].mxu0
      %v1709 = vadd.f32 0.0, %v1708
      %v1710 = vpop.f32.mrb[0].mxu0
      %1711 = vmatprep.mubr.bf16.mxu0 0
      %1712 = vmatmul.mubr.bf16.gmra.mrb[0].mxu0 %v1229
      %v1713 = vpop.f32.mrb[0].mxu0
      %v1714 = vadd.f32 0.0, %v1713
      %v1715 = vpop.f32.mrb[0].mxu0
      %v1716 = vpop.f32.mrb[0].mxu0
      %v1717 = vadd.f32 0.0, %v1716
      %v1718 = vpop.f32.mrb[0].mxu0
      %1719 = vmatprep.mubr.bf16.mxu0 0
      %1720 = vmatmul.mubr.bf16.gmra.mrb[0].mxu0 %v1232
      %v1721 = vpop.f32.mrb[0].mxu0
      %v1722 = vadd.f32 0.0, %v1721
      %v1723 = vpop.f32.mrb[0].mxu0
      %v1724 = vpop.f32.mrb[0].mxu0
      %v1725 = vadd.f32 0.0, %v1724
      %v1726 = vpop.f32.mrb[0].mxu0
      %1727 = vmatprep.mubr.bf16.mxu0 0
      %1728 = vmatmul.mubr.bf16.gmra.mrb[0].mxu0 %v1235
      %v1729 = vpop.f32.mrb[0].mxu0
      %v1730 = vadd.f32 0.0, %v1729
      %v1731 = vpop.f32.mrb[0].mxu0
      %v1732 = vpop.f32.mrb[0].mxu0
      %v1733 = vadd.f32 0.0, %v1732
      %v1734 = vpop.f32.mrb[0].mxu0
      %1735 = vmatprep.mubr.bf16.mxu0 0
      %1736 = vmatmul.mubr.bf16.gmra.mrb[0].mxu0 %v1238
      %v1737 = vpop.f32.mrb[0].mxu0
      %v1738 = vadd.f32 0.0, %v1737
      %v1739 = vpop.f32.mrb[0].mxu0
      %v1740 = vpop.f32.mrb[0].mxu0
      %v1741 = vadd.f32 0.0, %v1740
      %v1742 = vpop.f32.mrb[0].mxu0
      %1743 = vmatprep.mubr.bf16.mxu0 0
      %1744 = vmatmul.mubr.bf16.gmra.mrb[0].mxu0 %v1241
      %v1745 = vpop.f32.mrb[0].mxu0
      %v1746 = vadd.f32 0.0, %v1745
      %v1747 = vpop.f32.mrb[0].mxu0
      %v1748 = vpop.f32.mrb[0].mxu0
      %v1749 = vadd.f32 0.0, %v1748
      %v1750 = vpop.f32.mrb[0].mxu0
      %1751 = vmatprep.mubr.bf16.mxu0 0
      %1752 = vmatmul.mubr.bf16.gmra.mrb[0].mxu0 %v1244
      %v1753 = vpop.f32.mrb[0].mxu0
      %v1754 = vadd.f32 0.0, %v1753
      %v1755 = vpop.f32.mrb[0].mxu0
      %v1756 = vpop.f32.mrb[0].mxu0
      %v1757 = vadd.f32 0.0, %v1756
      %v1758 = vpop.f32.mrb[0].mxu0
      %1759 = vmatprep.mubr.bf16.mxu0 0
      %1760 = vmatmul.mubr.bf16.gmra.mrb[0].mxu0 %v1247
      %v1761 = vpop.f32.mrb[0].mxu0
      %v1762 = vadd.f32 0.0, %v1761
      %v1763 = vpop.f32.mrb[0].mxu0
      %v1764 = vpop.f32.mrb[0].mxu0
      %v1765 = vadd.f32 0.0, %v1764
      %v1766 = vpop.f32.mrb[0].mxu0
      %1767 = vmatprep.mubr.bf16.mxu0 0
      %1768 = vmatmul.mubr.bf16.gmra.mrb[0].mxu0 %v1250
      %v1769 = vpop.f32.mrb[0].mxu0
      %v1770 = vadd.f32 0.0, %v1769
      %v1771 = vpop.f32.mrb[0].mxu0
      %v1772 = vpop.f32.mrb[0].mxu0
      %v1773 = vadd.f32 0.0, %v1772
      %v1774 = vpop.f32.mrb[0].mxu0
      %1775 = vmatprep.mubr.bf16.mxu0 0
      %1776 = vmatmul.mubr.bf16.gmra.mrb[0].mxu0 %v1253
      %v1777 = vpop.f32.mrb[0].mxu0
      %v1778 = vadd.f32 0.0, %v1777
      %v1779 = vpop.f32.mrb[0].mxu0
      %v1780 = vpop.f32.mrb[0].mxu0
      %v1781 = vadd.f32 0.0, %v1780
      %v1782 = vpop.f32.mrb[0].mxu0
      %1783 = vmatprep.mubr.bf16.mxu0 0
      %1784 = vmatmul.mubr.bf16.gmra.mrb[0].mxu0 %v1256
      %v1785 = vpop.f32.mrb[0].mxu0
      %v1786 = vadd.f32 0.0, %v1785
      %v1787 = vpop.f32.mrb[0].mxu0
      %v1788 = vpop.f32.mrb[0].mxu0
      %v1789 = vadd.f32 0.0, %v1788
      %v1790 = vpop.f32.mrb[0].mxu0
      %1791 = vmatprep.mubr.bf16.mxu0 0
      %1792 = vmatmul.mubr.bf16.gmra.mrb[0].mxu0 %v1259
      %v1793 = vpop.f32.mrb[0].mxu0
      %v1794 = vadd.f32 0.0, %v1793
      %v1795 = vpop.f32.mrb[0].mxu0
      %v1796 = vpop.f32.mrb[0].mxu0
      %v1797 = vadd.f32 0.0, %v1796
      %v1798 = vpop.f32.mrb[0].mxu0
      %1799 = vmatprep.mubr.bf16.mxu0 0
      %1800 = vmatmul.mubr.bf16.gmra.mrb[0].mxu0 %v1262
      %v1801 = vpop.f32.mrb[0].mxu0
      %v1802 = vadd.f32 0.0, %v1801
      %v1803 = vpop.f32.mrb[0].mxu0
      %v1804 = vpop.f32.mrb[0].mxu0
      %v1805 = vadd.f32 0.0, %v1804
      %v1806 = vpop.f32.mrb[0].mxu0
      %1807 = vmatprep.mubr.bf16.mxu0 0
      %1808 = vmatmul.mubr.bf16.gmra.mrb[0].mxu0 %v1265
      %v1809 = vpop.f32.mrb[0].mxu0
      %v1810 = vadd.f32 0.0, %v1809
      %v1811 = vpop.f32.mrb[0].mxu0
      %v1812 = vpop.f32.mrb[0].mxu0
      %v1813 = vadd.f32 0.0, %v1812
      %v1814 = vpop.f32.mrb[0].mxu0
      %1815 = vmatprep.mubr.bf16.mxu0 0
      %1816 = vmatmul.mubr.bf16.gmra.mrb[0].mxu0 %v1268
      %v1817 = vpop.f32.mrb[0].mxu0
      %v1818 = vadd.f32 0.0, %v1817
      %v1819 = vpop.f32.mrb[0].mxu0
      %v1820 = vpop.f32.mrb[0].mxu0
      %v1821 = vadd.f32 0.0, %v1820
      %v1822 = vpop.f32.mrb[0].mxu0
      %1823 = vmatprep.mubr.bf16.mxu0 0
      %1824 = vmatmul.mubr.bf16.gmra.mrb[0].mxu0 %v1271
      %v1825 = vpop.f32.mrb[0].mxu0
      %v1826 = vadd.f32 0.0, %v1825
      %v1827 = vpop.f32.mrb[0].mxu0
      %v1828 = vpop.f32.mrb[0].mxu0
      %v1829 = vadd.f32 0.0, %v1828
      %v1830 = vpop.f32.mrb[0].mxu0
      %1831 = vmatprep.mubr.bf16.mxu0 0
      %1832 = vmatmul.mubr.bf16.gmra.mrb[0].mxu0 %v1274
      %v1833 = vpop.f32.mrb[0].mxu0
      %v1834 = vadd.f32 0.0, %v1833
      %v1835 = vpop.f32.mrb[0].mxu0
      %v1836 = vpop.f32.mrb[0].mxu0
      %v1837 = vadd.f32 0.0, %v1836
      %v1838 = vpop.f32.mrb[0].mxu0
      %1839 = vmatprep.mubr.bf16.mxu0 0
      %1840 = vmatmul.mubr.bf16.gmra.mrb[0].mxu0 %v1277
      %v1841 = vpop.f32.mrb[0].mxu0
      %v1842 = vadd.f32 0.0, %v1841
      %v1843 = vpop.f32.mrb[0].mxu0
      %v1844 = vpop.f32.mrb[0].mxu0
      %v1845 = vadd.f32 0.0, %v1844
      %v1846 = vpop.f32.mrb[0].mxu0
      %1847 = vmatprep.mubr.bf16.mxu0 0
      %1848 = vmatmul.mubr.bf16.gmra.mrb[0].mxu0 %v1280
      %v1849 = vpop.f32.mrb[0].mxu0
      %v1850 = vadd.f32 0.0, %v1849
      %v1851 = vpop.f32.mrb[0].mxu0
      %v1852 = vpop.f32.mrb[0].mxu0
      %v1853 = vadd.f32 0.0, %v1852
      %v1854 = vpop.f32.mrb[0].mxu0
      %1855 = vmatprep.mubr.bf16.mxu0 0
      %1856 = vmatmul.mubr.bf16.gmra.mrb[0].mxu0 %v1283
      %v1857 = vpop.f32.mrb[0].mxu0
      %v1858 = vadd.f32 0.0, %v1857
      %v1859 = vpop.f32.mrb[0].mxu0
      %v1860 = vpop.f32.mrb[0].mxu0
      %v1861 = vadd.f32 0.0, %v1860
      %v1862 = vpop.f32.mrb[0].mxu0
      %1863 = vmatprep.mubr.bf16.mxu0 0
      %1864 = vmatmul.mubr.bf16.gmra.mrb[0].mxu0 %v1286
      %v1865 = vpop.f32.mrb[0].mxu0
      %v1866 = vadd.f32 0.0, %v1865
      %v1867 = vpop.f32.mrb[0].mxu0
      %v1868 = vpop.f32.mrb[0].mxu0
      %v1869 = vadd.f32 0.0, %v1868
      %v1870 = vpop.f32.mrb[0].mxu0
      %1871 = vmatprep.mubr.bf16.mxu0 0
      %1872 = vmatmul.mubr.bf16.gmra.mrb[0].mxu0 %v1289
      %v1873 = vpop.f32.mrb[0].mxu0
      %v1874 = vadd.f32 0.0, %v1873
      %v1875 = vpop.f32.mrb[0].mxu0
      %v1876 = vpop.f32.mrb[0].mxu0
      %v1877 = vadd.f32 0.0, %v1876
      %v1878 = vpop.f32.mrb[0].mxu0
      %1879 = vmatprep.mubr.bf16.mxu0 0
      %1880 = vmatmul.mubr.bf16.gmra.mrb[0].mxu0 %v1292
      %v1881 = vpop.f32.mrb[0].mxu0
      %v1882 = vadd.f32 0.0, %v1881
      %v1883 = vpop.f32.mrb[0].mxu0
      %v1884 = vpop.f32.mrb[0].mxu0
      %v1885 = vadd.f32 0.0, %v1884
      %v1886 = vpop.f32.mrb[0].mxu0
      %1887 = vmatprep.mubr.bf16.mxu0 0
      %1888 = vmatmul.mubr.bf16.gmra.mrb[0].mxu0 %v1295
      %v1889 = vpop.f32.mrb[0].mxu0
      %v1890 = vadd.f32 0.0, %v1889
      %v1891 = vpop.f32.mrb[0].mxu0
      %v1892 = vpop.f32.mrb[0].mxu0
      %v1893 = vadd.f32 0.0, %v1892
      %v1894 = vpop.f32.mrb[0].mxu0
      %1895 = vmatprep.mubr.bf16.mxu0 0
      %1896 = vmatmul.mubr.bf16.gmra.mrb[0].mxu0 %v1298
      %v1897 = vpop.f32.mrb[0].mxu0
      %v1898 = vadd.f32 0.0, %v1897
      %v1899 = vpop.f32.mrb[0].mxu0
      %v1900 = vpop.f32.mrb[0].mxu0
      %v1901 = vadd.f32 0.0, %v1900
      %v1902 = vpop.f32.mrb[0].mxu0
      %1903 = vmatprep.mubr.bf16.mxu0 0
      %1904 = vmatmul.mubr.bf16.gmra.mrb[0].mxu0 %v1301
      %v1905 = vpop.f32.mrb[0].mxu0
      %v1906 = vadd.f32 0.0, %v1905
      %v1907 = vpop.f32.mrb[0].mxu0
      %v1908 = vpop.f32.mrb[0].mxu0
      %v1909 = vadd.f32 0.0, %v1908
      %v1910 = vpop.f32.mrb[0].mxu0
      %1911 = vmatprep.mubr.bf16.mxu0 0
      %1912 = vmatmul.mubr.bf16.gmra.mrb[0].mxu0 %v1304
      %v1913 = vpop.f32.mrb[0].mxu0
      %v1914 = vadd.f32 0.0, %v1913
      %v1915 = vpop.f32.mrb[0].mxu0
      %v1916 = vpop.f32.mrb[0].mxu0
      %v1917 = vadd.f32 0.0, %v1916
      %v1918 = vpop.f32.mrb[0].mxu0
      %1919 = vmatprep.mubr.bf16.mxu0 0
      %1920 = vmatmul.mubr.bf16.gmra.mrb[0].mxu0 %v1307
      %v1921 = vpop.f32.mrb[0].mxu0
      %v1922 = vadd.f32 0.0, %v1921
      %v1923 = vpop.f32.mrb[0].mxu0
      %v1924 = vpop.f32.mrb[0].mxu0
      %v1925 = vadd.f32 0.0, %v1924
      %v1926 = vpop.f32.mrb[0].mxu0
      %1927 = vmatprep.mubr.bf16.mxu0 0
      %1928 = vmatmul.mubr.bf16.gmra.mrb[0].mxu0 %v1310
      %v1929 = vpop.f32.mrb[0].mxu0
      %v1930 = vadd.f32 0.0, %v1929
      %v1931 = vpop.f32.mrb[0].mxu0
      %v1932 = vpop.f32.mrb[0].mxu0
      %v1933 = vadd.f32 0.0, %v1932
      %v1934 = vpop.f32.mrb[0].mxu0
      %1935 = vmatprep.mubr.bf16.mxu0 0
      %1936 = vmatmul.mubr.bf16.gmra.mrb[0].mxu0 %v1313
      %v1937 = vpop.f32.mrb[0].mxu0
      %v1938 = vadd.f32 0.0, %v1937
      %v1939 = vpop.f32.mrb[0].mxu0
      %v1940 = vpop.f32.mrb[0].mxu0
      %v1941 = vadd.f32 0.0, %v1940
      %v1942 = vpop.f32.mrb[0].mxu0
      %1943 = vmatprep.mubr.bf16.mxu0 0
      %1944 = vmatmul.mubr.bf16.gmra.mrb[0].mxu0 %v1316
      %v1945 = vpop.f32.mrb[0].mxu0
      %v1946 = vadd.f32 0.0, %v1945
      %v1947 = vpop.f32.mrb[0].mxu0
      %v1948 = vpop.f32.mrb[0].mxu0
      %v1949 = vadd.f32 0.0, %v1948
      %v1950 = vpop.f32.mrb[0].mxu0
      %1951 = vmatprep.mubr.bf16.mxu0 0
      %1952 = vmatmul.mubr.bf16.gmra.mrb[0].mxu0 %v1319
      %v1953 = vpop.f32.mrb[0].mxu0
      %v1954 = vadd.f32 0.0, %v1953
      %v1955 = vpop.f32.mrb[0].mxu0
      %v1956 = vpop.f32.mrb[0].mxu0
      %v1957 = vadd.f32 0.0, %v1956
      %v1958 = vpop.f32.mrb[0].mxu0
      %1959 = vmatprep.mubr.bf16.mxu0 0
      %1960 = vmatmul.mubr.bf16.gmra.mrb[0].mxu0 %v1322
      %v1961 = vpop.f32.mrb[0].mxu0
      %v1962 = vadd.f32 0.0, %v1961
      %v1963 = vpop.f32.mrb[0].mxu0
      %v1964 = vpop.f32.mrb[0].mxu0
      %v1965 = vadd.f32 0.0, %v1964
      %v1966 = vpop.f32.mrb[0].mxu0
      %1967 = vmatprep.mubr.bf16.mxu0 0
      %1968 = vmatmul.mubr.bf16.gmra.mrb[0].mxu0 %v1325
      %v1969 = vpop.f32.mrb[0].mxu0
      %v1970 = vadd.f32 0.0, %v1969
      %v1971 = vpop.f32.mrb[0].mxu0
      %v1972 = vpop.f32.mrb[0].mxu0
      %v1973 = vadd.f32 0.0, %v1972
      %v1974 = vpop.f32.mrb[0].mxu0
      %1975 = vmatprep.mubr.bf16.mxu0 0
      %1976 = vmatmul.mubr.bf16.gmra.mrb[0].mxu0 %v1328
      %v1977 = vpop.f32.mrb[0].mxu0
      %v1978 = vadd.f32 0.0, %v1977
      %v1979 = vpop.f32.mrb[0].mxu0
      %v1980 = vpop.f32.mrb[0].mxu0
      %v1981 = vadd.f32 0.0, %v1980
      %v1982 = vpop.f32.mrb[0].mxu0
      %1983 = vmatprep.mubr.bf16.mxu0 0
      %1984 = vmatmul.mubr.bf16.gmra.mrb[0].mxu0 %v1331
      %v1985 = vpop.f32.mrb[0].mxu0
      %v1986 = vadd.f32 0.0, %v1985
      %v1987 = vpop.f32.mrb[0].mxu0
      %v1988 = vpop.f32.mrb[0].mxu0
      %v1989 = vadd.f32 0.0, %v1988
      %v1990 = vpop.f32.mrb[0].mxu0
      %1991 = vmatprep.mubr.bf16.mxu0 0
      %1992 = vmatmul.mubr.bf16.gmra.mrb[0].mxu0 %v1334
      %v1993 = vpop.f32.mrb[0].mxu0
      %v1994 = vadd.f32 0.0, %v1993
      %v1995 = vpop.f32.mrb[0].mxu0
      %v1996 = vpop.f32.mrb[0].mxu0
      %v1997 = vadd.f32 0.0, %v1996
      %v1998 = vpop.f32.mrb[0].mxu0
      %1999 = vmatprep.mubr.bf16.mxu0 0
      %2000 = vmatmul.mubr.bf16.gmra.mrb[0].mxu0 %v1337
      %v2001 = vpop.f32.mrb[0].mxu0
      %v2002 = vadd.f32 0.0, %v2001
      %v2003 = vpop.f32.mrb[0].mxu0
      %v2004 = vpop.f32.mrb[0].mxu0
      %v2005 = vadd.f32 0.0, %v2004
      %v2006 = vpop.f32.mrb[0].mxu0
      %2007 = vmatprep.mubr.bf16.mxu0 0
      %2008 = vmatmul.mubr.bf16.gmra.mrb[0].mxu0 %v1340
      %v2009 = vpop.f32.mrb[0].mxu0
      %v2010 = vadd.f32 0.0, %v2009
      %v2011 = vpop.f32.mrb[0].mxu0
      %v2012 = vpop.f32.mrb[0].mxu0
      %v2013 = vadd.f32 0.0, %v2012
      %v2014 = vpop.f32.mrb[0].mxu0
      %2015 = vmatprep.mubr.bf16.mxu0 0
      %2016 = vmatmul.mubr.bf16.gmra.mrb[0].mxu0 %v1343
      %v2017 = vpop.f32.mrb[0].mxu0
      %v2018 = vadd.f32 0.0, %v2017
      %v2019 = vpop.f32.mrb[0].mxu0
      %v2020 = vpop.f32.mrb[0].mxu0
      %v2021 = vadd.f32 0.0, %v2020
      %v2022 = vpop.f32.mrb[0].mxu0
      %2023 = vmatprep.mubr.bf16.mxu0 0
      %2024 = vmatmul.mubr.bf16.gmra.mrb[0].mxu0 %v1346
      %v2025 = vpop.f32.mrb[0].mxu0
      %v2026 = vadd.f32 0.0, %v2025
      %v2027 = vpop.f32.mrb[0].mxu0
      %v2028 = vpop.f32.mrb[0].mxu0
      %v2029 = vadd.f32 0.0, %v2028
      %v2030 = vpop.f32.mrb[0].mxu0
      %2031 = vmatprep.mubr.bf16.mxu0 0
      %2032 = vmatmul.mubr.bf16.gmra.mrb[0].mxu0 %v1349
      %v2033 = vpop.f32.mrb[0].mxu0
      %v2034 = vadd.f32 0.0, %v2033
      %v2035 = vpop.f32.mrb[0].mxu0
      %v2036 = vpop.f32.mrb[0].mxu0
      %v2037 = vadd.f32 0.0, %v2036
      %v2038 = vpop.f32.mrb[0].mxu0
      %2039 = vmatprep.mubr.bf16.mxu0 0
      %2040 = vmatmul.mubr.bf16.gmra.mrb[0].mxu0 %v1352
      %v2041 = vpop.f32.mrb[0].mxu0
      %v2042 = vadd.f32 0.0, %v2041
      %v2043 = vpop.f32.mrb[0].mxu0
      %v2044 = vpop.f32.mrb[0].mxu0
      %v2045 = vadd.f32 0.0, %v2044
      %v2046 = vpop.f32.mrb[0].mxu0
      %2047 = vmatprep.mubr.bf16.mxu0 0
      %2048 = vmatmul.mubr.bf16.gmra.mrb[0].mxu0 %v1355
      %v2049 = vpop.f32.mrb[0].mxu0
      %v2050 = vadd.f32 0.0, %v2049
      %v2051 = vpop.f32.mrb[0].mxu0
      %v2052 = vpop.f32.mrb[0].mxu0
      %v2053 = vadd.f32 0.0, %v2052
      %v2054 = vpop.f32.mrb[0].mxu0
      %2055 = vmatprep.mubr.bf16.mxu0 0
      %2056 = vmatmul.mubr.bf16.gmra.mrb[0].mxu0 %v1358
      %v2057 = vpop.f32.mrb[0].mxu0
      %v2058 = vadd.f32 0.0, %v2057
      %v2059 = vpop.f32.mrb[0].mxu0
      %v2060 = vpop.f32.mrb[0].mxu0
      %v2061 = vadd.f32 0.0, %v2060
      %v2062 = vpop.f32.mrb[0].mxu0
      %2063 = vmatprep.mubr.bf16.mxu0 0
      %2064 = vmatmul.mubr.bf16.gmra.mrb[0].mxu0 %v1361
      %v2065 = vpop.f32.mrb[0].mxu0
      %v2066 = vadd.f32 0.0, %v2065
      %v2067 = vpop.f32.mrb[0].mxu0
      %v2068 = vpop.f32.mrb[0].mxu0
      %v2069 = vadd.f32 0.0, %v2068
      %v2070 = vpop.f32.mrb[0].mxu0
      %2071 = vmatprep.mubr.bf16.mxu0 0
      %2072 = vmatmul.mubr.bf16.gmra.mrb[0].mxu0 %v1364
      %v2073 = vpop.f32.mrb[0].mxu0
      %v2074 = vadd.f32 0.0, %v2073
      %v2075 = vpop.f32.mrb[0].mxu0
      %v2076 = vpop.f32.mrb[0].mxu0
      %v2077 = vadd.f32 0.0, %v2076
      %v2078 = vpop.f32.mrb[0].mxu0
      %2079 = vmatprep.mubr.bf16.mxu0 0
      %2080 = vmatmul.mubr.bf16.gmra.mrb[0].mxu0 %v1367
      %v2081 = vpop.f32.mrb[0].mxu0
      %v2082 = vadd.f32 0.0, %v2081
      %v2083 = vpop.f32.mrb[0].mxu0
      %v2084 = vpop.f32.mrb[0].mxu0
      %v2085 = vadd.f32 0.0, %v2084
      %v2086 = vpop.f32.mrb[0].mxu0
      %2087 = vmatprep.mubr.bf16.mxu0 0
      %2088 = vmatmul.mubr.bf16.gmra.mrb[0].mxu0 %v1370
      %v2089 = vpop.f32.mrb[0].mxu0
      %v2090 = vadd.f32 0.0, %v2089
      %v2091 = vpop.f32.mrb[0].mxu0
      %v2092 = vpop.f32.mrb[0].mxu0
      %v2093 = vadd.f32 0.0, %v2092
      %v2094 = vpop.f32.mrb[0].mxu0
      %2095 = vmatprep.mubr.bf16.mxu0 0
      %2096 = vmatmul.mubr.bf16.gmra.mrb[0].mxu0 %v1373
      %v2097 = vpop.f32.mrb[0].mxu0
      %v2098 = vadd.f32 0.0, %v2097
      %v2099 = vpop.f32.mrb[0].mxu0
      %v2100 = vpop.f32.mrb[0].mxu0
      %v2101 = vadd.f32 0.0, %v2100
      %v2102 = vpop.f32.mrb[0].mxu0
      %2103 = vmatprep.mubr.bf16.mxu0 0
      %2104 = vmatmul.mubr.bf16.gmra.mrb[0].mxu0 %v1376
      %v2105 = vpop.f32.mrb[0].mxu0
      %v2106 = vadd.f32 0.0, %v2105
      %v2107 = vpop.f32.mrb[0].mxu0
      %v2108 = vpop.f32.mrb[0].mxu0
      %v2109 = vadd.f32 0.0, %v2108
      %v2110 = vpop.f32.mrb[0].mxu0
      %2111 = vmatprep.mubr.bf16.mxu0 0
      %2112 = vmatmul.mubr.bf16.gmra.mrb[0].mxu0 %v1379
      %v2113 = vpop.f32.mrb[0].mxu0
      %v2114 = vadd.f32 0.0, %v2113
      %v2115 = vpop.f32.mrb[0].mxu0
      %v2116 = vpop.f32.mrb[0].mxu0
      %v2117 = vadd.f32 0.0, %v2116
      %v2118 = vpop.f32.mrb[0].mxu0
      %2119 = vmatprep.mubr.bf16.mxu0 0
      %2120 = vmatmul.mubr.bf16.gmra.mrb[0].mxu0 %v1382
      %v2121 = vpop.f32.mrb[0].mxu0
      %v2122 = vadd.f32 0.0, %v2121
      %v2123 = vpop.f32.mrb[0].mxu0
      %v2124 = vpop.f32.mrb[0].mxu0
      %v2125 = vadd.f32 0.0, %v2124
      %v2126 = vpop.f32.mrb[0].mxu0
      %2127 = vmatprep.mubr.bf16.mxu0 0
      %2128 = vmatmul.mubr.bf16.gmra.mrb[0].mxu0 %v1385
      %v2129 = vpop.f32.mrb[0].mxu0
      %v2130 = vadd.f32 0.0, %v2129
      %v2131 = vpop.f32.mrb[0].mxu0
      %v2132 = vpop.f32.mrb[0].mxu0
      %v2133 = vadd.f32 0.0, %v2132
      %v2134 = vpop.f32.mrb[0].mxu0
      %2135 = vmatprep.mubr.bf16.mxu0 0
      %2136 = vmatmul.mubr.bf16.gmra.mrb[0].mxu0 %v1388
      %v2137 = vpop.f32.mrb[0].mxu0
      %v2138 = vadd.f32 0.0, %v2137
      %v2139 = vpop.f32.mrb[0].mxu0
      %v2140 = vpop.f32.mrb[0].mxu0
      %v2141 = vadd.f32 0.0, %v2140
      %v2142 = vpop.f32.mrb[0].mxu0
      %2143 = vmatprep.mubr.bf16.mxu0 0
      %2144 = vmatmul.mubr.bf16.gmra.mrb[0].mxu0 %v1391
      %v2145 = vpop.f32.mrb[0].mxu0
      %v2146 = vadd.f32 0.0, %v2145
      %v2147 = vpop.f32.mrb[0].mxu0
      %v2148 = vpop.f32.mrb[0].mxu0
      %v2149 = vadd.f32 0.0, %v2148
      %v2150 = vpop.f32.mrb[0].mxu0
      %2151 = vmatprep.mubr.bf16.mxu0 0
      %2152 = vmatmul.mubr.bf16.gmra.mrb[0].mxu0 %v1394
      %v2153 = vpop.f32.mrb[0].mxu0
      %v2154 = vadd.f32 0.0, %v2153
      %v2155 = vpop.f32.mrb[0].mxu0
      %v2156 = vpop.f32.mrb[0].mxu0
      %v2157 = vadd.f32 0.0, %v2156
      %v2158 = vpop.f32.mrb[0].mxu0
      %2159 = vmatprep.mubr.bf16.mxu0 0
      %2160 = vmatmul.mubr.bf16.gmra.mrb[0].mxu0 %v1397
      %v2161 = vpop.f32.mrb[0].mxu0
      %v2162 = vadd.f32 0.0, %v2161
      %v2163 = vpop.f32.mrb[0].mxu0
      %v2164 = vpop.f32.mrb[0].mxu0
      %v2165 = vadd.f32 0.0, %v2164
      %v2166 = vpop.f32.mrb[0].mxu0
      %2167 = vmatprep.mubr.bf16.mxu0 0
      %2168 = vmatmul.mubr.bf16.gmra.mrb[0].mxu0 %v1400
      %v2169 = vpop.f32.mrb[0].mxu0
      %v2170 = vadd.f32 0.0, %v2169
      %v2171 = vpop.f32.mrb[0].mxu0
      %v2172 = vpop.f32.mrb[0].mxu0
      %v2173 = vadd.f32 0.0, %v2172
      %v2174 = vpop.f32.mrb[0].mxu0
      %2175 = vmatprep.mubr.bf16.mxu0 0
      %2176 = vmatmul.mubr.bf16.gmra.mrb[0].mxu0 %v1403
      %v2177 = vpop.f32.mrb[0].mxu0
      %v2178 = vadd.f32 0.0, %v2177
      %v2179 = vpop.f32.mrb[0].mxu0
      %v2180 = vpop.f32.mrb[0].mxu0
      %v2181 = vadd.f32 0.0, %v2180
      %v2182 = vpop.f32.mrb[0].mxu0
      %2183 = vmatprep.mubr.bf16.mxu0 0
      %2184 = vmatmul.mubr.bf16.gmra.mrb[0].mxu0 %v1406
      %v2185 = vpop.f32.mrb[0].mxu0
      %v2186 = vadd.f32 0.0, %v2185
      %v2187 = vpop.f32.mrb[0].mxu0
      %v2188 = vpop.f32.mrb[0].mxu0
      %v2189 = vadd.f32 0.0, %v2188
      %v2190 = vpop.f32.mrb[0].mxu0
      %2191 = vmatprep.mubr.bf16.mxu0 0
      %2192 = vmatmul.mubr.bf16.gmra.mrb[0].mxu0 %v1409
      %v2193 = vpop.f32.mrb[0].mxu0
      %v2194 = vadd.f32 0.0, %v2193
      %v2195 = vpop.f32.mrb[0].mxu0
      %v2196 = vpop.f32.mrb[0].mxu0
      %v2197 = vadd.f32 0.0, %v2196
      %v2198 = vpop.f32.mrb[0].mxu0
      %2199 = vmatprep.mubr.bf16.mxu0 0
      %2200 = vmatmul.mubr.bf16.gmra.mrb[0].mxu0 %v1412
      %v2201 = vpop.f32.mrb[0].mxu0
      %v2202 = vadd.f32 0.0, %v2201
      %v2203 = vpop.f32.mrb[0].mxu0
      %v2204 = vpop.f32.mrb[0].mxu0
      %v2205 = vadd.f32 0.0, %v2204
      %v2206 = vpop.f32.mrb[0].mxu0
      %2207 = vmatprep.mubr.bf16.mxu0 0
      %2208 = vmatmul.mubr.bf16.gmra.mrb[0].mxu0 %v1415
      %v2209 = vpop.f32.mrb[0].mxu0
      %v2210 = vadd.f32 0.0, %v2209
      %v2211 = vpop.f32.mrb[0].mxu0
      %v2212 = vpop.f32.mrb[0].mxu0
      %v2213 = vadd.f32 0.0, %v2212
      %v2214 = vpop.f32.mrb[0].mxu0
      %2215 = vmatprep.mubr.bf16.mxu0 0
      %2216 = vmatmul.mubr.bf16.gmra.mrb[0].mxu0 %v1418
      %v2217 = vpop.f32.mrb[0].mxu0
      %v2218 = vadd.f32 0.0, %v2217
      %v2219 = vpop.f32.mrb[0].mxu0
      %v2220 = vpop.f32.mrb[0].mxu0
      %v2221 = vadd.f32 0.0, %v2220
      %v2222 = vpop.f32.mrb[0].mxu0
      %2223 = vmatprep.mubr.bf16.mxu0 0
      %2224 = vmatmul.mubr.bf16.gmra.mrb[0].mxu0 %v1421
      %v2225 = vpop.f32.mrb[0].mxu0
      %v2226 = vadd.f32 0.0, %v2225
      %v2227 = vpop.f32.mrb[0].mxu0
      %v2228 = vpop.f32.mrb[0].mxu0
      %v2229 = vadd.f32 0.0, %v2228
      %v2230 = vpop.f32.mrb[0].mxu0
      %2231 = vmatprep.mubr.bf16.mxu0 0
      %2232 = vmatmul.mubr.bf16.gmra.mrb[0].mxu0 %v1424
      %v2233 = vpop.f32.mrb[0].mxu0
      %v2234 = vadd.f32 0.0, %v2233
      %v2235 = vpop.f32.mrb[0].mxu0
      %v2236 = vpop.f32.mrb[0].mxu0
      %v2237 = vadd.f32 0.0, %v2236
      %v2238 = vpop.f32.mrb[0].mxu0
      %2239 = vmatprep.mubr.bf16.mxu0 0
      %2240 = vmatmul.mubr.bf16.gmra.mrb[0].mxu0 %v1427
      %v2241 = vpop.f32.mrb[0].mxu0
      %v2242 = vadd.f32 0.0, %v2241
      %v2243 = vpop.f32.mrb[0].mxu0
      %v2244 = vpop.f32.mrb[0].mxu0
      %v2245 = vadd.f32 0.0, %v2244
      %v2246 = vpop.f32.mrb[0].mxu0
      %2247 = vmatprep.mubr.bf16.mxu0 0
      %2248 = vmatmul.mubr.bf16.gmra.mrb[0].mxu0 %v1430
      %v2249 = vpop.f32.mrb[0].mxu0
      %v2250 = vadd.f32 0.0, %v2249
      %v2251 = vpop.f32.mrb[0].mxu0
      %v2252 = vpop.f32.mrb[0].mxu0
      %v2253 = vadd.f32 0.0, %v2252
      %v2254 = vpop.f32.mrb[0].mxu0
      %2255 = vmatprep.mubr.bf16.mxu0 0
      %2256 = vmatmul.mubr.bf16.gmra.mrb[0].mxu0 %v1433
      %v2257 = vpop.f32.mrb[0].mxu0
      %v2258 = vadd.f32 0.0, %v2257
      %v2259 = vpop.f32.mrb[0].mxu0
      %v2260 = vpop.f32.mrb[0].mxu0
      %v2261 = vadd.f32 0.0, %v2260
      %v2262 = vpop.f32.mrb[0].mxu0
      %2263 = vmatprep.mubr.bf16.mxu0 0
      %2264 = vmatmul.mubr.bf16.gmra.mrb[0].mxu0 %v1436
      %v2265 = vpop.f32.mrb[0].mxu0
      %v2266 = vadd.f32 0.0, %v2265
      %v2267 = vpop.f32.mrb[0].mxu0
      %v2268 = vpop.f32.mrb[0].mxu0
      %v2269 = vadd.f32 0.0, %v2268
      %v2270 = vpop.f32.mrb[0].mxu0
      %2271 = vmatprep.mubr.bf16.mxu0 0
      %2272 = vmatmul.mubr.bf16.gmra.mrb[0].mxu0 %v1439
      %v2273 = vpop.f32.mrb[0].mxu0
      %v2274 = vadd.f32 0.0, %v2273
      %v2275 = vpop.f32.mrb[0].mxu0
      %v2276 = vpop.f32.mrb[0].mxu0
      %v2277 = vadd.f32 0.0, %v2276
      %v2278 = vpop.f32.mrb[0].mxu0
      %2279 = vmatprep.mubr.bf16.mxu0 0
      %2280 = vmatmul.mubr.bf16.gmra.mrb[0].mxu0 %v1442
      %v2281 = vpop.f32.mrb[0].mxu0
      %v2282 = vadd.f32 0.0, %v2281
      %v2283 = vpop.f32.mrb[0].mxu0
      %v2284 = vpop.f32.mrb[0].mxu0
      %v2285 = vadd.f32 0.0, %v2284
      %v2286 = vpop.f32.mrb[0].mxu0
      %2287 = vmatprep.mubr.bf16.mxu0 0
      %2288 = vmatmul.mubr.bf16.gmra.mrb[0].mxu0 %v1445
      %v2289 = vpop.f32.mrb[0].mxu0
      %v2290 = vadd.f32 0.0, %v2289
      %v2291 = vpop.f32.mrb[0].mxu0
      %v2292 = vpop.f32.mrb[0].mxu0
      %v2293 = vadd.f32 0.0, %v2292
      %v2294 = vpop.f32.mrb[0].mxu0
      %2295 = vmatprep.mubr.bf16.mxu0 0
      %2296 = vmatmul.mubr.bf16.gmra.mrb[0].mxu0 %v1448
      %v2297 = vpop.f32.mrb[0].mxu0
      %v2298 = vadd.f32 0.0, %v2297
      %v2299 = vpop.f32.mrb[0].mxu0
      %v2300 = vpop.f32.mrb[0].mxu0
      %v2301 = vadd.f32 0.0, %v2300
      %v2302 = vpop.f32.mrb[0].mxu0
      %2303 = vmatprep.mubr.bf16.mxu0 0
      %2304 = vmatmul.mubr.bf16.gmra.mrb[0].mxu0 %v1451
      %v2305 = vpop.f32.mrb[0].mxu0
      %v2306 = vadd.f32 0.0, %v2305
      %v2307 = vpop.f32.mrb[0].mxu0
      %v2308 = vpop.f32.mrb[0].mxu0
      %v2309 = vadd.f32 0.0, %v2308
      %v2310 = vpop.f32.mrb[0].mxu0
      %2311 = vmatprep.mubr.bf16.mxu0 0
      %2312 = vmatmul.mubr.bf16.gmra.mrb[0].mxu0 %v1454
      %v2313 = vpop.f32.mrb[0].mxu0
      %v2314 = vadd.f32 0.0, %v2313
      %v2315 = vpop.f32.mrb[0].mxu0
      %v2316 = vpop.f32.mrb[0].mxu0
      %v2317 = vadd.f32 0.0, %v2316
      %v2318 = vpop.f32.mrb[0].mxu0
      %2319 = vmatprep.mubr.bf16.mxu0 0
      %2320 = vmatmul.mubr.bf16.gmra.mrb[0].mxu0 %v1457
      %v2321 = vpop.f32.mrb[0].mxu0
      %v2322 = vadd.f32 0.0, %v2321
      %v2323 = vpop.f32.mrb[0].mxu0
      %v2324 = vpop.f32.mrb[0].mxu0
      %v2325 = vadd.f32 0.0, %v2324
      %v2326 = vpop.f32.mrb[0].mxu0
      %2327 = vmatprep.mubr.bf16.mxu0 0
      %2328 = vmatmul.mubr.bf16.gmra.mrb[0].mxu0 %v1460
      %v2329 = vpop.f32.mrb[0].mxu0
      %v2330 = vadd.f32 0.0, %v2329
      %v2331 = vpop.f32.mrb[0].mxu0
      %v2332 = vpop.f32.mrb[0].mxu0
      %v2333 = vadd.f32 0.0, %v2332
      %v2334 = vpop.f32.mrb[0].mxu0
      %2335 = vmatprep.mubr.bf16.mxu0 0
      %2336 = vmatmul.mubr.bf16.gmra.mrb[0].mxu0 %v1463
      %v2337 = vpop.f32.mrb[0].mxu0
      %v2338 = vadd.f32 0.0, %v2337
      %v2339 = vpop.f32.mrb[0].mxu0
      %v2340 = vpop.f32.mrb[0].mxu0
      %v2341 = vadd.f32 0.0, %v2340
      %v2342 = vpop.f32.mrb[0].mxu0
      %2343 = vmatprep.mubr.bf16.mxu0 0
      %2344 = vmatmul.mubr.bf16.gmra.mrb[0].mxu0 %v1466
      %v2345 = vpop.f32.mrb[0].mxu0
      %v2346 = vadd.f32 0.0, %v2345
      %v2347 = vpop.f32.mrb[0].mxu0
      %v2348 = vpop.f32.mrb[0].mxu0
      %v2349 = vadd.f32 0.0, %v2348
      %v2350 = vpop.f32.mrb[0].mxu0
      %2351 = vmatprep.mubr.bf16.mxu0 0
      %2352 = vmatmul.mubr.bf16.gmra.mrb[0].mxu0 %v1469
      %v2353 = vpop.f32.mrb[0].mxu0
      %v2354 = vadd.f32 0.0, %v2353
      %v2355 = vpop.f32.mrb[0].mxu0
      %v2356 = vpop.f32.mrb[0].mxu0
      %v2357 = vadd.f32 0.0, %v2356
      %v2358 = vpop.f32.mrb[0].mxu0
      %2359 = vmatprep.mubr.bf16.mxu0 0
      %2360 = vmatmul.mubr.bf16.gmra.mrb[0].mxu0 %v1472
      %v2361 = vpop.f32.mrb[0].mxu0
      %v2362 = vadd.f32 0.0, %v2361
      %v2363 = vpop.f32.mrb[0].mxu0
      %v2364 = vpop.f32.mrb[0].mxu0
      %v2365 = vadd.f32 0.0, %v2364
      %v2366 = vpop.f32.mrb[0].mxu0
      %2367 = vmatprep.mubr.bf16.mxu0 0
      %2368 = vmatmul.mubr.bf16.gmra.mrb[0].mxu0 %v1475
      %v2369 = vpop.f32.mrb[0].mxu0
      %v2370 = vadd.f32 0.0, %v2369
      %v2371 = vpop.f32.mrb[0].mxu0
      %v2372 = vpop.f32.mrb[0].mxu0
      %v2373 = vadd.f32 0.0, %v2372
      %v2374 = vpop.f32.mrb[0].mxu0
      %2375 = vmatprep.mubr.bf16.mxu0 0
      %2376 = vmatmul.mubr.bf16.gmra.mrb[0].mxu0 %v1478
      %v2377 = vpop.f32.mrb[0].mxu0
      %v2378 = vadd.f32 0.0, %v2377
      %v2379 = vpop.f32.mrb[0].mxu0
      %v2380 = vpop.f32.mrb[0].mxu0
      %v2381 = vadd.f32 0.0, %v2380
      %v2382 = vpop.f32.mrb[0].mxu0
      %2383 = vmatprep.mubr.bf16.mxu0 0
      %2384 = vmatmul.mubr.bf16.gmra.mrb[0].mxu0 %v1481
      %v2385 = vpop.f32.mrb[0].mxu0
      %v2386 = vadd.f32 0.0, %v2385
      %v2387 = vpop.f32.mrb[0].mxu0
      %v2388 = vpop.f32.mrb[0].mxu0
      %v2389 = vadd.f32 0.0, %v2388
      %v2390 = vpop.f32.mrb[0].mxu0
      %2391 = vmatprep.mubr.bf16.mxu0 0
      %2392 = vmatmul.mubr.bf16.gmra.mrb[0].mxu0 %v1484
      %v2393 = vpop.f32.mrb[0].mxu0
      %v2394 = vadd.f32 0.0, %v2393
      %v2395 = vpop.f32.mrb[0].mxu0
      %v2396 = vpop.f32.mrb[0].mxu0
      %v2397 = vadd.f32 0.0, %v2396
      %v2398 = vpop.f32.mrb[0].mxu0
      %2399 = vmatprep.mubr.bf16.mxu0 0
      %2400 = vmatmul.mubr.bf16.gmra.mrb[0].mxu0 %v1487
      %v2401 = vpop.f32.mrb[0].mxu0
      %v2402 = vadd.f32 0.0, %v2401
      %v2403 = vpop.f32.mrb[0].mxu0
      %v2404 = vpop.f32.mrb[0].mxu0
      %v2405 = vadd.f32 0.0, %v2404
      %v2406 = vpop.f32.mrb[0].mxu0
      %2407 = vmatprep.mubr.bf16.mxu0 0
      %2408 = vmatmul.mubr.bf16.gmra.mrb[0].mxu0 %v1490
      %v2409 = vpop.f32.mrb[0].mxu0
      %v2410 = vadd.f32 0.0, %v2409
      %v2411 = vpop.f32.mrb[0].mxu0
      %v2412 = vpop.f32.mrb[0].mxu0
      %v2413 = vadd.f32 0.0, %v2412
      %v2414 = vpop.f32.mrb[0].mxu0
      %2415 = vmatprep.mubr.bf16.mxu0 0
      %2416 = vmatmul.mubr.bf16.gmra.mrb[0].mxu0 %v1493
      %v2417 = vpop.f32.mrb[0].mxu0
      %v2418 = vadd.f32 0.0, %v2417
      %v2419 = vpop.f32.mrb[0].mxu0
      %v2420 = vpop.f32.mrb[0].mxu0
      %v2421 = vadd.f32 0.0, %v2420
      %v2422 = vpop.f32.mrb[0].mxu0
      %2423 = vmatprep.mubr.bf16.mxu0 0
      %2424 = vmatmul.mubr.bf16.gmra.mrb[0].mxu0 %v1496
      %v2425 = vpop.f32.mrb[0].mxu0
      %v2426 = vadd.f32 0.0, %v2425
      %v2427 = vpop.f32.mrb[0].mxu0
      %v2428 = vpop.f32.mrb[0].mxu0
      %v2429 = vadd.f32 0.0, %v2428
      %v2430 = vpop.f32.mrb[0].mxu0
      %2431 = vmatprep.mubr.bf16.mxu0 0
      %2432 = vmatmul.mubr.bf16.gmra.mrb[0].mxu0 %v1499
      %v2433 = vpop.f32.mrb[0].mxu0
      %v2434 = vadd.f32 0.0, %v2433
      %v2435 = vpop.f32.mrb[0].mxu0
      %v2436 = vpop.f32.mrb[0].mxu0
      %v2437 = vadd.f32 0.0, %v2436
      %v2438 = vpop.f32.mrb[0].mxu0
      %2439 = vmatprep.mubr.bf16.mxu0 0
      %2440 = vmatmul.mubr.bf16.gmra.mrb[0].mxu0 %v1502
      %v2441 = vpop.f32.mrb[0].mxu0
      %v2442 = vadd.f32 0.0, %v2441
      %v2443 = vpop.f32.mrb[0].mxu0
      %v2444 = vpop.f32.mrb[0].mxu0
      %v2445 = vadd.f32 0.0, %v2444
      %v2446 = vpop.f32.mrb[0].mxu0
      %2447 = vmatprep.mubr.bf16.mxu0 0
      %2448 = vmatmul.mubr.bf16.gmra.mrb[0].mxu0 %v1505
      %v2449 = vpop.f32.mrb[0].mxu0
      %v2450 = vadd.f32 0.0, %v2449
      %v2451 = vpop.f32.mrb[0].mxu0
      %v2452 = vpop.f32.mrb[0].mxu0
      %v2453 = vadd.f32 0.0, %v2452
      %v2454 = vpop.f32.mrb[0].mxu0
      %2455 = vmatprep.mubr.bf16.mxu0 0
      %2456 = vmatmul.mubr.bf16.gmra.mrb[0].mxu0 %v1508
      %v2457 = vpop.f32.mrb[0].mxu0
      %v2458 = vadd.f32 0.0, %v2457
      %v2459 = vpop.f32.mrb[0].mxu0
      %v2460 = vpop.f32.mrb[0].mxu0
      %v2461 = vadd.f32 0.0, %v2460
      %v2462 = vpop.f32.mrb[0].mxu0
      %2463 = vmatprep.mubr.bf16.mxu0 0
      %2464 = vmatmul.mubr.bf16.gmra.mrb[0].mxu0 %v1511
      %v2465 = vpop.f32.mrb[0].mxu0
      %v2466 = vadd.f32 0.0, %v2465
      %v2467 = vpop.f32.mrb[0].mxu0
      %v2468 = vpop.f32.mrb[0].mxu0
      %v2469 = vadd.f32 0.0, %v2468
      %v2470 = vpop.f32.mrb[0].mxu0
      %2471 = vmatprep.mubr.bf16.mxu0 0
      %2472 = vmatmul.mubr.bf16.gmra.mrb[0].mxu0 %v1514
      %v2473 = vpop.f32.mrb[0].mxu0
      %v2474 = vadd.f32 0.0, %v2473
      %v2475 = vpop.f32.mrb[0].mxu0
      %v2476 = vpop.f32.mrb[0].mxu0
      %v2477 = vadd.f32 0.0, %v2476
      %v2478 = vpop.f32.mrb[0].mxu0
      %2479 = vmatprep.mubr.bf16.mxu0 0
      %2480 = vmatmul.mubr.bf16.gmra.mrb[0].mxu0 %v1517
      %v2481 = vpop.f32.mrb[0].mxu0
      %v2482 = vadd.f32 0.0, %v2481
      %v2483 = vpop.f32.mrb[0].mxu0
      %v2484 = vpop.f32.mrb[0].mxu0
      %v2485 = vadd.f32 0.0, %v2484
      %v2486 = vpop.f32.mrb[0].mxu0
      %2487 = vmatprep.mubr.bf16.mxu0 0
      %2488 = vmatmul.mubr.bf16.gmra.mrb[0].mxu0 %v1520
      %v2489 = vpop.f32.mrb[0].mxu0
      %v2490 = vadd.f32 0.0, %v2489
      %v2491 = vpop.f32.mrb[0].mxu0
      %v2492 = vpop.f32.mrb[0].mxu0
      %v2493 = vadd.f32 0.0, %v2492
      %v2494 = vpop.f32.mrb[0].mxu0
      %2495 = vmatprep.mubr.bf16.mxu0 0
      %2496 = vmatmul.mubr.bf16.gmra.mrb[0].mxu0 %v1523
      %v2497 = vpop.f32.mrb[0].mxu0
      %v2498 = vadd.f32 0.0, %v2497
      %v2499 = vpop.f32.mrb[0].mxu0
      %v2500 = vpop.f32.mrb[0].mxu0
      %v2501 = vadd.f32 0.0, %v2500
      %v2502 = vpop.f32.mrb[0].mxu0
      %2503 = vmatprep.mubr.bf16.mxu0 0
      %2504 = vmatmul.mubr.bf16.gmra.mrb[0].mxu0 %v1526
      %v2505 = vpop.f32.mrb[0].mxu0
      %v2506 = vadd.f32 0.0, %v2505
      %v2507 = vpop.f32.mrb[0].mxu0
      %v2508 = vpop.f32.mrb[0].mxu0
      %v2509 = vadd.f32 0.0, %v2508
      %v2510 = vpop.f32.mrb[0].mxu0
      %2511 = vmatprep.mubr.bf16.mxu0 0
      %2512 = vmatmul.mubr.bf16.gmra.mrb[0].mxu0 %v1529
      %v2513 = vpop.f32.mrb[0].mxu0
      %v2514 = vadd.f32 0.0, %v2513
      %v2515 = vpop.f32.mrb[0].mxu0
      %v2516 = vpop.f32.mrb[0].mxu0
      %v2517 = vadd.f32 0.0, %v2516
      %v2518 = vpop.f32.mrb[0].mxu0
      %2519 = vmatprep.mubr.bf16.mxu0 0
      %2520 = vmatmul.mubr.bf16.gmra.mrb[0].mxu0 %v1532
      %v2521 = vpop.f32.mrb[0].mxu0
      %v2522 = vadd.f32 0.0, %v2521
      %v2523 = vpop.f32.mrb[0].mxu0
      %v2524 = vpop.f32.mrb[0].mxu0
      %v2525 = vadd.f32 0.0, %v2524
      %v2526 = vpop.f32.mrb[0].mxu0
      %2527 = vmatprep.mubr.bf16.mxu0 0
      %2528 = vmatmul.mubr.bf16.gmra.mrb[0].mxu0 %v1535
      %v2529 = vpop.f32.mrb[0].mxu0
      %v2530 = vadd.f32 0.0, %v2529
      %v2531 = vpop.f32.mrb[0].mxu0
      %v2532 = vpop.f32.mrb[0].mxu0
      %v2533 = vadd.f32 0.0, %v2532
      %v2534 = vpop.f32.mrb[0].mxu0
      %2535 = vmatprep.mubr.bf16.mxu0 0
      %2536 = vmatmul.mubr.bf16.gmra.mrb[0].mxu0 %v1538
      %v2537 = vpop.f32.mrb[0].mxu0
      %v2538 = vadd.f32 0.0, %v2537
      %v2539 = vpop.f32.mrb[0].mxu0
      %v2540 = vpop.f32.mrb[0].mxu0
      %v2541 = vadd.f32 0.0, %v2540
      %v2542 = vpop.f32.mrb[0].mxu0
      %2543 = vmatprep.mubr.bf16.mxu0 0
      %2544 = vmatmul.mubr.bf16.gmra.mrb[0].mxu0 %v1541
      %v2545 = vpop.f32.mrb[0].mxu0
      %v2546 = vadd.f32 0.0, %v2545
      %v2547 = vpop.f32.mrb[0].mxu0
      %v2548 = vpop.f32.mrb[0].mxu0
      %v2549 = vadd.f32 0.0, %v2548
      %v2550 = vpop.f32.mrb[0].mxu0
      %2551 = vmatprep.mubr.bf16.mxu0 0
      %2552 = vmatmul.mubr.bf16.gmra.mrb[0].mxu0 %v1544
      %v2553 = vpop.f32.mrb[0].mxu0
      %v2554 = vadd.f32 0.0, %v2553
      %v2555 = vpop.f32.mrb[0].mxu0
      %v2556 = vpop.f32.mrb[0].mxu0
      %v2557 = vadd.f32 0.0, %v2556
      %v2558 = vpop.f32.mrb[0].mxu0
      %2559 = vmatprep.mubr.bf16.mxu0 0
      %2560 = vmatmul.mubr.bf16.gmra.mrb[0].mxu0 %v1547
      %v2561 = vpop.f32.mrb[0].mxu0
      %v2562 = vadd.f32 0.0, %v2561
      %v2563 = vpop.f32.mrb[0].mxu0
      %v2564 = vpop.f32.mrb[0].mxu0
      %v2565 = vadd.f32 0.0, %v2564
      %v2566 = vpop.f32.mrb[0].mxu0
      %2567 = vmatprep.mubr.bf16.mxu0 0
      %2568 = vmatmul.mubr.bf16.gmra.mrb[0].mxu0 %v1550
      %v2569 = vpop.f32.mrb[0].mxu0
      %v2570 = vadd.f32 0.0, %v2569
      %v2571 = vpop.f32.mrb[0].mxu0
      %v2572 = vpop.f32.mrb[0].mxu0
      %v2573 = vadd.f32 0.0, %v2572
      %v2574 = vpop.f32.mrb[0].mxu0
      %2575 = vmatprep.mubr.bf16.mxu0 0
      %2576 = vmatmul.mubr.bf16.gmra.mrb[0].mxu0 %v1553
      %v2577 = vpop.f32.mrb[0].mxu0
      %v2578 = vadd.f32 0.0, %v2577
      %v2579 = vpop.f32.mrb[0].mxu0
      %v2580 = vpop.f32.mrb[0].mxu0
      %v2581 = vadd.f32 0.0, %v2580
      %v2582 = vpop.f32.mrb[0].mxu0
      %2583 = vmatprep.mubr.bf16.mxu0 0
      %2584 = vmatmul.mubr.bf16.gmra.mrb[0].mxu0 %v1556
      %v2585 = vpop.f32.mrb[0].mxu0
      %v2586 = vadd.f32 0.0, %v2585
      %v2587 = vpop.f32.mrb[0].mxu0
      %v2588 = vpop.f32.mrb[0].mxu0
      %v2589 = vadd.f32 0.0, %v2588
      %v2590 = vpop.f32.mrb[0].mxu0
      %2591 = vmatprep.mubr.bf16.mxu0 0
      %2592 = vmatmul.mubr.bf16.gmra.mrb[0].mxu0 %v1559
      %v2593 = vpop.f32.mrb[0].mxu0
      %v2594 = vadd.f32 0.0, %v2593
      %v2595 = vpop.f32.mrb[0].mxu0
      %v2596 = vpop.f32.mrb[0].mxu0
      %v2597 = vadd.f32 0.0, %v2596
      %v2598 = vpop.f32.mrb[0].mxu0
      %2599 = vmatprep.mubr.bf16.mxu0 0
      %2600 = vmatmul.mubr.bf16.gmra.mrb[0].mxu0 %v1562
      %v2601 = vpop.f32.mrb[0].mxu0
      %v2602 = vadd.f32 0.0, %v2601
      %v2603 = vpop.f32.mrb[0].mxu0
      %v2604 = vpop.f32.mrb[0].mxu0
      %v2605 = vadd.f32 0.0, %v2604
      %v2606 = vpop.f32.mrb[0].mxu0
      %2607 = vmatprep.mubr.bf16.mxu0 0
      %2608 = vmatmul.mubr.bf16.gmra.mrb[0].mxu0 %v1565
      %v2609 = vpop.f32.mrb[0].mxu0
      %v2610 = vadd.f32 0.0, %v2609
      %v2611 = vpop.f32.mrb[0].mxu0
      %v2612 = vpop.f32.mrb[0].mxu0
      %v2613 = vadd.f32 0.0, %v2612
      %v2614 = vpop.f32.mrb[0].mxu0
      %2615 = vmatprep.mubr.bf16.mxu0 0
      %2616 = vmatmul.mubr.bf16.gmra.mrb[0].mxu0 %v1568
      %v2617 = vpop.f32.mrb[0].mxu0
      %v2618 = vadd.f32 0.0, %v2617
      %v2619 = vpop.f32.mrb[0].mxu0
      %v2620 = vpop.f32.mrb[0].mxu0
      %v2621 = vadd.f32 0.0, %v2620
      %v2622 = vpop.f32.mrb[0].mxu0
      %2623 = vmatprep.mubr.bf16.mxu0 0
      %2624 = vmatmul.mubr.bf16.gmra.mrb[0].mxu0 %v1571
      %v2625 = vpop.f32.mrb[0].mxu0
      %v2626 = vadd.f32 0.0, %v2625
      %v2627 = vpop.f32.mrb[0].mxu0
      %v2628 = vpop.f32.mrb[0].mxu0
      %v2629 = vadd.f32 0.0, %v2628
      %v2630 = vpop.f32.mrb[0].mxu0
      %2631 = vmatprep.mubr.bf16.mxu0 0
      %2632 = vmatmul.mubr.bf16.gmra.mrb[0].mxu0 %v1574
      %v2633 = vpop.f32.mrb[0].mxu0
      %v2634 = vadd.f32 0.0, %v2633
      %v2635 = vpop.f32.mrb[0].mxu0
      %v2636 = vpop.f32.mrb[0].mxu0
      %v2637 = vadd.f32 0.0, %v2636
      %v2638 = vpop.f32.mrb[0].mxu0
      %2639 = vmatprep.mubr.bf16.mxu0 0
      %2640 = vmatmul.mubr.bf16.gmra.mrb[0].mxu0 %v1577
      %v2641 = vpop.f32.mrb[0].mxu0
      %v2642 = vadd.f32 0.0, %v2641
      %v2643 = vpop.f32.mrb[0].mxu0
      %v2644 = vpop.f32.mrb[0].mxu0
      %v2645 = vadd.f32 0.0, %v2644
      %v2646 = vpop.f32.mrb[0].mxu0
      %2647 = vmatprep.mubr.bf16.mxu0 0
      %2648 = vmatmul.mubr.bf16.gmra.mrb[0].mxu0 %v1580
      %v2649 = vpop.f32.mrb[0].mxu0
      %v2650 = vadd.f32 0.0, %v2649
      %v2651 = vpop.f32.mrb[0].mxu0
      %v2652 = vpop.f32.mrb[0].mxu0
      %v2653 = vadd.f32 0.0, %v2652
      %v2654 = vpop.f32.mrb[0].mxu0
      %2655 = vmatprep.mubr.bf16.mxu0 0
      %2656 = vmatmul.mubr.bf16.gmra.mrb[0].mxu0 %v1583
      %v2657 = vpop.f32.mrb[0].mxu0
      %v2658 = vadd.f32 0.0, %v2657
      %v2659 = vpop.f32.mrb[0].mxu0
      %v2660 = vpop.f32.mrb[0].mxu0
      %v2661 = vadd.f32 0.0, %v2660
      %v2662 = vpop.f32.mrb[0].mxu0
      %2663 = vmatprep.mubr.bf16.mxu0 0
      %2664 = vmatmul.mubr.bf16.gmra.mrb[0].mxu0 %v1586
      %v2665 = vpop.f32.mrb[0].mxu0
      %v2666 = vadd.f32 0.0, %v2665
      %v2667 = vpop.f32.mrb[0].mxu0
      %v2668 = vpop.f32.mrb[0].mxu0
      %v2669 = vadd.f32 0.0, %v2668
      %v2670 = vpop.f32.mrb[0].mxu0
      %2671 = vmatprep.mubr.bf16.mxu0 0
      %2672 = vmatmul.mubr.bf16.gmra.mrb[0].mxu0 %v1589
      %v2673 = vpop.f32.mrb[0].mxu0
      %v2674 = vadd.f32 0.0, %v2673
      %v2675 = vpop.f32.mrb[0].mxu0
      %v2676 = vpop.f32.mrb[0].mxu0
      %v2677 = vadd.f32 0.0, %v2676
      %v2678 = vpop.f32.mrb[0].mxu0
      %2679 = vmatprep.mubr.bf16.mxu0 0
      %2680 = vmatmul.mubr.bf16.gmra.mrb[0].mxu0 %v1592
      %v2681 = vpop.f32.mrb[0].mxu0
      %v2682 = vadd.f32 0.0, %v2681
      %v2683 = vpop.f32.mrb[0].mxu0
      %v2684 = vpop.f32.mrb[0].mxu0
      %v2685 = vadd.f32 0.0, %v2684
      %v2686 = vpop.f32.mrb[0].mxu0
      %2687 = vmatprep.mubr.bf16.mxu0 0
      %2688 = vmatmul.mubr.bf16.gmra.mrb[0].mxu0 %v1595
      %v2689 = vpop.f32.mrb[0].mxu0
      %v2690 = vadd.f32 0.0, %v2689
      %v2691 = vpop.f32.mrb[0].mxu0
      %v2692 = vpop.f32.mrb[0].mxu0
      %v2693 = vadd.f32 0.0, %v2692
      %v2694 = vpop.f32.mrb[0].mxu0
      %2695 = vmatprep.mubr.bf16.mxu0 0
      %2696 = vmatmul.mubr.bf16.gmra.mrb[0].mxu0 %v1598
      %v2697 = vpop.f32.mrb[0].mxu0
      %v2698 = vadd.f32 0.0, %v2697
      %v2699 = vpop.f32.mrb[0].mxu0
      %v2700 = vpop.f32.mrb[0].mxu0
      %v2701 = vadd.f32 0.0, %v2700
      %v2702 = vpop.f32.mrb[0].mxu0
      %2703 = vmatprep.mubr.bf16.mxu0 0
      %2704 = vmatmul.mubr.bf16.gmra.mrb[0].mxu0 %v1601
      %v2705 = vpop.f32.mrb[0].mxu0
      %v2706 = vadd.f32 0.0, %v2705
      %v2707 = vpop.f32.mrb[0].mxu0
      %v2708 = vpop.f32.mrb[0].mxu0
      %v2709 = vadd.f32 0.0, %v2708
      %v2710 = vpop.f32.mrb[0].mxu0
      %2711 = vdwg.mxu0
      %v2712 = vmax.f32 %v1642, %v1909
      %v2713 = vmax.f32 %v1645, %v1914
      %v2714 = vmax.f32 %v1650, %v1917
      %v2715 = vmax.f32 %v1653, %v1922
      %v2716 = vmax.f32 %v1658, %v1925
      %v2717 = vmax.f32 %v1661, %v1930
      %v2718 = vmax.f32 %v1666, %v1933
      %v2719 = vmax.f32 %v1669, %v1938
      %v2720 = vmax.f32 %v1674, %v1941
      %v2721 = vmax.f32 %v1677, %v1946
      %v2722 = vmax.f32 %v1682, %v1949
      %v2723 = vmax.f32 %v1685, %v1954
      %v2724 = vmax.f32 %v1690, %v1957
      %v2725 = vmax.f32 %v1693, %v1962
      %v2726 = vmax.f32 %v1698, %v1965
      %v2727 = vmax.f32 %v1701, %v1970
      %v2728 = vmax.f32 %v1706, %v1973
      %v2729 = vmax.f32 %v1709, %v1978
      %v2730 = vmax.f32 %v1714, %v1981
      %v2731 = vmax.f32 %v1717, %v1986
      %v2732 = vmax.f32 %v1722, %v1989
      %v2733 = vmax.f32 %v1725, %v1994
      %v2734 = vmax.f32 %v1730, %v1997
      %v2735 = vmax.f32 %v1733, %v2002
      %v2736 = vmax.f32 %v1738, %v2005
      %v2737 = vmax.f32 %v1741, %v2010
      %v2738 = vmax.f32 %v1746, %v2013
      %v2739 = vmax.f32 %v1749, %v2018
      %v2740 = vmax.f32 %v1754, %v2021
      %v2741 = vmax.f32 %v1757, %v2026
      %v2742 = vmax.f32 %v1762, %v2029
      %v2743 = vmax.f32 %v1765, %v2034
      %v2744 = vmax.f32 %v1770, %v2037
      %v2745 = vmax.f32 %v1773, %v2042
      %v2746 = vmax.f32 %v1778, %v2045
      %v2747 = vmax.f32 %v1781, %v2050
      %v2748 = vmax.f32 %v1786, %v2053
      %v2749 = vmax.f32 %v1789, %v2058
      %v2750 = vmax.f32 %v1794, %v2061
      %v2751 = vmax.f32 %v1797, %v2066
      %v2752 = vmax.f32 %v1802, %v2069
      %v2753 = vmax.f32 %v1805, %v2074
      %v2754 = vmax.f32 %v1810, %v2077
      %v2755 = vmax.f32 %v1813, %v2082
      %v2756 = vmax.f32 %v1818, %v2085
      %v2757 = vmax.f32 %v1821, %v2090
      %v2758 = vmax.f32 %v1826, %v2093
      %v2759 = vmax.f32 %v1829, %v2098
      %v2760 = vmax.f32 %v1834, %v2101
      %v2761 = vmax.f32 %v1837, %v2106
      %v2762 = vmax.f32 %v1842, %v2109
      %v2763 = vmax.f32 %v1845, %v2114
      %v2764 = vmax.f32 %v1850, %v2117
      %v2765 = vmax.f32 %v1853, %v2122
      %v2766 = vmax.f32 %v1858, %v2125
      %v2767 = vmax.f32 %v1861, %v2130
      %v2768 = vmax.f32 %v1866, %v2133
      %v2769 = vmax.f32 %v1869, %v2138
      %v2770 = vmax.f32 %v1874, %v2141
      %v2771 = vmax.f32 %v1877, %v2146
      %v2772 = vmax.f32 %v1882, %v2149
      %v2773 = vmax.f32 %v1885, %v2154
      %v2774 = vmax.f32 %v1890, %v2157
      %v2775 = vmax.f32 %v1893, %v2162
      %v2776 = vmax.f32 %v1898, %v2165
      %v2777 = vmax.f32 %v1901, %v2170
      %v2778 = vmax.f32 %v1906, %v2173
      %v2779 = vmax.f32 %v2178, %v2445
      %v2780 = vmax.f32 %v2181, %v2450
      %v2781 = vmax.f32 %v2186, %v2453
      %v2782 = vmax.f32 %v2189, %v2458
      %v2783 = vmax.f32 %v2194, %v2461
      %v2784 = vmax.f32 %v2197, %v2466
      %v2785 = vmax.f32 %v2202, %v2469
      %v2786 = vmax.f32 %v2205, %v2474
      %v2787 = vmax.f32 %v2210, %v2477
      %v2788 = vmax.f32 %v2213, %v2482
      %v2789 = vmax.f32 %v2218, %v2485
      %v2790 = vmax.f32 %v2221, %v2490
      %v2791 = vmax.f32 %v2226, %v2493
      %v2792 = vmax.f32 %v2229, %v2498
      %v2793 = vmax.f32 %v2234, %v2501
      %v2794 = vmax.f32 %v2237, %v2506
      %v2795 = vmax.f32 %v2242, %v2509
      %v2796 = vmax.f32 %v2245, %v2514
      %v2797 = vmax.f32 %v2250, %v2517
      %v2798 = vmax.f32 %v2253, %v2522
      %v2799 = vmax.f32 %v2258, %v2525
      %v2800 = vmax.f32 %v2261, %v2530
      %v2801 = vmax.f32 %v2266, %v2533
      %v2802 = vmax.f32 %v2269, %v2538
      %v2803 = vmax.f32 %v2274, %v2541
      %v2804 = vmax.f32 %v2277, %v2546
      %v2805 = vmax.f32 %v2282, %v2549
      %v2806 = vmax.f32 %v2285, %v2554
      %v2807 = vmax.f32 %v2290, %v2557
      %v2808 = vmax.f32 %v2293, %v2562
      %v2809 = vmax.f32 %v2298, %v2565
      %v2810 = vmax.f32 %v2301, %v2570
      %v2811 = vmax.f32 %v2306, %v2573
      %v2812 = vmax.f32 %v2309, %v2578
      %v2813 = vmax.f32 %v2314, %v2581
      %v2814 = vmax.f32 %v2317, %v2586
      %v2815 = vmax.f32 %v2322, %v2589
      %v2816 = vmax.f32 %v2325, %v2594
      %v2817 = vmax.f32 %v2330, %v2597
      %v2818 = vmax.f32 %v2333, %v2602
      %v2819 = vmax.f32 %v2338, %v2605
      %v2820 = vmax.f32 %v2341, %v2610
      %v2821 = vmax.f32 %v2346, %v2613
      %v2822 = vmax.f32 %v2349, %v2618
      %v2823 = vmax.f32 %v2354, %v2621
      %v2824 = vmax.f32 %v2357, %v2626
      %v2825 = vmax.f32 %v2362, %v2629
      %v2826 = vmax.f32 %v2365, %v2634
      %v2827 = vmax.f32 %v2370, %v2637
      %v2828 = vmax.f32 %v2373, %v2642
      %v2829 = vmax.f32 %v2378, %v2645
      %v2830 = vmax.f32 %v2381, %v2650
      %v2831 = vmax.f32 %v2386, %v2653
      %v2832 = vmax.f32 %v2389, %v2658
      %v2833 = vmax.f32 %v2394, %v2661
      %v2834 = vmax.f32 %v2397, %v2666
      %v2835 = vmax.f32 %v2402, %v2669
      %v2836 = vmax.f32 %v2405, %v2674
      %v2837 = vmax.f32 %v2410, %v2677
      %v2838 = vmax.f32 %v2413, %v2682
      %v2839 = vmax.f32 %v2418, %v2685
      %v2840 = vmax.f32 %v2421, %v2690
      %v2841 = vmax.f32 %v2426, %v2693
      %v2842 = vmax.f32 %v2429, %v2698
      %v2843 = vmax.f32 %v2434, %v2701
      %v2844 = vmax.f32 %v2437, %v2706
      %v2845 = vmax.f32 %v2442, %v2709
      %v2846 = vmax.f32 %v2712, %v2779
      %v2847 = vmax.f32 %v2713, %v2780
      %v2848 = vmax.f32 %v2714, %v2781
      %v2849 = vmax.f32 %v2715, %v2782
      %v2850 = vmax.f32 %v2716, %v2783
      %v2851 = vmax.f32 %v2717, %v2784
      %v2852 = vmax.f32 %v2718, %v2785
      %v2853 = vmax.f32 %v2719, %v2786
      %v2854 = vmax.f32 %v2720, %v2787
      %v2855 = vmax.f32 %v2721, %v2788
      %v2856 = vmax.f32 %v2722, %v2789
      %v2857 = vmax.f32 %v2723, %v2790
      %v2858 = vmax.f32 %v2724, %v2791
      %v2859 = vmax.f32 %v2725, %v2792
      %v2860 = vmax.f32 %v2726, %v2793
      %v2861 = vmax.f32 %v2727, %v2794
      %v2862 = vmax.f32 %v2728, %v2795
      %v2863 = vmax.f32 %v2729, %v2796
      %v2864 = vmax.f32 %v2730, %v2797
      %v2865 = vmax.f32 %v2731, %v2798
      %v2866 = vmax.f32 %v2732, %v2799
      %v2867 = vmax.f32 %v2733, %v2800
      %v2868 = vmax.f32 %v2734, %v2801
      %v2869 = vmax.f32 %v2735, %v2802
      %v2870 = vmax.f32 %v2736, %v2803
      %v2871 = vmax.f32 %v2737, %v2804
      %v2872 = vmax.f32 %v2738, %v2805
      %v2873 = vmax.f32 %v2739, %v2806
      %v2874 = vmax.f32 %v2740, %v2807
      %v2875 = vmax.f32 %v2741, %v2808
      %v2876 = vmax.f32 %v2742, %v2809
      %v2877 = vmax.f32 %v2743, %v2810
      %v2878 = vmax.f32 %v2744, %v2811
      %v2879 = vmax.f32 %v2745, %v2812
      %v2880 = vmax.f32 %v2746, %v2813
      %v2881 = vmax.f32 %v2747, %v2814
      %v2882 = vmax.f32 %v2748, %v2815
      %v2883 = vmax.f32 %v2749, %v2816
      %v2884 = vmax.f32 %v2750, %v2817
      %v2885 = vmax.f32 %v2751, %v2818
      %v2886 = vmax.f32 %v2752, %v2819
      %v2887 = vmax.f32 %v2753, %v2820
      %v2888 = vmax.f32 %v2754, %v2821
      %v2889 = vmax.f32 %v2755, %v2822
      %v2890 = vmax.f32 %v2756, %v2823
      %v2891 = vmax.f32 %v2757, %v2824
      %v2892 = vmax.f32 %v2758, %v2825
      %v2893 = vmax.f32 %v2759, %v2826
      %v2894 = vmax.f32 %v2760, %v2827
      %v2895 = vmax.f32 %v2761, %v2828
      %v2896 = vmax.f32 %v2762, %v2829
      %v2897 = vmax.f32 %v2763, %v2830
      %v2898 = vmax.f32 %v2764, %v2831
      %v2899 = vmax.f32 %v2765, %v2832
      %v2900 = vmax.f32 %v2766, %v2833
      %v2901 = vmax.f32 %v2767, %v2834
      %v2902 = vmax.f32 %v2768, %v2835
      %v2903 = vmax.f32 %v2769, %v2836
      %v2904 = vmax.f32 %v2770, %v2837
      %v2905 = vmax.f32 %v2771, %v2838
      %v2906 = vmax.f32 %v2772, %v2839
      %v2907 = vmax.f32 %v2773, %v2840
      %v2908 = vmax.f32 %v2774, %v2841
      %v2909 = vmax.f32 %v2775, %v2842
      %v2910 = vmax.f32 %v2776, %v2843
      %v2911 = vmax.f32 %v2777, %v2844
      %v2912 = vmax.f32 %v2778, %v2845
      %v2913 = vld [vmem:[%s2] sm:$0x1]
      %v2915 = vlaneseq
      %v2916 = vshrl.u32 %v2915, 7
      %v2917 = vsub.s32 0, %v2916
      %v2918 = vrot.slane %v2913, %v2917
      %v2920 = vadd.f32 %v2846, %v2918
      %v2921 = vadd.f32 %v2847, %v2918
      %v2922 = vadd.f32 %v2848, %v2918
      %v2923 = vadd.f32 %v2849, %v2918
      %v2924 = vadd.f32 %v2850, %v2918
      %v2925 = vadd.f32 %v2851, %v2918
      %v2926 = vadd.f32 %v2852, %v2918
      %v2927 = vadd.f32 %v2853, %v2918
      %v2928 = vadd.f32 %v2854, %v2918
      %v2929 = vadd.f32 %v2855, %v2918
      %v2930 = vadd.f32 %v2856, %v2918
      %v2931 = vadd.f32 %v2857, %v2918
      %v2932 = vadd.f32 %v2858, %v2918
      %v2933 = vadd.f32 %v2859, %v2918
      %v2934 = vadd.f32 %v2860, %v2918
      %v2935 = vadd.f32 %v2861, %v2918
      %v2936 = vadd.f32 %v2862, %v2918
      %v2937 = vadd.f32 %v2863, %v2918
      %v2938 = vadd.f32 %v2864, %v2918
      %v2939 = vadd.f32 %v2865, %v2918
      %v2940 = vadd.f32 %v2866, %v2918
      %v2941 = vadd.f32 %v2867, %v2918
      %v2942 = vadd.f32 %v2868, %v2918
      %v2943 = vadd.f32 %v2869, %v2918
      %v2944 = vadd.f32 %v2870, %v2918
      %v2945 = vadd.f32 %v2871, %v2918
      %v2946 = vadd.f32 %v2872, %v2918
      %v2947 = vadd.f32 %v2873, %v2918
      %v2948 = vadd.f32 %v2874, %v2918
      %v2949 = vadd.f32 %v2875, %v2918
      %v2950 = vadd.f32 %v2876, %v2918
      %v2951 = vadd.f32 %v2877, %v2918
      %v2952 = vadd.f32 %v2878, %v2918
      %v2953 = vadd.f32 %v2879, %v2918
      %v2954 = vadd.f32 %v2880, %v2918
      %v2955 = vadd.f32 %v2881, %v2918
      %v2956 = vadd.f32 %v2882, %v2918
      %v2957 = vadd.f32 %v2883, %v2918
      %v2958 = vadd.f32 %v2884, %v2918
      %v2959 = vadd.f32 %v2885, %v2918
      %v2960 = vadd.f32 %v2886, %v2918
      %v2961 = vadd.f32 %v2887, %v2918
      %v2962 = vadd.f32 %v2888, %v2918
      %v2963 = vadd.f32 %v2889, %v2918
      %v2964 = vadd.f32 %v2890, %v2918
      %v2965 = vadd.f32 %v2891, %v2918
      %v2966 = vadd.f32 %v2892, %v2918
      %v2967 = vadd.f32 %v2893, %v2918
      %v2968 = vadd.f32 %v2894, %v2918
      %v2969 = vadd.f32 %v2895, %v2918
      %v2970 = vadd.f32 %v2896, %v2918
      %v2971 = vadd.f32 %v2897, %v2918
      %v2972 = vadd.f32 %v2898, %v2918
      %v2973 = vadd.f32 %v2899, %v2918
      %v2974 = vadd.f32 %v2900, %v2918
      %v2975 = vadd.f32 %v2901, %v2918
      %v2976 = vadd.f32 %v2902, %v2918
      %v2977 = vadd.f32 %v2903, %v2918
      %v2978 = vadd.f32 %v2904, %v2918
      %v2979 = vadd.f32 %v2905, %v2918
      %v2980 = vadd.f32 %v2906, %v2918
      %v2981 = vadd.f32 %v2907, %v2918
      %v2982 = vadd.f32 %v2908, %v2918
      %v2983 = vadd.f32 %v2909, %v2918
      %v2984 = vadd.f32 %v2910, %v2918
      %v2985 = vadd.f32 %v2911, %v2918
      %v2986 = vadd.f32 %v2912, %v2918
      %vm2987 = vcmask 523264
      %2988 = vst.msk [vmem:[%s224] sm:$0xff] %vm2987, %v2920
      %2989 = vst.msk [vmem:[%s224 + $0x8] sm:$0xff] %vm2987, %v2921
      %2990 = vst.msk [vmem:[%s224 + $0x10] sm:$0xff] %vm2987, %v2922
      %2991 = vst.msk [vmem:[%s224 + $0x18] sm:$0xff] %vm2987, %v2923
      %2992 = vst.msk [vmem:[%s224 + $0x20] sm:$0xff] %vm2987, %v2924
      %2993 = vst.msk [vmem:[%s224 + $0x28] sm:$0xff] %vm2987, %v2925
      %2994 = vst.msk [vmem:[%s224 + $0x30] sm:$0xff] %vm2987, %v2926
      %2995 = vst.msk [vmem:[%s224 + $0x38] sm:$0xff] %vm2987, %v2927
      %2996 = vst.msk [vmem:[%s224 + $0x40] sm:$0xff] %vm2987, %v2928
      %2997 = vst.msk [vmem:[%s224 + $0x48] sm:$0xff] %vm2987, %v2929
      %2998 = vst.msk [vmem:[%s224 + $0x50] sm:$0xff] %vm2987, %v2930
      %2999 = vst.msk [vmem:[%s224 + $0x58] sm:$0xff] %vm2987, %v2931
      %3000 = vst.msk [vmem:[%s224 + $0x60] sm:$0xff] %vm2987, %v2932
      %3001 = vst.msk [vmem:[%s224 + $0x68] sm:$0xff] %vm2987, %v2933
      %3002 = vst.msk [vmem:[%s224 + $0x70] sm:$0xff] %vm2987, %v2934
      %3003 = vst.msk [vmem:[%s224 + $0x78] sm:$0xff] %vm2987, %v2935
      %3004 = vst.msk [vmem:[%s224 + $0x80] sm:$0xff] %vm2987, %v2936
      %3005 = vst.msk [vmem:[%s224 + $0x88] sm:$0xff] %vm2987, %v2937
      %3006 = vst.msk [vmem:[%s224 + $0x90] sm:$0xff] %vm2987, %v2938
      %3007 = vst.msk [vmem:[%s224 + $0x98] sm:$0xff] %vm2987, %v2939
      %3008 = vst.msk [vmem:[%s224 + $0xa0] sm:$0xff] %vm2987, %v2940
      %3009 = vst.msk [vmem:[%s224 + $0xa8] sm:$0xff] %vm2987, %v2941
      %3010 = vst.msk [vmem:[%s224 + $0xb0] sm:$0xff] %vm2987, %v2942
      %3011 = vst.msk [vmem:[%s224 + $0xb8] sm:$0xff] %vm2987, %v2943
      %3012 = vst.msk [vmem:[%s224 + $0xc0] sm:$0xff] %vm2987, %v2944
      %3013 = vst.msk [vmem:[%s224 + $0xc8] sm:$0xff] %vm2987, %v2945
      %3014 = vst.msk [vmem:[%s224 + $0xd0] sm:$0xff] %vm2987, %v2946
      %3015 = vst.msk [vmem:[%s224 + $0xd8] sm:$0xff] %vm2987, %v2947
      %3016 = vst.msk [vmem:[%s224 + $0xe0] sm:$0xff] %vm2987, %v2948
      %3017 = vst.msk [vmem:[%s224 + $0xe8] sm:$0xff] %vm2987, %v2949
      %3018 = vst.msk [vmem:[%s224 + $0xf0] sm:$0xff] %vm2987, %v2950
      %3019 = vst.msk [vmem:[%s224 + $0xf8] sm:$0xff] %vm2987, %v2951
      %3020 = vst.msk [vmem:[%s224 + $0x100] sm:$0xff] %vm2987, %v2952
      %3021 = vst.msk [vmem:[%s224 + $0x108] sm:$0xff] %vm2987, %v2953
      %3022 = vst.msk [vmem:[%s224 + $0x110] sm:$0xff] %vm2987, %v2954
      %3023 = vst.msk [vmem:[%s224 + $0x118] sm:$0xff] %vm2987, %v2955
      %3024 = vst.msk [vmem:[%s224 + $0x120] sm:$0xff] %vm2987, %v2956
      %3025 = vst.msk [vmem:[%s224 + $0x128] sm:$0xff] %vm2987, %v2957
      %3026 = vst.msk [vmem:[%s224 + $0x130] sm:$0xff] %vm2987, %v2958
      %3027 = vst.msk [vmem:[%s224 + $0x138] sm:$0xff] %vm2987, %v2959
      %3028 = vst.msk [vmem:[%s224 + $0x140] sm:$0xff] %vm2987, %v2960
      %3029 = vst.msk [vmem:[%s224 + $0x148] sm:$0xff] %vm2987, %v2961
      %3030 = vst.msk [vmem:[%s224 + $0x150] sm:$0xff] %vm2987, %v2962
      %3031 = vst.msk [vmem:[%s224 + $0x158] sm:$0xff] %vm2987, %v2963
      %3032 = vst.msk [vmem:[%s224 + $0x160] sm:$0xff] %vm2987, %v2964
      %3033 = vst.msk [vmem:[%s224 + $0x168] sm:$0xff] %vm2987, %v2965
      %3034 = vst.msk [vmem:[%s224 + $0x170] sm:$0xff] %vm2987, %v2966
      %3035 = vst.msk [vmem:[%s224 + $0x178] sm:$0xff] %vm2987, %v2967
      %3036 = vst.msk [vmem:[%s224 + $0x180] sm:$0xff] %vm2987, %v2968
      %3037 = vst.msk [vmem:[%s224 + $0x188] sm:$0xff] %vm2987, %v2969
      %3038 = vst.msk [vmem:[%s224 + $0x190] sm:$0xff] %vm2987, %v2970
      %3039 = vst.msk [vmem:[%s224 + $0x198] sm:$0xff] %vm2987, %v2971
      %3040 = vst.msk [vmem:[%s224 + $0x1a0] sm:$0xff] %vm2987, %v2972
      %3041 = vst.msk [vmem:[%s224 + $0x1a8] sm:$0xff] %vm2987, %v2973
      %3042 = vst.msk [vmem:[%s224 + $0x1b0] sm:$0xff] %vm2987, %v2974
      %3043 = vst.msk [vmem:[%s224 + $0x1b8] sm:$0xff] %vm2987, %v2975
      %3044 = vst.msk [vmem:[%s224 + $0x1c0] sm:$0xff] %vm2987, %v2976
      %3045 = vst.msk [vmem:[%s224 + $0x1c8] sm:$0xff] %vm2987, %v2977
      %3046 = vst.msk [vmem:[%s224 + $0x1d0] sm:$0xff] %vm2987, %v2978
      %3047 = vst.msk [vmem:[%s224 + $0x1d8] sm:$0xff] %vm2987, %v2979
      %3048 = vst.msk [vmem:[%s224 + $0x1e0] sm:$0xff] %vm2987, %v2980
      %3049 = vst.msk [vmem:[%s224 + $0x1e8] sm:$0xff] %vm2987, %v2981
      %3050 = vst.msk [vmem:[%s224 + $0x1f0] sm:$0xff] %vm2987, %v2982
      %3051 = vst.msk [vmem:[%s224 + $0x1f8] sm:$0xff] %vm2987, %v2983
      %3052 = vst.msk [vmem:[%s224 + $0x200] sm:$0xff] %vm2987, %v2984
      %3053 = vst.msk [vmem:[%s224 + $0x208] sm:$0xff] %vm2987, %v2985
      %vm3054 = vcmask 516096
      %3055 = vst.msk [vmem:[%s224 + $0x210] sm:$0x1] %vm3054, %v2986
      %p3056 = scmp.lt.s32.totalorder %s16, 7
      %s3057 = scalar_select %p3056, %s16, 7
      %s3058 = smul.addr %s3057, 67
      %s3059 = smul.addr %s3058, 8
      %s3060 = scalar_lea.vmem %s5, %s3059
      // Predicated region
      $region41: #{metarn_forward.4} parent=39 // pred_check
        %p3061 = pneg %p144
      $region42: #{metarn_forward.4} parent=39 // pred_check_branch
        %3063 = sbr.rel (%p3061) target = $region44
      $region43: #{metarn_forward.4} parent=39 // pred_region
        _
      $region44: #{metarn_forward.4} parent=39 // pred_fallthru
        _
    $region40: #{metarn_forward.4} parent=5 // pred_fallthru
      _
    %p3064 = scmp.le.s32.totalorder 2, %s11
    // Predicated region
    $region45: #{metarn_forward.4} parent=5 // pred_check
      %p3065 = pneg %p3064
    $region46: #{metarn_forward.4} parent=5 // pred_check_branch
      %3067 = sbr.rel (%p3065) target = $region48
    $region47: #{metarn_forward.4} parent=5 // pred_region
      %s3068 = ssub.s32 %s11, 2
      // Predicated region
      $region49: #{metarn_forward.4} parent=47 // pred_check
        %p3069 = pneg %p150
      $region50: #{metarn_forward.4} parent=47 // pred_check_branch
        %3071 = sbr.rel (%p3069) target = $region52
      $region51: #{metarn_forward.4} parent=47 // pred_region
        %p3072 = scmp.lt.s32.totalorder %s17, 7
        %s3073 = scalar_select %p3072, %s17, 7
        %s3074 = smul.addr %s3073, 67
        %s3075 = smul.addr %s3074, 8
        %s3076 = scalar_lea.vmem %s5, %s3075
      $region52: #{metarn_forward.4} parent=47 // pred_fallthru
        _
    $region48: #{metarn_forward.4} parent=5 // pred_fallthru
      _
  $region6: #{metarn_forward.4} parent=0 // loop_footer
    %s15 = sadd.s32 1, %s11
  $region7: #{metarn_forward.4} parent=0 // loop_footer_branch
    %10 = sbr.rel target = $region3
  $region8: #{metarn_forward.4} parent=0 // loop_exit
    _

// kernel: tile.33
$region0: #{tile.33}
  #allocation0 [shape = 's32[1]{0}', space=sflag, size = 0x4, scoped, tag = 'scoped memory for tile.33']
  %s0 = inlined_call_operand.vmem [shape: f32[64], index: 0, kind: input, shape index: {}]
  %s1 = inlined_call_operand.vmem [shape: f32[9,64], index: 1, kind: output, shape index: {}]
  // Predicated region
  $region2: #{tile.33} parent=0 // pred_check
    _
  $region3: #{tile.33} parent=0 // pred_check_branch
    %3 = sbr.rel (0) target = $region5
  $region4: #{tile.33} parent=0 // pred_region
    _
  $region5: #{tile.33} parent=0 // pred_fallthru
    _
  %v4 = vld [vmem:[%s0] ss:$0 sm:$0xff]
  %5 = vst [vmem:[%s1] sm:$0xff] %v4
  %s6 = scalar_lea.vmem %s1, 8
  %7 = vst [vmem:[%s6] sm:$0xff] %v4

// kernel: tile.34
$region0: #{tile.34}
  %s0 = inlined_call_operand.vmem [shape: f32[9,64], index: 0, kind: input, shape index: {}]
  %s1 = inlined_call_operand.vmem [shape: f32[1,576], index: 1, kind: output, shape index: {}]
  $region1: #{tile.34} parent=0
    #allocation0 [shape = 'u8[20480]{0}', space=vmem, size = 0x5000, scoped, tag = 'scoped mem for output reshape']
    %v2 = vld [vmem:[%s0] ss:$2 sm:$0x1f]
    %vm3 = vcmask 523264
    %4 = vst.msk [vmem:[#allocation0] ss:$8 sm:$0xf] %vm3, %v2
    %s5 = scalar_lea.vmem [#allocation0], 28
    %6 = vst.msk [vmem:[%s5] sm:$0x10] %vm3, %v2
    %s7 = scalar_lea.vmem %s0, 1
    %v8 = vld [vmem:[%s7] ss:$2 sm:$0xf]
    %9 = vrot.lane.b32.xlu0 %v8, 64
    %v10 = vpop.permute.xlu0 %9
    %vm11 = vcmask 1048064
    %12 = vst.msk [vmem:[#allocation0] ss:$8 sm:$0xf] %vm11, %v10
    %s14 = sshllo.u32 0, 1
    %v16 = vld [vmem:[#allocation0] sm:%s14]
    %s17 = sshllo.u32 0, 1
    %18 = vst [vmem:[%s1] sm:%s17] %v16
    %s19 = scalar_lea.vmem [#allocation0], 8
    %v20 = vld [vmem:[%s19] sm:%s14]
    %s21 = sshllo.u32 0, 1
    %s22 = scalar_lea.vmem %s1, 1
    %23 = vst [vmem:[%s22] sm:%s21] %v20
    %s24 = scalar_lea.vmem [#allocation0], 16
    %v25 = vld [vmem:[%s24] sm:%s14]
    %s26 = sshllo.u32 0, 1
    %s27 = smul.addr 1, 2
    %s28 = scalar_lea.vmem %s1, %s27
    %29 = vst [vmem:[%s28] sm:%s26] %v25
    %s30 = scalar_lea.vmem [#allocation0], 24
    %v31 = vld [vmem:[%s30] sm:%s14]
    %s32 = sshllo.u32 0, 1
    %s33 = smul.addr 1, 3
    %s34 = scalar_lea.vmem %s1, %s33
    %35 = vst [vmem:[%s34] sm:%s32] %v31
    %s36 = scalar_lea.vmem [#allocation0], 32
    %v37 = vld [vmem:[%s36] sm:%s14]
    %s38 = sshllo.u32 0, 1
    %s39 = smul.addr 1, 4
    %s40 = scalar_lea.vmem %s1, %s39
    %41 = vst [vmem:[%s40] sm:%s38] %v37

// kernel: metarn_forward.5
$region0: #{metarn_forward.5}
  #allocation0 [shape = 'u32[]', space=smem, size = 0x4, offset = 0x4, fixed_abs, tag = 'smem constant byte address 0x4 - core index']
  #allocation1 [shape = 'u32[144,128]{1,0:T(1,128)}', space=vmem, size = 0x12000, scoped, tag = 'internal scratch']
  %s0 = inlined_call_operand.vmem [shape: bf16[8,416,576], index: 0, kind: input, shape index: {}]
  %s1 = inlined_call_operand.vmem [shape: bf16[576,64], index: 1, kind: input, shape index: {}]
  %s2 = inlined_call_operand.vmem [shape: f32[1,64], index: 2, kind: input, shape index: {}]
  %s3 = inlined_call_operand.vmem [shape: f32[1,576], index: 3, kind: input, shape index: {}]
  %s4 = inlined_call_operand.vmem [shape: f32[1,576], index: 4, kind: input, shape index: {}]
  %s5 = inlined_call_operand.vmem [shape: f32[8,100,64], index: 5, kind: output, shape index: {}]
  %s6 = sld [smem:[#allocation0]]
  $region53: #{metarn_forward.5} parent=0
    _
  %s8 = ssub.s32 1, %s6
  %s9 = scalar_select 0, %s8, %s6
  loop: start=0, step=1, limit=10
  $region2: #{metarn_forward.5} parent=0 // loop_pre_header
    _
  $region3: #{metarn_forward.5} parent=0 // loop_header
    %s11 = sphi 0, %s15
    %p12 = scmp.ge.s32.totalorder %s11, 10
    %s21 = sphi 0, %s23
    %s24 = sphi 0, %s21
    %s25 = sphi 0, %s24
    %s41 = sphi 0, %s25
    %s45 = sphi 0, %s45
    %s47 = sphi 0, %s45
    %s48 = sphi 0, %s47
    %s62 = sphi 0, %s48
    %s66 = sphi 0, %s66
    %s68 = sphi 0, %s66
    %s69 = sphi 0, %s68
    %s83 = sphi 0, %s69
    %s87 = sphi 0, %s87
    %s89 = sphi 0, %s87
    %s90 = sphi 0, %s89
    %s104 = sphi 0, %s90
    %s108 = sphi 0, %s108
    %s110 = sphi 0, %s108
    %s111 = sphi 0, %s110
    %s125 = sphi 0, %s111
    %s131 = sphi 0, %s133
    %s134 = sphi 0, %s131
    %s135 = sphi 0, %s134
    %s151 = sphi 0, %s135
  $region4: #{metarn_forward.5} parent=0 // loop_header_branch
    %14 = sbr.rel (%p12) target = $region8
  $region5: #{metarn_forward.5} parent=0 // loop_body
    %s16 = ssub.s32 %s11, 1
    %s17 = ssub.s32 %s11, 2
    %s18 = sadd.s32 %s11, 1
    %s19 = ssub.s32 %s11, %s18
    %p20 = scmp.eq.s32.totalorder %s19, 0
    %s22 = sadd.s32 %s21, 1
    %s23 = scalar_select %p20, %s21, %s22
    %p26 = pneg %p20
    %p27 = scmp.eq.s32.totalorder %s11, 7
    %p28 = por %p26, %p27
    %p29 = scmp.ne.s32.totalorder %s21, %s24
    %p30 = scmp.eq.s32.totalorder %s11, 0
    %p31 = por %p29, %p30
    %p32 = scmp.ne.s32.totalorder %s21, %s24
    %p33 = scmp.eq.s32.totalorder %s16, 7
    %p34 = por %p32, %p33
    %p35 = scmp.ne.s32.totalorder %s24, %s25
    %p36 = scmp.eq.s32.totalorder %s16, 0
    %p37 = por %p35, %p36
    %p38 = scmp.ne.s32.totalorder %s24, %s25
    %p39 = scmp.eq.s32.totalorder %s17, 7
    %p40 = por %p38, %p39
    %p42 = scmp.ne.s32.totalorder %s25, %s41
    %p43 = scmp.eq.s32.totalorder %s17, 0
    %p44 = por %p42, %p43
    %s46 = sadd.s32 %s45, 1
    %p49 = scmp.eq.s32.totalorder %s11, 7
    %p50 = scmp.ne.s32.totalorder %s45, %s47
    %p51 = scmp.eq.s32.totalorder %s11, 0
    %p52 = por %p50, %p51
    %p53 = scmp.ne.s32.totalorder %s45, %s47
    %p54 = scmp.eq.s32.totalorder %s16, 7
    %p55 = por %p53, %p54
    %p56 = scmp.ne.s32.totalorder %s47, %s48
    %p57 = scmp.eq.s32.totalorder %s16, 0
    %p58 = por %p56, %p57
    %p59 = scmp.ne.s32.totalorder %s47, %s48
    %p60 = scmp.eq.s32.totalorder %s17, 7
    %p61 = por %p59, %p60
    %p63 = scmp.ne.s32.totalorder %s48, %s62
    %p64 = scmp.eq.s32.totalorder %s17, 0
    %p65 = por %p63, %p64
    %s67 = sadd.s32 %s66, 1
    %p70 = scmp.eq.s32.totalorder %s11, 7
    %p71 = scmp.ne.s32.totalorder %s66, %s68
    %p72 = scmp.eq.s32.totalorder %s11, 0
    %p73 = por %p71, %p72
    %p74 = scmp.ne.s32.totalorder %s66, %s68
    %p75 = scmp.eq.s32.totalorder %s16, 7
    %p76 = por %p74, %p75
    %p77 = scmp.ne.s32.totalorder %s68, %s69
    %p78 = scmp.eq.s32.totalorder %s16, 0
    %p79 = por %p77, %p78
    %p80 = scmp.ne.s32.totalorder %s68, %s69
    %p81 = scmp.eq.s32.totalorder %s17, 7
    %p82 = por %p80, %p81
    %p84 = scmp.ne.s32.totalorder %s69, %s83
    %p85 = scmp.eq.s32.totalorder %s17, 0
    %p86 = por %p84, %p85
    %s88 = sadd.s32 %s87, 1
    %p91 = scmp.eq.s32.totalorder %s11, 7
    %p92 = scmp.ne.s32.totalorder %s87, %s89
    %p93 = scmp.eq.s32.totalorder %s11, 0
    %p94 = por %p92, %p93
    %p95 = scmp.ne.s32.totalorder %s87, %s89
    %p96 = scmp.eq.s32.totalorder %s16, 7
    %p97 = por %p95, %p96
    %p98 = scmp.ne.s32.totalorder %s89, %s90
    %p99 = scmp.eq.s32.totalorder %s16, 0
    %p100 = por %p98, %p99
    %p101 = scmp.ne.s32.totalorder %s89, %s90
    %p102 = scmp.eq.s32.totalorder %s17, 7
    %p103 = por %p101, %p102
    %p105 = scmp.ne.s32.totalorder %s90, %s104
    %p106 = scmp.eq.s32.totalorder %s17, 0
    %p107 = por %p105, %p106
    %s109 = sadd.s32 %s108, 1
    %p112 = scmp.eq.s32.totalorder %s11, 7
    %p113 = scmp.ne.s32.totalorder %s108, %s110
    %p114 = scmp.eq.s32.totalorder %s11, 0
    %p115 = por %p113, %p114
    %p116 = scmp.ne.s32.totalorder %s108, %s110
    %p117 = scmp.eq.s32.totalorder %s16, 7
    %p118 = por %p116, %p117
    %p119 = scmp.ne.s32.totalorder %s110, %s111
    %p120 = scmp.eq.s32.totalorder %s16, 0
    %p121 = por %p119, %p120
    %p122 = scmp.ne.s32.totalorder %s110, %s111
    %p123 = scmp.eq.s32.totalorder %s17, 7
    %p124 = por %p122, %p123
    %p126 = scmp.ne.s32.totalorder %s111, %s125
    %p127 = scmp.eq.s32.totalorder %s17, 0
    %p128 = por %p126, %p127
    %s129 = ssub.s32 %s11, %s18
    %p130 = scmp.eq.s32.totalorder %s129, 0
    %s132 = sadd.s32 %s131, 1
    %s133 = scalar_select %p130, %s131, %s132
    %p136 = pneg %p130
    %p137 = scmp.eq.s32.totalorder %s11, 7
    %p138 = por %p136, %p137
    %p139 = scmp.ne.s32.totalorder %s131, %s134
    %p140 = scmp.eq.s32.totalorder %s11, 0
    %p141 = por %p139, %p140
    %p142 = scmp.ne.s32.totalorder %s131, %s134
    %p143 = scmp.eq.s32.totalorder %s16, 7
    %p144 = por %p142, %p143
    %p145 = scmp.ne.s32.totalorder %s134, %s135
    %p146 = scmp.eq.s32.totalorder %s16, 0
    %p147 = por %p145, %p146
    %p148 = scmp.ne.s32.totalorder %s134, %s135
    %p149 = scmp.eq.s32.totalorder %s17, 7
    %p150 = por %p148, %p149
    %p152 = scmp.ne.s32.totalorder %s135, %s151
    %p153 = scmp.eq.s32.totalorder %s17, 0
    %p154 = por %p152, %p153
    %p155 = scmp.le.s32.totalorder 1, %s11
    %p156 = scmp.lt.s32.totalorder %s11, 9
    %p157 = pnand %p155, %p156
    %p158 = pneg %p157
    // Predicated region
    $region9: #{metarn_forward.5} parent=5 // pred_check
      _
    $region10: #{metarn_forward.5} parent=5 // pred_check_branch
      %160 = sbr.rel (%p157) target = $region12
    $region11: #{metarn_forward.5} parent=5 // pred_region
      %s161 = ssub.s32 %s11, 1
      // Predicated region
      $region13: #{metarn_forward.5} parent=11 // pred_check
        %p162 = pneg %p58
      $region14: #{metarn_forward.5} parent=11 // pred_check_branch
        %164 = sbr.rel (%p162) target = $region16
      $region15: #{metarn_forward.5} parent=11 // pred_region
        _
      $region16: #{metarn_forward.5} parent=11 // pred_fallthru
        _
      // Predicated region
      $region17: #{metarn_forward.5} parent=11 // pred_check
        %p165 = pneg %p79
      $region18: #{metarn_forward.5} parent=11 // pred_check_branch
        %167 = sbr.rel (%p165) target = $region20
      $region19: #{metarn_forward.5} parent=11 // pred_region
        _
      $region20: #{metarn_forward.5} parent=11 // pred_fallthru
        _
      // Predicated region
      $region21: #{metarn_forward.5} parent=11 // pred_check
        %p168 = pneg %p100
      $region22: #{metarn_forward.5} parent=11 // pred_check_branch
        %170 = sbr.rel (%p168) target = $region24
      $region23: #{metarn_forward.5} parent=11 // pred_region
        _
      $region24: #{metarn_forward.5} parent=11 // pred_fallthru
        _
      // Predicated region
      $region25: #{metarn_forward.5} parent=11 // pred_check
        %p171 = pneg %p121
      $region26: #{metarn_forward.5} parent=11 // pred_check_branch
        %173 = sbr.rel (%p171) target = $region28
      $region27: #{metarn_forward.5} parent=11 // pred_region
        _
      $region28: #{metarn_forward.5} parent=11 // pred_fallthru
        _
    $region12: #{metarn_forward.5} parent=5 // pred_fallthru
      _
    %p174 = scmp.lt.s32.totalorder %s11, 8
    // Predicated region
    $region29: #{metarn_forward.5} parent=5 // pred_check
      %p175 = pneg %p174
    $region30: #{metarn_forward.5} parent=5 // pred_check_branch
      %177 = sbr.rel (%p175) target = $region32
    $region31: #{metarn_forward.5} parent=5 // pred_region
      // Predicated region
      $region33: #{metarn_forward.5} parent=31 // pred_check
        %p178 = pneg %p31
      $region34: #{metarn_forward.5} parent=31 // pred_check_branch
        %180 = sbr.rel (%p178) target = $region36
      $region35: #{metarn_forward.5} parent=31 // pred_region
        %p181 = scmp.lt.s32.totalorder %s11, 7
        %s182 = scalar_select %p181, %s11, 7
        %s183 = smul.addr %s182, 260
        %s184 = smul.addr %s183, 4
        %s185 = scalar_lea.vmem %s0, %s184
      $region36: #{metarn_forward.5} parent=31 // pred_fallthru
        _
    $region32: #{metarn_forward.5} parent=5 // pred_fallthru
      _
    %p186 = scmp.le.s32.totalorder 1, %s11
    %p187 = scmp.lt.s32.totalorder %s11, 9
    %p188 = pnand %p186, %p187
    %p189 = pneg %p188
    // Predicated region
    $region37: #{metarn_forward.5} parent=5 // pred_check
      _
    $region38: #{metarn_forward.5} parent=5 // pred_check_branch
      %191 = sbr.rel (%p188) target = $region40
    $region39: #{metarn_forward.5} parent=5 // pred_region
      %s192 = ssub.s32 %s11, 1
      %p193 = scmp.lt.s32.totalorder %s16, 7
      %s194 = scalar_select %p193, %s16, 7
      %s195 = smul.addr %s194, 260
      %s196 = smul.addr %s195, 4
      %s197 = scalar_lea.vmem %s0, %s196
      %p198 = pneg %p37
      %p199 = pneg %p34
      %p200 = pneg %p58
      %p201 = pneg %p55
      %p202 = pneg %p79
      %p203 = pneg %p76
      %p204 = pneg %p100
      %p205 = pneg %p97
      %p206 = pneg %p121
      %p207 = pneg %p118
      %p208 = pneg %p147
      %p209 = pneg %p144
      %p210 = scmp.lt.s32.totalorder %s16, 7
      %s211 = scalar_select %p210, %s16, 7
      %s212 = smul.addr %s211, 13
      %s213 = smul.addr %s212, 8
      %s214 = scalar_lea.vmem %s5, %s213
      %p215 = scmp.lt.s32.totalorder %s16, 7
      %s216 = scalar_select %p215, %s16, 7
      %s217 = smul.addr %s216, 260
      %s218 = smul.addr %s217, 4
      %s219 = scalar_lea.vmem %s0, %s218
      %p220 = scmp.lt.s32.totalorder %s16, 7
      %s221 = scalar_select %p220, %s16, 7
      %s222 = smul.addr %s221, 13
      %s223 = smul.addr %s222, 8
      %s224 = scalar_lea.vmem %s5, %s223
      %v226 = vld [vmem:[%s219] sm:$0xff]
      %v227 = vld [vmem:[%s219 + $0x8] sm:$0xff]
      %v228 = vld [vmem:[%s219 + $0x10] sm:$0xf]
      %v229 = vld [vmem:[%s219 + $0x14] sm:$0xff]
      %v230 = vld [vmem:[%s219 + $0x1c] sm:$0xff]
      %v231 = vld [vmem:[%s219 + $0x24] sm:$0xf]
      %v232 = vld [vmem:[%s219 + $0x28] sm:$0xff]
      %v233 = vld [vmem:[%s219 + $0x30] sm:$0xff]
      %v234 = vld [vmem:[%s219 + $0x38] sm:$0xf]
      %v235 = vld [vmem:[%s219 + $0x3c] sm:$0xff]
      %v236 = vld [vmem:[%s219 + $0x44] sm:$0xff]
      %v237 = vld [vmem:[%s219 + $0x4c] sm:$0xf]
      %v238 = vld [vmem:[%s219 + $0x50] sm:$0xff]
      %v239 = vld [vmem:[%s219 + $0x58] sm:$0xff]
      %v240 = vld [vmem:[%s219 + $0x60] sm:$0xf]
      %v241 = vld [vmem:[%s219 + $0x64] sm:$0xff]
      %v242 = vld [vmem:[%s219 + $0x6c] sm:$0xff]
      %v243 = vld [vmem:[%s219 + $0x74] sm:$0xf]
      %v244 = vld [vmem:[%s219 + $0x78] sm:$0xff]
      %v245 = vld [vmem:[%s219 + $0x80] sm:$0xff]
      %v246 = vld [vmem:[%s219 + $0x88] sm:$0xf]
      %v247 = vld [vmem:[%s219 + $0x8c] sm:$0xff]
      %v248 = vld [vmem:[%s219 + $0x94] sm:$0xff]
      %v249 = vld [vmem:[%s219 + $0x9c] sm:$0xf]
      %v250 = vld [vmem:[%s219 + $0xa0] sm:$0xff]
      %v251 = vld [vmem:[%s219 + $0xa8] sm:$0xff]
      %v252 = vld [vmem:[%s219 + $0xb0] sm:$0xf]
      %v253 = vld [vmem:[%s219 + $0xb4] sm:$0xff]
      %v254 = vld [vmem:[%s219 + $0xbc] sm:$0xff]
      %v255 = vld [vmem:[%s219 + $0xc4] sm:$0xf]
      %v256 = vld [vmem:[%s219 + $0xc8] sm:$0xff]
      %v257 = vld [vmem:[%s219 + $0xd0] sm:$0xff]
      %v258 = vld [vmem:[%s219 + $0xd8] sm:$0xf]
      %v259 = vld [vmem:[%s219 + $0xdc] sm:$0xff]
      %v260 = vld [vmem:[%s219 + $0xe4] sm:$0xff]
      %v261 = vld [vmem:[%s219 + $0xec] sm:$0xf]
      %v262 = vld [vmem:[%s219 + $0xf0] sm:$0xff]
      %v263 = vld [vmem:[%s219 + $0xf8] sm:$0xff]
      %v264 = vld [vmem:[%s219 + $0x100] sm:$0xf]
      %v265 = vld [vmem:[%s219 + $0x104] sm:$0xff]
      %v266 = vld [vmem:[%s219 + $0x10c] sm:$0xff]
      %v267 = vld [vmem:[%s219 + $0x114] sm:$0xf]
      %v268 = vld [vmem:[%s219 + $0x118] sm:$0xff]
      %v269 = vld [vmem:[%s219 + $0x120] sm:$0xff]
      %v270 = vld [vmem:[%s219 + $0x128] sm:$0xf]
      %v271 = vld [vmem:[%s219 + $0x12c] sm:$0xff]
      %v272 = vld [vmem:[%s219 + $0x134] sm:$0xff]
      %v273 = vld [vmem:[%s219 + $0x13c] sm:$0xf]
      %v274 = vld [vmem:[%s219 + $0x140] sm:$0xff]
      %v275 = vld [vmem:[%s219 + $0x148] sm:$0xff]
      %v276 = vld [vmem:[%s219 + $0x150] sm:$0xf]
      %v277 = vld [vmem:[%s219 + $0x154] sm:$0xff]
      %v278 = vld [vmem:[%s219 + $0x15c] sm:$0xff]
      %v279 = vld [vmem:[%s219 + $0x164] sm:$0xf]
      %v280 = vld [vmem:[%s219 + $0x168] sm:$0xff]
      %v281 = vld [vmem:[%s219 + $0x170] sm:$0xff]
      %v282 = vld [vmem:[%s219 + $0x178] sm:$0xf]
      %v283 = vld [vmem:[%s219 + $0x17c] sm:$0xff]
      %v284 = vld [vmem:[%s219 + $0x184] sm:$0xff]
      %v285 = vld [vmem:[%s219 + $0x18c] sm:$0xf]
      %v286 = vld [vmem:[%s219 + $0x190] sm:$0xff]
      %v287 = vld [vmem:[%s219 + $0x198] sm:$0xff]
      %v288 = vld [vmem:[%s219 + $0x1a0] sm:$0xf]
      %v289 = vld [vmem:[%s219 + $0x1a4] sm:$0xff]
      %v290 = vld [vmem:[%s219 + $0x1ac] sm:$0xff]
      %v291 = vld [vmem:[%s219 + $0x1b4] sm:$0xf]
      %v292 = vld [vmem:[%s219 + $0x1b8] sm:$0xff]
      %v293 = vld [vmem:[%s219 + $0x1c0] sm:$0xff]
      %v294 = vld [vmem:[%s219 + $0x1c8] sm:$0xf]
      %v295 = vld [vmem:[%s219 + $0x1cc] sm:$0xff]
      %v296 = vld [vmem:[%s219 + $0x1d4] sm:$0xff]
      %v297 = vld [vmem:[%s219 + $0x1dc] sm:$0xf]
      %v298 = vld [vmem:[%s219 + $0x1e0] sm:$0xff]
      %v299 = vld [vmem:[%s219 + $0x1e8] sm:$0xff]
      %v300 = vld [vmem:[%s219 + $0x1f0] sm:$0xf]
      %v301 = vld [vmem:[%s219 + $0x1f4] sm:$0xff]
      %v302 = vld [vmem:[%s219 + $0x1fc] sm:$0xff]
      %v303 = vld [vmem:[%s219 + $0x204] sm:$0xf]
      %v304 = vld [vmem:[%s219 + $0x208] sm:$0xff]
      %v305 = vld [vmem:[%s219 + $0x210] sm:$0xff]
      %v306 = vld [vmem:[%s219 + $0x218] sm:$0xf]
      %v307 = vld [vmem:[%s219 + $0x21c] sm:$0xff]
      %v308 = vld [vmem:[%s219 + $0x224] sm:$0xff]
      %v309 = vld [vmem:[%s219 + $0x22c] sm:$0xf]
      %v310 = vld [vmem:[%s219 + $0x230] sm:$0xff]
      %v311 = vld [vmem:[%s219 + $0x238] sm:$0xff]
      %v312 = vld [vmem:[%s219 + $0x240] sm:$0xf]
      %v313 = vld [vmem:[%s219 + $0x244] sm:$0xff]
      %v314 = vld [vmem:[%s219 + $0x24c] sm:$0xff]
      %v315 = vld [vmem:[%s219 + $0x254] sm:$0xf]
      %v316 = vld [vmem:[%s219 + $0x258] sm:$0xff]
      %v317 = vld [vmem:[%s219 + $0x260] sm:$0xff]
      %v318 = vld [vmem:[%s219 + $0x268] sm:$0xf]
      %v319 = vld [vmem:[%s219 + $0x26c] sm:$0xff]
      %v320 = vld [vmem:[%s219 + $0x274] sm:$0xff]
      %v321 = vld [vmem:[%s219 + $0x27c] sm:$0xf]
      %v322 = vld [vmem:[%s219 + $0x280] sm:$0xff]
      %v323 = vld [vmem:[%s219 + $0x288] sm:$0xff]
      %v324 = vld [vmem:[%s219 + $0x290] sm:$0xf]
      %v325 = vld [vmem:[%s219 + $0x294] sm:$0xff]
      %v326 = vld [vmem:[%s219 + $0x29c] sm:$0xff]
      %v327 = vld [vmem:[%s219 + $0x2a4] sm:$0xf]
      %v328 = vld [vmem:[%s219 + $0x2a8] sm:$0xff]
      %v329 = vld [vmem:[%s219 + $0x2b0] sm:$0xff]
      %v330 = vld [vmem:[%s219 + $0x2b8] sm:$0xf]
      %v331 = vld [vmem:[%s219 + $0x2bc] sm:$0xff]
      %v332 = vld [vmem:[%s219 + $0x2c4] sm:$0xff]
      %v333 = vld [vmem:[%s219 + $0x2cc] sm:$0xf]
      %v334 = vld [vmem:[%s219 + $0x2d0] sm:$0xff]
      %v335 = vld [vmem:[%s219 + $0x2d8] sm:$0xff]
      %v336 = vld [vmem:[%s219 + $0x2e0] sm:$0xf]
      %v337 = vld [vmem:[%s219 + $0x2e4] sm:$0xff]
      %v338 = vld [vmem:[%s219 + $0x2ec] sm:$0xff]
      %v339 = vld [vmem:[%s219 + $0x2f4] sm:$0xf]
      %v340 = vld [vmem:[%s219 + $0x2f8] sm:$0xff]
      %v341 = vld [vmem:[%s219 + $0x300] sm:$0xff]
      %v342 = vld [vmem:[%s219 + $0x308] sm:$0xf]
      %v343 = vld [vmem:[%s219 + $0x30c] sm:$0xff]
      %v344 = vld [vmem:[%s219 + $0x314] sm:$0xff]
      %v345 = vld [vmem:[%s219 + $0x31c] sm:$0xf]
      %v346 = vld [vmem:[%s219 + $0x320] sm:$0xff]
      %v347 = vld [vmem:[%s219 + $0x328] sm:$0xff]
      %v348 = vld [vmem:[%s219 + $0x330] sm:$0xf]
      %v349 = vld [vmem:[%s219 + $0x334] sm:$0xff]
      %v350 = vld [vmem:[%s219 + $0x33c] sm:$0xff]
      %v351 = vld [vmem:[%s219 + $0x344] sm:$0xf]
      %v352 = vld [vmem:[%s219 + $0x348] sm:$0xff]
      %v353 = vld [vmem:[%s219 + $0x350] sm:$0xff]
      %v354 = vld [vmem:[%s219 + $0x358] sm:$0xf]
      %v355 = vld [vmem:[%s219 + $0x35c] sm:$0xff]
      %v356 = vld [vmem:[%s219 + $0x364] sm:$0xff]
      %v357 = vld [vmem:[%s219 + $0x36c] sm:$0xf]
      %v358 = vld [vmem:[%s219 + $0x370] sm:$0xff]
      %v359 = vld [vmem:[%s219 + $0x378] sm:$0xff]
      %v360 = vld [vmem:[%s219 + $0x380] sm:$0xf]
      %v361 = vld [vmem:[%s219 + $0x384] sm:$0xff]
      %v362 = vld [vmem:[%s219 + $0x38c] sm:$0xff]
      %v363 = vld [vmem:[%s219 + $0x394] sm:$0xf]
      %v364 = vld [vmem:[%s219 + $0x398] sm:$0xff]
      %v365 = vld [vmem:[%s219 + $0x3a0] sm:$0xff]
      %v366 = vld [vmem:[%s219 + $0x3a8] sm:$0xf]
      %v367 = vld [vmem:[%s219 + $0x3ac] sm:$0xff]
      %v368 = vld [vmem:[%s219 + $0x3b4] sm:$0xff]
      %v369 = vld [vmem:[%s219 + $0x3bc] sm:$0xf]
      %v370 = vld [vmem:[%s219 + $0x3c0] sm:$0xff]
      %v371 = vld [vmem:[%s219 + $0x3c8] sm:$0xff]
      %v372 = vld [vmem:[%s219 + $0x3d0] sm:$0xf]
      %v373 = vld [vmem:[%s219 + $0x3d4] sm:$0xff]
      %v374 = vld [vmem:[%s219 + $0x3dc] sm:$0xff]
      %v375 = vld [vmem:[%s219 + $0x3e4] sm:$0xf]
      %v376 = vld [vmem:[%s219 + $0x3e8] sm:$0xff]
      %v377 = vld [vmem:[%s219 + $0x3f0] sm:$0xff]
      %v378 = vld [vmem:[%s219 + $0x3f8] sm:$0xf]
      %v379 = vld [vmem:[%s219 + $0x3fc] sm:$0xff]
      %v380 = vld [vmem:[%s219 + $0x404] sm:$0xff]
      %v381 = vld [vmem:[%s219 + $0x40c] sm:$0xf]
      %v382 = vunpack.c.l.bf16 %v226
      %v383 = vunpack.c.h.bf16 %v226
      %v384 = vunpack.c.l.bf16 %v227
      %v385 = vunpack.c.h.bf16 %v227
      %v386 = vunpack.c.l.bf16 %v228
      %v387 = vunpack.c.l.bf16 %v229
      %v388 = vunpack.c.h.bf16 %v229
      %v389 = vunpack.c.l.bf16 %v230
      %v390 = vunpack.c.h.bf16 %v230
      %v391 = vunpack.c.l.bf16 %v231
      %v392 = vunpack.c.l.bf16 %v232
      %v393 = vunpack.c.h.bf16 %v232
      %v394 = vunpack.c.l.bf16 %v233
      %v395 = vunpack.c.h.bf16 %v233
      %v396 = vunpack.c.l.bf16 %v234
      %v397 = vunpack.c.l.bf16 %v235
      %v398 = vunpack.c.h.bf16 %v235
      %v399 = vunpack.c.l.bf16 %v236
      %v400 = vunpack.c.h.bf16 %v236
      %v401 = vunpack.c.l.bf16 %v237
      %v402 = vunpack.c.l.bf16 %v238
      %v403 = vunpack.c.h.bf16 %v238
      %v404 = vunpack.c.l.bf16 %v239
      %v405 = vunpack.c.h.bf16 %v239
      %v406 = vunpack.c.l.bf16 %v240
      %v407 = vunpack.c.l.bf16 %v241
      %v408 = vunpack.c.h.bf16 %v241
      %v409 = vunpack.c.l.bf16 %v242
      %v410 = vunpack.c.h.bf16 %v242
      %v411 = vunpack.c.l.bf16 %v243
      %v412 = vunpack.c.l.bf16 %v244
      %v413 = vunpack.c.h.bf16 %v244
      %v414 = vunpack.c.l.bf16 %v245
      %v415 = vunpack.c.h.bf16 %v245
      %v416 = vunpack.c.l.bf16 %v246
      %v417 = vunpack.c.l.bf16 %v247
      %v418 = vunpack.c.h.bf16 %v247
      %v419 = vunpack.c.l.bf16 %v248
      %v420 = vunpack.c.h.bf16 %v248
      %v421 = vunpack.c.l.bf16 %v249
      %v422 = vunpack.c.l.bf16 %v250
      %v423 = vunpack.c.h.bf16 %v250
      %v424 = vunpack.c.l.bf16 %v251
      %v425 = vunpack.c.h.bf16 %v251
      %v426 = vunpack.c.l.bf16 %v252
      %v427 = vunpack.c.l.bf16 %v253
      %v428 = vunpack.c.h.bf16 %v253
      %v429 = vunpack.c.l.bf16 %v254
      %v430 = vunpack.c.h.bf16 %v254
      %v431 = vunpack.c.l.bf16 %v255
      %v432 = vunpack.c.l.bf16 %v256
      %v433 = vunpack.c.h.bf16 %v256
      %v434 = vunpack.c.l.bf16 %v257
      %v435 = vunpack.c.h.bf16 %v257
      %v436 = vunpack.c.l.bf16 %v258
      %v437 = vunpack.c.l.bf16 %v259
      %v438 = vunpack.c.h.bf16 %v259
      %v439 = vunpack.c.l.bf16 %v260
      %v440 = vunpack.c.h.bf16 %v260
      %v441 = vunpack.c.l.bf16 %v261
      %v442 = vunpack.c.l.bf16 %v262
      %v443 = vunpack.c.h.bf16 %v262
      %v444 = vunpack.c.l.bf16 %v263
      %v445 = vunpack.c.h.bf16 %v263
      %v446 = vunpack.c.l.bf16 %v264
      %v447 = vunpack.c.l.bf16 %v265
      %v448 = vunpack.c.h.bf16 %v265
      %v449 = vunpack.c.l.bf16 %v266
      %v450 = vunpack.c.h.bf16 %v266
      %v451 = vunpack.c.l.bf16 %v267
      %v452 = vunpack.c.l.bf16 %v268
      %v453 = vunpack.c.h.bf16 %v268
      %v454 = vunpack.c.l.bf16 %v269
      %v455 = vunpack.c.h.bf16 %v269
      %v456 = vunpack.c.l.bf16 %v270
      %v457 = vunpack.c.l.bf16 %v271
      %v458 = vunpack.c.h.bf16 %v271
      %v459 = vunpack.c.l.bf16 %v272
      %v460 = vunpack.c.h.bf16 %v272
      %v461 = vunpack.c.l.bf16 %v273
      %v462 = vunpack.c.l.bf16 %v274
      %v463 = vunpack.c.h.bf16 %v274
      %v464 = vunpack.c.l.bf16 %v275
      %v465 = vunpack.c.h.bf16 %v275
      %v466 = vunpack.c.l.bf16 %v276
      %v467 = vunpack.c.l.bf16 %v277
      %v468 = vunpack.c.h.bf16 %v277
      %v469 = vunpack.c.l.bf16 %v278
      %v470 = vunpack.c.h.bf16 %v278
      %v471 = vunpack.c.l.bf16 %v279
      %v472 = vunpack.c.l.bf16 %v280
      %v473 = vunpack.c.h.bf16 %v280
      %v474 = vunpack.c.l.bf16 %v281
      %v475 = vunpack.c.h.bf16 %v281
      %v476 = vunpack.c.l.bf16 %v282
      %v477 = vunpack.c.l.bf16 %v283
      %v478 = vunpack.c.h.bf16 %v283
      %v479 = vunpack.c.l.bf16 %v284
      %v480 = vunpack.c.h.bf16 %v284
      %v481 = vunpack.c.l.bf16 %v285
      %v482 = vunpack.c.l.bf16 %v286
      %v483 = vunpack.c.h.bf16 %v286
      %v484 = vunpack.c.l.bf16 %v287
      %v485 = vunpack.c.h.bf16 %v287
      %v486 = vunpack.c.l.bf16 %v288
      %v487 = vunpack.c.l.bf16 %v289
      %v488 = vunpack.c.h.bf16 %v289
      %v489 = vunpack.c.l.bf16 %v290
      %v490 = vunpack.c.h.bf16 %v290
      %v491 = vunpack.c.l.bf16 %v291
      %v492 = vunpack.c.l.bf16 %v292
      %v493 = vunpack.c.h.bf16 %v292
      %v494 = vunpack.c.l.bf16 %v293
      %v495 = vunpack.c.h.bf16 %v293
      %v496 = vunpack.c.l.bf16 %v294
      %v497 = vunpack.c.l.bf16 %v295
      %v498 = vunpack.c.h.bf16 %v295
      %v499 = vunpack.c.l.bf16 %v296
      %v500 = vunpack.c.h.bf16 %v296
      %v501 = vunpack.c.l.bf16 %v297
      %v502 = vunpack.c.l.bf16 %v298
      %v503 = vunpack.c.h.bf16 %v298
      %v504 = vunpack.c.l.bf16 %v299
      %v505 = vunpack.c.h.bf16 %v299
      %v506 = vunpack.c.l.bf16 %v300
      %v507 = vunpack.c.l.bf16 %v301
      %v508 = vunpack.c.h.bf16 %v301
      %v509 = vunpack.c.l.bf16 %v302
      %v510 = vunpack.c.h.bf16 %v302
      %v511 = vunpack.c.l.bf16 %v303
      %v512 = vunpack.c.l.bf16 %v304
      %v513 = vunpack.c.h.bf16 %v304
      %v514 = vunpack.c.l.bf16 %v305
      %v515 = vunpack.c.h.bf16 %v305
      %v516 = vunpack.c.l.bf16 %v306
      %v517 = vunpack.c.l.bf16 %v307
      %v518 = vunpack.c.h.bf16 %v307
      %v519 = vunpack.c.l.bf16 %v308
      %v520 = vunpack.c.h.bf16 %v308
      %v521 = vunpack.c.l.bf16 %v309
      %v522 = vunpack.c.l.bf16 %v310
      %v523 = vunpack.c.h.bf16 %v310
      %v524 = vunpack.c.l.bf16 %v311
      %v525 = vunpack.c.h.bf16 %v311
      %v526 = vunpack.c.l.bf16 %v312
      %v527 = vunpack.c.l.bf16 %v313
      %v528 = vunpack.c.h.bf16 %v313
      %v529 = vunpack.c.l.bf16 %v314
      %v530 = vunpack.c.h.bf16 %v314
      %v531 = vunpack.c.l.bf16 %v315
      %v532 = vunpack.c.l.bf16 %v316
      %v533 = vunpack.c.h.bf16 %v316
      %v534 = vunpack.c.l.bf16 %v317
      %v535 = vunpack.c.h.bf16 %v317
      %v536 = vunpack.c.l.bf16 %v318
      %v537 = vunpack.c.l.bf16 %v319
      %v538 = vunpack.c.h.bf16 %v319
      %v539 = vunpack.c.l.bf16 %v320
      %v540 = vunpack.c.h.bf16 %v320
      %v541 = vunpack.c.l.bf16 %v321
      %v542 = vunpack.c.l.bf16 %v322
      %v543 = vunpack.c.h.bf16 %v322
      %v544 = vunpack.c.l.bf16 %v323
      %v545 = vunpack.c.h.bf16 %v323
      %v546 = vunpack.c.l.bf16 %v324
      %v547 = vunpack.c.l.bf16 %v325
      %v548 = vunpack.c.h.bf16 %v325
      %v549 = vunpack.c.l.bf16 %v326
      %v550 = vunpack.c.h.bf16 %v326
      %v551 = vunpack.c.l.bf16 %v327
      %v552 = vunpack.c.l.bf16 %v328
      %v553 = vunpack.c.h.bf16 %v328
      %v554 = vunpack.c.l.bf16 %v329
      %v555 = vunpack.c.h.bf16 %v329
      %v556 = vunpack.c.l.bf16 %v330
      %v557 = vunpack.c.l.bf16 %v331
      %v558 = vunpack.c.h.bf16 %v331
      %v559 = vunpack.c.l.bf16 %v332
      %v560 = vunpack.c.h.bf16 %v332
      %v561 = vunpack.c.l.bf16 %v333
      %v562 = vunpack.c.l.bf16 %v334
      %v563 = vunpack.c.h.bf16 %v334
      %v564 = vunpack.c.l.bf16 %v335
      %v565 = vunpack.c.h.bf16 %v335
      %v566 = vunpack.c.l.bf16 %v336
      %v567 = vunpack.c.l.bf16 %v337
      %v568 = vunpack.c.h.bf16 %v337
      %v569 = vunpack.c.l.bf16 %v338
      %v570 = vunpack.c.h.bf16 %v338
      %v571 = vunpack.c.l.bf16 %v339
      %v572 = vunpack.c.l.bf16 %v340
      %v573 = vunpack.c.h.bf16 %v340
      %v574 = vunpack.c.l.bf16 %v341
      %v575 = vunpack.c.h.bf16 %v341
      %v576 = vunpack.c.l.bf16 %v342
      %v577 = vunpack.c.l.bf16 %v343
      %v578 = vunpack.c.h.bf16 %v343
      %v579 = vunpack.c.l.bf16 %v344
      %v580 = vunpack.c.h.bf16 %v344
      %v581 = vunpack.c.l.bf16 %v345
      %v582 = vunpack.c.l.bf16 %v346
      %v583 = vunpack.c.h.bf16 %v346
      %v584 = vunpack.c.l.bf16 %v347
      %v585 = vunpack.c.h.bf16 %v347
      %v586 = vunpack.c.l.bf16 %v348
      %v587 = vunpack.c.l.bf16 %v349
      %v588 = vunpack.c.h.bf16 %v349
      %v589 = vunpack.c.l.bf16 %v350
      %v590 = vunpack.c.h.bf16 %v350
      %v591 = vunpack.c.l.bf16 %v351
      %v592 = vunpack.c.l.bf16 %v352
      %v593 = vunpack.c.h.bf16 %v352
      %v594 = vunpack.c.l.bf16 %v353
      %v595 = vunpack.c.h.bf16 %v353
      %v596 = vunpack.c.l.bf16 %v354
      %v597 = vunpack.c.l.bf16 %v355
      %v598 = vunpack.c.h.bf16 %v355
      %v599 = vunpack.c.l.bf16 %v356
      %v600 = vunpack.c.h.bf16 %v356
      %v601 = vunpack.c.l.bf16 %v357
      %v602 = vunpack.c.l.bf16 %v358
      %v603 = vunpack.c.h.bf16 %v358
      %v604 = vunpack.c.l.bf16 %v359
      %v605 = vunpack.c.h.bf16 %v359
      %v606 = vunpack.c.l.bf16 %v360
      %v607 = vunpack.c.l.bf16 %v361
      %v608 = vunpack.c.h.bf16 %v361
      %v609 = vunpack.c.l.bf16 %v362
      %v610 = vunpack.c.h.bf16 %v362
      %v611 = vunpack.c.l.bf16 %v363
      %v612 = vunpack.c.l.bf16 %v364
      %v613 = vunpack.c.h.bf16 %v364
      %v614 = vunpack.c.l.bf16 %v365
      %v615 = vunpack.c.h.bf16 %v365
      %v616 = vunpack.c.l.bf16 %v366
      %v617 = vunpack.c.l.bf16 %v367
      %v618 = vunpack.c.h.bf16 %v367
      %v619 = vunpack.c.l.bf16 %v368
      %v620 = vunpack.c.h.bf16 %v368
      %v621 = vunpack.c.l.bf16 %v369
      %v622 = vunpack.c.l.bf16 %v370
      %v623 = vunpack.c.h.bf16 %v370
      %v624 = vunpack.c.l.bf16 %v371
      %v625 = vunpack.c.h.bf16 %v371
      %v626 = vunpack.c.l.bf16 %v372
      %v627 = vunpack.c.l.bf16 %v373
      %v628 = vunpack.c.h.bf16 %v373
      %v629 = vunpack.c.l.bf16 %v374
      %v630 = vunpack.c.h.bf16 %v374
      %v631 = vunpack.c.l.bf16 %v375
      %v632 = vunpack.c.l.bf16 %v376
      %v633 = vunpack.c.h.bf16 %v376
      %v634 = vunpack.c.l.bf16 %v377
      %v635 = vunpack.c.h.bf16 %v377
      %v636 = vunpack.c.l.bf16 %v378
      %v637 = vunpack.c.l.bf16 %v379
      %v638 = vunpack.c.h.bf16 %v379
      %v639 = vunpack.c.l.bf16 %v380
      %v640 = vunpack.c.h.bf16 %v380
      %v641 = vunpack.c.l.bf16 %v381
      %v642 = vld [vmem:[%s3] sm:$0x1f]
      %v644 = vlaneseq
      %v645 = vshrl.u32 %v644, 7
      %v646 = vsub.s32 0, %v645
      %v647 = vrot.slane %v642, %v646
      %v648 = vlaneseq
      %v649 = vshrl.u32 %v648, 7
      %v650 = vsub.s32 1, %v649
      %v651 = vrot.slane %v642, %v650
      %v652 = vlaneseq
      %v653 = vshrl.u32 %v652, 7
      %v654 = vsub.s32 2, %v653
      %v655 = vrot.slane %v642, %v654
      %v656 = vlaneseq
      %v657 = vshrl.u32 %v656, 7
      %v658 = vsub.s32 3, %v657
      %v659 = vrot.slane %v642, %v658
      %v660 = vlaneseq
      %v661 = vshrl.u32 %v660, 7
      %v662 = vsub.s32 4, %v661
      %v663 = vrot.slane %v642, %v662
      %v669 = vmul.f32 %v382, %v647
      %v670 = vmul.f32 %v383, %v651
      %v671 = vmul.f32 %v384, %v655
      %v672 = vmul.f32 %v385, %v659
      %v673 = vmul.f32 %v386, %v663
      %v674 = vmul.f32 %v387, %v647
      %v675 = vmul.f32 %v388, %v651
      %v676 = vmul.f32 %v389, %v655
      %v677 = vmul.f32 %v390, %v659
      %v678 = vmul.f32 %v391, %v663
      %v679 = vmul.f32 %v392, %v647
      %v680 = vmul.f32 %v393, %v651
      %v681 = vmul.f32 %v394, %v655
      %v682 = vmul.f32 %v395, %v659
      %v683 = vmul.f32 %v396, %v663
      %v684 = vmul.f32 %v397, %v647
      %v685 = vmul.f32 %v398, %v651
      %v686 = vmul.f32 %v399, %v655
      %v687 = vmul.f32 %v400, %v659
      %v688 = vmul.f32 %v401, %v663
      %v689 = vmul.f32 %v402, %v647
      %v690 = vmul.f32 %v403, %v651
      %v691 = vmul.f32 %v404, %v655
      %v692 = vmul.f32 %v405, %v659
      %v693 = vmul.f32 %v406, %v663
      %v694 = vmul.f32 %v407, %v647
      %v695 = vmul.f32 %v408, %v651
      %v696 = vmul.f32 %v409, %v655
      %v697 = vmul.f32 %v410, %v659
      %v698 = vmul.f32 %v411, %v663
      %v699 = vmul.f32 %v412, %v647
      %v700 = vmul.f32 %v413, %v651
      %v701 = vmul.f32 %v414, %v655
      %v702 = vmul.f32 %v415, %v659
      %v703 = vmul.f32 %v416, %v663
      %v704 = vmul.f32 %v417, %v647
      %v705 = vmul.f32 %v418, %v651
      %v706 = vmul.f32 %v419, %v655
      %v707 = vmul.f32 %v420, %v659
      %v708 = vmul.f32 %v421, %v663
      %v709 = vmul.f32 %v422, %v647
      %v710 = vmul.f32 %v423, %v651
      %v711 = vmul.f32 %v424, %v655
      %v712 = vmul.f32 %v425, %v659
      %v713 = vmul.f32 %v426, %v663
      %v714 = vmul.f32 %v427, %v647
      %v715 = vmul.f32 %v428, %v651
      %v716 = vmul.f32 %v429, %v655
      %v717 = vmul.f32 %v430, %v659
      %v718 = vmul.f32 %v431, %v663
      %v719 = vmul.f32 %v432, %v647
      %v720 = vmul.f32 %v433, %v651
      %v721 = vmul.f32 %v434, %v655
      %v722 = vmul.f32 %v435, %v659
      %v723 = vmul.f32 %v436, %v663
      %v724 = vmul.f32 %v437, %v647
      %v725 = vmul.f32 %v438, %v651
      %v726 = vmul.f32 %v439, %v655
      %v727 = vmul.f32 %v440, %v659
      %v728 = vmul.f32 %v441, %v663
      %v729 = vmul.f32 %v442, %v647
      %v730 = vmul.f32 %v443, %v651
      %v731 = vmul.f32 %v444, %v655
      %v732 = vmul.f32 %v445, %v659
      %v733 = vmul.f32 %v446, %v663
      %v734 = vmul.f32 %v447, %v647
      %v735 = vmul.f32 %v448, %v651
      %v736 = vmul.f32 %v449, %v655
      %v737 = vmul.f32 %v450, %v659
      %v738 = vmul.f32 %v451, %v663
      %v739 = vmul.f32 %v452, %v647
      %v740 = vmul.f32 %v453, %v651
      %v741 = vmul.f32 %v454, %v655
      %v742 = vmul.f32 %v455, %v659
      %v743 = vmul.f32 %v456, %v663
      %v744 = vmul.f32 %v457, %v647
      %v745 = vmul.f32 %v458, %v651
      %v746 = vmul.f32 %v459, %v655
      %v747 = vmul.f32 %v460, %v659
      %v748 = vmul.f32 %v461, %v663
      %v749 = vmul.f32 %v462, %v647
      %v750 = vmul.f32 %v463, %v651
      %v751 = vmul.f32 %v464, %v655
      %v752 = vmul.f32 %v465, %v659
      %v753 = vmul.f32 %v466, %v663
      %v754 = vmul.f32 %v467, %v647
      %v755 = vmul.f32 %v468, %v651
      %v756 = vmul.f32 %v469, %v655
      %v757 = vmul.f32 %v470, %v659
      %v758 = vmul.f32 %v471, %v663
      %v759 = vmul.f32 %v472, %v647
      %v760 = vmul.f32 %v473, %v651
      %v761 = vmul.f32 %v474, %v655
      %v762 = vmul.f32 %v475, %v659
      %v763 = vmul.f32 %v476, %v663
      %v764 = vmul.f32 %v477, %v647
      %v765 = vmul.f32 %v478, %v651
      %v766 = vmul.f32 %v479, %v655
      %v767 = vmul.f32 %v480, %v659
      %v768 = vmul.f32 %v481, %v663
      %v769 = vmul.f32 %v482, %v647
      %v770 = vmul.f32 %v483, %v651
      %v771 = vmul.f32 %v484, %v655
      %v772 = vmul.f32 %v485, %v659
      %v773 = vmul.f32 %v486, %v663
      %v774 = vmul.f32 %v487, %v647
      %v775 = vmul.f32 %v488, %v651
      %v776 = vmul.f32 %v489, %v655
      %v777 = vmul.f32 %v490, %v659
      %v778 = vmul.f32 %v491, %v663
      %v779 = vmul.f32 %v492, %v647
      %v780 = vmul.f32 %v493, %v651
      %v781 = vmul.f32 %v494, %v655
      %v782 = vmul.f32 %v495, %v659
      %v783 = vmul.f32 %v496, %v663
      %v784 = vmul.f32 %v497, %v647
      %v785 = vmul.f32 %v498, %v651
      %v786 = vmul.f32 %v499, %v655
      %v787 = vmul.f32 %v500, %v659
      %v788 = vmul.f32 %v501, %v663
      %v789 = vmul.f32 %v502, %v647
      %v790 = vmul.f32 %v503, %v651
      %v791 = vmul.f32 %v504, %v655
      %v792 = vmul.f32 %v505, %v659
      %v793 = vmul.f32 %v506, %v663
      %v794 = vmul.f32 %v507, %v647
      %v795 = vmul.f32 %v508, %v651
      %v796 = vmul.f32 %v509, %v655
      %v797 = vmul.f32 %v510, %v659
      %v798 = vmul.f32 %v511, %v663
      %v799 = vmul.f32 %v512, %v647
      %v800 = vmul.f32 %v513, %v651
      %v801 = vmul.f32 %v514, %v655
      %v802 = vmul.f32 %v515, %v659
      %v803 = vmul.f32 %v516, %v663
      %v804 = vmul.f32 %v517, %v647
      %v805 = vmul.f32 %v518, %v651
      %v806 = vmul.f32 %v519, %v655
      %v807 = vmul.f32 %v520, %v659
      %v808 = vmul.f32 %v521, %v663
      %v809 = vmul.f32 %v522, %v647
      %v810 = vmul.f32 %v523, %v651
      %v811 = vmul.f32 %v524, %v655
      %v812 = vmul.f32 %v525, %v659
      %v813 = vmul.f32 %v526, %v663
      %v814 = vmul.f32 %v527, %v647
      %v815 = vmul.f32 %v528, %v651
      %v816 = vmul.f32 %v529, %v655
      %v817 = vmul.f32 %v530, %v659
      %v818 = vmul.f32 %v531, %v663
      %v819 = vmul.f32 %v532, %v647
      %v820 = vmul.f32 %v533, %v651
      %v821 = vmul.f32 %v534, %v655
      %v822 = vmul.f32 %v535, %v659
      %v823 = vmul.f32 %v536, %v663
      %v824 = vmul.f32 %v537, %v647
      %v825 = vmul.f32 %v538, %v651
      %v826 = vmul.f32 %v539, %v655
      %v827 = vmul.f32 %v540, %v659
      %v828 = vmul.f32 %v541, %v663
      %v829 = vmul.f32 %v542, %v647
      %v830 = vmul.f32 %v543, %v651
      %v831 = vmul.f32 %v544, %v655
      %v832 = vmul.f32 %v545, %v659
      %v833 = vmul.f32 %v546, %v663
      %v834 = vmul.f32 %v547, %v647
      %v835 = vmul.f32 %v548, %v651
      %v836 = vmul.f32 %v549, %v655
      %v837 = vmul.f32 %v550, %v659
      %v838 = vmul.f32 %v551, %v663
      %v839 = vmul.f32 %v552, %v647
      %v840 = vmul.f32 %v553, %v651
      %v841 = vmul.f32 %v554, %v655
      %v842 = vmul.f32 %v555, %v659
      %v843 = vmul.f32 %v556, %v663
      %v844 = vmul.f32 %v557, %v647
      %v845 = vmul.f32 %v558, %v651
      %v846 = vmul.f32 %v559, %v655
      %v847 = vmul.f32 %v560, %v659
      %v848 = vmul.f32 %v561, %v663
      %v849 = vmul.f32 %v562, %v647
      %v850 = vmul.f32 %v563, %v651
      %v851 = vmul.f32 %v564, %v655
      %v852 = vmul.f32 %v565, %v659
      %v853 = vmul.f32 %v566, %v663
      %v854 = vmul.f32 %v567, %v647
      %v855 = vmul.f32 %v568, %v651
      %v856 = vmul.f32 %v569, %v655
      %v857 = vmul.f32 %v570, %v659
      %v858 = vmul.f32 %v571, %v663
      %v859 = vmul.f32 %v572, %v647
      %v860 = vmul.f32 %v573, %v651
      %v861 = vmul.f32 %v574, %v655
      %v862 = vmul.f32 %v575, %v659
      %v863 = vmul.f32 %v576, %v663
      %v864 = vmul.f32 %v577, %v647
      %v865 = vmul.f32 %v578, %v651
      %v866 = vmul.f32 %v579, %v655
      %v867 = vmul.f32 %v580, %v659
      %v868 = vmul.f32 %v581, %v663
      %v869 = vmul.f32 %v582, %v647
      %v870 = vmul.f32 %v583, %v651
      %v871 = vmul.f32 %v584, %v655
      %v872 = vmul.f32 %v585, %v659
      %v873 = vmul.f32 %v586, %v663
      %v874 = vmul.f32 %v587, %v647
      %v875 = vmul.f32 %v588, %v651
      %v876 = vmul.f32 %v589, %v655
      %v877 = vmul.f32 %v590, %v659
      %v878 = vmul.f32 %v591, %v663
      %v879 = vmul.f32 %v592, %v647
      %v880 = vmul.f32 %v593, %v651
      %v881 = vmul.f32 %v594, %v655
      %v882 = vmul.f32 %v595, %v659
      %v883 = vmul.f32 %v596, %v663
      %v884 = vmul.f32 %v597, %v647
      %v885 = vmul.f32 %v598, %v651
      %v886 = vmul.f32 %v599, %v655
      %v887 = vmul.f32 %v600, %v659
      %v888 = vmul.f32 %v601, %v663
      %v889 = vmul.f32 %v602, %v647
      %v890 = vmul.f32 %v603, %v651
      %v891 = vmul.f32 %v604, %v655
      %v892 = vmul.f32 %v605, %v659
      %v893 = vmul.f32 %v606, %v663
      %v894 = vmul.f32 %v607, %v647
      %v895 = vmul.f32 %v608, %v651
      %v896 = vmul.f32 %v609, %v655
      %v897 = vmul.f32 %v610, %v659
      %v898 = vmul.f32 %v611, %v663
      %v899 = vmul.f32 %v612, %v647
      %v900 = vmul.f32 %v613, %v651
      %v901 = vmul.f32 %v614, %v655
      %v902 = vmul.f32 %v615, %v659
      %v903 = vmul.f32 %v616, %v663
      %v904 = vmul.f32 %v617, %v647
      %v905 = vmul.f32 %v618, %v651
      %v906 = vmul.f32 %v619, %v655
      %v907 = vmul.f32 %v620, %v659
      %v908 = vmul.f32 %v621, %v663
      %v909 = vmul.f32 %v622, %v647
      %v910 = vmul.f32 %v623, %v651
      %v911 = vmul.f32 %v624, %v655
      %v912 = vmul.f32 %v625, %v659
      %v913 = vmul.f32 %v626, %v663
      %v914 = vmul.f32 %v627, %v647
      %v915 = vmul.f32 %v628, %v651
      %v916 = vmul.f32 %v629, %v655
      %v917 = vmul.f32 %v630, %v659
      %v918 = vmul.f32 %v631, %v663
      %v919 = vmul.f32 %v632, %v647
      %v920 = vmul.f32 %v633, %v651
      %v921 = vmul.f32 %v634, %v655
      %v922 = vmul.f32 %v635, %v659
      %v923 = vmul.f32 %v636, %v663
      %v924 = vmul.f32 %v637, %v647
      %v925 = vmul.f32 %v638, %v651
      %v926 = vmul.f32 %v639, %v655
      %v927 = vmul.f32 %v640, %v659
      %v928 = vmul.f32 %v641, %v663
      %v929 = vld [vmem:[%s4] sm:$0x1f]
      %v931 = vlaneseq
      %v932 = vshrl.u32 %v931, 7
      %v933 = vsub.s32 0, %v932
      %v934 = vrot.slane %v929, %v933
      %v935 = vlaneseq
      %v936 = vshrl.u32 %v935, 7
      %v937 = vsub.s32 1, %v936
      %v938 = vrot.slane %v929, %v937
      %v939 = vlaneseq
      %v940 = vshrl.u32 %v939, 7
      %v941 = vsub.s32 2, %v940
      %v942 = vrot.slane %v929, %v941
      %v943 = vlaneseq
      %v944 = vshrl.u32 %v943, 7
      %v945 = vsub.s32 3, %v944
      %v946 = vrot.slane %v929, %v945
      %v947 = vlaneseq
      %v948 = vshrl.u32 %v947, 7
      %v949 = vsub.s32 4, %v948
      %v950 = vrot.slane %v929, %v949
      %v956 = vadd.f32 %v669, %v934
      %v957 = vadd.f32 %v670, %v938
      %v958 = vadd.f32 %v671, %v942
      %v959 = vadd.f32 %v672, %v946
      %v960 = vadd.f32 %v673, %v950
      %v961 = vadd.f32 %v674, %v934
      %v962 = vadd.f32 %v675, %v938
      %v963 = vadd.f32 %v676, %v942
      %v964 = vadd.f32 %v677, %v946
      %v965 = vadd.f32 %v678, %v950
      %v966 = vadd.f32 %v679, %v934
      %v967 = vadd.f32 %v680, %v938
      %v968 = vadd.f32 %v681, %v942
      %v969 = vadd.f32 %v682, %v946
      %v970 = vadd.f32 %v683, %v950
      %v971 = vadd.f32 %v684, %v934
      %v972 = vadd.f32 %v685, %v938
      %v973 = vadd.f32 %v686, %v942
      %v974 = vadd.f32 %v687, %v946
      %v975 = vadd.f32 %v688, %v950
      %v976 = vadd.f32 %v689, %v934
      %v977 = vadd.f32 %v690, %v938
      %v978 = vadd.f32 %v691, %v942
      %v979 = vadd.f32 %v692, %v946
      %v980 = vadd.f32 %v693, %v950
      %v981 = vadd.f32 %v694, %v934
      %v982 = vadd.f32 %v695, %v938
      %v983 = vadd.f32 %v696, %v942
      %v984 = vadd.f32 %v697, %v946
      %v985 = vadd.f32 %v698, %v950
      %v986 = vadd.f32 %v699, %v934
      %v987 = vadd.f32 %v700, %v938
      %v988 = vadd.f32 %v701, %v942
      %v989 = vadd.f32 %v702, %v946
      %v990 = vadd.f32 %v703, %v950
      %v991 = vadd.f32 %v704, %v934
      %v992 = vadd.f32 %v705, %v938
      %v993 = vadd.f32 %v706, %v942
      %v994 = vadd.f32 %v707, %v946
      %v995 = vadd.f32 %v708, %v950
      %v996 = vadd.f32 %v709, %v934
      %v997 = vadd.f32 %v710, %v938
      %v998 = vadd.f32 %v711, %v942
      %v999 = vadd.f32 %v712, %v946
      %v1000 = vadd.f32 %v713, %v950
      %v1001 = vadd.f32 %v714, %v934
      %v1002 = vadd.f32 %v715, %v938
      %v1003 = vadd.f32 %v716, %v942
      %v1004 = vadd.f32 %v717, %v946
      %v1005 = vadd.f32 %v718, %v950
      %v1006 = vadd.f32 %v719, %v934
      %v1007 = vadd.f32 %v720, %v938
      %v1008 = vadd.f32 %v721, %v942
      %v1009 = vadd.f32 %v722, %v946
      %v1010 = vadd.f32 %v723, %v950
      %v1011 = vadd.f32 %v724, %v934
      %v1012 = vadd.f32 %v725, %v938
      %v1013 = vadd.f32 %v726, %v942
      %v1014 = vadd.f32 %v727, %v946
      %v1015 = vadd.f32 %v728, %v950
      %v1016 = vadd.f32 %v729, %v934
      %v1017 = vadd.f32 %v730, %v938
      %v1018 = vadd.f32 %v731, %v942
      %v1019 = vadd.f32 %v732, %v946
      %v1020 = vadd.f32 %v733, %v950
      %v1021 = vadd.f32 %v734, %v934
      %v1022 = vadd.f32 %v735, %v938
      %v1023 = vadd.f32 %v736, %v942
      %v1024 = vadd.f32 %v737, %v946
      %v1025 = vadd.f32 %v738, %v950
      %v1026 = vadd.f32 %v739, %v934
      %v1027 = vadd.f32 %v740, %v938
      %v1028 = vadd.f32 %v741, %v942
      %v1029 = vadd.f32 %v742, %v946
      %v1030 = vadd.f32 %v743, %v950
      %v1031 = vadd.f32 %v744, %v934
      %v1032 = vadd.f32 %v745, %v938
      %v1033 = vadd.f32 %v746, %v942
      %v1034 = vadd.f32 %v747, %v946
      %v1035 = vadd.f32 %v748, %v950
      %v1036 = vadd.f32 %v749, %v934
      %v1037 = vadd.f32 %v750, %v938
      %v1038 = vadd.f32 %v751, %v942
      %v1039 = vadd.f32 %v752, %v946
      %v1040 = vadd.f32 %v753, %v950
      %v1041 = vadd.f32 %v754, %v934
      %v1042 = vadd.f32 %v755, %v938
      %v1043 = vadd.f32 %v756, %v942
      %v1044 = vadd.f32 %v757, %v946
      %v1045 = vadd.f32 %v758, %v950
      %v1046 = vadd.f32 %v759, %v934
      %v1047 = vadd.f32 %v760, %v938
      %v1048 = vadd.f32 %v761, %v942
      %v1049 = vadd.f32 %v762, %v946
      %v1050 = vadd.f32 %v763, %v950
      %v1051 = vadd.f32 %v764, %v934
      %v1052 = vadd.f32 %v765, %v938
      %v1053 = vadd.f32 %v766, %v942
      %v1054 = vadd.f32 %v767, %v946
      %v1055 = vadd.f32 %v768, %v950
      %v1056 = vadd.f32 %v769, %v934
      %v1057 = vadd.f32 %v770, %v938
      %v1058 = vadd.f32 %v771, %v942
      %v1059 = vadd.f32 %v772, %v946
      %v1060 = vadd.f32 %v773, %v950
      %v1061 = vadd.f32 %v774, %v934
      %v1062 = vadd.f32 %v775, %v938
      %v1063 = vadd.f32 %v776, %v942
      %v1064 = vadd.f32 %v777, %v946
      %v1065 = vadd.f32 %v778, %v950
      %v1066 = vadd.f32 %v779, %v934
      %v1067 = vadd.f32 %v780, %v938
      %v1068 = vadd.f32 %v781, %v942
      %v1069 = vadd.f32 %v782, %v946
      %v1070 = vadd.f32 %v783, %v950
      %v1071 = vadd.f32 %v784, %v934
      %v1072 = vadd.f32 %v785, %v938
      %v1073 = vadd.f32 %v786, %v942
      %v1074 = vadd.f32 %v787, %v946
      %v1075 = vadd.f32 %v788, %v950
      %v1076 = vadd.f32 %v789, %v934
      %v1077 = vadd.f32 %v790, %v938
      %v1078 = vadd.f32 %v791, %v942
      %v1079 = vadd.f32 %v792, %v946
      %v1080 = vadd.f32 %v793, %v950
      %v1081 = vadd.f32 %v794, %v934
      %v1082 = vadd.f32 %v795, %v938
      %v1083 = vadd.f32 %v796, %v942
      %v1084 = vadd.f32 %v797, %v946
      %v1085 = vadd.f32 %v798, %v950
      %v1086 = vadd.f32 %v799, %v934
      %v1087 = vadd.f32 %v800, %v938
      %v1088 = vadd.f32 %v801, %v942
      %v1089 = vadd.f32 %v802, %v946
      %v1090 = vadd.f32 %v803, %v950
      %v1091 = vadd.f32 %v804, %v934
      %v1092 = vadd.f32 %v805, %v938
      %v1093 = vadd.f32 %v806, %v942
      %v1094 = vadd.f32 %v807, %v946
      %v1095 = vadd.f32 %v808, %v950
      %v1096 = vadd.f32 %v809, %v934
      %v1097 = vadd.f32 %v810, %v938
      %v1098 = vadd.f32 %v811, %v942
      %v1099 = vadd.f32 %v812, %v946
      %v1100 = vadd.f32 %v813, %v950
      %v1101 = vadd.f32 %v814, %v934
      %v1102 = vadd.f32 %v815, %v938
      %v1103 = vadd.f32 %v816, %v942
      %v1104 = vadd.f32 %v817, %v946
      %v1105 = vadd.f32 %v818, %v950
      %v1106 = vadd.f32 %v819, %v934
      %v1107 = vadd.f32 %v820, %v938
      %v1108 = vadd.f32 %v821, %v942
      %v1109 = vadd.f32 %v822, %v946
      %v1110 = vadd.f32 %v823, %v950
      %v1111 = vadd.f32 %v824, %v934
      %v1112 = vadd.f32 %v825, %v938
      %v1113 = vadd.f32 %v826, %v942
      %v1114 = vadd.f32 %v827, %v946
      %v1115 = vadd.f32 %v828, %v950
      %v1116 = vadd.f32 %v829, %v934
      %v1117 = vadd.f32 %v830, %v938
      %v1118 = vadd.f32 %v831, %v942
      %v1119 = vadd.f32 %v832, %v946
      %v1120 = vadd.f32 %v833, %v950
      %v1121 = vadd.f32 %v834, %v934
      %v1122 = vadd.f32 %v835, %v938
      %v1123 = vadd.f32 %v836, %v942
      %v1124 = vadd.f32 %v837, %v946
      %v1125 = vadd.f32 %v838, %v950
      %v1126 = vadd.f32 %v839, %v934
      %v1127 = vadd.f32 %v840, %v938
      %v1128 = vadd.f32 %v841, %v942
      %v1129 = vadd.f32 %v842, %v946
      %v1130 = vadd.f32 %v843, %v950
      %v1131 = vadd.f32 %v844, %v934
      %v1132 = vadd.f32 %v845, %v938
      %v1133 = vadd.f32 %v846, %v942
      %v1134 = vadd.f32 %v847, %v946
      %v1135 = vadd.f32 %v848, %v950
      %v1136 = vadd.f32 %v849, %v934
      %v1137 = vadd.f32 %v850, %v938
      %v1138 = vadd.f32 %v851, %v942
      %v1139 = vadd.f32 %v852, %v946
      %v1140 = vadd.f32 %v853, %v950
      %v1141 = vadd.f32 %v854, %v934
      %v1142 = vadd.f32 %v855, %v938
      %v1143 = vadd.f32 %v856, %v942
      %v1144 = vadd.f32 %v857, %v946
      %v1145 = vadd.f32 %v858, %v950
      %v1146 = vadd.f32 %v859, %v934
      %v1147 = vadd.f32 %v860, %v938
      %v1148 = vadd.f32 %v861, %v942
      %v1149 = vadd.f32 %v862, %v946
      %v1150 = vadd.f32 %v863, %v950
      %v1151 = vadd.f32 %v864, %v934
      %v1152 = vadd.f32 %v865, %v938
      %v1153 = vadd.f32 %v866, %v942
      %v1154 = vadd.f32 %v867, %v946
      %v1155 = vadd.f32 %v868, %v950
      %v1156 = vadd.f32 %v869, %v934
      %v1157 = vadd.f32 %v870, %v938
      %v1158 = vadd.f32 %v871, %v942
      %v1159 = vadd.f32 %v872, %v946
      %v1160 = vadd.f32 %v873, %v950
      %v1161 = vadd.f32 %v874, %v934
      %v1162 = vadd.f32 %v875, %v938
      %v1163 = vadd.f32 %v876, %v942
      %v1164 = vadd.f32 %v877, %v946
      %v1165 = vadd.f32 %v878, %v950
      %v1166 = vadd.f32 %v879, %v934
      %v1167 = vadd.f32 %v880, %v938
      %v1168 = vadd.f32 %v881, %v942
      %v1169 = vadd.f32 %v882, %v946
      %v1170 = vadd.f32 %v883, %v950
      %v1171 = vadd.f32 %v884, %v934
      %v1172 = vadd.f32 %v885, %v938
      %v1173 = vadd.f32 %v886, %v942
      %v1174 = vadd.f32 %v887, %v946
      %v1175 = vadd.f32 %v888, %v950
      %v1176 = vadd.f32 %v889, %v934
      %v1177 = vadd.f32 %v890, %v938
      %v1178 = vadd.f32 %v891, %v942
      %v1179 = vadd.f32 %v892, %v946
      %v1180 = vadd.f32 %v893, %v950
      %v1181 = vadd.f32 %v894, %v934
      %v1182 = vadd.f32 %v895, %v938
      %v1183 = vadd.f32 %v896, %v942
      %v1184 = vadd.f32 %v897, %v946
      %v1185 = vadd.f32 %v898, %v950
      %v1186 = vadd.f32 %v899, %v934
      %v1187 = vadd.f32 %v900, %v938
      %v1188 = vadd.f32 %v901, %v942
      %v1189 = vadd.f32 %v902, %v946
      %v1190 = vadd.f32 %v903, %v950
      %v1191 = vadd.f32 %v904, %v934
      %v1192 = vadd.f32 %v905, %v938
      %v1193 = vadd.f32 %v906, %v942
      %v1194 = vadd.f32 %v907, %v946
      %v1195 = vadd.f32 %v908, %v950
      %v1196 = vadd.f32 %v909, %v934
      %v1197 = vadd.f32 %v910, %v938
      %v1198 = vadd.f32 %v911, %v942
      %v1199 = vadd.f32 %v912, %v946
      %v1200 = vadd.f32 %v913, %v950
      %v1201 = vadd.f32 %v914, %v934
      %v1202 = vadd.f32 %v915, %v938
      %v1203 = vadd.f32 %v916, %v942
      %v1204 = vadd.f32 %v917, %v946
      %v1205 = vadd.f32 %v918, %v950
      %v1206 = vadd.f32 %v919, %v934
      %v1207 = vadd.f32 %v920, %v938
      %v1208 = vadd.f32 %v921, %v942
      %v1209 = vadd.f32 %v922, %v946
      %v1210 = vadd.f32 %v923, %v950
      %v1211 = vadd.f32 %v924, %v934
      %v1212 = vadd.f32 %v925, %v938
      %v1213 = vadd.f32 %v926, %v942
      %v1214 = vadd.f32 %v927, %v946
      %v1215 = vadd.f32 %v928, %v950
      %v1216 = vmax.f32 %v956, 0.0
      %v1217 = vmax.f32 %v957, 0.0
      %v1218 = vmax.f32 %v958, 0.0
      %v1219 = vmax.f32 %v959, 0.0
      %v1220 = vmax.f32 %v960, 0.0
      %v1221 = vmax.f32 %v961, 0.0
      %v1222 = vmax.f32 %v962, 0.0
      %v1223 = vmax.f32 %v963, 0.0
      %v1224 = vmax.f32 %v964, 0.0
      %v1225 = vmax.f32 %v965, 0.0
      %v1226 = vmax.f32 %v966, 0.0
      %v1227 = vmax.f32 %v967, 0.0
      %v1228 = vmax.f32 %v968, 0.0
      %v1229 = vmax.f32 %v969, 0.0
      %v1230 = vmax.f32 %v970, 0.0
      %v1231 = vmax.f32 %v971, 0.0
      %v1232 = vmax.f32 %v972, 0.0
      %v1233 = vmax.f32 %v973, 0.0
      %v1234 = vmax.f32 %v974, 0.0
      %v1235 = vmax.f32 %v975, 0.0
      %v1236 = vmax.f32 %v976, 0.0
      %v1237 = vmax.f32 %v977, 0.0
      %v1238 = vmax.f32 %v978, 0.0
      %v1239 = vmax.f32 %v979, 0.0
      %v1240 = vmax.f32 %v980, 0.0
      %v1241 = vmax.f32 %v981, 0.0
      %v1242 = vmax.f32 %v982, 0.0
      %v1243 = vmax.f32 %v983, 0.0
      %v1244 = vmax.f32 %v984, 0.0
      %v1245 = vmax.f32 %v985, 0.0
      %v1246 = vmax.f32 %v986, 0.0
      %v1247 = vmax.f32 %v987, 0.0
      %v1248 = vmax.f32 %v988, 0.0
      %v1249 = vmax.f32 %v989, 0.0
      %v1250 = vmax.f32 %v990, 0.0
      %v1251 = vmax.f32 %v991, 0.0
      %v1252 = vmax.f32 %v992, 0.0
      %v1253 = vmax.f32 %v993, 0.0
      %v1254 = vmax.f32 %v994, 0.0
      %v1255 = vmax.f32 %v995, 0.0
      %v1256 = vmax.f32 %v996, 0.0
      %v1257 = vmax.f32 %v997, 0.0
      %v1258 = vmax.f32 %v998, 0.0
      %v1259 = vmax.f32 %v999, 0.0
      %v1260 = vmax.f32 %v1000, 0.0
      %v1261 = vmax.f32 %v1001, 0.0
      %v1262 = vmax.f32 %v1002, 0.0
      %v1263 = vmax.f32 %v1003, 0.0
      %v1264 = vmax.f32 %v1004, 0.0
      %v1265 = vmax.f32 %v1005, 0.0
      %v1266 = vmax.f32 %v1006, 0.0
      %v1267 = vmax.f32 %v1007, 0.0
      %v1268 = vmax.f32 %v1008, 0.0
      %v1269 = vmax.f32 %v1009, 0.0
      %v1270 = vmax.f32 %v1010, 0.0
      %v1271 = vmax.f32 %v1011, 0.0
      %v1272 = vmax.f32 %v1012, 0.0
      %v1273 = vmax.f32 %v1013, 0.0
      %v1274 = vmax.f32 %v1014, 0.0
      %v1275 = vmax.f32 %v1015, 0.0
      %v1276 = vmax.f32 %v1016, 0.0
      %v1277 = vmax.f32 %v1017, 0.0
      %v1278 = vmax.f32 %v1018, 0.0
      %v1279 = vmax.f32 %v1019, 0.0
      %v1280 = vmax.f32 %v1020, 0.0
      %v1281 = vmax.f32 %v1021, 0.0
      %v1282 = vmax.f32 %v1022, 0.0
      %v1283 = vmax.f32 %v1023, 0.0
      %v1284 = vmax.f32 %v1024, 0.0
      %v1285 = vmax.f32 %v1025, 0.0
      %v1286 = vmax.f32 %v1026, 0.0
      %v1287 = vmax.f32 %v1027, 0.0
      %v1288 = vmax.f32 %v1028, 0.0
      %v1289 = vmax.f32 %v1029, 0.0
      %v1290 = vmax.f32 %v1030, 0.0
      %v1291 = vmax.f32 %v1031, 0.0
      %v1292 = vmax.f32 %v1032, 0.0
      %v1293 = vmax.f32 %v1033, 0.0
      %v1294 = vmax.f32 %v1034, 0.0
      %v1295 = vmax.f32 %v1035, 0.0
      %v1296 = vmax.f32 %v1036, 0.0
      %v1297 = vmax.f32 %v1037, 0.0
      %v1298 = vmax.f32 %v1038, 0.0
      %v1299 = vmax.f32 %v1039, 0.0
      %v1300 = vmax.f32 %v1040, 0.0
      %v1301 = vmax.f32 %v1041, 0.0
      %v1302 = vmax.f32 %v1042, 0.0
      %v1303 = vmax.f32 %v1043, 0.0
      %v1304 = vmax.f32 %v1044, 0.0
      %v1305 = vmax.f32 %v1045, 0.0
      %v1306 = vmax.f32 %v1046, 0.0
      %v1307 = vmax.f32 %v1047, 0.0
      %v1308 = vmax.f32 %v1048, 0.0
      %v1309 = vmax.f32 %v1049, 0.0
      %v1310 = vmax.f32 %v1050, 0.0
      %v1311 = vmax.f32 %v1051, 0.0
      %v1312 = vmax.f32 %v1052, 0.0
      %v1313 = vmax.f32 %v1053, 0.0
      %v1314 = vmax.f32 %v1054, 0.0
      %v1315 = vmax.f32 %v1055, 0.0
      %v1316 = vmax.f32 %v1056, 0.0
      %v1317 = vmax.f32 %v1057, 0.0
      %v1318 = vmax.f32 %v1058, 0.0
      %v1319 = vmax.f32 %v1059, 0.0
      %v1320 = vmax.f32 %v1060, 0.0
      %v1321 = vmax.f32 %v1061, 0.0
      %v1322 = vmax.f32 %v1062, 0.0
      %v1323 = vmax.f32 %v1063, 0.0
      %v1324 = vmax.f32 %v1064, 0.0
      %v1325 = vmax.f32 %v1065, 0.0
      %v1326 = vmax.f32 %v1066, 0.0
      %v1327 = vmax.f32 %v1067, 0.0
      %v1328 = vmax.f32 %v1068, 0.0
      %v1329 = vmax.f32 %v1069, 0.0
      %v1330 = vmax.f32 %v1070, 0.0
      %v1331 = vmax.f32 %v1071, 0.0
      %v1332 = vmax.f32 %v1072, 0.0
      %v1333 = vmax.f32 %v1073, 0.0
      %v1334 = vmax.f32 %v1074, 0.0
      %v1335 = vmax.f32 %v1075, 0.0
      %v1336 = vmax.f32 %v1076, 0.0
      %v1337 = vmax.f32 %v1077, 0.0
      %v1338 = vmax.f32 %v1078, 0.0
      %v1339 = vmax.f32 %v1079, 0.0
      %v1340 = vmax.f32 %v1080, 0.0
      %v1341 = vmax.f32 %v1081, 0.0
      %v1342 = vmax.f32 %v1082, 0.0
      %v1343 = vmax.f32 %v1083, 0.0
      %v1344 = vmax.f32 %v1084, 0.0
      %v1345 = vmax.f32 %v1085, 0.0
      %v1346 = vmax.f32 %v1086, 0.0
      %v1347 = vmax.f32 %v1087, 0.0
      %v1348 = vmax.f32 %v1088, 0.0
      %v1349 = vmax.f32 %v1089, 0.0
      %v1350 = vmax.f32 %v1090, 0.0
      %v1351 = vmax.f32 %v1091, 0.0
      %v1352 = vmax.f32 %v1092, 0.0
      %v1353 = vmax.f32 %v1093, 0.0
      %v1354 = vmax.f32 %v1094, 0.0
      %v1355 = vmax.f32 %v1095, 0.0
      %v1356 = vmax.f32 %v1096, 0.0
      %v1357 = vmax.f32 %v1097, 0.0
      %v1358 = vmax.f32 %v1098, 0.0
      %v1359 = vmax.f32 %v1099, 0.0
      %v1360 = vmax.f32 %v1100, 0.0
      %v1361 = vmax.f32 %v1101, 0.0
      %v1362 = vmax.f32 %v1102, 0.0
      %v1363 = vmax.f32 %v1103, 0.0
      %v1364 = vmax.f32 %v1104, 0.0
      %v1365 = vmax.f32 %v1105, 0.0
      %v1366 = vmax.f32 %v1106, 0.0
      %v1367 = vmax.f32 %v1107, 0.0
      %v1368 = vmax.f32 %v1108, 0.0
      %v1369 = vmax.f32 %v1109, 0.0
      %v1370 = vmax.f32 %v1110, 0.0
      %v1371 = vmax.f32 %v1111, 0.0
      %v1372 = vmax.f32 %v1112, 0.0
      %v1373 = vmax.f32 %v1113, 0.0
      %v1374 = vmax.f32 %v1114, 0.0
      %v1375 = vmax.f32 %v1115, 0.0
      %v1376 = vmax.f32 %v1116, 0.0
      %v1377 = vmax.f32 %v1117, 0.0
      %v1378 = vmax.f32 %v1118, 0.0
      %v1379 = vmax.f32 %v1119, 0.0
      %v1380 = vmax.f32 %v1120, 0.0
      %v1381 = vmax.f32 %v1121, 0.0
      %v1382 = vmax.f32 %v1122, 0.0
      %v1383 = vmax.f32 %v1123, 0.0
      %v1384 = vmax.f32 %v1124, 0.0
      %v1385 = vmax.f32 %v1125, 0.0
      %v1386 = vmax.f32 %v1126, 0.0
      %v1387 = vmax.f32 %v1127, 0.0
      %v1388 = vmax.f32 %v1128, 0.0
      %v1389 = vmax.f32 %v1129, 0.0
      %v1390 = vmax.f32 %v1130, 0.0
      %v1391 = vmax.f32 %v1131, 0.0
      %v1392 = vmax.f32 %v1132, 0.0
      %v1393 = vmax.f32 %v1133, 0.0
      %v1394 = vmax.f32 %v1134, 0.0
      %v1395 = vmax.f32 %v1135, 0.0
      %v1396 = vmax.f32 %v1136, 0.0
      %v1397 = vmax.f32 %v1137, 0.0
      %v1398 = vmax.f32 %v1138, 0.0
      %v1399 = vmax.f32 %v1139, 0.0
      %v1400 = vmax.f32 %v1140, 0.0
      %v1401 = vmax.f32 %v1141, 0.0
      %v1402 = vmax.f32 %v1142, 0.0
      %v1403 = vmax.f32 %v1143, 0.0
      %v1404 = vmax.f32 %v1144, 0.0
      %v1405 = vmax.f32 %v1145, 0.0
      %v1406 = vmax.f32 %v1146, 0.0
      %v1407 = vmax.f32 %v1147, 0.0
      %v1408 = vmax.f32 %v1148, 0.0
      %v1409 = vmax.f32 %v1149, 0.0
      %v1410 = vmax.f32 %v1150, 0.0
      %v1411 = vmax.f32 %v1151, 0.0
      %v1412 = vmax.f32 %v1152, 0.0
      %v1413 = vmax.f32 %v1153, 0.0
      %v1414 = vmax.f32 %v1154, 0.0
      %v1415 = vmax.f32 %v1155, 0.0
      %v1416 = vmax.f32 %v1156, 0.0
      %v1417 = vmax.f32 %v1157, 0.0
      %v1418 = vmax.f32 %v1158, 0.0
      %v1419 = vmax.f32 %v1159, 0.0
      %v1420 = vmax.f32 %v1160, 0.0
      %v1421 = vmax.f32 %v1161, 0.0
      %v1422 = vmax.f32 %v1162, 0.0
      %v1423 = vmax.f32 %v1163, 0.0
      %v1424 = vmax.f32 %v1164, 0.0
      %v1425 = vmax.f32 %v1165, 0.0
      %v1426 = vmax.f32 %v1166, 0.0
      %v1427 = vmax.f32 %v1167, 0.0
      %v1428 = vmax.f32 %v1168, 0.0
      %v1429 = vmax.f32 %v1169, 0.0
      %v1430 = vmax.f32 %v1170, 0.0
      %v1431 = vmax.f32 %v1171, 0.0
      %v1432 = vmax.f32 %v1172, 0.0
      %v1433 = vmax.f32 %v1173, 0.0
      %v1434 = vmax.f32 %v1174, 0.0
      %v1435 = vmax.f32 %v1175, 0.0
      %v1436 = vmax.f32 %v1176, 0.0
      %v1437 = vmax.f32 %v1177, 0.0
      %v1438 = vmax.f32 %v1178, 0.0
      %v1439 = vmax.f32 %v1179, 0.0
      %v1440 = vmax.f32 %v1180, 0.0
      %v1441 = vmax.f32 %v1181, 0.0
      %v1442 = vmax.f32 %v1182, 0.0
      %v1443 = vmax.f32 %v1183, 0.0
      %v1444 = vmax.f32 %v1184, 0.0
      %v1445 = vmax.f32 %v1185, 0.0
      %v1446 = vmax.f32 %v1186, 0.0
      %v1447 = vmax.f32 %v1187, 0.0
      %v1448 = vmax.f32 %v1188, 0.0
      %v1449 = vmax.f32 %v1189, 0.0
      %v1450 = vmax.f32 %v1190, 0.0
      %v1451 = vmax.f32 %v1191, 0.0
      %v1452 = vmax.f32 %v1192, 0.0
      %v1453 = vmax.f32 %v1193, 0.0
      %v1454 = vmax.f32 %v1194, 0.0
      %v1455 = vmax.f32 %v1195, 0.0
      %v1456 = vmax.f32 %v1196, 0.0
      %v1457 = vmax.f32 %v1197, 0.0
      %v1458 = vmax.f32 %v1198, 0.0
      %v1459 = vmax.f32 %v1199, 0.0
      %v1460 = vmax.f32 %v1200, 0.0
      %v1461 = vmax.f32 %v1201, 0.0
      %v1462 = vmax.f32 %v1202, 0.0
      %v1463 = vmax.f32 %v1203, 0.0
      %v1464 = vmax.f32 %v1204, 0.0
      %v1465 = vmax.f32 %v1205, 0.0
      %v1466 = vmax.f32 %v1206, 0.0
      %v1467 = vmax.f32 %v1207, 0.0
      %v1468 = vmax.f32 %v1208, 0.0
      %v1469 = vmax.f32 %v1209, 0.0
      %v1470 = vmax.f32 %v1210, 0.0
      %v1471 = vmax.f32 %v1211, 0.0
      %v1472 = vmax.f32 %v1212, 0.0
      %v1473 = vmax.f32 %v1213, 0.0
      %v1474 = vmax.f32 %v1214, 0.0
      %v1475 = vmax.f32 %v1215, 0.0
      %v1476 = vpack.c.bf16 %v1221, %v1216
      %v1477 = vpack.c.bf16 %v1222, %v1217
      %v1478 = vpack.c.bf16 %v1223, %v1218
      %v1479 = vpack.c.bf16 %v1224, %v1219
      %v1480 = vpack.c.bf16 %v1225, %v1220
      %v1481 = vpack.c.bf16 %v1231, %v1226
      %v1482 = vpack.c.bf16 %v1232, %v1227
      %v1483 = vpack.c.bf16 %v1233, %v1228
      %v1484 = vpack.c.bf16 %v1234, %v1229
      %v1485 = vpack.c.bf16 %v1235, %v1230
      %v1486 = vpack.c.bf16 %v1241, %v1236
      %v1487 = vpack.c.bf16 %v1242, %v1237
      %v1488 = vpack.c.bf16 %v1243, %v1238
      %v1489 = vpack.c.bf16 %v1244, %v1239
      %v1490 = vpack.c.bf16 %v1245, %v1240
      %v1491 = vpack.c.bf16 %v1251, %v1246
      %v1492 = vpack.c.bf16 %v1252, %v1247
      %v1493 = vpack.c.bf16 %v1253, %v1248
      %v1494 = vpack.c.bf16 %v1254, %v1249
      %v1495 = vpack.c.bf16 %v1255, %v1250
      %v1496 = vpack.c.bf16 %v1261, %v1256
      %v1497 = vpack.c.bf16 %v1262, %v1257
      %v1498 = vpack.c.bf16 %v1263, %v1258
      %v1499 = vpack.c.bf16 %v1264, %v1259
      %v1500 = vpack.c.bf16 %v1265, %v1260
      %v1501 = vpack.c.bf16 %v1271, %v1266
      %v1502 = vpack.c.bf16 %v1272, %v1267
      %v1503 = vpack.c.bf16 %v1273, %v1268
      %v1504 = vpack.c.bf16 %v1274, %v1269
      %v1505 = vpack.c.bf16 %v1275, %v1270
      %v1506 = vpack.c.bf16 %v1281, %v1276
      %v1507 = vpack.c.bf16 %v1282, %v1277
      %v1508 = vpack.c.bf16 %v1283, %v1278
      %v1509 = vpack.c.bf16 %v1284, %v1279
      %v1510 = vpack.c.bf16 %v1285, %v1280
      %v1511 = vpack.c.bf16 %v1291, %v1286
      %v1512 = vpack.c.bf16 %v1292, %v1287
      %v1513 = vpack.c.bf16 %v1293, %v1288
      %v1514 = vpack.c.bf16 %v1294, %v1289
      %v1515 = vpack.c.bf16 %v1295, %v1290
      %v1516 = vpack.c.bf16 %v1301, %v1296
      %v1517 = vpack.c.bf16 %v1302, %v1297
      %v1518 = vpack.c.bf16 %v1303, %v1298
      %v1519 = vpack.c.bf16 %v1304, %v1299
      %v1520 = vpack.c.bf16 %v1305, %v1300
      %v1521 = vpack.c.bf16 %v1311, %v1306
      %v1522 = vpack.c.bf16 %v1312, %v1307
      %v1523 = vpack.c.bf16 %v1313, %v1308
      %v1524 = vpack.c.bf16 %v1314, %v1309
      %v1525 = vpack.c.bf16 %v1315, %v1310
      %v1526 = vpack.c.bf16 %v1321, %v1316
      %v1527 = vpack.c.bf16 %v1322, %v1317
      %v1528 = vpack.c.bf16 %v1323, %v1318
      %v1529 = vpack.c.bf16 %v1324, %v1319
      %v1530 = vpack.c.bf16 %v1325, %v1320
      %v1531 = vpack.c.bf16 %v1331, %v1326
      %v1532 = vpack.c.bf16 %v1332, %v1327
      %v1533 = vpack.c.bf16 %v1333, %v1328
      %v1534 = vpack.c.bf16 %v1334, %v1329
      %v1535 = vpack.c.bf16 %v1335, %v1330
      %v1536 = vpack.c.bf16 %v1341, %v1336
      %v1537 = vpack.c.bf16 %v1342, %v1337
      %v1538 = vpack.c.bf16 %v1343, %v1338
      %v1539 = vpack.c.bf16 %v1344, %v1339
      %v1540 = vpack.c.bf16 %v1345, %v1340
      %v1541 = vpack.c.bf16 %v1351, %v1346
      %v1542 = vpack.c.bf16 %v1352, %v1347
      %v1543 = vpack.c.bf16 %v1353, %v1348
      %v1544 = vpack.c.bf16 %v1354, %v1349
      %v1545 = vpack.c.bf16 %v1355, %v1350
      %v1546 = vpack.c.bf16 %v1361, %v1356
      %v1547 = vpack.c.bf16 %v1362, %v1357
      %v1548 = vpack.c.bf16 %v1363, %v1358
      %v1549 = vpack.c.bf16 %v1364, %v1359
      %v1550 = vpack.c.bf16 %v1365, %v1360
      %v1551 = vpack.c.bf16 %v1371, %v1366
      %v1552 = vpack.c.bf16 %v1372, %v1367
      %v1553 = vpack.c.bf16 %v1373, %v1368
      %v1554 = vpack.c.bf16 %v1374, %v1369
      %v1555 = vpack.c.bf16 %v1375, %v1370
      %v1556 = vpack.c.bf16 %v1381, %v1376
      %v1557 = vpack.c.bf16 %v1382, %v1377
      %v1558 = vpack.c.bf16 %v1383, %v1378
      %v1559 = vpack.c.bf16 %v1384, %v1379
      %v1560 = vpack.c.bf16 %v1385, %v1380
      %v1561 = vpack.c.bf16 %v1391, %v1386
      %v1562 = vpack.c.bf16 %v1392, %v1387
      %v1563 = vpack.c.bf16 %v1393, %v1388
      %v1564 = vpack.c.bf16 %v1394, %v1389
      %v1565 = vpack.c.bf16 %v1395, %v1390
      %v1566 = vpack.c.bf16 %v1401, %v1396
      %v1567 = vpack.c.bf16 %v1402, %v1397
      %v1568 = vpack.c.bf16 %v1403, %v1398
      %v1569 = vpack.c.bf16 %v1404, %v1399
      %v1570 = vpack.c.bf16 %v1405, %v1400
      %v1571 = vpack.c.bf16 %v1411, %v1406
      %v1572 = vpack.c.bf16 %v1412, %v1407
      %v1573 = vpack.c.bf16 %v1413, %v1408
      %v1574 = vpack.c.bf16 %v1414, %v1409
      %v1575 = vpack.c.bf16 %v1415, %v1410
      %v1576 = vpack.c.bf16 %v1421, %v1416
      %v1577 = vpack.c.bf16 %v1422, %v1417
      %v1578 = vpack.c.bf16 %v1423, %v1418
      %v1579 = vpack.c.bf16 %v1424, %v1419
      %v1580 = vpack.c.bf16 %v1425, %v1420
      %v1581 = vpack.c.bf16 %v1431, %v1426
      %v1582 = vpack.c.bf16 %v1432, %v1427
      %v1583 = vpack.c.bf16 %v1433, %v1428
      %v1584 = vpack.c.bf16 %v1434, %v1429
      %v1585 = vpack.c.bf16 %v1435, %v1430
      %v1586 = vpack.c.bf16 %v1441, %v1436
      %v1587 = vpack.c.bf16 %v1442, %v1437
      %v1588 = vpack.c.bf16 %v1443, %v1438
      %v1589 = vpack.c.bf16 %v1444, %v1439
      %v1590 = vpack.c.bf16 %v1445, %v1440
      %v1591 = vpack.c.bf16 %v1451, %v1446
      %v1592 = vpack.c.bf16 %v1452, %v1447
      %v1593 = vpack.c.bf16 %v1453, %v1448
      %v1594 = vpack.c.bf16 %v1454, %v1449
      %v1595 = vpack.c.bf16 %v1455, %v1450
      %v1596 = vpack.c.bf16 %v1461, %v1456
      %v1597 = vpack.c.bf16 %v1462, %v1457
      %v1598 = vpack.c.bf16 %v1463, %v1458
      %v1599 = vpack.c.bf16 %v1464, %v1459
      %v1600 = vpack.c.bf16 %v1465, %v1460
      %v1601 = vpack.c.bf16 %v1471, %v1466
      %v1602 = vpack.c.bf16 %v1472, %v1467
      %v1603 = vpack.c.bf16 %v1473, %v1468
      %v1604 = vpack.c.bf16 %v1474, %v1469
      %v1605 = vpack.c.bf16 %v1475, %v1470
      %v1606 = vld [vmem:[%s1] sm:$0xf]
      %v1607 = vld [vmem:[%s1 + $0x4] sm:$0xf]
      %v1608 = vld [vmem:[%s1 + $0x8] sm:$0xf]
      %v1609 = vld [vmem:[%s1 + $0xc] sm:$0xf]
      %v1610 = vld [vmem:[%s1 + $0x10] sm:$0xf]
      %v1611 = vld [vmem:[%s1 + $0x14] sm:$0xf]
      %v1612 = vld [vmem:[%s1 + $0x18] sm:$0xf]
      %v1613 = vld [vmem:[%s1 + $0x1c] sm:$0xf]
      %v1614 = vld [vmem:[%s1 + $0x20] sm:$0xf]
      %v1615 = vld [vmem:[%s1 + $0x24] sm:$0xf]
      %v1616 = vld [vmem:[%s1 + $0x28] sm:$0xf]
      %v1617 = vld [vmem:[%s1 + $0x2c] sm:$0xf]
      %v1618 = vld [vmem:[%s1 + $0x30] sm:$0xf]
      %v1619 = vld [vmem:[%s1 + $0x34] sm:$0xf]
      %v1620 = vld [vmem:[%s1 + $0x38] sm:$0xf]
      %v1621 = vld [vmem:[%s1 + $0x3c] sm:$0xf]
      %v1622 = vld [vmem:[%s1 + $0x40] sm:$0xf]
      %v1623 = vld [vmem:[%s1 + $0x44] sm:$0xf]
      %v1624 = vld [vmem:[%s1 + $0x48] sm:$0xf]
      %v1625 = vld [vmem:[%s1 + $0x4c] sm:$0xf]
      %v1626 = vld [vmem:[%s1 + $0x50] sm:$0xf]
      %v1627 = vld [vmem:[%s1 + $0x54] sm:$0xf]
      %v1628 = vld [vmem:[%s1 + $0x58] sm:$0xf]
      %v1629 = vld [vmem:[%s1 + $0x5c] sm:$0xf]
      %v1630 = vld [vmem:[%s1 + $0x60] sm:$0xf]
      %v1631 = vld [vmem:[%s1 + $0x64] sm:$0xf]
      %v1632 = vld [vmem:[%s1 + $0x68] sm:$0xf]
      %v1633 = vld [vmem:[%s1 + $0x6c] sm:$0xf]
      %v1634 = vld [vmem:[%s1 + $0x70] sm:$0xf]
      %v1635 = vld [vmem:[%s1 + $0x74] sm:$0xf]
      %v1636 = vld [vmem:[%s1 + $0x78] sm:$0xf]
      %v1637 = vld [vmem:[%s1 + $0x7c] sm:$0xf]
      %v1638 = vld [vmem:[%s1 + $0x80] sm:$0xf]
      %v1639 = vld [vmem:[%s1 + $0x84] sm:$0xf]
      %v1640 = vld [vmem:[%s1 + $0x88] sm:$0xf]
      %v1641 = vld [vmem:[%s1 + $0x8c] sm:$0xf]
      %v1642 = vld [vmem:[%s1 + $0x90] sm:$0xf]
      %v1643 = vld [vmem:[%s1 + $0x94] sm:$0xf]
      %v1644 = vld [vmem:[%s1 + $0x98] sm:$0xf]
      %v1645 = vld [vmem:[%s1 + $0x9c] sm:$0xf]
      %v1646 = vld [vmem:[%s1 + $0xa0] sm:$0xf]
      %v1647 = vld [vmem:[%s1 + $0xa4] sm:$0xf]
      %v1648 = vld [vmem:[%s1 + $0xa8] sm:$0xf]
      %v1649 = vld [vmem:[%s1 + $0xac] sm:$0xf]
      %v1650 = vld [vmem:[%s1 + $0xb0] sm:$0xf]
      %v1651 = vld [vmem:[%s1 + $0xb4] sm:$0xf]
      %v1652 = vld [vmem:[%s1 + $0xb8] sm:$0xf]
      %v1653 = vld [vmem:[%s1 + $0xbc] sm:$0xf]
      %v1654 = vld [vmem:[%s1 + $0xc0] sm:$0xf]
      %v1655 = vld [vmem:[%s1 + $0xc4] sm:$0xf]
      %v1656 = vld [vmem:[%s1 + $0xc8] sm:$0xf]
      %v1657 = vld [vmem:[%s1 + $0xcc] sm:$0xf]
      %v1658 = vld [vmem:[%s1 + $0xd0] sm:$0xf]
      %v1659 = vld [vmem:[%s1 + $0xd4] sm:$0xf]
      %v1660 = vld [vmem:[%s1 + $0xd8] sm:$0xf]
      %v1661 = vld [vmem:[%s1 + $0xdc] sm:$0xf]
      %v1662 = vld [vmem:[%s1 + $0xe0] sm:$0xf]
      %v1663 = vld [vmem:[%s1 + $0xe4] sm:$0xf]
      %v1664 = vld [vmem:[%s1 + $0xe8] sm:$0xf]
      %v1665 = vld [vmem:[%s1 + $0xec] sm:$0xf]
      %v1666 = vld [vmem:[%s1 + $0xf0] sm:$0xf]
      %v1667 = vld [vmem:[%s1 + $0xf4] sm:$0xf]
      %v1668 = vld [vmem:[%s1 + $0xf8] sm:$0xf]
      %v1669 = vld [vmem:[%s1 + $0xfc] sm:$0xf]
      %v1670 = vld [vmem:[%s1 + $0x100] sm:$0xf]
      %v1671 = vld [vmem:[%s1 + $0x104] sm:$0xf]
      %v1672 = vld [vmem:[%s1 + $0x108] sm:$0xf]
      %v1673 = vld [vmem:[%s1 + $0x10c] sm:$0xf]
      %v1674 = vld [vmem:[%s1 + $0x110] sm:$0xf]
      %v1675 = vld [vmem:[%s1 + $0x114] sm:$0xf]
      %v1676 = vld [vmem:[%s1 + $0x118] sm:$0xf]
      %v1677 = vld [vmem:[%s1 + $0x11c] sm:$0xf]
      %v1750 = vunpack.c.l.b16 %v1606
      %v1751 = vunpack.c.l.b16 %v1607
      %v1752 = vunpack.c.l.b16 %v1608
      %v1753 = vunpack.c.l.b16 %v1609
      %v1754 = vunpack.c.l.b16 %v1610
      %v1755 = vunpack.c.l.b16 %v1611
      %v1756 = vunpack.c.l.b16 %v1612
      %v1757 = vunpack.c.l.b16 %v1613
      %v1758 = vunpack.c.l.b16 %v1614
      %v1759 = vunpack.c.l.b16 %v1615
      %v1760 = vunpack.c.l.b16 %v1616
      %v1761 = vunpack.c.l.b16 %v1617
      %v1762 = vunpack.c.l.b16 %v1618
      %v1763 = vunpack.c.l.b16 %v1619
      %v1764 = vunpack.c.l.b16 %v1620
      %v1765 = vunpack.c.l.b16 %v1621
      %v1766 = vunpack.c.l.b16 %v1622
      %v1767 = vunpack.c.l.b16 %v1623
      %v1768 = vunpack.c.l.b16 %v1624
      %v1769 = vunpack.c.l.b16 %v1625
      %v1770 = vunpack.c.l.b16 %v1626
      %v1771 = vunpack.c.l.b16 %v1627
      %v1772 = vunpack.c.l.b16 %v1628
      %v1773 = vunpack.c.l.b16 %v1629
      %v1774 = vunpack.c.l.b16 %v1630
      %v1775 = vunpack.c.l.b16 %v1631
      %v1776 = vunpack.c.l.b16 %v1632
      %v1777 = vunpack.c.l.b16 %v1633
      %v1778 = vunpack.c.l.b16 %v1634
      %v1779 = vunpack.c.l.b16 %v1635
      %v1780 = vunpack.c.l.b16 %v1636
      %v1781 = vunpack.c.l.b16 %v1637
      %v1782 = vunpack.c.l.b16 %v1638
      %v1783 = vunpack.c.l.b16 %v1639
      %v1784 = vunpack.c.l.b16 %v1640
      %v1785 = vunpack.c.l.b16 %v1641
      %v1786 = vunpack.c.l.b16 %v1642
      %v1787 = vunpack.c.l.b16 %v1643
      %v1788 = vunpack.c.l.b16 %v1644
      %v1789 = vunpack.c.l.b16 %v1645
      %v1790 = vunpack.c.l.b16 %v1646
      %v1791 = vunpack.c.l.b16 %v1647
      %v1792 = vunpack.c.l.b16 %v1648
      %v1793 = vunpack.c.l.b16 %v1649
      %v1794 = vunpack.c.l.b16 %v1650
      %v1795 = vunpack.c.l.b16 %v1651
      %v1796 = vunpack.c.l.b16 %v1652
      %v1797 = vunpack.c.l.b16 %v1653
      %v1798 = vunpack.c.l.b16 %v1654
      %v1799 = vunpack.c.l.b16 %v1655
      %v1800 = vunpack.c.l.b16 %v1656
      %v1801 = vunpack.c.l.b16 %v1657
      %v1802 = vunpack.c.l.b16 %v1658
      %v1803 = vunpack.c.l.b16 %v1659
      %v1804 = vunpack.c.l.b16 %v1660
      %v1805 = vunpack.c.l.b16 %v1661
      %v1806 = vunpack.c.l.b16 %v1662
      %v1807 = vunpack.c.l.b16 %v1663
      %v1808 = vunpack.c.l.b16 %v1664
      %v1809 = vunpack.c.l.b16 %v1665
      %v1810 = vunpack.c.l.b16 %v1666
      %v1811 = vunpack.c.l.b16 %v1667
      %v1812 = vunpack.c.l.b16 %v1668
      %v1813 = vunpack.c.l.b16 %v1669
      %v1814 = vunpack.c.l.b16 %v1670
      %v1815 = vunpack.c.l.b16 %v1671
      %v1816 = vunpack.c.l.b16 %v1672
      %v1817 = vunpack.c.l.b16 %v1673
      %v1818 = vunpack.c.l.b16 %v1674
      %v1819 = vunpack.c.l.b16 %v1675
      %v1820 = vunpack.c.l.b16 %v1676
      %v1821 = vunpack.c.l.b16 %v1677
      %v1822 = vpack.c.b16 %v1751, %v1750
      %v1823 = vpack.c.b16 %v1753, %v1752
      %v1824 = vpack.c.b16 %v1755, %v1754
      %v1825 = vpack.c.b16 %v1757, %v1756
      %v1826 = vpack.c.b16 %v1759, %v1758
      %v1827 = vpack.c.b16 %v1761, %v1760
      %v1828 = vpack.c.b16 %v1763, %v1762
      %v1829 = vpack.c.b16 %v1765, %v1764
      %v1830 = vpack.c.b16 %v1767, %v1766
      %v1831 = vpack.c.b16 %v1769, %v1768
      %v1832 = vpack.c.b16 %v1771, %v1770
      %v1833 = vpack.c.b16 %v1773, %v1772
      %v1834 = vpack.c.b16 %v1775, %v1774
      %v1835 = vpack.c.b16 %v1777, %v1776
      %v1836 = vpack.c.b16 %v1779, %v1778
      %v1837 = vpack.c.b16 %v1781, %v1780
      %v1838 = vpack.c.b16 %v1783, %v1782
      %v1839 = vpack.c.b16 %v1785, %v1784
      %v1840 = vpack.c.b16 %v1787, %v1786
      %v1841 = vpack.c.b16 %v1789, %v1788
      %v1842 = vpack.c.b16 %v1791, %v1790
      %v1843 = vpack.c.b16 %v1793, %v1792
      %v1844 = vpack.c.b16 %v1795, %v1794
      %v1845 = vpack.c.b16 %v1797, %v1796
      %v1846 = vpack.c.b16 %v1799, %v1798
      %v1847 = vpack.c.b16 %v1801, %v1800
      %v1848 = vpack.c.b16 %v1803, %v1802
      %v1849 = vpack.c.b16 %v1805, %v1804
      %v1850 = vpack.c.b16 %v1807, %v1806
      %v1851 = vpack.c.b16 %v1809, %v1808
      %v1852 = vpack.c.b16 %v1811, %v1810
      %v1853 = vpack.c.b16 %v1813, %v1812
      %v1854 = vpack.c.b16 %v1815, %v1814
      %v1855 = vpack.c.b16 %v1817, %v1816
      %v1856 = vpack.c.b16 %v1819, %v1818
      %v1857 = vpack.c.b16 %v1821, %v1820
      %vm1894 = vcmask 523264
      %v1896 = vsel %vm1894, %v1480, 0
      %v1899 = vsel %vm1894, %v1485, 0
      %v1902 = vsel %vm1894, %v1490, 0
      %v1905 = vsel %vm1894, %v1495, 0
      %v1908 = vsel %vm1894, %v1500, 0
      %v1911 = vsel %vm1894, %v1505, 0
      %v1914 = vsel %vm1894, %v1510, 0
      %v1917 = vsel %vm1894, %v1515, 0
      %v1920 = vsel %vm1894, %v1520, 0
      %v1923 = vsel %vm1894, %v1525, 0
      %v1926 = vsel %vm1894, %v1530, 0
      %v1929 = vsel %vm1894, %v1535, 0
      %v1932 = vsel %vm1894, %v1540, 0
      %v1935 = vsel %vm1894, %v1545, 0
      %v1938 = vsel %vm1894, %v1550, 0
      %v1941 = vsel %vm1894, %v1555, 0
      %v1944 = vsel %vm1894, %v1560, 0
      %v1947 = vsel %vm1894, %v1565, 0
      %v1950 = vsel %vm1894, %v1570, 0
      %v1953 = vsel %vm1894, %v1575, 0
      %v1956 = vsel %vm1894, %v1580, 0
      %v1959 = vsel %vm1894, %v1585, 0
      %v1962 = vsel %vm1894, %v1590, 0
      %v1965 = vsel %vm1894, %v1595, 0
      %v1968 = vsel %vm1894, %v1600, 0
      %v1971 = vsel %vm1894, %v1605, 0
      %1973 = vmatprep.subr.bf16.mxu0 0
      %1974 = vmatpush1.bf16.msra.mxu0 %v1822
      %1975 = vmatprep.subr.bf16.mxu0 0
      %1976 = vmatpush1.bf16.msra.mxu0 %v1823
      %1977 = vmatprep.subr.bf16.mxu0 0
      %1978 = vmatpush1.bf16.msra.mxu0 %v1824
      %1979 = vmatprep.subr.bf16.mxu0 0
      %1980 = vmatpush1.bf16.msra.mxu0 %v1825
      %1981 = vmatprep.subr.bf16.mxu0 0
      %1982 = vmatpush1.bf16.msra.mxu0 %v1826
      %1983 = vmatprep.subr.bf16.mxu0 0
      %1984 = vmatpush1.bf16.msra.mxu0 %v1827
      %1985 = vmatprep.subr.bf16.mxu0 0
      %1986 = vmatpush1.bf16.msra.mxu0 %v1828
      %1987 = vmatprep.subr.bf16.mxu0 0
      %1988 = vmatpush1.bf16.msra.mxu0 %v1829
      %1989 = vmatprep.subr.bf16.mxu0 0
      %1990 = vmatpush1.bf16.msra.mxu0 %v1830
      %1991 = vmatprep.subr.bf16.mxu0 0
      %1992 = vmatpush1.bf16.msra.mxu0 %v1831
      %1993 = vmatprep.subr.bf16.mxu0 0
      %1994 = vmatpush1.bf16.msra.mxu0 %v1832
      %1995 = vmatprep.subr.bf16.mxu0 0
      %1996 = vmatpush1.bf16.msra.mxu0 %v1833
      %1997 = vmatprep.subr.bf16.mxu0 0
      %1998 = vmatpush1.bf16.msra.mxu0 %v1834
      %1999 = vmatprep.subr.bf16.mxu0 0
      %2000 = vmatpush1.bf16.msra.mxu0 %v1835
      %2001 = vmatprep.subr.bf16.mxu0 0
      %2002 = vmatpush1.bf16.msra.mxu0 %v1836
      %2003 = vmatprep.subr.bf16.mxu0 0
      %2004 = vmatpush1.bf16.msra.mxu0 %v1837
      %2005 = vmatprep.mubr.bf16.mxu0 %v1477
      %2006 = vmatmul.mubr.bf16.gmra.mrb[0].mxu0 %v1476
      %v2007 = vpop.f32.mrb[0].mxu0
      %v2008 = vadd.f32 0.0, %v2007
      %v2009 = vpop.f32.mrb[0].mxu0
      %v2010 = vpop.f32.mrb[0].mxu0
      %v2011 = vadd.f32 0.0, %v2010
      %v2012 = vpop.f32.mrb[0].mxu0
      %2013 = vmatprep.mubr.bf16.mxu0 %v1482
      %2014 = vmatmul.mubr.bf16.gmra.mrb[0].mxu0 %v1481
      %v2015 = vpop.f32.mrb[0].mxu0
      %v2016 = vadd.f32 0.0, %v2015
      %v2017 = vpop.f32.mrb[0].mxu0
      %v2018 = vpop.f32.mrb[0].mxu0
      %v2019 = vadd.f32 0.0, %v2018
      %v2020 = vpop.f32.mrb[0].mxu0
      %2021 = vmatprep.mubr.bf16.mxu0 %v1487
      %2022 = vmatmul.mubr.bf16.gmra.mrb[0].mxu0 %v1486
      %v2023 = vpop.f32.mrb[0].mxu0
      %v2024 = vadd.f32 0.0, %v2023
      %v2025 = vpop.f32.mrb[0].mxu0
      %v2026 = vpop.f32.mrb[0].mxu0
      %v2027 = vadd.f32 0.0, %v2026
      %v2028 = vpop.f32.mrb[0].mxu0
      %2029 = vmatprep.mubr.bf16.mxu0 %v1492
      %2030 = vmatmul.mubr.bf16.gmra.mrb[0].mxu0 %v1491
      %v2031 = vpop.f32.mrb[0].mxu0
      %v2032 = vadd.f32 0.0, %v2031
      %v2033 = vpop.f32.mrb[0].mxu0
      %v2034 = vpop.f32.mrb[0].mxu0
      %v2035 = vadd.f32 0.0, %v2034
      %v2036 = vpop.f32.mrb[0].mxu0
      %2037 = vmatprep.mubr.bf16.mxu0 %v1497
      %2038 = vmatmul.mubr.bf16.gmra.mrb[0].mxu0 %v1496
      %v2039 = vpop.f32.mrb[0].mxu0
      %v2040 = vadd.f32 0.0, %v2039
      %v2041 = vpop.f32.mrb[0].mxu0
      %v2042 = vpop.f32.mrb[0].mxu0
      %v2043 = vadd.f32 0.0, %v2042
      %v2044 = vpop.f32.mrb[0].mxu0
      %2045 = vmatprep.mubr.bf16.mxu0 %v1502
      %2046 = vmatmul.mubr.bf16.gmra.mrb[0].mxu0 %v1501
      %v2047 = vpop.f32.mrb[0].mxu0
      %v2048 = vadd.f32 0.0, %v2047
      %v2049 = vpop.f32.mrb[0].mxu0
      %v2050 = vpop.f32.mrb[0].mxu0
      %v2051 = vadd.f32 0.0, %v2050
      %v2052 = vpop.f32.mrb[0].mxu0
      %2053 = vmatprep.mubr.bf16.mxu0 %v1507
      %2054 = vmatmul.mubr.bf16.gmra.mrb[0].mxu0 %v1506
      %v2055 = vpop.f32.mrb[0].mxu0
      %v2056 = vadd.f32 0.0, %v2055
      %v2057 = vpop.f32.mrb[0].mxu0
      %v2058 = vpop.f32.mrb[0].mxu0
      %v2059 = vadd.f32 0.0, %v2058
      %v2060 = vpop.f32.mrb[0].mxu0
      %2061 = vmatprep.mubr.bf16.mxu0 %v1512
      %2062 = vmatmul.mubr.bf16.gmra.mrb[0].mxu0 %v1511
      %v2063 = vpop.f32.mrb[0].mxu0
      %v2064 = vadd.f32 0.0, %v2063
      %v2065 = vpop.f32.mrb[0].mxu0
      %v2066 = vpop.f32.mrb[0].mxu0
      %v2067 = vadd.f32 0.0, %v2066
      %v2068 = vpop.f32.mrb[0].mxu0
      %2069 = vmatprep.mubr.bf16.mxu0 %v1517
      %2070 = vmatmul.mubr.bf16.gmra.mrb[0].mxu0 %v1516
      %v2071 = vpop.f32.mrb[0].mxu0
      %v2072 = vadd.f32 0.0, %v2071
      %v2073 = vpop.f32.mrb[0].mxu0
      %v2074 = vpop.f32.mrb[0].mxu0
      %v2075 = vadd.f32 0.0, %v2074
      %v2076 = vpop.f32.mrb[0].mxu0
      %2077 = vmatprep.mubr.bf16.mxu0 %v1522
      %2078 = vmatmul.mubr.bf16.gmra.mrb[0].mxu0 %v1521
      %v2079 = vpop.f32.mrb[0].mxu0
      %v2080 = vadd.f32 0.0, %v2079
      %v2081 = vpop.f32.mrb[0].mxu0
      %v2082 = vpop.f32.mrb[0].mxu0
      %v2083 = vadd.f32 0.0, %v2082
      %v2084 = vpop.f32.mrb[0].mxu0
      %2085 = vmatprep.mubr.bf16.mxu0 %v1527
      %2086 = vmatmul.mubr.bf16.gmra.mrb[0].mxu0 %v1526
      %v2087 = vpop.f32.mrb[0].mxu0
      %v2088 = vadd.f32 0.0, %v2087
      %v2089 = vpop.f32.mrb[0].mxu0
      %v2090 = vpop.f32.mrb[0].mxu0
      %v2091 = vadd.f32 0.0, %v2090
      %v2092 = vpop.f32.mrb[0].mxu0
      %2093 = vmatprep.mubr.bf16.mxu0 %v1532
      %2094 = vmatmul.mubr.bf16.gmra.mrb[0].mxu0 %v1531
      %v2095 = vpop.f32.mrb[0].mxu0
      %v2096 = vadd.f32 0.0, %v2095
      %v2097 = vpop.f32.mrb[0].mxu0
      %v2098 = vpop.f32.mrb[0].mxu0
      %v2099 = vadd.f32 0.0, %v2098
      %v2100 = vpop.f32.mrb[0].mxu0
      %2101 = vmatprep.mubr.bf16.mxu0 %v1537
      %2102 = vmatmul.mubr.bf16.gmra.mrb[0].mxu0 %v1536
      %v2103 = vpop.f32.mrb[0].mxu0
      %v2104 = vadd.f32 0.0, %v2103
      %v2105 = vpop.f32.mrb[0].mxu0
      %v2106 = vpop.f32.mrb[0].mxu0
      %v2107 = vadd.f32 0.0, %v2106
      %v2108 = vpop.f32.mrb[0].mxu0
      %2109 = vmatprep.mubr.bf16.mxu0 %v1542
      %2110 = vmatmul.mubr.bf16.gmra.mrb[0].mxu0 %v1541
      %v2111 = vpop.f32.mrb[0].mxu0
      %v2112 = vadd.f32 0.0, %v2111
      %v2113 = vpop.f32.mrb[0].mxu0
      %v2114 = vpop.f32.mrb[0].mxu0
      %v2115 = vadd.f32 0.0, %v2114
      %v2116 = vpop.f32.mrb[0].mxu0
      %2117 = vmatprep.mubr.bf16.mxu0 %v1547
      %2118 = vmatmul.mubr.bf16.gmra.mrb[0].mxu0 %v1546
      %v2119 = vpop.f32.mrb[0].mxu0
      %v2120 = vadd.f32 0.0, %v2119
      %v2121 = vpop.f32.mrb[0].mxu0
      %v2122 = vpop.f32.mrb[0].mxu0
      %v2123 = vadd.f32 0.0, %v2122
      %v2124 = vpop.f32.mrb[0].mxu0
      %2125 = vmatprep.mubr.bf16.mxu0 %v1552
      %2126 = vmatmul.mubr.bf16.gmra.mrb[0].mxu0 %v1551
      %v2127 = vpop.f32.mrb[0].mxu0
      %v2128 = vadd.f32 0.0, %v2127
      %v2129 = vpop.f32.mrb[0].mxu0
      %v2130 = vpop.f32.mrb[0].mxu0
      %v2131 = vadd.f32 0.0, %v2130
      %v2132 = vpop.f32.mrb[0].mxu0
      %2133 = vmatprep.mubr.bf16.mxu0 %v1557
      %2134 = vmatmul.mubr.bf16.gmra.mrb[0].mxu0 %v1556
      %v2135 = vpop.f32.mrb[0].mxu0
      %v2136 = vadd.f32 0.0, %v2135
      %v2137 = vpop.f32.mrb[0].mxu0
      %v2138 = vpop.f32.mrb[0].mxu0
      %v2139 = vadd.f32 0.0, %v2138
      %v2140 = vpop.f32.mrb[0].mxu0
      %2141 = vmatprep.mubr.bf16.mxu0 %v1562
      %2142 = vmatmul.mubr.bf16.gmra.mrb[0].mxu0 %v1561
      %v2143 = vpop.f32.mrb[0].mxu0
      %v2144 = vadd.f32 0.0, %v2143
      %v2145 = vpop.f32.mrb[0].mxu0
      %v2146 = vpop.f32.mrb[0].mxu0
      %v2147 = vadd.f32 0.0, %v2146
      %v2148 = vpop.f32.mrb[0].mxu0
      %2149 = vmatprep.mubr.bf16.mxu0 %v1567
      %2150 = vmatmul.mubr.bf16.gmra.mrb[0].mxu0 %v1566
      %v2151 = vpop.f32.mrb[0].mxu0
      %v2152 = vadd.f32 0.0, %v2151
      %v2153 = vpop.f32.mrb[0].mxu0
      %v2154 = vpop.f32.mrb[0].mxu0
      %v2155 = vadd.f32 0.0, %v2154
      %v2156 = vpop.f32.mrb[0].mxu0
      %2157 = vmatprep.mubr.bf16.mxu0 %v1572
      %2158 = vmatmul.mubr.bf16.gmra.mrb[0].mxu0 %v1571
      %v2159 = vpop.f32.mrb[0].mxu0
      %v2160 = vadd.f32 0.0, %v2159
      %v2161 = vpop.f32.mrb[0].mxu0
      %v2162 = vpop.f32.mrb[0].mxu0
      %v2163 = vadd.f32 0.0, %v2162
      %v2164 = vpop.f32.mrb[0].mxu0
      %2165 = vmatprep.mubr.bf16.mxu0 %v1577
      %2166 = vmatmul.mubr.bf16.gmra.mrb[0].mxu0 %v1576
      %v2167 = vpop.f32.mrb[0].mxu0
      %v2168 = vadd.f32 0.0, %v2167
      %v2169 = vpop.f32.mrb[0].mxu0
      %v2170 = vpop.f32.mrb[0].mxu0
      %v2171 = vadd.f32 0.0, %v2170
      %v2172 = vpop.f32.mrb[0].mxu0
      %2173 = vmatprep.mubr.bf16.mxu0 %v1582
      %2174 = vmatmul.mubr.bf16.gmra.mrb[0].mxu0 %v1581
      %v2175 = vpop.f32.mrb[0].mxu0
      %v2176 = vadd.f32 0.0, %v2175
      %v2177 = vpop.f32.mrb[0].mxu0
      %v2178 = vpop.f32.mrb[0].mxu0
      %v2179 = vadd.f32 0.0, %v2178
      %v2180 = vpop.f32.mrb[0].mxu0
      %2181 = vmatprep.mubr.bf16.mxu0 %v1587
      %2182 = vmatmul.mubr.bf16.gmra.mrb[0].mxu0 %v1586
      %v2183 = vpop.f32.mrb[0].mxu0
      %v2184 = vadd.f32 0.0, %v2183
      %v2185 = vpop.f32.mrb[0].mxu0
      %v2186 = vpop.f32.mrb[0].mxu0
      %v2187 = vadd.f32 0.0, %v2186
      %v2188 = vpop.f32.mrb[0].mxu0
      %2189 = vmatprep.mubr.bf16.mxu0 %v1592
      %2190 = vmatmul.mubr.bf16.gmra.mrb[0].mxu0 %v1591
      %v2191 = vpop.f32.mrb[0].mxu0
      %v2192 = vadd.f32 0.0, %v2191
      %v2193 = vpop.f32.mrb[0].mxu0
      %v2194 = vpop.f32.mrb[0].mxu0
      %v2195 = vadd.f32 0.0, %v2194
      %v2196 = vpop.f32.mrb[0].mxu0
      %2197 = vmatprep.mubr.bf16.mxu0 %v1597
      %2198 = vmatmul.mubr.bf16.gmra.mrb[0].mxu0 %v1596
      %v2199 = vpop.f32.mrb[0].mxu0
      %v2200 = vadd.f32 0.0, %v2199
      %v2201 = vpop.f32.mrb[0].mxu0
      %v2202 = vpop.f32.mrb[0].mxu0
      %v2203 = vadd.f32 0.0, %v2202
      %v2204 = vpop.f32.mrb[0].mxu0
      %2205 = vmatprep.mubr.bf16.mxu0 %v1602
      %2206 = vmatmul.mubr.bf16.gmra.mrb[0].mxu0 %v1601
      %v2207 = vpop.f32.mrb[0].mxu0
      %v2208 = vadd.f32 0.0, %v2207
      %v2209 = vpop.f32.mrb[0].mxu0
      %v2210 = vpop.f32.mrb[0].mxu0
      %v2211 = vadd.f32 0.0, %v2210
      %v2212 = vpop.f32.mrb[0].mxu0
      %2213 = vdwg.mxu0
      %2214 = vmatprep.subr.bf16.mxu0 0
      %2215 = vmatpush1.bf16.msra.mxu0 %v1838
      %2216 = vmatprep.subr.bf16.mxu0 0
      %2217 = vmatpush1.bf16.msra.mxu0 %v1839
      %2218 = vmatprep.subr.bf16.mxu0 0
      %2219 = vmatpush1.bf16.msra.mxu0 %v1840
      %2220 = vmatprep.subr.bf16.mxu0 0
      %2221 = vmatpush1.bf16.msra.mxu0 %v1841
      %2222 = vmatprep.subr.bf16.mxu0 0
      %2223 = vmatpush1.bf16.msra.mxu0 %v1842
      %2224 = vmatprep.subr.bf16.mxu0 0
      %2225 = vmatpush1.bf16.msra.mxu0 %v1843
      %2226 = vmatprep.subr.bf16.mxu0 0
      %2227 = vmatpush1.bf16.msra.mxu0 %v1844
      %2228 = vmatprep.subr.bf16.mxu0 0
      %2229 = vmatpush1.bf16.msra.mxu0 %v1845
      %2230 = vmatprep.subr.bf16.mxu0 0
      %2231 = vmatpush1.bf16.msra.mxu0 %v1846
      %2232 = vmatprep.subr.bf16.mxu0 0
      %2233 = vmatpush1.bf16.msra.mxu0 %v1847
      %2234 = vmatprep.subr.bf16.mxu0 0
      %2235 = vmatpush1.bf16.msra.mxu0 %v1848
      %2236 = vmatprep.subr.bf16.mxu0 0
      %2237 = vmatpush1.bf16.msra.mxu0 %v1849
      %2238 = vmatprep.subr.bf16.mxu0 0
      %2239 = vmatpush1.bf16.msra.mxu0 %v1850
      %2240 = vmatprep.subr.bf16.mxu0 0
      %2241 = vmatpush1.bf16.msra.mxu0 %v1851
      %2242 = vmatprep.subr.bf16.mxu0 0
      %2243 = vmatpush1.bf16.msra.mxu0 %v1852
      %2244 = vmatprep.subr.bf16.mxu0 0
      %2245 = vmatpush1.bf16.msra.mxu0 %v1853
      %2246 = vmatprep.mubr.bf16.mxu0 %v1479
      %2247 = vmatmul.mubr.bf16.gmra.mrb[0].mxu0 %v1478
      %v2248 = vpop.f32.mrb[0].mxu0
      %v2249 = vadd.f32 %v2008, %v2248
      %v2250 = vpop.f32.mrb[0].mxu0
      %v2251 = vpop.f32.mrb[0].mxu0
      %v2252 = vadd.f32 %v2011, %v2251
      %v2253 = vpop.f32.mrb[0].mxu0
      %2254 = vmatprep.mubr.bf16.mxu0 %v1484
      %2255 = vmatmul.mubr.bf16.gmra.mrb[0].mxu0 %v1483
      %v2256 = vpop.f32.mrb[0].mxu0
      %v2257 = vadd.f32 %v2016, %v2256
      %v2258 = vpop.f32.mrb[0].mxu0
      %v2259 = vpop.f32.mrb[0].mxu0
      %v2260 = vadd.f32 %v2019, %v2259
      %v2261 = vpop.f32.mrb[0].mxu0
      %2262 = vmatprep.mubr.bf16.mxu0 %v1489
      %2263 = vmatmul.mubr.bf16.gmra.mrb[0].mxu0 %v1488
      %v2264 = vpop.f32.mrb[0].mxu0
      %v2265 = vadd.f32 %v2024, %v2264
      %v2266 = vpop.f32.mrb[0].mxu0
      %v2267 = vpop.f32.mrb[0].mxu0
      %v2268 = vadd.f32 %v2027, %v2267
      %v2269 = vpop.f32.mrb[0].mxu0
      %2270 = vmatprep.mubr.bf16.mxu0 %v1494
      %2271 = vmatmul.mubr.bf16.gmra.mrb[0].mxu0 %v1493
      %v2272 = vpop.f32.mrb[0].mxu0
      %v2273 = vadd.f32 %v2032, %v2272
      %v2274 = vpop.f32.mrb[0].mxu0
      %v2275 = vpop.f32.mrb[0].mxu0
      %v2276 = vadd.f32 %v2035, %v2275
      %v2277 = vpop.f32.mrb[0].mxu0
      %2278 = vmatprep.mubr.bf16.mxu0 %v1499
      %2279 = vmatmul.mubr.bf16.gmra.mrb[0].mxu0 %v1498
      %v2280 = vpop.f32.mrb[0].mxu0
      %v2281 = vadd.f32 %v2040, %v2280
      %v2282 = vpop.f32.mrb[0].mxu0
      %v2283 = vpop.f32.mrb[0].mxu0
      %v2284 = vadd.f32 %v2043, %v2283
      %v2285 = vpop.f32.mrb[0].mxu0
      %2286 = vmatprep.mubr.bf16.mxu0 %v1504
      %2287 = vmatmul.mubr.bf16.gmra.mrb[0].mxu0 %v1503
      %v2288 = vpop.f32.mrb[0].mxu0
      %v2289 = vadd.f32 %v2048, %v2288
      %v2290 = vpop.f32.mrb[0].mxu0
      %v2291 = vpop.f32.mrb[0].mxu0
      %v2292 = vadd.f32 %v2051, %v2291
      %v2293 = vpop.f32.mrb[0].mxu0
      %2294 = vmatprep.mubr.bf16.mxu0 %v1509
      %2295 = vmatmul.mubr.bf16.gmra.mrb[0].mxu0 %v1508
      %v2296 = vpop.f32.mrb[0].mxu0
      %v2297 = vadd.f32 %v2056, %v2296
      %v2298 = vpop.f32.mrb[0].mxu0
      %v2299 = vpop.f32.mrb[0].mxu0
      %v2300 = vadd.f32 %v2059, %v2299
      %v2301 = vpop.f32.mrb[0].mxu0
      %2302 = vmatprep.mubr.bf16.mxu0 %v1514
      %2303 = vmatmul.mubr.bf16.gmra.mrb[0].mxu0 %v1513
      %v2304 = vpop.f32.mrb[0].mxu0
      %v2305 = vadd.f32 %v2064, %v2304
      %v2306 = vpop.f32.mrb[0].mxu0
      %v2307 = vpop.f32.mrb[0].mxu0
      %v2308 = vadd.f32 %v2067, %v2307
      %v2309 = vpop.f32.mrb[0].mxu0
      %2310 = vmatprep.mubr.bf16.mxu0 %v1519
      %2311 = vmatmul.mubr.bf16.gmra.mrb[0].mxu0 %v1518
      %v2312 = vpop.f32.mrb[0].mxu0
      %v2313 = vadd.f32 %v2072, %v2312
      %v2314 = vpop.f32.mrb[0].mxu0
      %v2315 = vpop.f32.mrb[0].mxu0
      %v2316 = vadd.f32 %v2075, %v2315
      %v2317 = vpop.f32.mrb[0].mxu0
      %2318 = vmatprep.mubr.bf16.mxu0 %v1524
      %2319 = vmatmul.mubr.bf16.gmra.mrb[0].mxu0 %v1523
      %v2320 = vpop.f32.mrb[0].mxu0
      %v2321 = vadd.f32 %v2080, %v2320
      %v2322 = vpop.f32.mrb[0].mxu0
      %v2323 = vpop.f32.mrb[0].mxu0
      %v2324 = vadd.f32 %v2083, %v2323
      %v2325 = vpop.f32.mrb[0].mxu0
      %2326 = vmatprep.mubr.bf16.mxu0 %v1529
      %2327 = vmatmul.mubr.bf16.gmra.mrb[0].mxu0 %v1528
      %v2328 = vpop.f32.mrb[0].mxu0
      %v2329 = vadd.f32 %v2088, %v2328
      %v2330 = vpop.f32.mrb[0].mxu0
      %v2331 = vpop.f32.mrb[0].mxu0
      %v2332 = vadd.f32 %v2091, %v2331
      %v2333 = vpop.f32.mrb[0].mxu0
      %2334 = vmatprep.mubr.bf16.mxu0 %v1534
      %2335 = vmatmul.mubr.bf16.gmra.mrb[0].mxu0 %v1533
      %v2336 = vpop.f32.mrb[0].mxu0
      %v2337 = vadd.f32 %v2096, %v2336
      %v2338 = vpop.f32.mrb[0].mxu0
      %v2339 = vpop.f32.mrb[0].mxu0
      %v2340 = vadd.f32 %v2099, %v2339
      %v2341 = vpop.f32.mrb[0].mxu0
      %2342 = vmatprep.mubr.bf16.mxu0 %v1539
      %2343 = vmatmul.mubr.bf16.gmra.mrb[0].mxu0 %v1538
      %v2344 = vpop.f32.mrb[0].mxu0
      %v2345 = vadd.f32 %v2104, %v2344
      %v2346 = vpop.f32.mrb[0].mxu0
      %v2347 = vpop.f32.mrb[0].mxu0
      %v2348 = vadd.f32 %v2107, %v2347
      %v2349 = vpop.f32.mrb[0].mxu0
      %2350 = vmatprep.mubr.bf16.mxu0 %v1544
      %2351 = vmatmul.mubr.bf16.gmra.mrb[0].mxu0 %v1543
      %v2352 = vpop.f32.mrb[0].mxu0
      %v2353 = vadd.f32 %v2112, %v2352
      %v2354 = vpop.f32.mrb[0].mxu0
      %v2355 = vpop.f32.mrb[0].mxu0
      %v2356 = vadd.f32 %v2115, %v2355
      %v2357 = vpop.f32.mrb[0].mxu0
      %2358 = vmatprep.mubr.bf16.mxu0 %v1549
      %2359 = vmatmul.mubr.bf16.gmra.mrb[0].mxu0 %v1548
      %v2360 = vpop.f32.mrb[0].mxu0
      %v2361 = vadd.f32 %v2120, %v2360
      %v2362 = vpop.f32.mrb[0].mxu0
      %v2363 = vpop.f32.mrb[0].mxu0
      %v2364 = vadd.f32 %v2123, %v2363
      %v2365 = vpop.f32.mrb[0].mxu0
      %2366 = vmatprep.mubr.bf16.mxu0 %v1554
      %2367 = vmatmul.mubr.bf16.gmra.mrb[0].mxu0 %v1553
      %v2368 = vpop.f32.mrb[0].mxu0
      %v2369 = vadd.f32 %v2128, %v2368
      %v2370 = vpop.f32.mrb[0].mxu0
      %v2371 = vpop.f32.mrb[0].mxu0
      %v2372 = vadd.f32 %v2131, %v2371
      %v2373 = vpop.f32.mrb[0].mxu0
      %2374 = vmatprep.mubr.bf16.mxu0 %v1559
      %2375 = vmatmul.mubr.bf16.gmra.mrb[0].mxu0 %v1558
      %v2376 = vpop.f32.mrb[0].mxu0
      %v2377 = vadd.f32 %v2136, %v2376
      %v2378 = vpop.f32.mrb[0].mxu0
      %v2379 = vpop.f32.mrb[0].mxu0
      %v2380 = vadd.f32 %v2139, %v2379
      %v2381 = vpop.f32.mrb[0].mxu0
      %2382 = vmatprep.mubr.bf16.mxu0 %v1564
      %2383 = vmatmul.mubr.bf16.gmra.mrb[0].mxu0 %v1563
      %v2384 = vpop.f32.mrb[0].mxu0
      %v2385 = vadd.f32 %v2144, %v2384
      %v2386 = vpop.f32.mrb[0].mxu0
      %v2387 = vpop.f32.mrb[0].mxu0
      %v2388 = vadd.f32 %v2147, %v2387
      %v2389 = vpop.f32.mrb[0].mxu0
      %2390 = vmatprep.mubr.bf16.mxu0 %v1569
      %2391 = vmatmul.mubr.bf16.gmra.mrb[0].mxu0 %v1568
      %v2392 = vpop.f32.mrb[0].mxu0
      %v2393 = vadd.f32 %v2152, %v2392
      %v2394 = vpop.f32.mrb[0].mxu0
      %v2395 = vpop.f32.mrb[0].mxu0
      %v2396 = vadd.f32 %v2155, %v2395
      %v2397 = vpop.f32.mrb[0].mxu0
      %2398 = vmatprep.mubr.bf16.mxu0 %v1574
      %2399 = vmatmul.mubr.bf16.gmra.mrb[0].mxu0 %v1573
      %v2400 = vpop.f32.mrb[0].mxu0
      %v2401 = vadd.f32 %v2160, %v2400
      %v2402 = vpop.f32.mrb[0].mxu0
      %v2403 = vpop.f32.mrb[0].mxu0
      %v2404 = vadd.f32 %v2163, %v2403
      %v2405 = vpop.f32.mrb[0].mxu0
      %2406 = vmatprep.mubr.bf16.mxu0 %v1579
      %2407 = vmatmul.mubr.bf16.gmra.mrb[0].mxu0 %v1578
      %v2408 = vpop.f32.mrb[0].mxu0
      %v2409 = vadd.f32 %v2168, %v2408
      %v2410 = vpop.f32.mrb[0].mxu0
      %v2411 = vpop.f32.mrb[0].mxu0
      %v2412 = vadd.f32 %v2171, %v2411
      %v2413 = vpop.f32.mrb[0].mxu0
      %2414 = vmatprep.mubr.bf16.mxu0 %v1584
      %2415 = vmatmul.mubr.bf16.gmra.mrb[0].mxu0 %v1583
      %v2416 = vpop.f32.mrb[0].mxu0
      %v2417 = vadd.f32 %v2176, %v2416
      %v2418 = vpop.f32.mrb[0].mxu0
      %v2419 = vpop.f32.mrb[0].mxu0
      %v2420 = vadd.f32 %v2179, %v2419
      %v2421 = vpop.f32.mrb[0].mxu0
      %2422 = vmatprep.mubr.bf16.mxu0 %v1589
      %2423 = vmatmul.mubr.bf16.gmra.mrb[0].mxu0 %v1588
      %v2424 = vpop.f32.mrb[0].mxu0
      %v2425 = vadd.f32 %v2184, %v2424
      %v2426 = vpop.f32.mrb[0].mxu0
      %v2427 = vpop.f32.mrb[0].mxu0
      %v2428 = vadd.f32 %v2187, %v2427
      %v2429 = vpop.f32.mrb[0].mxu0
      %2430 = vmatprep.mubr.bf16.mxu0 %v1594
      %2431 = vmatmul.mubr.bf16.gmra.mrb[0].mxu0 %v1593
      %v2432 = vpop.f32.mrb[0].mxu0
      %v2433 = vadd.f32 %v2192, %v2432
      %v2434 = vpop.f32.mrb[0].mxu0
      %v2435 = vpop.f32.mrb[0].mxu0
      %v2436 = vadd.f32 %v2195, %v2435
      %v2437 = vpop.f32.mrb[0].mxu0
      %2438 = vmatprep.mubr.bf16.mxu0 %v1599
      %2439 = vmatmul.mubr.bf16.gmra.mrb[0].mxu0 %v1598
      %v2440 = vpop.f32.mrb[0].mxu0
      %v2441 = vadd.f32 %v2200, %v2440
      %v2442 = vpop.f32.mrb[0].mxu0
      %v2443 = vpop.f32.mrb[0].mxu0
      %v2444 = vadd.f32 %v2203, %v2443
      %v2445 = vpop.f32.mrb[0].mxu0
      %2446 = vmatprep.mubr.bf16.mxu0 %v1604
      %2447 = vmatmul.mubr.bf16.gmra.mrb[0].mxu0 %v1603
      %v2448 = vpop.f32.mrb[0].mxu0
      %v2449 = vadd.f32 %v2208, %v2448
      %v2450 = vpop.f32.mrb[0].mxu0
      %v2451 = vpop.f32.mrb[0].mxu0
      %v2452 = vadd.f32 %v2211, %v2451
      %v2453 = vpop.f32.mrb[0].mxu0
      %2454 = vdwg.mxu0
      %2455 = vmatprep.subr.bf16.mxu0 0
      %2456 = vmatpush1.bf16.msra.mxu0 %v1854
      %2457 = vmatprep.subr.bf16.mxu0 0
      %2458 = vmatpush1.bf16.msra.mxu0 %v1855
      %2459 = vmatprep.subr.bf16.mxu0 0
      %2460 = vmatpush1.bf16.msra.mxu0 %v1856
      %2461 = vmatprep.subr.bf16.mxu0 0
      %2462 = vmatpush1.bf16.msra.mxu0 %v1857
      %2463 = vmatprep.subr.bf16.mxu0 0
      %2464 = vmatpush1.bf16.msra.mxu0 0
      %2465 = vmatprep.subr.bf16.mxu0 0
      %2466 = vmatpush1.bf16.msra.mxu0 0
      %2467 = vmatprep.subr.bf16.mxu0 0
      %2468 = vmatpush1.bf16.msra.mxu0 0
      %2469 = vmatprep.subr.bf16.mxu0 0
      %2470 = vmatpush1.bf16.msra.mxu0 0
      %2471 = vmatprep.subr.bf16.mxu0 0
      %2472 = vmatpush1.bf16.msra.mxu0 0
      %2473 = vmatprep.subr.bf16.mxu0 0
      %2474 = vmatpush1.bf16.msra.mxu0 0
      %2475 = vmatprep.subr.bf16.mxu0 0
      %2476 = vmatpush1.bf16.msra.mxu0 0
      %2477 = vmatprep.subr.bf16.mxu0 0
      %2478 = vmatpush1.bf16.msra.mxu0 0
      %2479 = vmatprep.subr.bf16.mxu0 0
      %2480 = vmatpush1.bf16.msra.mxu0 0
      %2481 = vmatprep.subr.bf16.mxu0 0
      %2482 = vmatpush1.bf16.msra.mxu0 0
      %2483 = vmatprep.subr.bf16.mxu0 0
      %2484 = vmatpush1.bf16.msra.mxu0 0
      %2485 = vmatprep.subr.bf16.mxu0 0
      %2486 = vmatpush1.bf16.msra.mxu0 0
      %2487 = vmatprep.mubr.bf16.mxu0 0
      %2488 = vmatmul.mubr.bf16.gmra.mrb[0].mxu0 %v1896
      %v2489 = vpop.f32.mrb[0].mxu0
      %v2490 = vadd.f32 %v2249, %v2489
      %v2491 = vpop.f32.mrb[0].mxu0
      %v2492 = vpop.f32.mrb[0].mxu0
      %v2493 = vadd.f32 %v2252, %v2492
      %v2494 = vpop.f32.mrb[0].mxu0
      %2495 = vmatprep.mubr.bf16.mxu0 0
      %2496 = vmatmul.mubr.bf16.gmra.mrb[0].mxu0 %v1899
      %v2497 = vpop.f32.mrb[0].mxu0
      %v2498 = vadd.f32 %v2257, %v2497
      %v2499 = vpop.f32.mrb[0].mxu0
      %v2500 = vpop.f32.mrb[0].mxu0
      %v2501 = vadd.f32 %v2260, %v2500
      %v2502 = vpop.f32.mrb[0].mxu0
      %2503 = vmatprep.mubr.bf16.mxu0 0
      %2504 = vmatmul.mubr.bf16.gmra.mrb[0].mxu0 %v1902
      %v2505 = vpop.f32.mrb[0].mxu0
      %v2506 = vadd.f32 %v2265, %v2505
      %v2507 = vpop.f32.mrb[0].mxu0
      %v2508 = vpop.f32.mrb[0].mxu0
      %v2509 = vadd.f32 %v2268, %v2508
      %v2510 = vpop.f32.mrb[0].mxu0
      %2511 = vmatprep.mubr.bf16.mxu0 0
      %2512 = vmatmul.mubr.bf16.gmra.mrb[0].mxu0 %v1905
      %v2513 = vpop.f32.mrb[0].mxu0
      %v2514 = vadd.f32 %v2273, %v2513
      %v2515 = vpop.f32.mrb[0].mxu0
      %v2516 = vpop.f32.mrb[0].mxu0
      %v2517 = vadd.f32 %v2276, %v2516
      %v2518 = vpop.f32.mrb[0].mxu0
      %2519 = vmatprep.mubr.bf16.mxu0 0
      %2520 = vmatmul.mubr.bf16.gmra.mrb[0].mxu0 %v1908
      %v2521 = vpop.f32.mrb[0].mxu0
      %v2522 = vadd.f32 %v2281, %v2521
      %v2523 = vpop.f32.mrb[0].mxu0
      %v2524 = vpop.f32.mrb[0].mxu0
      %v2525 = vadd.f32 %v2284, %v2524
      %v2526 = vpop.f32.mrb[0].mxu0
      %2527 = vmatprep.mubr.bf16.mxu0 0
      %2528 = vmatmul.mubr.bf16.gmra.mrb[0].mxu0 %v1911
      %v2529 = vpop.f32.mrb[0].mxu0
      %v2530 = vadd.f32 %v2289, %v2529
      %v2531 = vpop.f32.mrb[0].mxu0
      %v2532 = vpop.f32.mrb[0].mxu0
      %v2533 = vadd.f32 %v2292, %v2532
      %v2534 = vpop.f32.mrb[0].mxu0
      %2535 = vmatprep.mubr.bf16.mxu0 0
      %2536 = vmatmul.mubr.bf16.gmra.mrb[0].mxu0 %v1914
      %v2537 = vpop.f32.mrb[0].mxu0
      %v2538 = vadd.f32 %v2297, %v2537
      %v2539 = vpop.f32.mrb[0].mxu0
      %v2540 = vpop.f32.mrb[0].mxu0
      %v2541 = vadd.f32 %v2300, %v2540
      %v2542 = vpop.f32.mrb[0].mxu0
      %2543 = vmatprep.mubr.bf16.mxu0 0
      %2544 = vmatmul.mubr.bf16.gmra.mrb[0].mxu0 %v1917
      %v2545 = vpop.f32.mrb[0].mxu0
      %v2546 = vadd.f32 %v2305, %v2545
      %v2547 = vpop.f32.mrb[0].mxu0
      %v2548 = vpop.f32.mrb[0].mxu0
      %v2549 = vadd.f32 %v2308, %v2548
      %v2550 = vpop.f32.mrb[0].mxu0
      %2551 = vmatprep.mubr.bf16.mxu0 0
      %2552 = vmatmul.mubr.bf16.gmra.mrb[0].mxu0 %v1920
      %v2553 = vpop.f32.mrb[0].mxu0
      %v2554 = vadd.f32 %v2313, %v2553
      %v2555 = vpop.f32.mrb[0].mxu0
      %v2556 = vpop.f32.mrb[0].mxu0
      %v2557 = vadd.f32 %v2316, %v2556
      %v2558 = vpop.f32.mrb[0].mxu0
      %2559 = vmatprep.mubr.bf16.mxu0 0
      %2560 = vmatmul.mubr.bf16.gmra.mrb[0].mxu0 %v1923
      %v2561 = vpop.f32.mrb[0].mxu0
      %v2562 = vadd.f32 %v2321, %v2561
      %v2563 = vpop.f32.mrb[0].mxu0
      %v2564 = vpop.f32.mrb[0].mxu0
      %v2565 = vadd.f32 %v2324, %v2564
      %v2566 = vpop.f32.mrb[0].mxu0
      %2567 = vmatprep.mubr.bf16.mxu0 0
      %2568 = vmatmul.mubr.bf16.gmra.mrb[0].mxu0 %v1926
      %v2569 = vpop.f32.mrb[0].mxu0
      %v2570 = vadd.f32 %v2329, %v2569
      %v2571 = vpop.f32.mrb[0].mxu0
      %v2572 = vpop.f32.mrb[0].mxu0
      %v2573 = vadd.f32 %v2332, %v2572
      %v2574 = vpop.f32.mrb[0].mxu0
      %2575 = vmatprep.mubr.bf16.mxu0 0
      %2576 = vmatmul.mubr.bf16.gmra.mrb[0].mxu0 %v1929
      %v2577 = vpop.f32.mrb[0].mxu0
      %v2578 = vadd.f32 %v2337, %v2577
      %v2579 = vpop.f32.mrb[0].mxu0
      %v2580 = vpop.f32.mrb[0].mxu0
      %v2581 = vadd.f32 %v2340, %v2580
      %v2582 = vpop.f32.mrb[0].mxu0
      %2583 = vmatprep.mubr.bf16.mxu0 0
      %2584 = vmatmul.mubr.bf16.gmra.mrb[0].mxu0 %v1932
      %v2585 = vpop.f32.mrb[0].mxu0
      %v2586 = vadd.f32 %v2345, %v2585
      %v2587 = vpop.f32.mrb[0].mxu0
      %v2588 = vpop.f32.mrb[0].mxu0
      %v2589 = vadd.f32 %v2348, %v2588
      %v2590 = vpop.f32.mrb[0].mxu0
      %2591 = vmatprep.mubr.bf16.mxu0 0
      %2592 = vmatmul.mubr.bf16.gmra.mrb[0].mxu0 %v1935
      %v2593 = vpop.f32.mrb[0].mxu0
      %v2594 = vadd.f32 %v2353, %v2593
      %v2595 = vpop.f32.mrb[0].mxu0
      %v2596 = vpop.f32.mrb[0].mxu0
      %v2597 = vadd.f32 %v2356, %v2596
      %v2598 = vpop.f32.mrb[0].mxu0
      %2599 = vmatprep.mubr.bf16.mxu0 0
      %2600 = vmatmul.mubr.bf16.gmra.mrb[0].mxu0 %v1938
      %v2601 = vpop.f32.mrb[0].mxu0
      %v2602 = vadd.f32 %v2361, %v2601
      %v2603 = vpop.f32.mrb[0].mxu0
      %v2604 = vpop.f32.mrb[0].mxu0
      %v2605 = vadd.f32 %v2364, %v2604
      %v2606 = vpop.f32.mrb[0].mxu0
      %2607 = vmatprep.mubr.bf16.mxu0 0
      %2608 = vmatmul.mubr.bf16.gmra.mrb[0].mxu0 %v1941
      %v2609 = vpop.f32.mrb[0].mxu0
      %v2610 = vadd.f32 %v2369, %v2609
      %v2611 = vpop.f32.mrb[0].mxu0
      %v2612 = vpop.f32.mrb[0].mxu0
      %v2613 = vadd.f32 %v2372, %v2612
      %v2614 = vpop.f32.mrb[0].mxu0
      %2615 = vmatprep.mubr.bf16.mxu0 0
      %2616 = vmatmul.mubr.bf16.gmra.mrb[0].mxu0 %v1944
      %v2617 = vpop.f32.mrb[0].mxu0
      %v2618 = vadd.f32 %v2377, %v2617
      %v2619 = vpop.f32.mrb[0].mxu0
      %v2620 = vpop.f32.mrb[0].mxu0
      %v2621 = vadd.f32 %v2380, %v2620
      %v2622 = vpop.f32.mrb[0].mxu0
      %2623 = vmatprep.mubr.bf16.mxu0 0
      %2624 = vmatmul.mubr.bf16.gmra.mrb[0].mxu0 %v1947
      %v2625 = vpop.f32.mrb[0].mxu0
      %v2626 = vadd.f32 %v2385, %v2625
      %v2627 = vpop.f32.mrb[0].mxu0
      %v2628 = vpop.f32.mrb[0].mxu0
      %v2629 = vadd.f32 %v2388, %v2628
      %v2630 = vpop.f32.mrb[0].mxu0
      %2631 = vmatprep.mubr.bf16.mxu0 0
      %2632 = vmatmul.mubr.bf16.gmra.mrb[0].mxu0 %v1950
      %v2633 = vpop.f32.mrb[0].mxu0
      %v2634 = vadd.f32 %v2393, %v2633
      %v2635 = vpop.f32.mrb[0].mxu0
      %v2636 = vpop.f32.mrb[0].mxu0
      %v2637 = vadd.f32 %v2396, %v2636
      %v2638 = vpop.f32.mrb[0].mxu0
      %2639 = vmatprep.mubr.bf16.mxu0 0
      %2640 = vmatmul.mubr.bf16.gmra.mrb[0].mxu0 %v1953
      %v2641 = vpop.f32.mrb[0].mxu0
      %v2642 = vadd.f32 %v2401, %v2641
      %v2643 = vpop.f32.mrb[0].mxu0
      %v2644 = vpop.f32.mrb[0].mxu0
      %v2645 = vadd.f32 %v2404, %v2644
      %v2646 = vpop.f32.mrb[0].mxu0
      %2647 = vmatprep.mubr.bf16.mxu0 0
      %2648 = vmatmul.mubr.bf16.gmra.mrb[0].mxu0 %v1956
      %v2649 = vpop.f32.mrb[0].mxu0
      %v2650 = vadd.f32 %v2409, %v2649
      %v2651 = vpop.f32.mrb[0].mxu0
      %v2652 = vpop.f32.mrb[0].mxu0
      %v2653 = vadd.f32 %v2412, %v2652
      %v2654 = vpop.f32.mrb[0].mxu0
      %2655 = vmatprep.mubr.bf16.mxu0 0
      %2656 = vmatmul.mubr.bf16.gmra.mrb[0].mxu0 %v1959
      %v2657 = vpop.f32.mrb[0].mxu0
      %v2658 = vadd.f32 %v2417, %v2657
      %v2659 = vpop.f32.mrb[0].mxu0
      %v2660 = vpop.f32.mrb[0].mxu0
      %v2661 = vadd.f32 %v2420, %v2660
      %v2662 = vpop.f32.mrb[0].mxu0
      %2663 = vmatprep.mubr.bf16.mxu0 0
      %2664 = vmatmul.mubr.bf16.gmra.mrb[0].mxu0 %v1962
      %v2665 = vpop.f32.mrb[0].mxu0
      %v2666 = vadd.f32 %v2425, %v2665
      %v2667 = vpop.f32.mrb[0].mxu0
      %v2668 = vpop.f32.mrb[0].mxu0
      %v2669 = vadd.f32 %v2428, %v2668
      %v2670 = vpop.f32.mrb[0].mxu0
      %2671 = vmatprep.mubr.bf16.mxu0 0
      %2672 = vmatmul.mubr.bf16.gmra.mrb[0].mxu0 %v1965
      %v2673 = vpop.f32.mrb[0].mxu0
      %v2674 = vadd.f32 %v2433, %v2673
      %v2675 = vpop.f32.mrb[0].mxu0
      %v2676 = vpop.f32.mrb[0].mxu0
      %v2677 = vadd.f32 %v2436, %v2676
      %v2678 = vpop.f32.mrb[0].mxu0
      %2679 = vmatprep.mubr.bf16.mxu0 0
      %2680 = vmatmul.mubr.bf16.gmra.mrb[0].mxu0 %v1968
      %v2681 = vpop.f32.mrb[0].mxu0
      %v2682 = vadd.f32 %v2441, %v2681
      %v2683 = vpop.f32.mrb[0].mxu0
      %v2684 = vpop.f32.mrb[0].mxu0
      %v2685 = vadd.f32 %v2444, %v2684
      %v2686 = vpop.f32.mrb[0].mxu0
      %2687 = vmatprep.mubr.bf16.mxu0 0
      %2688 = vmatmul.mubr.bf16.gmra.mrb[0].mxu0 %v1971
      %v2689 = vpop.f32.mrb[0].mxu0
      %v2690 = vadd.f32 %v2449, %v2689
      %v2691 = vpop.f32.mrb[0].mxu0
      %v2692 = vpop.f32.mrb[0].mxu0
      %v2693 = vadd.f32 %v2452, %v2692
      %v2694 = vpop.f32.mrb[0].mxu0
      %2695 = vdwg.mxu0
      %v2696 = vmax.f32 %v2490, %v2541
      %v2697 = vmax.f32 %v2493, %v2546
      %v2698 = vmax.f32 %v2498, %v2549
      %v2699 = vmax.f32 %v2501, %v2554
      %v2700 = vmax.f32 %v2506, %v2557
      %v2701 = vmax.f32 %v2509, %v2562
      %v2702 = vmax.f32 %v2514, %v2565
      %v2703 = vmax.f32 %v2517, %v2570
      %v2704 = vmax.f32 %v2522, %v2573
      %v2705 = vmax.f32 %v2525, %v2578
      %v2706 = vmax.f32 %v2530, %v2581
      %v2707 = vmax.f32 %v2533, %v2586
      %v2708 = vmax.f32 %v2538, %v2589
      %v2709 = vmax.f32 %v2594, %v2645
      %v2710 = vmax.f32 %v2597, %v2650
      %v2711 = vmax.f32 %v2602, %v2653
      %v2712 = vmax.f32 %v2605, %v2658
      %v2713 = vmax.f32 %v2610, %v2661
      %v2714 = vmax.f32 %v2613, %v2666
      %v2715 = vmax.f32 %v2618, %v2669
      %v2716 = vmax.f32 %v2621, %v2674
      %v2717 = vmax.f32 %v2626, %v2677
      %v2718 = vmax.f32 %v2629, %v2682
      %v2719 = vmax.f32 %v2634, %v2685
      %v2720 = vmax.f32 %v2637, %v2690
      %v2721 = vmax.f32 %v2642, %v2693
      %v2722 = vmax.f32 %v2696, %v2709
      %v2723 = vmax.f32 %v2697, %v2710
      %v2724 = vmax.f32 %v2698, %v2711
      %v2725 = vmax.f32 %v2699, %v2712
      %v2726 = vmax.f32 %v2700, %v2713
      %v2727 = vmax.f32 %v2701, %v2714
      %v2728 = vmax.f32 %v2702, %v2715
      %v2729 = vmax.f32 %v2703, %v2716
      %v2730 = vmax.f32 %v2704, %v2717
      %v2731 = vmax.f32 %v2705, %v2718
      %v2732 = vmax.f32 %v2706, %v2719
      %v2733 = vmax.f32 %v2707, %v2720
      %v2734 = vmax.f32 %v2708, %v2721
      %v2735 = vld [vmem:[%s2] sm:$0x1]
      %v2737 = vlaneseq
      %v2738 = vshrl.u32 %v2737, 7
      %v2739 = vsub.s32 0, %v2738
      %v2740 = vrot.slane %v2735, %v2739
      %v2742 = vadd.f32 %v2722, %v2740
      %v2743 = vadd.f32 %v2723, %v2740
      %v2744 = vadd.f32 %v2724, %v2740
      %v2745 = vadd.f32 %v2725, %v2740
      %v2746 = vadd.f32 %v2726, %v2740
      %v2747 = vadd.f32 %v2727, %v2740
      %v2748 = vadd.f32 %v2728, %v2740
      %v2749 = vadd.f32 %v2729, %v2740
      %v2750 = vadd.f32 %v2730, %v2740
      %v2751 = vadd.f32 %v2731, %v2740
      %v2752 = vadd.f32 %v2732, %v2740
      %v2753 = vadd.f32 %v2733, %v2740
      %v2754 = vadd.f32 %v2734, %v2740
      %2755 = vst.msk [vmem:[%s224] sm:$0xff] %vm1894, %v2742
      %2756 = vst.msk [vmem:[%s224 + $0x8] sm:$0xff] %vm1894, %v2743
      %2757 = vst.msk [vmem:[%s224 + $0x10] sm:$0xff] %vm1894, %v2744
      %2758 = vst.msk [vmem:[%s224 + $0x18] sm:$0xff] %vm1894, %v2745
      %2759 = vst.msk [vmem:[%s224 + $0x20] sm:$0xff] %vm1894, %v2746
      %2760 = vst.msk [vmem:[%s224 + $0x28] sm:$0xff] %vm1894, %v2747
      %2761 = vst.msk [vmem:[%s224 + $0x30] sm:$0xff] %vm1894, %v2748
      %2762 = vst.msk [vmem:[%s224 + $0x38] sm:$0xff] %vm1894, %v2749
      %2763 = vst.msk [vmem:[%s224 + $0x40] sm:$0xff] %vm1894, %v2750
      %2764 = vst.msk [vmem:[%s224 + $0x48] sm:$0xff] %vm1894, %v2751
      %2765 = vst.msk [vmem:[%s224 + $0x50] sm:$0xff] %vm1894, %v2752
      %2766 = vst.msk [vmem:[%s224 + $0x58] sm:$0xff] %vm1894, %v2753
      %vm2767 = vcmask 519168
      %2768 = vst.msk [vmem:[%s224 + $0x60] sm:$0xf] %vm2767, %v2754
      %p2769 = scmp.lt.s32.totalorder %s16, 7
      %s2770 = scalar_select %p2769, %s16, 7
      %s2771 = smul.addr %s2770, 13
      %s2772 = smul.addr %s2771, 8
      %s2773 = scalar_lea.vmem %s5, %s2772
      // Predicated region
      $region41: #{metarn_forward.5} parent=39 // pred_check
        %p2774 = pneg %p144
      $region42: #{metarn_forward.5} parent=39 // pred_check_branch
        %2776 = sbr.rel (%p2774) target = $region44
      $region43: #{metarn_forward.5} parent=39 // pred_region
        _
      $region44: #{metarn_forward.5} parent=39 // pred_fallthru
        _
    $region40: #{metarn_forward.5} parent=5 // pred_fallthru
      _
    %p2777 = scmp.le.s32.totalorder 2, %s11
    // Predicated region
    $region45: #{metarn_forward.5} parent=5 // pred_check
      %p2778 = pneg %p2777
    $region46: #{metarn_forward.5} parent=5 // pred_check_branch
      %2780 = sbr.rel (%p2778) target = $region48
    $region47: #{metarn_forward.5} parent=5 // pred_region
      %s2781 = ssub.s32 %s11, 2
      // Predicated region
      $region49: #{metarn_forward.5} parent=47 // pred_check
        %p2782 = pneg %p150
      $region50: #{metarn_forward.5} parent=47 // pred_check_branch
        %2784 = sbr.rel (%p2782) target = $region52
      $region51: #{metarn_forward.5} parent=47 // pred_region
        %p2785 = scmp.lt.s32.totalorder %s17, 7
        %s2786 = scalar_select %p2785, %s17, 7
        %s2787 = smul.addr %s2786, 13
        %s2788 = smul.addr %s2787, 8
        %s2789 = scalar_lea.vmem %s5, %s2788
      $region52: #{metarn_forward.5} parent=47 // pred_fallthru
        _
    $region48: #{metarn_forward.5} parent=5 // pred_fallthru
      _
  $region6: #{metarn_forward.5} parent=0 // loop_footer
    %s15 = sadd.s32 1, %s11
  $region7: #{metarn_forward.5} parent=0 // loop_footer_branch
    %10 = sbr.rel target = $region3
  $region8: #{metarn_forward.5} parent=0 // loop_exit
    _

// kernel: metarn_forward.6
$region0: #{metarn_forward.6}
  #allocation0 [shape = 'u32[]', space=smem, size = 0x4, offset = 0x4, fixed_abs, tag = 'smem constant byte address 0x4 - core index']
  #allocation1 [shape = 'u32[144,128]{1,0:T(1,128)}', space=vmem, size = 0x12000, scoped, tag = 'internal scratch']
  %s0 = inlined_call_operand.vmem [shape: f32[1,512,576], index: 0, kind: input, shape index: {}]
  %s1 = inlined_call_operand.vmem [shape: f32[576,64], index: 1, kind: input, shape index: {}]
  %s2 = inlined_call_operand.vmem [shape: f32[1,64], index: 2, kind: input, shape index: {}]
  %s3 = inlined_call_operand.vmem [shape: f32[1,576], index: 3, kind: input, shape index: {}]
  %s4 = inlined_call_operand.vmem [shape: f32[1,576], index: 4, kind: input, shape index: {}]
  %s5 = inlined_call_operand.vmem [shape: f32[1,512,64], index: 5, kind: output, shape index: {}]
  %s6 = sld [smem:[#allocation0]]
  $region30: #{metarn_forward.6} parent=0
    _
  %s8 = ssub.s32 1, %s6
  %s9 = scalar_select 0, %s8, %s6
  // Predicated region
  $region2: #{metarn_forward.6} parent=0 // pred_check
    _
  $region3: #{metarn_forward.6} parent=0 // pred_check_branch
    %11 = sbr.rel (0) target = $region5
  $region4: #{metarn_forward.6} parent=0 // pred_region
    _
  $region5: #{metarn_forward.6} parent=0 // pred_fallthru
    _
  // Predicated region
  $region6: #{metarn_forward.6} parent=0 // pred_check
    _
  $region7: #{metarn_forward.6} parent=0 // pred_check_branch
    %13 = sbr.rel (0) target = $region9
  $region8: #{metarn_forward.6} parent=0 // pred_region
    _
  $region9: #{metarn_forward.6} parent=0 // pred_fallthru
    _
  // Predicated region
  $region10: #{metarn_forward.6} parent=0 // pred_check
    _
  $region11: #{metarn_forward.6} parent=0 // pred_check_branch
    %15 = sbr.rel (0) target = $region13
  $region12: #{metarn_forward.6} parent=0 // pred_region
    _
  $region13: #{metarn_forward.6} parent=0 // pred_fallthru
    _
  // Predicated region
  $region14: #{metarn_forward.6} parent=0 // pred_check
    _
  $region15: #{metarn_forward.6} parent=0 // pred_check_branch
    %17 = sbr.rel (0) target = $region17
  $region16: #{metarn_forward.6} parent=0 // pred_region
    _
  $region17: #{metarn_forward.6} parent=0 // pred_fallthru
    _
  // Predicated region
  $region18: #{metarn_forward.6} parent=0 // pred_check
    _
  $region19: #{metarn_forward.6} parent=0 // pred_check_branch
    %19 = sbr.rel (0) target = $region21
  $region20: #{metarn_forward.6} parent=0 // pred_region
    _
  $region21: #{metarn_forward.6} parent=0 // pred_fallthru
    _
  %v20 = vld [vmem:[%s0] sm:$0xff]
  %v21 = vld [vmem:[%s0 + $0x8] sm:$0xff]
  %v22 = vld [vmem:[%s0 + $0x10] sm:$0xff]
  %v23 = vld [vmem:[%s0 + $0x18] sm:$0xff]
  %v24 = vld [vmem:[%s0 + $0x20] sm:$0xff]
  %v25 = vld [vmem:[%s0 + $0x28] sm:$0xff]
  %v26 = vld [vmem:[%s0 + $0x30] sm:$0xff]
  %v27 = vld [vmem:[%s0 + $0x38] sm:$0xff]
  %v28 = vld [vmem:[%s0 + $0x40] sm:$0xff]
  %v29 = vld [vmem:[%s0 + $0x48] sm:$0xff]
  %v30 = vld [vmem:[%s0 + $0x50] sm:$0xff]
  %v31 = vld [vmem:[%s0 + $0x58] sm:$0xff]
  %v32 = vld [vmem:[%s0 + $0x60] sm:$0xff]
  %v33 = vld [vmem:[%s0 + $0x68] sm:$0xff]
  %v34 = vld [vmem:[%s0 + $0x70] sm:$0xff]
  %v35 = vld [vmem:[%s0 + $0x78] sm:$0xff]
  %v36 = vld [vmem:[%s0 + $0x80] sm:$0xff]
  %v37 = vld [vmem:[%s0 + $0x88] sm:$0xff]
  %v38 = vld [vmem:[%s0 + $0x90] sm:$0xff]
  %v39 = vld [vmem:[%s0 + $0x98] sm:$0xff]
  %v40 = vld [vmem:[%s0 + $0xa0] sm:$0xff]
  %v41 = vld [vmem:[%s0 + $0xa8] sm:$0xff]
  %v42 = vld [vmem:[%s0 + $0xb0] sm:$0xff]
  %v43 = vld [vmem:[%s0 + $0xb8] sm:$0xff]
  %v44 = vld [vmem:[%s0 + $0xc0] sm:$0xff]
  %v45 = vld [vmem:[%s0 + $0xc8] sm:$0xff]
  %v46 = vld [vmem:[%s0 + $0xd0] sm:$0xff]
  %v47 = vld [vmem:[%s0 + $0xd8] sm:$0xff]
  %v48 = vld [vmem:[%s0 + $0xe0] sm:$0xff]
  %v49 = vld [vmem:[%s0 + $0xe8] sm:$0xff]
  %v50 = vld [vmem:[%s0 + $0xf0] sm:$0xff]
  %v51 = vld [vmem:[%s0 + $0xf8] sm:$0xff]
  %v52 = vld [vmem:[%s0 + $0x100] sm:$0xff]
  %v53 = vld [vmem:[%s0 + $0x108] sm:$0xff]
  %v54 = vld [vmem:[%s0 + $0x110] sm:$0xff]
  %v55 = vld [vmem:[%s0 + $0x118] sm:$0xff]
  %v56 = vld [vmem:[%s0 + $0x120] sm:$0xff]
  %v57 = vld [vmem:[%s0 + $0x128] sm:$0xff]
  %v58 = vld [vmem:[%s0 + $0x130] sm:$0xff]
  %v59 = vld [vmem:[%s0 + $0x138] sm:$0xff]
  %v60 = vld [vmem:[%s0 + $0x140] sm:$0xff]
  %v61 = vld [vmem:[%s0 + $0x148] sm:$0xff]
  %v62 = vld [vmem:[%s0 + $0x150] sm:$0xff]
  %v63 = vld [vmem:[%s0 + $0x158] sm:$0xff]
  %v64 = vld [vmem:[%s0 + $0x160] sm:$0xff]
  %v65 = vld [vmem:[%s0 + $0x168] sm:$0xff]
  %v66 = vld [vmem:[%s0 + $0x170] sm:$0xff]
  %v67 = vld [vmem:[%s0 + $0x178] sm:$0xff]
  %v68 = vld [vmem:[%s0 + $0x180] sm:$0xff]
  %v69 = vld [vmem:[%s0 + $0x188] sm:$0xff]
  %v70 = vld [vmem:[%s0 + $0x190] sm:$0xff]
  %v71 = vld [vmem:[%s0 + $0x198] sm:$0xff]
  %v72 = vld [vmem:[%s0 + $0x1a0] sm:$0xff]
  %v73 = vld [vmem:[%s0 + $0x1a8] sm:$0xff]
  %v74 = vld [vmem:[%s0 + $0x1b0] sm:$0xff]
  %v75 = vld [vmem:[%s0 + $0x1b8] sm:$0xff]
  %v76 = vld [vmem:[%s0 + $0x1c0] sm:$0xff]
  %v77 = vld [vmem:[%s0 + $0x1c8] sm:$0xff]
  %v78 = vld [vmem:[%s0 + $0x1d0] sm:$0xff]
  %v79 = vld [vmem:[%s0 + $0x1d8] sm:$0xff]
  %v80 = vld [vmem:[%s0 + $0x1e0] sm:$0xff]
  %v81 = vld [vmem:[%s0 + $0x1e8] sm:$0xff]
  %v82 = vld [vmem:[%s0 + $0x1f0] sm:$0xff]
  %v83 = vld [vmem:[%s0 + $0x1f8] sm:$0xff]
  %v84 = vld [vmem:[%s0 + $0x200] sm:$0xff]
  %v85 = vld [vmem:[%s0 + $0x208] sm:$0xff]
  %v86 = vld [vmem:[%s0 + $0x210] sm:$0xff]
  %v87 = vld [vmem:[%s0 + $0x218] sm:$0xff]
  %v88 = vld [vmem:[%s0 + $0x220] sm:$0xff]
  %v89 = vld [vmem:[%s0 + $0x228] sm:$0xff]
  %v90 = vld [vmem:[%s0 + $0x230] sm:$0xff]
  %v91 = vld [vmem:[%s0 + $0x238] sm:$0xff]
  %v92 = vld [vmem:[%s0 + $0x240] sm:$0xff]
  %v93 = vld [vmem:[%s0 + $0x248] sm:$0xff]
  %v94 = vld [vmem:[%s0 + $0x250] sm:$0xff]
  %v95 = vld [vmem:[%s0 + $0x258] sm:$0xff]
  %v96 = vld [vmem:[%s0 + $0x260] sm:$0xff]
  %v97 = vld [vmem:[%s0 + $0x268] sm:$0xff]
  %v98 = vld [vmem:[%s0 + $0x270] sm:$0xff]
  %v99 = vld [vmem:[%s0 + $0x278] sm:$0xff]
  %v100 = vld [vmem:[%s0 + $0x280] sm:$0xff]
  %v101 = vld [vmem:[%s0 + $0x288] sm:$0xff]
  %v102 = vld [vmem:[%s0 + $0x290] sm:$0xff]
  %v103 = vld [vmem:[%s0 + $0x298] sm:$0xff]
  %v104 = vld [vmem:[%s0 + $0x2a0] sm:$0xff]
  %v105 = vld [vmem:[%s0 + $0x2a8] sm:$0xff]
  %v106 = vld [vmem:[%s0 + $0x2b0] sm:$0xff]
  %v107 = vld [vmem:[%s0 + $0x2b8] sm:$0xff]
  %v108 = vld [vmem:[%s0 + $0x2c0] sm:$0xff]
  %v109 = vld [vmem:[%s0 + $0x2c8] sm:$0xff]
  %v110 = vld [vmem:[%s0 + $0x2d0] sm:$0xff]
  %v111 = vld [vmem:[%s0 + $0x2d8] sm:$0xff]
  %v112 = vld [vmem:[%s0 + $0x2e0] sm:$0xff]
  %v113 = vld [vmem:[%s0 + $0x2e8] sm:$0xff]
  %v114 = vld [vmem:[%s0 + $0x2f0] sm:$0xff]
  %v115 = vld [vmem:[%s0 + $0x2f8] sm:$0xff]
  %v116 = vld [vmem:[%s0 + $0x300] sm:$0xff]
  %v117 = vld [vmem:[%s0 + $0x308] sm:$0xff]
  %v118 = vld [vmem:[%s0 + $0x310] sm:$0xff]
  %v119 = vld [vmem:[%s0 + $0x318] sm:$0xff]
  %v120 = vld [vmem:[%s0 + $0x320] sm:$0xff]
  %v121 = vld [vmem:[%s0 + $0x328] sm:$0xff]
  %v122 = vld [vmem:[%s0 + $0x330] sm:$0xff]
  %v123 = vld [vmem:[%s0 + $0x338] sm:$0xff]
  %v124 = vld [vmem:[%s0 + $0x340] sm:$0xff]
  %v125 = vld [vmem:[%s0 + $0x348] sm:$0xff]
  %v126 = vld [vmem:[%s0 + $0x350] sm:$0xff]
  %v127 = vld [vmem:[%s0 + $0x358] sm:$0xff]
  %v128 = vld [vmem:[%s0 + $0x360] sm:$0xff]
  %v129 = vld [vmem:[%s0 + $0x368] sm:$0xff]
  %v130 = vld [vmem:[%s0 + $0x370] sm:$0xff]
  %v131 = vld [vmem:[%s0 + $0x378] sm:$0xff]
  %v132 = vld [vmem:[%s0 + $0x380] sm:$0xff]
  %v133 = vld [vmem:[%s0 + $0x388] sm:$0xff]
  %v134 = vld [vmem:[%s0 + $0x390] sm:$0xff]
  %v135 = vld [vmem:[%s0 + $0x398] sm:$0xff]
  %v136 = vld [vmem:[%s0 + $0x3a0] sm:$0xff]
  %v137 = vld [vmem:[%s0 + $0x3a8] sm:$0xff]
  %v138 = vld [vmem:[%s0 + $0x3b0] sm:$0xff]
  %v139 = vld [vmem:[%s0 + $0x3b8] sm:$0xff]
  %v140 = vld [vmem:[%s0 + $0x3c0] sm:$0xff]
  %v141 = vld [vmem:[%s0 + $0x3c8] sm:$0xff]
  %v142 = vld [vmem:[%s0 + $0x3d0] sm:$0xff]
  %v143 = vld [vmem:[%s0 + $0x3d8] sm:$0xff]
  %v144 = vld [vmem:[%s0 + $0x3e0] sm:$0xff]
  %v145 = vld [vmem:[%s0 + $0x3e8] sm:$0xff]
  %v146 = vld [vmem:[%s0 + $0x3f0] sm:$0xff]
  %v147 = vld [vmem:[%s0 + $0x3f8] sm:$0xff]
  %v148 = vld [vmem:[%s0 + $0x400] sm:$0xff]
  %v149 = vld [vmem:[%s0 + $0x408] sm:$0xff]
  %v150 = vld [vmem:[%s0 + $0x410] sm:$0xff]
  %v151 = vld [vmem:[%s0 + $0x418] sm:$0xff]
  %v152 = vld [vmem:[%s0 + $0x420] sm:$0xff]
  %v153 = vld [vmem:[%s0 + $0x428] sm:$0xff]
  %v154 = vld [vmem:[%s0 + $0x430] sm:$0xff]
  %v155 = vld [vmem:[%s0 + $0x438] sm:$0xff]
  %v156 = vld [vmem:[%s0 + $0x440] sm:$0xff]
  %v157 = vld [vmem:[%s0 + $0x448] sm:$0xff]
  %v158 = vld [vmem:[%s0 + $0x450] sm:$0xff]
  %v159 = vld [vmem:[%s0 + $0x458] sm:$0xff]
  %v160 = vld [vmem:[%s0 + $0x460] sm:$0xff]
  %v161 = vld [vmem:[%s0 + $0x468] sm:$0xff]
  %v162 = vld [vmem:[%s0 + $0x470] sm:$0xff]
  %v163 = vld [vmem:[%s0 + $0x478] sm:$0xff]
  %v164 = vld [vmem:[%s0 + $0x480] sm:$0xff]
  %v165 = vld [vmem:[%s0 + $0x488] sm:$0xff]
  %v166 = vld [vmem:[%s0 + $0x490] sm:$0xff]
  %v167 = vld [vmem:[%s0 + $0x498] sm:$0xff]
  %v168 = vld [vmem:[%s0 + $0x4a0] sm:$0xff]
  %v169 = vld [vmem:[%s0 + $0x4a8] sm:$0xff]
  %v170 = vld [vmem:[%s0 + $0x4b0] sm:$0xff]
  %v171 = vld [vmem:[%s0 + $0x4b8] sm:$0xff]
  %v172 = vld [vmem:[%s0 + $0x4c0] sm:$0xff]
  %v173 = vld [vmem:[%s0 + $0x4c8] sm:$0xff]
  %v174 = vld [vmem:[%s0 + $0x4d0] sm:$0xff]
  %v175 = vld [vmem:[%s0 + $0x4d8] sm:$0xff]
  %v176 = vld [vmem:[%s0 + $0x4e0] sm:$0xff]
  %v177 = vld [vmem:[%s0 + $0x4e8] sm:$0xff]
  %v178 = vld [vmem:[%s0 + $0x4f0] sm:$0xff]
  %v179 = vld [vmem:[%s0 + $0x4f8] sm:$0xff]
  %v180 = vld [vmem:[%s0 + $0x500] sm:$0xff]
  %v181 = vld [vmem:[%s0 + $0x508] sm:$0xff]
  %v182 = vld [vmem:[%s0 + $0x510] sm:$0xff]
  %v183 = vld [vmem:[%s0 + $0x518] sm:$0xff]
  %v184 = vld [vmem:[%s0 + $0x520] sm:$0xff]
  %v185 = vld [vmem:[%s0 + $0x528] sm:$0xff]
  %v186 = vld [vmem:[%s0 + $0x530] sm:$0xff]
  %v187 = vld [vmem:[%s0 + $0x538] sm:$0xff]
  %v188 = vld [vmem:[%s0 + $0x540] sm:$0xff]
  %v189 = vld [vmem:[%s0 + $0x548] sm:$0xff]
  %v190 = vld [vmem:[%s0 + $0x550] sm:$0xff]
  %v191 = vld [vmem:[%s0 + $0x558] sm:$0xff]
  %v192 = vld [vmem:[%s0 + $0x560] sm:$0xff]
  %v193 = vld [vmem:[%s0 + $0x568] sm:$0xff]
  %v194 = vld [vmem:[%s0 + $0x570] sm:$0xff]
  %v195 = vld [vmem:[%s0 + $0x578] sm:$0xff]
  %v196 = vld [vmem:[%s0 + $0x580] sm:$0xff]
  %v197 = vld [vmem:[%s0 + $0x588] sm:$0xff]
  %v198 = vld [vmem:[%s0 + $0x590] sm:$0xff]
  %v199 = vld [vmem:[%s0 + $0x598] sm:$0xff]
  %v200 = vld [vmem:[%s0 + $0x5a0] sm:$0xff]
  %v201 = vld [vmem:[%s0 + $0x5a8] sm:$0xff]
  %v202 = vld [vmem:[%s0 + $0x5b0] sm:$0xff]
  %v203 = vld [vmem:[%s0 + $0x5b8] sm:$0xff]
  %v204 = vld [vmem:[%s0 + $0x5c0] sm:$0xff]
  %v205 = vld [vmem:[%s0 + $0x5c8] sm:$0xff]
  %v206 = vld [vmem:[%s0 + $0x5d0] sm:$0xff]
  %v207 = vld [vmem:[%s0 + $0x5d8] sm:$0xff]
  %v208 = vld [vmem:[%s0 + $0x5e0] sm:$0xff]
  %v209 = vld [vmem:[%s0 + $0x5e8] sm:$0xff]
  %v210 = vld [vmem:[%s0 + $0x5f0] sm:$0xff]
  %v211 = vld [vmem:[%s0 + $0x5f8] sm:$0xff]
  %v212 = vld [vmem:[%s0 + $0x600] sm:$0xff]
  %v213 = vld [vmem:[%s0 + $0x608] sm:$0xff]
  %v214 = vld [vmem:[%s0 + $0x610] sm:$0xff]
  %v215 = vld [vmem:[%s0 + $0x618] sm:$0xff]
  %v216 = vld [vmem:[%s0 + $0x620] sm:$0xff]
  %v217 = vld [vmem:[%s0 + $0x628] sm:$0xff]
  %v218 = vld [vmem:[%s0 + $0x630] sm:$0xff]
  %v219 = vld [vmem:[%s0 + $0x638] sm:$0xff]
  %v220 = vld [vmem:[%s0 + $0x640] sm:$0xff]
  %v221 = vld [vmem:[%s0 + $0x648] sm:$0xff]
  %v222 = vld [vmem:[%s0 + $0x650] sm:$0xff]
  %v223 = vld [vmem:[%s0 + $0x658] sm:$0xff]
  %v224 = vld [vmem:[%s0 + $0x660] sm:$0xff]
  %v225 = vld [vmem:[%s0 + $0x668] sm:$0xff]
  %v226 = vld [vmem:[%s0 + $0x670] sm:$0xff]
  %v227 = vld [vmem:[%s0 + $0x678] sm:$0xff]
  %v228 = vld [vmem:[%s0 + $0x680] sm:$0xff]
  %v229 = vld [vmem:[%s0 + $0x688] sm:$0xff]
  %v230 = vld [vmem:[%s0 + $0x690] sm:$0xff]
  %v231 = vld [vmem:[%s0 + $0x698] sm:$0xff]
  %v232 = vld [vmem:[%s0 + $0x6a0] sm:$0xff]
  %v233 = vld [vmem:[%s0 + $0x6a8] sm:$0xff]
  %v234 = vld [vmem:[%s0 + $0x6b0] sm:$0xff]
  %v235 = vld [vmem:[%s0 + $0x6b8] sm:$0xff]
  %v236 = vld [vmem:[%s0 + $0x6c0] sm:$0xff]
  %v237 = vld [vmem:[%s0 + $0x6c8] sm:$0xff]
  %v238 = vld [vmem:[%s0 + $0x6d0] sm:$0xff]
  %v239 = vld [vmem:[%s0 + $0x6d8] sm:$0xff]
  %v240 = vld [vmem:[%s0 + $0x6e0] sm:$0xff]
  %v241 = vld [vmem:[%s0 + $0x6e8] sm:$0xff]
  %v242 = vld [vmem:[%s0 + $0x6f0] sm:$0xff]
  %v243 = vld [vmem:[%s0 + $0x6f8] sm:$0xff]
  %v244 = vld [vmem:[%s0 + $0x700] sm:$0xff]
  %v245 = vld [vmem:[%s0 + $0x708] sm:$0xff]
  %v246 = vld [vmem:[%s0 + $0x710] sm:$0xff]
  %v247 = vld [vmem:[%s0 + $0x718] sm:$0xff]
  %v248 = vld [vmem:[%s0 + $0x720] sm:$0xff]
  %v249 = vld [vmem:[%s0 + $0x728] sm:$0xff]
  %v250 = vld [vmem:[%s0 + $0x730] sm:$0xff]
  %v251 = vld [vmem:[%s0 + $0x738] sm:$0xff]
  %v252 = vld [vmem:[%s0 + $0x740] sm:$0xff]
  %v253 = vld [vmem:[%s0 + $0x748] sm:$0xff]
  %v254 = vld [vmem:[%s0 + $0x750] sm:$0xff]
  %v255 = vld [vmem:[%s0 + $0x758] sm:$0xff]
  %v256 = vld [vmem:[%s0 + $0x760] sm:$0xff]
  %v257 = vld [vmem:[%s0 + $0x768] sm:$0xff]
  %v258 = vld [vmem:[%s0 + $0x770] sm:$0xff]
  %v259 = vld [vmem:[%s0 + $0x778] sm:$0xff]
  %v260 = vld [vmem:[%s0 + $0x780] sm:$0xff]
  %v261 = vld [vmem:[%s0 + $0x788] sm:$0xff]
  %v262 = vld [vmem:[%s0 + $0x790] sm:$0xff]
  %v263 = vld [vmem:[%s0 + $0x798] sm:$0xff]
  %v264 = vld [vmem:[%s0 + $0x7a0] sm:$0xff]
  %v265 = vld [vmem:[%s0 + $0x7a8] sm:$0xff]
  %v266 = vld [vmem:[%s0 + $0x7b0] sm:$0xff]
  %v267 = vld [vmem:[%s0 + $0x7b8] sm:$0xff]
  %v268 = vld [vmem:[%s0 + $0x7c0] sm:$0xff]
  %v269 = vld [vmem:[%s0 + $0x7c8] sm:$0xff]
  %v270 = vld [vmem:[%s0 + $0x7d0] sm:$0xff]
  %v271 = vld [vmem:[%s0 + $0x7d8] sm:$0xff]
  %v272 = vld [vmem:[%s0 + $0x7e0] sm:$0xff]
  %v273 = vld [vmem:[%s0 + $0x7e8] sm:$0xff]
  %v274 = vld [vmem:[%s0 + $0x7f0] sm:$0xff]
  %v275 = vld [vmem:[%s0 + $0x7f8] sm:$0xff]
  %v276 = vld [vmem:[%s0 + $0x800] sm:$0xff]
  %v277 = vld [vmem:[%s0 + $0x808] sm:$0xff]
  %v278 = vld [vmem:[%s0 + $0x810] sm:$0xff]
  %v279 = vld [vmem:[%s0 + $0x818] sm:$0xff]
  %v280 = vld [vmem:[%s0 + $0x820] sm:$0xff]
  %v281 = vld [vmem:[%s0 + $0x828] sm:$0xff]
  %v282 = vld [vmem:[%s0 + $0x830] sm:$0xff]
  %v283 = vld [vmem:[%s0 + $0x838] sm:$0xff]
  %v284 = vld [vmem:[%s0 + $0x840] sm:$0xff]
  %v285 = vld [vmem:[%s0 + $0x848] sm:$0xff]
  %v286 = vld [vmem:[%s0 + $0x850] sm:$0xff]
  %v287 = vld [vmem:[%s0 + $0x858] sm:$0xff]
  %v288 = vld [vmem:[%s0 + $0x860] sm:$0xff]
  %v289 = vld [vmem:[%s0 + $0x868] sm:$0xff]
  %v290 = vld [vmem:[%s0 + $0x870] sm:$0xff]
  %v291 = vld [vmem:[%s0 + $0x878] sm:$0xff]
  %v292 = vld [vmem:[%s0 + $0x880] sm:$0xff]
  %v293 = vld [vmem:[%s0 + $0x888] sm:$0xff]
  %v294 = vld [vmem:[%s0 + $0x890] sm:$0xff]
  %v295 = vld [vmem:[%s0 + $0x898] sm:$0xff]
  %v296 = vld [vmem:[%s0 + $0x8a0] sm:$0xff]
  %v297 = vld [vmem:[%s0 + $0x8a8] sm:$0xff]
  %v298 = vld [vmem:[%s0 + $0x8b0] sm:$0xff]
  %v299 = vld [vmem:[%s0 + $0x8b8] sm:$0xff]
  %v300 = vld [vmem:[%s0 + $0x8c0] sm:$0xff]
  %v301 = vld [vmem:[%s0 + $0x8c8] sm:$0xff]
  %v302 = vld [vmem:[%s0 + $0x8d0] sm:$0xff]
  %v303 = vld [vmem:[%s0 + $0x8d8] sm:$0xff]
  %v304 = vld [vmem:[%s0 + $0x8e0] sm:$0xff]
  %v305 = vld [vmem:[%s0 + $0x8e8] sm:$0xff]
  %v306 = vld [vmem:[%s0 + $0x8f0] sm:$0xff]
  %v307 = vld [vmem:[%s0 + $0x8f8] sm:$0xff]
  %v308 = vld [vmem:[%s0 + $0x900] sm:$0xff]
  %v309 = vld [vmem:[%s0 + $0x908] sm:$0xff]
  %v310 = vld [vmem:[%s0 + $0x910] sm:$0xff]
  %v311 = vld [vmem:[%s0 + $0x918] sm:$0xff]
  %v312 = vld [vmem:[%s0 + $0x920] sm:$0xff]
  %v313 = vld [vmem:[%s0 + $0x928] sm:$0xff]
  %v314 = vld [vmem:[%s0 + $0x930] sm:$0xff]
  %v315 = vld [vmem:[%s0 + $0x938] sm:$0xff]
  %v316 = vld [vmem:[%s0 + $0x940] sm:$0xff]
  %v317 = vld [vmem:[%s0 + $0x948] sm:$0xff]
  %v318 = vld [vmem:[%s0 + $0x950] sm:$0xff]
  %v319 = vld [vmem:[%s0 + $0x958] sm:$0xff]
  %v320 = vld [vmem:[%s0 + $0x960] sm:$0xff]
  %v321 = vld [vmem:[%s0 + $0x968] sm:$0xff]
  %v322 = vld [vmem:[%s0 + $0x970] sm:$0xff]
  %v323 = vld [vmem:[%s0 + $0x978] sm:$0xff]
  %v324 = vld [vmem:[%s0 + $0x980] sm:$0xff]
  %v325 = vld [vmem:[%s0 + $0x988] sm:$0xff]
  %v326 = vld [vmem:[%s0 + $0x990] sm:$0xff]
  %v327 = vld [vmem:[%s0 + $0x998] sm:$0xff]
  %v328 = vld [vmem:[%s0 + $0x9a0] sm:$0xff]
  %v329 = vld [vmem:[%s0 + $0x9a8] sm:$0xff]
  %v330 = vld [vmem:[%s0 + $0x9b0] sm:$0xff]
  %v331 = vld [vmem:[%s0 + $0x9b8] sm:$0xff]
  %v332 = vld [vmem:[%s0 + $0x9c0] sm:$0xff]
  %v333 = vld [vmem:[%s0 + $0x9c8] sm:$0xff]
  %v334 = vld [vmem:[%s0 + $0x9d0] sm:$0xff]
  %v335 = vld [vmem:[%s0 + $0x9d8] sm:$0xff]
  %v336 = vld [vmem:[%s0 + $0x9e0] sm:$0xff]
  %v337 = vld [vmem:[%s0 + $0x9e8] sm:$0xff]
  %v338 = vld [vmem:[%s0 + $0x9f0] sm:$0xff]
  %v339 = vld [vmem:[%s0 + $0x9f8] sm:$0xff]
  %v340 = vld [vmem:[%s3] sm:$0x1f]
  %v342 = vlaneseq
  %v343 = vshrl.u32 %v342, 7
  %v344 = vsub.s32 0, %v343
  %v345 = vrot.slane %v340, %v344
  %v346 = vlaneseq
  %v347 = vshrl.u32 %v346, 7
  %v348 = vsub.s32 1, %v347
  %v349 = vrot.slane %v340, %v348
  %v350 = vlaneseq
  %v351 = vshrl.u32 %v350, 7
  %v352 = vsub.s32 2, %v351
  %v353 = vrot.slane %v340, %v352
  %v354 = vlaneseq
  %v355 = vshrl.u32 %v354, 7
  %v356 = vsub.s32 3, %v355
  %v357 = vrot.slane %v340, %v356
  %v358 = vlaneseq
  %v359 = vshrl.u32 %v358, 7
  %v360 = vsub.s32 4, %v359
  %v361 = vrot.slane %v340, %v360
  %v367 = vmul.f32 %v20, %v345
  %v368 = vmul.f32 %v21, %v349
  %v369 = vmul.f32 %v22, %v353
  %v370 = vmul.f32 %v23, %v357
  %v371 = vmul.f32 %v24, %v361
  %v372 = vmul.f32 %v25, %v345
  %v373 = vmul.f32 %v26, %v349
  %v374 = vmul.f32 %v27, %v353
  %v375 = vmul.f32 %v28, %v357
  %v376 = vmul.f32 %v29, %v361
  %v377 = vmul.f32 %v30, %v345
  %v378 = vmul.f32 %v31, %v349
  %v379 = vmul.f32 %v32, %v353
  %v380 = vmul.f32 %v33, %v357
  %v381 = vmul.f32 %v34, %v361
  %v382 = vmul.f32 %v35, %v345
  %v383 = vmul.f32 %v36, %v349
  %v384 = vmul.f32 %v37, %v353
  %v385 = vmul.f32 %v38, %v357
  %v386 = vmul.f32 %v39, %v361
  %v387 = vmul.f32 %v40, %v345
  %v388 = vmul.f32 %v41, %v349
  %v389 = vmul.f32 %v42, %v353
  %v390 = vmul.f32 %v43, %v357
  %v391 = vmul.f32 %v44, %v361
  %v392 = vmul.f32 %v45, %v345
  %v393 = vmul.f32 %v46, %v349
  %v394 = vmul.f32 %v47, %v353
  %v395 = vmul.f32 %v48, %v357
  %v396 = vmul.f32 %v49, %v361
  %v397 = vmul.f32 %v50, %v345
  %v398 = vmul.f32 %v51, %v349
  %v399 = vmul.f32 %v52, %v353
  %v400 = vmul.f32 %v53, %v357
  %v401 = vmul.f32 %v54, %v361
  %v402 = vmul.f32 %v55, %v345
  %v403 = vmul.f32 %v56, %v349
  %v404 = vmul.f32 %v57, %v353
  %v405 = vmul.f32 %v58, %v357
  %v406 = vmul.f32 %v59, %v361
  %v407 = vmul.f32 %v60, %v345
  %v408 = vmul.f32 %v61, %v349
  %v409 = vmul.f32 %v62, %v353
  %v410 = vmul.f32 %v63, %v357
  %v411 = vmul.f32 %v64, %v361
  %v412 = vmul.f32 %v65, %v345
  %v413 = vmul.f32 %v66, %v349
  %v414 = vmul.f32 %v67, %v353
  %v415 = vmul.f32 %v68, %v357
  %v416 = vmul.f32 %v69, %v361
  %v417 = vmul.f32 %v70, %v345
  %v418 = vmul.f32 %v71, %v349
  %v419 = vmul.f32 %v72, %v353
  %v420 = vmul.f32 %v73, %v357
  %v421 = vmul.f32 %v74, %v361
  %v422 = vmul.f32 %v75, %v345
  %v423 = vmul.f32 %v76, %v349
  %v424 = vmul.f32 %v77, %v353
  %v425 = vmul.f32 %v78, %v357
  %v426 = vmul.f32 %v79, %v361
  %v427 = vmul.f32 %v80, %v345
  %v428 = vmul.f32 %v81, %v349
  %v429 = vmul.f32 %v82, %v353
  %v430 = vmul.f32 %v83, %v357
  %v431 = vmul.f32 %v84, %v361
  %v432 = vmul.f32 %v85, %v345
  %v433 = vmul.f32 %v86, %v349
  %v434 = vmul.f32 %v87, %v353
  %v435 = vmul.f32 %v88, %v357
  %v436 = vmul.f32 %v89, %v361
  %v437 = vmul.f32 %v90, %v345
  %v438 = vmul.f32 %v91, %v349
  %v439 = vmul.f32 %v92, %v353
  %v440 = vmul.f32 %v93, %v357
  %v441 = vmul.f32 %v94, %v361
  %v442 = vmul.f32 %v95, %v345
  %v443 = vmul.f32 %v96, %v349
  %v444 = vmul.f32 %v97, %v353
  %v445 = vmul.f32 %v98, %v357
  %v446 = vmul.f32 %v99, %v361
  %v447 = vmul.f32 %v100, %v345
  %v448 = vmul.f32 %v101, %v349
  %v449 = vmul.f32 %v102, %v353
  %v450 = vmul.f32 %v103, %v357
  %v451 = vmul.f32 %v104, %v361
  %v452 = vmul.f32 %v105, %v345
  %v453 = vmul.f32 %v106, %v349
  %v454 = vmul.f32 %v107, %v353
  %v455 = vmul.f32 %v108, %v357
  %v456 = vmul.f32 %v109, %v361
  %v457 = vmul.f32 %v110, %v345
  %v458 = vmul.f32 %v111, %v349
  %v459 = vmul.f32 %v112, %v353
  %v460 = vmul.f32 %v113, %v357
  %v461 = vmul.f32 %v114, %v361
  %v462 = vmul.f32 %v115, %v345
  %v463 = vmul.f32 %v116, %v349
  %v464 = vmul.f32 %v117, %v353
  %v465 = vmul.f32 %v118, %v357
  %v466 = vmul.f32 %v119, %v361
  %v467 = vmul.f32 %v120, %v345
  %v468 = vmul.f32 %v121, %v349
  %v469 = vmul.f32 %v122, %v353
  %v470 = vmul.f32 %v123, %v357
  %v471 = vmul.f32 %v124, %v361
  %v472 = vmul.f32 %v125, %v345
  %v473 = vmul.f32 %v126, %v349
  %v474 = vmul.f32 %v127, %v353
  %v475 = vmul.f32 %v128, %v357
  %v476 = vmul.f32 %v129, %v361
  %v477 = vmul.f32 %v130, %v345
  %v478 = vmul.f32 %v131, %v349
  %v479 = vmul.f32 %v132, %v353
  %v480 = vmul.f32 %v133, %v357
  %v481 = vmul.f32 %v134, %v361
  %v482 = vmul.f32 %v135, %v345
  %v483 = vmul.f32 %v136, %v349
  %v484 = vmul.f32 %v137, %v353
  %v485 = vmul.f32 %v138, %v357
  %v486 = vmul.f32 %v139, %v361
  %v487 = vmul.f32 %v140, %v345
  %v488 = vmul.f32 %v141, %v349
  %v489 = vmul.f32 %v142, %v353
  %v490 = vmul.f32 %v143, %v357
  %v491 = vmul.f32 %v144, %v361
  %v492 = vmul.f32 %v145, %v345
  %v493 = vmul.f32 %v146, %v349
  %v494 = vmul.f32 %v147, %v353
  %v495 = vmul.f32 %v148, %v357
  %v496 = vmul.f32 %v149, %v361
  %v497 = vmul.f32 %v150, %v345
  %v498 = vmul.f32 %v151, %v349
  %v499 = vmul.f32 %v152, %v353
  %v500 = vmul.f32 %v153, %v357
  %v501 = vmul.f32 %v154, %v361
  %v502 = vmul.f32 %v155, %v345
  %v503 = vmul.f32 %v156, %v349
  %v504 = vmul.f32 %v157, %v353
  %v505 = vmul.f32 %v158, %v357
  %v506 = vmul.f32 %v159, %v361
  %v507 = vmul.f32 %v160, %v345
  %v508 = vmul.f32 %v161, %v349
  %v509 = vmul.f32 %v162, %v353
  %v510 = vmul.f32 %v163, %v357
  %v511 = vmul.f32 %v164, %v361
  %v512 = vmul.f32 %v165, %v345
  %v513 = vmul.f32 %v166, %v349
  %v514 = vmul.f32 %v167, %v353
  %v515 = vmul.f32 %v168, %v357
  %v516 = vmul.f32 %v169, %v361
  %v517 = vmul.f32 %v170, %v345
  %v518 = vmul.f32 %v171, %v349
  %v519 = vmul.f32 %v172, %v353
  %v520 = vmul.f32 %v173, %v357
  %v521 = vmul.f32 %v174, %v361
  %v522 = vmul.f32 %v175, %v345
  %v523 = vmul.f32 %v176, %v349
  %v524 = vmul.f32 %v177, %v353
  %v525 = vmul.f32 %v178, %v357
  %v526 = vmul.f32 %v179, %v361
  %v527 = vmul.f32 %v180, %v345
  %v528 = vmul.f32 %v181, %v349
  %v529 = vmul.f32 %v182, %v353
  %v530 = vmul.f32 %v183, %v357
  %v531 = vmul.f32 %v184, %v361
  %v532 = vmul.f32 %v185, %v345
  %v533 = vmul.f32 %v186, %v349
  %v534 = vmul.f32 %v187, %v353
  %v535 = vmul.f32 %v188, %v357
  %v536 = vmul.f32 %v189, %v361
  %v537 = vmul.f32 %v190, %v345
  %v538 = vmul.f32 %v191, %v349
  %v539 = vmul.f32 %v192, %v353
  %v540 = vmul.f32 %v193, %v357
  %v541 = vmul.f32 %v194, %v361
  %v542 = vmul.f32 %v195, %v345
  %v543 = vmul.f32 %v196, %v349
  %v544 = vmul.f32 %v197, %v353
  %v545 = vmul.f32 %v198, %v357
  %v546 = vmul.f32 %v199, %v361
  %v547 = vmul.f32 %v200, %v345
  %v548 = vmul.f32 %v201, %v349
  %v549 = vmul.f32 %v202, %v353
  %v550 = vmul.f32 %v203, %v357
  %v551 = vmul.f32 %v204, %v361
  %v552 = vmul.f32 %v205, %v345
  %v553 = vmul.f32 %v206, %v349
  %v554 = vmul.f32 %v207, %v353
  %v555 = vmul.f32 %v208, %v357
  %v556 = vmul.f32 %v209, %v361
  %v557 = vmul.f32 %v210, %v345
  %v558 = vmul.f32 %v211, %v349
  %v559 = vmul.f32 %v212, %v353
  %v560 = vmul.f32 %v213, %v357
  %v561 = vmul.f32 %v214, %v361
  %v562 = vmul.f32 %v215, %v345
  %v563 = vmul.f32 %v216, %v349
  %v564 = vmul.f32 %v217, %v353
  %v565 = vmul.f32 %v218, %v357
  %v566 = vmul.f32 %v219, %v361
  %v567 = vmul.f32 %v220, %v345
  %v568 = vmul.f32 %v221, %v349
  %v569 = vmul.f32 %v222, %v353
  %v570 = vmul.f32 %v223, %v357
  %v571 = vmul.f32 %v224, %v361
  %v572 = vmul.f32 %v225, %v345
  %v573 = vmul.f32 %v226, %v349
  %v574 = vmul.f32 %v227, %v353
  %v575 = vmul.f32 %v228, %v357
  %v576 = vmul.f32 %v229, %v361
  %v577 = vmul.f32 %v230, %v345
  %v578 = vmul.f32 %v231, %v349
  %v579 = vmul.f32 %v232, %v353
  %v580 = vmul.f32 %v233, %v357
  %v581 = vmul.f32 %v234, %v361
  %v582 = vmul.f32 %v235, %v345
  %v583 = vmul.f32 %v236, %v349
  %v584 = vmul.f32 %v237, %v353
  %v585 = vmul.f32 %v238, %v357
  %v586 = vmul.f32 %v239, %v361
  %v587 = vmul.f32 %v240, %v345
  %v588 = vmul.f32 %v241, %v349
  %v589 = vmul.f32 %v242, %v353
  %v590 = vmul.f32 %v243, %v357
  %v591 = vmul.f32 %v244, %v361
  %v592 = vmul.f32 %v245, %v345
  %v593 = vmul.f32 %v246, %v349
  %v594 = vmul.f32 %v247, %v353
  %v595 = vmul.f32 %v248, %v357
  %v596 = vmul.f32 %v249, %v361
  %v597 = vmul.f32 %v250, %v345
  %v598 = vmul.f32 %v251, %v349
  %v599 = vmul.f32 %v252, %v353
  %v600 = vmul.f32 %v253, %v357
  %v601 = vmul.f32 %v254, %v361
  %v602 = vmul.f32 %v255, %v345
  %v603 = vmul.f32 %v256, %v349
  %v604 = vmul.f32 %v257, %v353
  %v605 = vmul.f32 %v258, %v357
  %v606 = vmul.f32 %v259, %v361
  %v607 = vmul.f32 %v260, %v345
  %v608 = vmul.f32 %v261, %v349
  %v609 = vmul.f32 %v262, %v353
  %v610 = vmul.f32 %v263, %v357
  %v611 = vmul.f32 %v264, %v361
  %v612 = vmul.f32 %v265, %v345
  %v613 = vmul.f32 %v266, %v349
  %v614 = vmul.f32 %v267, %v353
  %v615 = vmul.f32 %v268, %v357
  %v616 = vmul.f32 %v269, %v361
  %v617 = vmul.f32 %v270, %v345
  %v618 = vmul.f32 %v271, %v349
  %v619 = vmul.f32 %v272, %v353
  %v620 = vmul.f32 %v273, %v357
  %v621 = vmul.f32 %v274, %v361
  %v622 = vmul.f32 %v275, %v345
  %v623 = vmul.f32 %v276, %v349
  %v624 = vmul.f32 %v277, %v353
  %v625 = vmul.f32 %v278, %v357
  %v626 = vmul.f32 %v279, %v361
  %v627 = vmul.f32 %v280, %v345
  %v628 = vmul.f32 %v281, %v349
  %v629 = vmul.f32 %v282, %v353
  %v630 = vmul.f32 %v283, %v357
  %v631 = vmul.f32 %v284, %v361
  %v632 = vmul.f32 %v285, %v345
  %v633 = vmul.f32 %v286, %v349
  %v634 = vmul.f32 %v287, %v353
  %v635 = vmul.f32 %v288, %v357
  %v636 = vmul.f32 %v289, %v361
  %v637 = vmul.f32 %v290, %v345
  %v638 = vmul.f32 %v291, %v349
  %v639 = vmul.f32 %v292, %v353
  %v640 = vmul.f32 %v293, %v357
  %v641 = vmul.f32 %v294, %v361
  %v642 = vmul.f32 %v295, %v345
  %v643 = vmul.f32 %v296, %v349
  %v644 = vmul.f32 %v297, %v353
  %v645 = vmul.f32 %v298, %v357
  %v646 = vmul.f32 %v299, %v361
  %v647 = vmul.f32 %v300, %v345
  %v648 = vmul.f32 %v301, %v349
  %v649 = vmul.f32 %v302, %v353
  %v650 = vmul.f32 %v303, %v357
  %v651 = vmul.f32 %v304, %v361
  %v652 = vmul.f32 %v305, %v345
  %v653 = vmul.f32 %v306, %v349
  %v654 = vmul.f32 %v307, %v353
  %v655 = vmul.f32 %v308, %v357
  %v656 = vmul.f32 %v309, %v361
  %v657 = vmul.f32 %v310, %v345
  %v658 = vmul.f32 %v311, %v349
  %v659 = vmul.f32 %v312, %v353
  %v660 = vmul.f32 %v313, %v357
  %v661 = vmul.f32 %v314, %v361
  %v662 = vmul.f32 %v315, %v345
  %v663 = vmul.f32 %v316, %v349
  %v664 = vmul.f32 %v317, %v353
  %v665 = vmul.f32 %v318, %v357
  %v666 = vmul.f32 %v319, %v361
  %v667 = vmul.f32 %v320, %v345
  %v668 = vmul.f32 %v321, %v349
  %v669 = vmul.f32 %v322, %v353
  %v670 = vmul.f32 %v323, %v357
  %v671 = vmul.f32 %v324, %v361
  %v672 = vmul.f32 %v325, %v345
  %v673 = vmul.f32 %v326, %v349
  %v674 = vmul.f32 %v327, %v353
  %v675 = vmul.f32 %v328, %v357
  %v676 = vmul.f32 %v329, %v361
  %v677 = vmul.f32 %v330, %v345
  %v678 = vmul.f32 %v331, %v349
  %v679 = vmul.f32 %v332, %v353
  %v680 = vmul.f32 %v333, %v357
  %v681 = vmul.f32 %v334, %v361
  %v682 = vmul.f32 %v335, %v345
  %v683 = vmul.f32 %v336, %v349
  %v684 = vmul.f32 %v337, %v353
  %v685 = vmul.f32 %v338, %v357
  %v686 = vmul.f32 %v339, %v361
  %v687 = vld [vmem:[%s4] sm:$0x1f]
  %v689 = vlaneseq
  %v690 = vshrl.u32 %v689, 7
  %v691 = vsub.s32 0, %v690
  %v692 = vrot.slane %v687, %v691
  %v693 = vlaneseq
  %v694 = vshrl.u32 %v693, 7
  %v695 = vsub.s32 1, %v694
  %v696 = vrot.slane %v687, %v695
  %v697 = vlaneseq
  %v698 = vshrl.u32 %v697, 7
  %v699 = vsub.s32 2, %v698
  %v700 = vrot.slane %v687, %v699
  %v701 = vlaneseq
  %v702 = vshrl.u32 %v701, 7
  %v703 = vsub.s32 3, %v702
  %v704 = vrot.slane %v687, %v703
  %v705 = vlaneseq
  %v706 = vshrl.u32 %v705, 7
  %v707 = vsub.s32 4, %v706
  %v708 = vrot.slane %v687, %v707
  %v714 = vadd.f32 %v367, %v692
  %v715 = vadd.f32 %v368, %v696
  %v716 = vadd.f32 %v369, %v700
  %v717 = vadd.f32 %v370, %v704
  %v718 = vadd.f32 %v371, %v708
  %v719 = vadd.f32 %v372, %v692
  %v720 = vadd.f32 %v373, %v696
  %v721 = vadd.f32 %v374, %v700
  %v722 = vadd.f32 %v375, %v704
  %v723 = vadd.f32 %v376, %v708
  %v724 = vadd.f32 %v377, %v692
  %v725 = vadd.f32 %v378, %v696
  %v726 = vadd.f32 %v379, %v700
  %v727 = vadd.f32 %v380, %v704
  %v728 = vadd.f32 %v381, %v708
  %v729 = vadd.f32 %v382, %v692
  %v730 = vadd.f32 %v383, %v696
  %v731 = vadd.f32 %v384, %v700
  %v732 = vadd.f32 %v385, %v704
  %v733 = vadd.f32 %v386, %v708
  %v734 = vadd.f32 %v387, %v692
  %v735 = vadd.f32 %v388, %v696
  %v736 = vadd.f32 %v389, %v700
  %v737 = vadd.f32 %v390, %v704
  %v738 = vadd.f32 %v391, %v708
  %v739 = vadd.f32 %v392, %v692
  %v740 = vadd.f32 %v393, %v696
  %v741 = vadd.f32 %v394, %v700
  %v742 = vadd.f32 %v395, %v704
  %v743 = vadd.f32 %v396, %v708
  %v744 = vadd.f32 %v397, %v692
  %v745 = vadd.f32 %v398, %v696
  %v746 = vadd.f32 %v399, %v700
  %v747 = vadd.f32 %v400, %v704
  %v748 = vadd.f32 %v401, %v708
  %v749 = vadd.f32 %v402, %v692
  %v750 = vadd.f32 %v403, %v696
  %v751 = vadd.f32 %v404, %v700
  %v752 = vadd.f32 %v405, %v704
  %v753 = vadd.f32 %v406, %v708
  %v754 = vadd.f32 %v407, %v692
  %v755 = vadd.f32 %v408, %v696
  %v756 = vadd.f32 %v409, %v700
  %v757 = vadd.f32 %v410, %v704
  %v758 = vadd.f32 %v411, %v708
  %v759 = vadd.f32 %v412, %v692
  %v760 = vadd.f32 %v413, %v696
  %v761 = vadd.f32 %v414, %v700
  %v762 = vadd.f32 %v415, %v704
  %v763 = vadd.f32 %v416, %v708
  %v764 = vadd.f32 %v417, %v692
  %v765 = vadd.f32 %v418, %v696
  %v766 = vadd.f32 %v419, %v700
  %v767 = vadd.f32 %v420, %v704
  %v768 = vadd.f32 %v421, %v708
  %v769 = vadd.f32 %v422, %v692
  %v770 = vadd.f32 %v423, %v696
  %v771 = vadd.f32 %v424, %v700
  %v772 = vadd.f32 %v425, %v704
  %v773 = vadd.f32 %v426, %v708
  %v774 = vadd.f32 %v427, %v692
  %v775 = vadd.f32 %v428, %v696
  %v776 = vadd.f32 %v429, %v700
  %v777 = vadd.f32 %v430, %v704
  %v778 = vadd.f32 %v431, %v708
  %v779 = vadd.f32 %v432, %v692
  %v780 = vadd.f32 %v433, %v696
  %v781 = vadd.f32 %v434, %v700
  %v782 = vadd.f32 %v435, %v704
  %v783 = vadd.f32 %v436, %v708
  %v784 = vadd.f32 %v437, %v692
  %v785 = vadd.f32 %v438, %v696
  %v786 = vadd.f32 %v439, %v700
  %v787 = vadd.f32 %v440, %v704
  %v788 = vadd.f32 %v441, %v708
  %v789 = vadd.f32 %v442, %v692
  %v790 = vadd.f32 %v443, %v696
  %v791 = vadd.f32 %v444, %v700
  %v792 = vadd.f32 %v445, %v704
  %v793 = vadd.f32 %v446, %v708
  %v794 = vadd.f32 %v447, %v692
  %v795 = vadd.f32 %v448, %v696
  %v796 = vadd.f32 %v449, %v700
  %v797 = vadd.f32 %v450, %v704
  %v798 = vadd.f32 %v451, %v708
  %v799 = vadd.f32 %v452, %v692
  %v800 = vadd.f32 %v453, %v696
  %v801 = vadd.f32 %v454, %v700
  %v802 = vadd.f32 %v455, %v704
  %v803 = vadd.f32 %v456, %v708
  %v804 = vadd.f32 %v457, %v692
  %v805 = vadd.f32 %v458, %v696
  %v806 = vadd.f32 %v459, %v700
  %v807 = vadd.f32 %v460, %v704
  %v808 = vadd.f32 %v461, %v708
  %v809 = vadd.f32 %v462, %v692
  %v810 = vadd.f32 %v463, %v696
  %v811 = vadd.f32 %v464, %v700
  %v812 = vadd.f32 %v465, %v704
  %v813 = vadd.f32 %v466, %v708
  %v814 = vadd.f32 %v467, %v692
  %v815 = vadd.f32 %v468, %v696
  %v816 = vadd.f32 %v469, %v700
  %v817 = vadd.f32 %v470, %v704
  %v818 = vadd.f32 %v471, %v708
  %v819 = vadd.f32 %v472, %v692
  %v820 = vadd.f32 %v473, %v696
  %v821 = vadd.f32 %v474, %v700
  %v822 = vadd.f32 %v475, %v704
  %v823 = vadd.f32 %v476, %v708
  %v824 = vadd.f32 %v477, %v692
  %v825 = vadd.f32 %v478, %v696
  %v826 = vadd.f32 %v479, %v700
  %v827 = vadd.f32 %v480, %v704
  %v828 = vadd.f32 %v481, %v708
  %v829 = vadd.f32 %v482, %v692
  %v830 = vadd.f32 %v483, %v696
  %v831 = vadd.f32 %v484, %v700
  %v832 = vadd.f32 %v485, %v704
  %v833 = vadd.f32 %v486, %v708
  %v834 = vadd.f32 %v487, %v692
  %v835 = vadd.f32 %v488, %v696
  %v836 = vadd.f32 %v489, %v700
  %v837 = vadd.f32 %v490, %v704
  %v838 = vadd.f32 %v491, %v708
  %v839 = vadd.f32 %v492, %v692
  %v840 = vadd.f32 %v493, %v696
  %v841 = vadd.f32 %v494, %v700
  %v842 = vadd.f32 %v495, %v704
  %v843 = vadd.f32 %v496, %v708
  %v844 = vadd.f32 %v497, %v692
  %v845 = vadd.f32 %v498, %v696
  %v846 = vadd.f32 %v499, %v700
  %v847 = vadd.f32 %v500, %v704
  %v848 = vadd.f32 %v501, %v708
  %v849 = vadd.f32 %v502, %v692
  %v850 = vadd.f32 %v503, %v696
  %v851 = vadd.f32 %v504, %v700
  %v852 = vadd.f32 %v505, %v704
  %v853 = vadd.f32 %v506, %v708
  %v854 = vadd.f32 %v507, %v692
  %v855 = vadd.f32 %v508, %v696
  %v856 = vadd.f32 %v509, %v700
  %v857 = vadd.f32 %v510, %v704
  %v858 = vadd.f32 %v511, %v708
  %v859 = vadd.f32 %v512, %v692
  %v860 = vadd.f32 %v513, %v696
  %v861 = vadd.f32 %v514, %v700
  %v862 = vadd.f32 %v515, %v704
  %v863 = vadd.f32 %v516, %v708
  %v864 = vadd.f32 %v517, %v692
  %v865 = vadd.f32 %v518, %v696
  %v866 = vadd.f32 %v519, %v700
  %v867 = vadd.f32 %v520, %v704
  %v868 = vadd.f32 %v521, %v708
  %v869 = vadd.f32 %v522, %v692
  %v870 = vadd.f32 %v523, %v696
  %v871 = vadd.f32 %v524, %v700
  %v872 = vadd.f32 %v525, %v704
  %v873 = vadd.f32 %v526, %v708
  %v874 = vadd.f32 %v527, %v692
  %v875 = vadd.f32 %v528, %v696
  %v876 = vadd.f32 %v529, %v700
  %v877 = vadd.f32 %v530, %v704
  %v878 = vadd.f32 %v531, %v708
  %v879 = vadd.f32 %v532, %v692
  %v880 = vadd.f32 %v533, %v696
  %v881 = vadd.f32 %v534, %v700
  %v882 = vadd.f32 %v535, %v704
  %v883 = vadd.f32 %v536, %v708
  %v884 = vadd.f32 %v537, %v692
  %v885 = vadd.f32 %v538, %v696
  %v886 = vadd.f32 %v539, %v700
  %v887 = vadd.f32 %v540, %v704
  %v888 = vadd.f32 %v541, %v708
  %v889 = vadd.f32 %v542, %v692
  %v890 = vadd.f32 %v543, %v696
  %v891 = vadd.f32 %v544, %v700
  %v892 = vadd.f32 %v545, %v704
  %v893 = vadd.f32 %v546, %v708
  %v894 = vadd.f32 %v547, %v692
  %v895 = vadd.f32 %v548, %v696
  %v896 = vadd.f32 %v549, %v700
  %v897 = vadd.f32 %v550, %v704
  %v898 = vadd.f32 %v551, %v708
  %v899 = vadd.f32 %v552, %v692
  %v900 = vadd.f32 %v553, %v696
  %v901 = vadd.f32 %v554, %v700
  %v902 = vadd.f32 %v555, %v704
  %v903 = vadd.f32 %v556, %v708
  %v904 = vadd.f32 %v557, %v692
  %v905 = vadd.f32 %v558, %v696
  %v906 = vadd.f32 %v559, %v700
  %v907 = vadd.f32 %v560, %v704
  %v908 = vadd.f32 %v561, %v708
  %v909 = vadd.f32 %v562, %v692
  %v910 = vadd.f32 %v563, %v696
  %v911 = vadd.f32 %v564, %v700
  %v912 = vadd.f32 %v565, %v704
  %v913 = vadd.f32 %v566, %v708
  %v914 = vadd.f32 %v567, %v692
  %v915 = vadd.f32 %v568, %v696
  %v916 = vadd.f32 %v569, %v700
  %v917 = vadd.f32 %v570, %v704
  %v918 = vadd.f32 %v571, %v708
  %v919 = vadd.f32 %v572, %v692
  %v920 = vadd.f32 %v573, %v696
  %v921 = vadd.f32 %v574, %v700
  %v922 = vadd.f32 %v575, %v704
  %v923 = vadd.f32 %v576, %v708
  %v924 = vadd.f32 %v577, %v692
  %v925 = vadd.f32 %v578, %v696
  %v926 = vadd.f32 %v579, %v700
  %v927 = vadd.f32 %v580, %v704
  %v928 = vadd.f32 %v581, %v708
  %v929 = vadd.f32 %v582, %v692
  %v930 = vadd.f32 %v583, %v696
  %v931 = vadd.f32 %v584, %v700
  %v932 = vadd.f32 %v585, %v704
  %v933 = vadd.f32 %v586, %v708
  %v934 = vadd.f32 %v587, %v692
  %v935 = vadd.f32 %v588, %v696
  %v936 = vadd.f32 %v589, %v700
  %v937 = vadd.f32 %v590, %v704
  %v938 = vadd.f32 %v591, %v708
  %v939 = vadd.f32 %v592, %v692
  %v940 = vadd.f32 %v593, %v696
  %v941 = vadd.f32 %v594, %v700
  %v942 = vadd.f32 %v595, %v704
  %v943 = vadd.f32 %v596, %v708
  %v944 = vadd.f32 %v597, %v692
  %v945 = vadd.f32 %v598, %v696
  %v946 = vadd.f32 %v599, %v700
  %v947 = vadd.f32 %v600, %v704
  %v948 = vadd.f32 %v601, %v708
  %v949 = vadd.f32 %v602, %v692
  %v950 = vadd.f32 %v603, %v696
  %v951 = vadd.f32 %v604, %v700
  %v952 = vadd.f32 %v605, %v704
  %v953 = vadd.f32 %v606, %v708
  %v954 = vadd.f32 %v607, %v692
  %v955 = vadd.f32 %v608, %v696
  %v956 = vadd.f32 %v609, %v700
  %v957 = vadd.f32 %v610, %v704
  %v958 = vadd.f32 %v611, %v708
  %v959 = vadd.f32 %v612, %v692
  %v960 = vadd.f32 %v613, %v696
  %v961 = vadd.f32 %v614, %v700
  %v962 = vadd.f32 %v615, %v704
  %v963 = vadd.f32 %v616, %v708
  %v964 = vadd.f32 %v617, %v692
  %v965 = vadd.f32 %v618, %v696
  %v966 = vadd.f32 %v619, %v700
  %v967 = vadd.f32 %v620, %v704
  %v968 = vadd.f32 %v621, %v708
  %v969 = vadd.f32 %v622, %v692
  %v970 = vadd.f32 %v623, %v696
  %v971 = vadd.f32 %v624, %v700
  %v972 = vadd.f32 %v625, %v704
  %v973 = vadd.f32 %v626, %v708
  %v974 = vadd.f32 %v627, %v692
  %v975 = vadd.f32 %v628, %v696
  %v976 = vadd.f32 %v629, %v700
  %v977 = vadd.f32 %v630, %v704
  %v978 = vadd.f32 %v631, %v708
  %v979 = vadd.f32 %v632, %v692
  %v980 = vadd.f32 %v633, %v696
  %v981 = vadd.f32 %v634, %v700
  %v982 = vadd.f32 %v635, %v704
  %v983 = vadd.f32 %v636, %v708
  %v984 = vadd.f32 %v637, %v692
  %v985 = vadd.f32 %v638, %v696
  %v986 = vadd.f32 %v639, %v700
  %v987 = vadd.f32 %v640, %v704
  %v988 = vadd.f32 %v641, %v708
  %v989 = vadd.f32 %v642, %v692
  %v990 = vadd.f32 %v643, %v696
  %v991 = vadd.f32 %v644, %v700
  %v992 = vadd.f32 %v645, %v704
  %v993 = vadd.f32 %v646, %v708
  %v994 = vadd.f32 %v647, %v692
  %v995 = vadd.f32 %v648, %v696
  %v996 = vadd.f32 %v649, %v700
  %v997 = vadd.f32 %v650, %v704
  %v998 = vadd.f32 %v651, %v708
  %v999 = vadd.f32 %v652, %v692
  %v1000 = vadd.f32 %v653, %v696
  %v1001 = vadd.f32 %v654, %v700
  %v1002 = vadd.f32 %v655, %v704
  %v1003 = vadd.f32 %v656, %v708
  %v1004 = vadd.f32 %v657, %v692
  %v1005 = vadd.f32 %v658, %v696
  %v1006 = vadd.f32 %v659, %v700
  %v1007 = vadd.f32 %v660, %v704
  %v1008 = vadd.f32 %v661, %v708
  %v1009 = vadd.f32 %v662, %v692
  %v1010 = vadd.f32 %v663, %v696
  %v1011 = vadd.f32 %v664, %v700
  %v1012 = vadd.f32 %v665, %v704
  %v1013 = vadd.f32 %v666, %v708
  %v1014 = vadd.f32 %v667, %v692
  %v1015 = vadd.f32 %v668, %v696
  %v1016 = vadd.f32 %v669, %v700
  %v1017 = vadd.f32 %v670, %v704
  %v1018 = vadd.f32 %v671, %v708
  %v1019 = vadd.f32 %v672, %v692
  %v1020 = vadd.f32 %v673, %v696
  %v1021 = vadd.f32 %v674, %v700
  %v1022 = vadd.f32 %v675, %v704
  %v1023 = vadd.f32 %v676, %v708
  %v1024 = vadd.f32 %v677, %v692
  %v1025 = vadd.f32 %v678, %v696
  %v1026 = vadd.f32 %v679, %v700
  %v1027 = vadd.f32 %v680, %v704
  %v1028 = vadd.f32 %v681, %v708
  %v1029 = vadd.f32 %v682, %v692
  %v1030 = vadd.f32 %v683, %v696
  %v1031 = vadd.f32 %v684, %v700
  %v1032 = vadd.f32 %v685, %v704
  %v1033 = vadd.f32 %v686, %v708
  %v1034 = vmax.f32 %v714, 0.0
  %v1035 = vmax.f32 %v715, 0.0
  %v1036 = vmax.f32 %v716, 0.0
  %v1037 = vmax.f32 %v717, 0.0
  %v1038 = vmax.f32 %v718, 0.0
  %v1039 = vmax.f32 %v719, 0.0
  %v1040 = vmax.f32 %v720, 0.0
  %v1041 = vmax.f32 %v721, 0.0
  %v1042 = vmax.f32 %v722, 0.0
  %v1043 = vmax.f32 %v723, 0.0
  %v1044 = vmax.f32 %v724, 0.0
  %v1045 = vmax.f32 %v725, 0.0
  %v1046 = vmax.f32 %v726, 0.0
  %v1047 = vmax.f32 %v727, 0.0
  %v1048 = vmax.f32 %v728, 0.0
  %v1049 = vmax.f32 %v729, 0.0
  %v1050 = vmax.f32 %v730, 0.0
  %v1051 = vmax.f32 %v731, 0.0
  %v1052 = vmax.f32 %v732, 0.0
  %v1053 = vmax.f32 %v733, 0.0
  %v1054 = vmax.f32 %v734, 0.0
  %v1055 = vmax.f32 %v735, 0.0
  %v1056 = vmax.f32 %v736, 0.0
  %v1057 = vmax.f32 %v737, 0.0
  %v1058 = vmax.f32 %v738, 0.0
  %v1059 = vmax.f32 %v739, 0.0
  %v1060 = vmax.f32 %v740, 0.0
  %v1061 = vmax.f32 %v741, 0.0
  %v1062 = vmax.f32 %v742, 0.0
  %v1063 = vmax.f32 %v743, 0.0
  %v1064 = vmax.f32 %v744, 0.0
  %v1065 = vmax.f32 %v745, 0.0
  %v1066 = vmax.f32 %v746, 0.0
  %v1067 = vmax.f32 %v747, 0.0
  %v1068 = vmax.f32 %v748, 0.0
  %v1069 = vmax.f32 %v749, 0.0
  %v1070 = vmax.f32 %v750, 0.0
  %v1071 = vmax.f32 %v751, 0.0
  %v1072 = vmax.f32 %v752, 0.0
  %v1073 = vmax.f32 %v753, 0.0
  %v1074 = vmax.f32 %v754, 0.0
  %v1075 = vmax.f32 %v755, 0.0
  %v1076 = vmax.f32 %v756, 0.0
  %v1077 = vmax.f32 %v757, 0.0
  %v1078 = vmax.f32 %v758, 0.0
  %v1079 = vmax.f32 %v759, 0.0
  %v1080 = vmax.f32 %v760, 0.0
  %v1081 = vmax.f32 %v761, 0.0
  %v1082 = vmax.f32 %v762, 0.0
  %v1083 = vmax.f32 %v763, 0.0
  %v1084 = vmax.f32 %v764, 0.0
  %v1085 = vmax.f32 %v765, 0.0
  %v1086 = vmax.f32 %v766, 0.0
  %v1087 = vmax.f32 %v767, 0.0
  %v1088 = vmax.f32 %v768, 0.0
  %v1089 = vmax.f32 %v769, 0.0
  %v1090 = vmax.f32 %v770, 0.0
  %v1091 = vmax.f32 %v771, 0.0
  %v1092 = vmax.f32 %v772, 0.0
  %v1093 = vmax.f32 %v773, 0.0
  %v1094 = vmax.f32 %v774, 0.0
  %v1095 = vmax.f32 %v775, 0.0
  %v1096 = vmax.f32 %v776, 0.0
  %v1097 = vmax.f32 %v777, 0.0
  %v1098 = vmax.f32 %v778, 0.0
  %v1099 = vmax.f32 %v779, 0.0
  %v1100 = vmax.f32 %v780, 0.0
  %v1101 = vmax.f32 %v781, 0.0
  %v1102 = vmax.f32 %v782, 0.0
  %v1103 = vmax.f32 %v783, 0.0
  %v1104 = vmax.f32 %v784, 0.0
  %v1105 = vmax.f32 %v785, 0.0
  %v1106 = vmax.f32 %v786, 0.0
  %v1107 = vmax.f32 %v787, 0.0
  %v1108 = vmax.f32 %v788, 0.0
  %v1109 = vmax.f32 %v789, 0.0
  %v1110 = vmax.f32 %v790, 0.0
  %v1111 = vmax.f32 %v791, 0.0
  %v1112 = vmax.f32 %v792, 0.0
  %v1113 = vmax.f32 %v793, 0.0
  %v1114 = vmax.f32 %v794, 0.0
  %v1115 = vmax.f32 %v795, 0.0
  %v1116 = vmax.f32 %v796, 0.0
  %v1117 = vmax.f32 %v797, 0.0
  %v1118 = vmax.f32 %v798, 0.0
  %v1119 = vmax.f32 %v799, 0.0
  %v1120 = vmax.f32 %v800, 0.0
  %v1121 = vmax.f32 %v801, 0.0
  %v1122 = vmax.f32 %v802, 0.0
  %v1123 = vmax.f32 %v803, 0.0
  %v1124 = vmax.f32 %v804, 0.0
  %v1125 = vmax.f32 %v805, 0.0
  %v1126 = vmax.f32 %v806, 0.0
  %v1127 = vmax.f32 %v807, 0.0
  %v1128 = vmax.f32 %v808, 0.0
  %v1129 = vmax.f32 %v809, 0.0
  %v1130 = vmax.f32 %v810, 0.0
  %v1131 = vmax.f32 %v811, 0.0
  %v1132 = vmax.f32 %v812, 0.0
  %v1133 = vmax.f32 %v813, 0.0
  %v1134 = vmax.f32 %v814, 0.0
  %v1135 = vmax.f32 %v815, 0.0
  %v1136 = vmax.f32 %v816, 0.0
  %v1137 = vmax.f32 %v817, 0.0
  %v1138 = vmax.f32 %v818, 0.0
  %v1139 = vmax.f32 %v819, 0.0
  %v1140 = vmax.f32 %v820, 0.0
  %v1141 = vmax.f32 %v821, 0.0
  %v1142 = vmax.f32 %v822, 0.0
  %v1143 = vmax.f32 %v823, 0.0
  %v1144 = vmax.f32 %v824, 0.0
  %v1145 = vmax.f32 %v825, 0.0
  %v1146 = vmax.f32 %v826, 0.0
  %v1147 = vmax.f32 %v827, 0.0
  %v1148 = vmax.f32 %v828, 0.0
  %v1149 = vmax.f32 %v829, 0.0
  %v1150 = vmax.f32 %v830, 0.0
  %v1151 = vmax.f32 %v831, 0.0
  %v1152 = vmax.f32 %v832, 0.0
  %v1153 = vmax.f32 %v833, 0.0
  %v1154 = vmax.f32 %v834, 0.0
  %v1155 = vmax.f32 %v835, 0.0
  %v1156 = vmax.f32 %v836, 0.0
  %v1157 = vmax.f32 %v837, 0.0
  %v1158 = vmax.f32 %v838, 0.0
  %v1159 = vmax.f32 %v839, 0.0
  %v1160 = vmax.f32 %v840, 0.0
  %v1161 = vmax.f32 %v841, 0.0
  %v1162 = vmax.f32 %v842, 0.0
  %v1163 = vmax.f32 %v843, 0.0
  %v1164 = vmax.f32 %v844, 0.0
  %v1165 = vmax.f32 %v845, 0.0
  %v1166 = vmax.f32 %v846, 0.0
  %v1167 = vmax.f32 %v847, 0.0
  %v1168 = vmax.f32 %v848, 0.0
  %v1169 = vmax.f32 %v849, 0.0
  %v1170 = vmax.f32 %v850, 0.0
  %v1171 = vmax.f32 %v851, 0.0
  %v1172 = vmax.f32 %v852, 0.0
  %v1173 = vmax.f32 %v853, 0.0
  %v1174 = vmax.f32 %v854, 0.0
  %v1175 = vmax.f32 %v855, 0.0
  %v1176 = vmax.f32 %v856, 0.0
  %v1177 = vmax.f32 %v857, 0.0
  %v1178 = vmax.f32 %v858, 0.0
  %v1179 = vmax.f32 %v859, 0.0
  %v1180 = vmax.f32 %v860, 0.0
  %v1181 = vmax.f32 %v861, 0.0
  %v1182 = vmax.f32 %v862, 0.0
  %v1183 = vmax.f32 %v863, 0.0
  %v1184 = vmax.f32 %v864, 0.0
  %v1185 = vmax.f32 %v865, 0.0
  %v1186 = vmax.f32 %v866, 0.0
  %v1187 = vmax.f32 %v867, 0.0
  %v1188 = vmax.f32 %v868, 0.0
  %v1189 = vmax.f32 %v869, 0.0
  %v1190 = vmax.f32 %v870, 0.0
  %v1191 = vmax.f32 %v871, 0.0
  %v1192 = vmax.f32 %v872, 0.0
  %v1193 = vmax.f32 %v873, 0.0
  %v1194 = vmax.f32 %v874, 0.0
  %v1195 = vmax.f32 %v875, 0.0
  %v1196 = vmax.f32 %v876, 0.0
  %v1197 = vmax.f32 %v877, 0.0
  %v1198 = vmax.f32 %v878, 0.0
  %v1199 = vmax.f32 %v879, 0.0
  %v1200 = vmax.f32 %v880, 0.0
  %v1201 = vmax.f32 %v881, 0.0
  %v1202 = vmax.f32 %v882, 0.0
  %v1203 = vmax.f32 %v883, 0.0
  %v1204 = vmax.f32 %v884, 0.0
  %v1205 = vmax.f32 %v885, 0.0
  %v1206 = vmax.f32 %v886, 0.0
  %v1207 = vmax.f32 %v887, 0.0
  %v1208 = vmax.f32 %v888, 0.0
  %v1209 = vmax.f32 %v889, 0.0
  %v1210 = vmax.f32 %v890, 0.0
  %v1211 = vmax.f32 %v891, 0.0
  %v1212 = vmax.f32 %v892, 0.0
  %v1213 = vmax.f32 %v893, 0.0
  %v1214 = vmax.f32 %v894, 0.0
  %v1215 = vmax.f32 %v895, 0.0
  %v1216 = vmax.f32 %v896, 0.0
  %v1217 = vmax.f32 %v897, 0.0
  %v1218 = vmax.f32 %v898, 0.0
  %v1219 = vmax.f32 %v899, 0.0
  %v1220 = vmax.f32 %v900, 0.0
  %v1221 = vmax.f32 %v901, 0.0
  %v1222 = vmax.f32 %v902, 0.0
  %v1223 = vmax.f32 %v903, 0.0
  %v1224 = vmax.f32 %v904, 0.0
  %v1225 = vmax.f32 %v905, 0.0
  %v1226 = vmax.f32 %v906, 0.0
  %v1227 = vmax.f32 %v907, 0.0
  %v1228 = vmax.f32 %v908, 0.0
  %v1229 = vmax.f32 %v909, 0.0
  %v1230 = vmax.f32 %v910, 0.0
  %v1231 = vmax.f32 %v911, 0.0
  %v1232 = vmax.f32 %v912, 0.0
  %v1233 = vmax.f32 %v913, 0.0
  %v1234 = vmax.f32 %v914, 0.0
  %v1235 = vmax.f32 %v915, 0.0
  %v1236 = vmax.f32 %v916, 0.0
  %v1237 = vmax.f32 %v917, 0.0
  %v1238 = vmax.f32 %v918, 0.0
  %v1239 = vmax.f32 %v919, 0.0
  %v1240 = vmax.f32 %v920, 0.0
  %v1241 = vmax.f32 %v921, 0.0
  %v1242 = vmax.f32 %v922, 0.0
  %v1243 = vmax.f32 %v923, 0.0
  %v1244 = vmax.f32 %v924, 0.0
  %v1245 = vmax.f32 %v925, 0.0
  %v1246 = vmax.f32 %v926, 0.0
  %v1247 = vmax.f32 %v927, 0.0
  %v1248 = vmax.f32 %v928, 0.0
  %v1249 = vmax.f32 %v929, 0.0
  %v1250 = vmax.f32 %v930, 0.0
  %v1251 = vmax.f32 %v931, 0.0
  %v1252 = vmax.f32 %v932, 0.0
  %v1253 = vmax.f32 %v933, 0.0
  %v1254 = vmax.f32 %v934, 0.0
  %v1255 = vmax.f32 %v935, 0.0
  %v1256 = vmax.f32 %v936, 0.0
  %v1257 = vmax.f32 %v937, 0.0
  %v1258 = vmax.f32 %v938, 0.0
  %v1259 = vmax.f32 %v939, 0.0
  %v1260 = vmax.f32 %v940, 0.0
  %v1261 = vmax.f32 %v941, 0.0
  %v1262 = vmax.f32 %v942, 0.0
  %v1263 = vmax.f32 %v943, 0.0
  %v1264 = vmax.f32 %v944, 0.0
  %v1265 = vmax.f32 %v945, 0.0
  %v1266 = vmax.f32 %v946, 0.0
  %v1267 = vmax.f32 %v947, 0.0
  %v1268 = vmax.f32 %v948, 0.0
  %v1269 = vmax.f32 %v949, 0.0
  %v1270 = vmax.f32 %v950, 0.0
  %v1271 = vmax.f32 %v951, 0.0
  %v1272 = vmax.f32 %v952, 0.0
  %v1273 = vmax.f32 %v953, 0.0
  %v1274 = vmax.f32 %v954, 0.0
  %v1275 = vmax.f32 %v955, 0.0
  %v1276 = vmax.f32 %v956, 0.0
  %v1277 = vmax.f32 %v957, 0.0
  %v1278 = vmax.f32 %v958, 0.0
  %v1279 = vmax.f32 %v959, 0.0
  %v1280 = vmax.f32 %v960, 0.0
  %v1281 = vmax.f32 %v961, 0.0
  %v1282 = vmax.f32 %v962, 0.0
  %v1283 = vmax.f32 %v963, 0.0
  %v1284 = vmax.f32 %v964, 0.0
  %v1285 = vmax.f32 %v965, 0.0
  %v1286 = vmax.f32 %v966, 0.0
  %v1287 = vmax.f32 %v967, 0.0
  %v1288 = vmax.f32 %v968, 0.0
  %v1289 = vmax.f32 %v969, 0.0
  %v1290 = vmax.f32 %v970, 0.0
  %v1291 = vmax.f32 %v971, 0.0
  %v1292 = vmax.f32 %v972, 0.0
  %v1293 = vmax.f32 %v973, 0.0
  %v1294 = vmax.f32 %v974, 0.0
  %v1295 = vmax.f32 %v975, 0.0
  %v1296 = vmax.f32 %v976, 0.0
  %v1297 = vmax.f32 %v977, 0.0
  %v1298 = vmax.f32 %v978, 0.0
  %v1299 = vmax.f32 %v979, 0.0
  %v1300 = vmax.f32 %v980, 0.0
  %v1301 = vmax.f32 %v981, 0.0
  %v1302 = vmax.f32 %v982, 0.0
  %v1303 = vmax.f32 %v983, 0.0
  %v1304 = vmax.f32 %v984, 0.0
  %v1305 = vmax.f32 %v985, 0.0
  %v1306 = vmax.f32 %v986, 0.0
  %v1307 = vmax.f32 %v987, 0.0
  %v1308 = vmax.f32 %v988, 0.0
  %v1309 = vmax.f32 %v989, 0.0
  %v1310 = vmax.f32 %v990, 0.0
  %v1311 = vmax.f32 %v991, 0.0
  %v1312 = vmax.f32 %v992, 0.0
  %v1313 = vmax.f32 %v993, 0.0
  %v1314 = vmax.f32 %v994, 0.0
  %v1315 = vmax.f32 %v995, 0.0
  %v1316 = vmax.f32 %v996, 0.0
  %v1317 = vmax.f32 %v997, 0.0
  %v1318 = vmax.f32 %v998, 0.0
  %v1319 = vmax.f32 %v999, 0.0
  %v1320 = vmax.f32 %v1000, 0.0
  %v1321 = vmax.f32 %v1001, 0.0
  %v1322 = vmax.f32 %v1002, 0.0
  %v1323 = vmax.f32 %v1003, 0.0
  %v1324 = vmax.f32 %v1004, 0.0
  %v1325 = vmax.f32 %v1005, 0.0
  %v1326 = vmax.f32 %v1006, 0.0
  %v1327 = vmax.f32 %v1007, 0.0
  %v1328 = vmax.f32 %v1008, 0.0
  %v1329 = vmax.f32 %v1009, 0.0
  %v1330 = vmax.f32 %v1010, 0.0
  %v1331 = vmax.f32 %v1011, 0.0
  %v1332 = vmax.f32 %v1012, 0.0
  %v1333 = vmax.f32 %v1013, 0.0
  %v1334 = vmax.f32 %v1014, 0.0
  %v1335 = vmax.f32 %v1015, 0.0
  %v1336 = vmax.f32 %v1016, 0.0
  %v1337 = vmax.f32 %v1017, 0.0
  %v1338 = vmax.f32 %v1018, 0.0
  %v1339 = vmax.f32 %v1019, 0.0
  %v1340 = vmax.f32 %v1020, 0.0
  %v1341 = vmax.f32 %v1021, 0.0
  %v1342 = vmax.f32 %v1022, 0.0
  %v1343 = vmax.f32 %v1023, 0.0
  %v1344 = vmax.f32 %v1024, 0.0
  %v1345 = vmax.f32 %v1025, 0.0
  %v1346 = vmax.f32 %v1026, 0.0
  %v1347 = vmax.f32 %v1027, 0.0
  %v1348 = vmax.f32 %v1028, 0.0
  %v1349 = vmax.f32 %v1029, 0.0
  %v1350 = vmax.f32 %v1030, 0.0
  %v1351 = vmax.f32 %v1031, 0.0
  %v1352 = vmax.f32 %v1032, 0.0
  %v1353 = vmax.f32 %v1033, 0.0
  %v1354 = vld [vmem:[%s1] sm:$0xff]
  %v1355 = vld [vmem:[%s1 + $0x8] sm:$0xff]
  %v1356 = vld [vmem:[%s1 + $0x10] sm:$0xff]
  %v1357 = vld [vmem:[%s1 + $0x18] sm:$0xff]
  %v1358 = vld [vmem:[%s1 + $0x20] sm:$0xff]
  %v1359 = vld [vmem:[%s1 + $0x28] sm:$0xff]
  %v1360 = vld [vmem:[%s1 + $0x30] sm:$0xff]
  %v1361 = vld [vmem:[%s1 + $0x38] sm:$0xff]
  %v1362 = vld [vmem:[%s1 + $0x40] sm:$0xff]
  %v1363 = vld [vmem:[%s1 + $0x48] sm:$0xff]
  %v1364 = vld [vmem:[%s1 + $0x50] sm:$0xff]
  %v1365 = vld [vmem:[%s1 + $0x58] sm:$0xff]
  %v1366 = vld [vmem:[%s1 + $0x60] sm:$0xff]
  %v1367 = vld [vmem:[%s1 + $0x68] sm:$0xff]
  %v1368 = vld [vmem:[%s1 + $0x70] sm:$0xff]
  %v1369 = vld [vmem:[%s1 + $0x78] sm:$0xff]
  %v1370 = vld [vmem:[%s1 + $0x80] sm:$0xff]
  %v1371 = vld [vmem:[%s1 + $0x88] sm:$0xff]
  %v1372 = vld [vmem:[%s1 + $0x90] sm:$0xff]
  %v1373 = vld [vmem:[%s1 + $0x98] sm:$0xff]
  %v1374 = vld [vmem:[%s1 + $0xa0] sm:$0xff]
  %v1375 = vld [vmem:[%s1 + $0xa8] sm:$0xff]
  %v1376 = vld [vmem:[%s1 + $0xb0] sm:$0xff]
  %v1377 = vld [vmem:[%s1 + $0xb8] sm:$0xff]
  %v1378 = vld [vmem:[%s1 + $0xc0] sm:$0xff]
  %v1379 = vld [vmem:[%s1 + $0xc8] sm:$0xff]
  %v1380 = vld [vmem:[%s1 + $0xd0] sm:$0xff]
  %v1381 = vld [vmem:[%s1 + $0xd8] sm:$0xff]
  %v1382 = vld [vmem:[%s1 + $0xe0] sm:$0xff]
  %v1383 = vld [vmem:[%s1 + $0xe8] sm:$0xff]
  %v1384 = vld [vmem:[%s1 + $0xf0] sm:$0xff]
  %v1385 = vld [vmem:[%s1 + $0xf8] sm:$0xff]
  %v1386 = vld [vmem:[%s1 + $0x100] sm:$0xff]
  %v1387 = vld [vmem:[%s1 + $0x108] sm:$0xff]
  %v1388 = vld [vmem:[%s1 + $0x110] sm:$0xff]
  %v1389 = vld [vmem:[%s1 + $0x118] sm:$0xff]
  %v1390 = vld [vmem:[%s1 + $0x120] sm:$0xff]
  %v1391 = vld [vmem:[%s1 + $0x128] sm:$0xff]
  %v1392 = vld [vmem:[%s1 + $0x130] sm:$0xff]
  %v1393 = vld [vmem:[%s1 + $0x138] sm:$0xff]
  %v1394 = vld [vmem:[%s1 + $0x140] sm:$0xff]
  %v1395 = vld [vmem:[%s1 + $0x148] sm:$0xff]
  %v1396 = vld [vmem:[%s1 + $0x150] sm:$0xff]
  %v1397 = vld [vmem:[%s1 + $0x158] sm:$0xff]
  %v1398 = vld [vmem:[%s1 + $0x160] sm:$0xff]
  %v1399 = vld [vmem:[%s1 + $0x168] sm:$0xff]
  %v1400 = vld [vmem:[%s1 + $0x170] sm:$0xff]
  %v1401 = vld [vmem:[%s1 + $0x178] sm:$0xff]
  %v1402 = vld [vmem:[%s1 + $0x180] sm:$0xff]
  %v1403 = vld [vmem:[%s1 + $0x188] sm:$0xff]
  %v1404 = vld [vmem:[%s1 + $0x190] sm:$0xff]
  %v1405 = vld [vmem:[%s1 + $0x198] sm:$0xff]
  %v1406 = vld [vmem:[%s1 + $0x1a0] sm:$0xff]
  %v1407 = vld [vmem:[%s1 + $0x1a8] sm:$0xff]
  %v1408 = vld [vmem:[%s1 + $0x1b0] sm:$0xff]
  %v1409 = vld [vmem:[%s1 + $0x1b8] sm:$0xff]
  %v1410 = vld [vmem:[%s1 + $0x1c0] sm:$0xff]
  %v1411 = vld [vmem:[%s1 + $0x1c8] sm:$0xff]
  %v1412 = vld [vmem:[%s1 + $0x1d0] sm:$0xff]
  %v1413 = vld [vmem:[%s1 + $0x1d8] sm:$0xff]
  %v1414 = vld [vmem:[%s1 + $0x1e0] sm:$0xff]
  %v1415 = vld [vmem:[%s1 + $0x1e8] sm:$0xff]
  %v1416 = vld [vmem:[%s1 + $0x1f0] sm:$0xff]
  %v1417 = vld [vmem:[%s1 + $0x1f8] sm:$0xff]
  %v1418 = vld [vmem:[%s1 + $0x200] sm:$0xff]
  %v1419 = vld [vmem:[%s1 + $0x208] sm:$0xff]
  %v1420 = vld [vmem:[%s1 + $0x210] sm:$0xff]
  %v1421 = vld [vmem:[%s1 + $0x218] sm:$0xff]
  %v1422 = vld [vmem:[%s1 + $0x220] sm:$0xff]
  %v1423 = vld [vmem:[%s1 + $0x228] sm:$0xff]
  %v1424 = vld [vmem:[%s1 + $0x230] sm:$0xff]
  %v1425 = vld [vmem:[%s1 + $0x238] sm:$0xff]
  %v1426 = vld [vmem:[%s2] sm:$0x1]
  %v1428 = vlaneseq
  %v1429 = vshrl.u32 %v1428, 7
  %v1430 = vsub.s32 0, %v1429
  %v1431 = vrot.slane %v1426, %v1430
  %vm1433 = vcmask 523264
  %v1435 = vsel %vm1433, %v1038, 0
  %v1438 = vsel %vm1433, %v1043, 0
  %v1441 = vsel %vm1433, %v1048, 0
  %v1444 = vsel %vm1433, %v1053, 0
  %v1447 = vsel %vm1433, %v1058, 0
  %v1450 = vsel %vm1433, %v1063, 0
  %v1453 = vsel %vm1433, %v1068, 0
  %v1456 = vsel %vm1433, %v1073, 0
  %v1459 = vsel %vm1433, %v1078, 0
  %v1462 = vsel %vm1433, %v1083, 0
  %v1465 = vsel %vm1433, %v1088, 0
  %v1468 = vsel %vm1433, %v1093, 0
  %v1471 = vsel %vm1433, %v1098, 0
  %v1474 = vsel %vm1433, %v1103, 0
  %v1477 = vsel %vm1433, %v1108, 0
  %v1480 = vsel %vm1433, %v1113, 0
  %v1483 = vsel %vm1433, %v1118, 0
  %v1486 = vsel %vm1433, %v1123, 0
  %v1489 = vsel %vm1433, %v1128, 0
  %v1492 = vsel %vm1433, %v1133, 0
  %v1495 = vsel %vm1433, %v1138, 0
  %v1498 = vsel %vm1433, %v1143, 0
  %v1501 = vsel %vm1433, %v1148, 0
  %v1504 = vsel %vm1433, %v1153, 0
  %v1507 = vsel %vm1433, %v1158, 0
  %v1510 = vsel %vm1433, %v1163, 0
  %v1513 = vsel %vm1433, %v1168, 0
  %v1516 = vsel %vm1433, %v1173, 0
  %v1519 = vsel %vm1433, %v1178, 0
  %v1522 = vsel %vm1433, %v1183, 0
  %v1525 = vsel %vm1433, %v1188, 0
  %v1528 = vsel %vm1433, %v1193, 0
  %v1531 = vsel %vm1433, %v1198, 0
  %v1534 = vsel %vm1433, %v1203, 0
  %v1537 = vsel %vm1433, %v1208, 0
  %v1540 = vsel %vm1433, %v1213, 0
  %v1543 = vsel %vm1433, %v1218, 0
  %v1546 = vsel %vm1433, %v1223, 0
  %v1549 = vsel %vm1433, %v1228, 0
  %v1552 = vsel %vm1433, %v1233, 0
  %v1555 = vsel %vm1433, %v1238, 0
  %v1558 = vsel %vm1433, %v1243, 0
  %v1561 = vsel %vm1433, %v1248, 0
  %v1564 = vsel %vm1433, %v1253, 0
  %v1567 = vsel %vm1433, %v1258, 0
  %v1570 = vsel %vm1433, %v1263, 0
  %v1573 = vsel %vm1433, %v1268, 0
  %v1576 = vsel %vm1433, %v1273, 0
  %v1579 = vsel %vm1433, %v1278, 0
  %v1582 = vsel %vm1433, %v1283, 0
  %v1585 = vsel %vm1433, %v1288, 0
  %v1588 = vsel %vm1433, %v1293, 0
  %v1591 = vsel %vm1433, %v1298, 0
  %v1594 = vsel %vm1433, %v1303, 0
  %v1597 = vsel %vm1433, %v1308, 0
  %v1600 = vsel %vm1433, %v1313, 0
  %v1603 = vsel %vm1433, %v1318, 0
  %v1606 = vsel %vm1433, %v1323, 0
  %v1609 = vsel %vm1433, %v1328, 0
  %v1612 = vsel %vm1433, %v1333, 0
  %v1615 = vsel %vm1433, %v1338, 0
  %v1618 = vsel %vm1433, %v1343, 0
  %v1621 = vsel %vm1433, %v1348, 0
  %v1624 = vsel %vm1433, %v1353, 0
  %1626 = vmatprep.subr.mxu0 0.0
  %1627 = vmatpush1.msra.mxu0 %v1354
  %1628 = vmatprep.subr.mxu0 0.0
  %1629 = vmatpush1.msra.mxu0 %v1355
  %1630 = vmatprep.subr.mxu0 0.0
  %1631 = vmatpush1.msra.mxu0 %v1356
  %1632 = vmatprep.subr.mxu0 0.0
  %1633 = vmatpush1.msra.mxu0 %v1357
  %1634 = vmatprep.subr.mxu0 0.0
  %1635 = vmatpush1.msra.mxu0 %v1358
  %1636 = vmatprep.subr.mxu0 0.0
  %1637 = vmatpush1.msra.mxu0 %v1359
  %1638 = vmatprep.subr.mxu0 0.0
  %1639 = vmatpush1.msra.mxu0 %v1360
  %1640 = vmatprep.subr.mxu0 0.0
  %1641 = vmatpush1.msra.mxu0 %v1361
  %1642 = vmatprep.subr.mxu0 0.0
  %1643 = vmatpush1.msra.mxu0 %v1362
  %1644 = vmatprep.subr.mxu0 0.0
  %1645 = vmatpush1.msra.mxu0 %v1363
  %1646 = vmatprep.subr.mxu0 0.0
  %1647 = vmatpush1.msra.mxu0 %v1364
  %1648 = vmatprep.subr.mxu0 0.0
  %1649 = vmatpush1.msra.mxu0 %v1365
  %1650 = vmatprep.subr.mxu0 0.0
  %1651 = vmatpush1.msra.mxu0 %v1366
  %1652 = vmatprep.subr.mxu0 0.0
  %1653 = vmatpush1.msra.mxu0 %v1367
  %1654 = vmatprep.subr.mxu0 0.0
  %1655 = vmatpush1.msra.mxu0 %v1368
  %1656 = vmatprep.subr.mxu0 0.0
  %1657 = vmatpush1.msra.mxu0 %v1369
  %1658 = vmatprep.subr.mxu0 0.0
  %1659 = vmatpush1.msra.mxu0 %v1370
  %1660 = vmatprep.subr.mxu0 0.0
  %1661 = vmatpush1.msra.mxu0 %v1371
  %1662 = vmatprep.subr.mxu0 0.0
  %1663 = vmatpush1.msra.mxu0 %v1372
  %1664 = vmatprep.subr.mxu0 0.0
  %1665 = vmatpush1.msra.mxu0 %v1373
  %1666 = vmatprep.subr.mxu0 0.0
  %1667 = vmatpush1.msra.mxu0 %v1374
  %1668 = vmatprep.subr.mxu0 0.0
  %1669 = vmatpush1.msra.mxu0 %v1375
  %1670 = vmatprep.subr.mxu0 0.0
  %1671 = vmatpush1.msra.mxu0 %v1376
  %1672 = vmatprep.subr.mxu0 0.0
  %1673 = vmatpush1.msra.mxu0 %v1377
  %1674 = vmatprep.subr.mxu0 0.0
  %1675 = vmatpush1.msra.mxu0 %v1378
  %1676 = vmatprep.subr.mxu0 0.0
  %1677 = vmatpush1.msra.mxu0 %v1379
  %1678 = vmatprep.subr.mxu0 0.0
  %1679 = vmatpush1.msra.mxu0 %v1380
  %1680 = vmatprep.subr.mxu0 0.0
  %1681 = vmatpush1.msra.mxu0 %v1381
  %1682 = vmatprep.subr.mxu0 0.0
  %1683 = vmatpush1.msra.mxu0 %v1382
  %1684 = vmatprep.subr.mxu0 0.0
  %1685 = vmatpush1.msra.mxu0 %v1383
  %1686 = vmatprep.subr.mxu0 0.0
  %1687 = vmatpush1.msra.mxu0 %v1384
  %1688 = vmatprep.subr.mxu0 0.0
  %1689 = vmatpush1.msra.mxu0 %v1385
  %1690 = vmatprep.mubr.f32.mxu0 %v1035
  %1691 = vmatmul.mubr.f32.gmra.mrb[0].mxu0 %v1034
  %v1692 = vpop.f32.mrb[0].mxu0
  %v1693 = vadd.f32 %v1431, %v1692
  %v1694 = vpop.f32.mrb[0].mxu0
  %1695 = vmatprep.mubr.f32.mxu0 %v1040
  %1696 = vmatmul.mubr.f32.gmra.mrb[0].mxu0 %v1039
  %v1697 = vpop.f32.mrb[0].mxu0
  %v1698 = vadd.f32 %v1431, %v1697
  %v1699 = vpop.f32.mrb[0].mxu0
  %1700 = vmatprep.mubr.f32.mxu0 %v1045
  %1701 = vmatmul.mubr.f32.gmra.mrb[0].mxu0 %v1044
  %v1702 = vpop.f32.mrb[0].mxu0
  %v1703 = vadd.f32 %v1431, %v1702
  %v1704 = vpop.f32.mrb[0].mxu0
  %1705 = vmatprep.mubr.f32.mxu0 %v1050
  %1706 = vmatmul.mubr.f32.gmra.mrb[0].mxu0 %v1049
  %v1707 = vpop.f32.mrb[0].mxu0
  %v1708 = vadd.f32 %v1431, %v1707
  %v1709 = vpop.f32.mrb[0].mxu0
  %1710 = vmatprep.mubr.f32.mxu0 %v1055
  %1711 = vmatmul.mubr.f32.gmra.mrb[0].mxu0 %v1054
  %v1712 = vpop.f32.mrb[0].mxu0
  %v1713 = vadd.f32 %v1431, %v1712
  %v1714 = vpop.f32.mrb[0].mxu0
  %1715 = vmatprep.mubr.f32.mxu0 %v1060
  %1716 = vmatmul.mubr.f32.gmra.mrb[0].mxu0 %v1059
  %v1717 = vpop.f32.mrb[0].mxu0
  %v1718 = vadd.f32 %v1431, %v1717
  %v1719 = vpop.f32.mrb[0].mxu0
  %1720 = vmatprep.mubr.f32.mxu0 %v1065
  %1721 = vmatmul.mubr.f32.gmra.mrb[0].mxu0 %v1064
  %v1722 = vpop.f32.mrb[0].mxu0
  %v1723 = vadd.f32 %v1431, %v1722
  %v1724 = vpop.f32.mrb[0].mxu0
  %1725 = vmatprep.mubr.f32.mxu0 %v1070
  %1726 = vmatmul.mubr.f32.gmra.mrb[0].mxu0 %v1069
  %v1727 = vpop.f32.mrb[0].mxu0
  %v1728 = vadd.f32 %v1431, %v1727
  %v1729 = vpop.f32.mrb[0].mxu0
  %1730 = vmatprep.mubr.f32.mxu0 %v1075
  %1731 = vmatmul.mubr.f32.gmra.mrb[0].mxu0 %v1074
  %v1732 = vpop.f32.mrb[0].mxu0
  %v1733 = vadd.f32 %v1431, %v1732
  %v1734 = vpop.f32.mrb[0].mxu0
  %1735 = vmatprep.mubr.f32.mxu0 %v1080
  %1736 = vmatmul.mubr.f32.gmra.mrb[0].mxu0 %v1079
  %v1737 = vpop.f32.mrb[0].mxu0
  %v1738 = vadd.f32 %v1431, %v1737
  %v1739 = vpop.f32.mrb[0].mxu0
  %1740 = vmatprep.mubr.f32.mxu0 %v1085
  %1741 = vmatmul.mubr.f32.gmra.mrb[0].mxu0 %v1084
  %v1742 = vpop.f32.mrb[0].mxu0
  %v1743 = vadd.f32 %v1431, %v1742
  %v1744 = vpop.f32.mrb[0].mxu0
  %1745 = vmatprep.mubr.f32.mxu0 %v1090
  %1746 = vmatmul.mubr.f32.gmra.mrb[0].mxu0 %v1089
  %v1747 = vpop.f32.mrb[0].mxu0
  %v1748 = vadd.f32 %v1431, %v1747
  %v1749 = vpop.f32.mrb[0].mxu0
  %1750 = vmatprep.mubr.f32.mxu0 %v1095
  %1751 = vmatmul.mubr.f32.gmra.mrb[0].mxu0 %v1094
  %v1752 = vpop.f32.mrb[0].mxu0
  %v1753 = vadd.f32 %v1431, %v1752
  %v1754 = vpop.f32.mrb[0].mxu0
  %1755 = vmatprep.mubr.f32.mxu0 %v1100
  %1756 = vmatmul.mubr.f32.gmra.mrb[0].mxu0 %v1099
  %v1757 = vpop.f32.mrb[0].mxu0
  %v1758 = vadd.f32 %v1431, %v1757
  %v1759 = vpop.f32.mrb[0].mxu0
  %1760 = vmatprep.mubr.f32.mxu0 %v1105
  %1761 = vmatmul.mubr.f32.gmra.mrb[0].mxu0 %v1104
  %v1762 = vpop.f32.mrb[0].mxu0
  %v1763 = vadd.f32 %v1431, %v1762
  %v1764 = vpop.f32.mrb[0].mxu0
  %1765 = vmatprep.mubr.f32.mxu0 %v1110
  %1766 = vmatmul.mubr.f32.gmra.mrb[0].mxu0 %v1109
  %v1767 = vpop.f32.mrb[0].mxu0
  %v1768 = vadd.f32 %v1431, %v1767
  %v1769 = vpop.f32.mrb[0].mxu0
  %1770 = vmatprep.mubr.f32.mxu0 %v1115
  %1771 = vmatmul.mubr.f32.gmra.mrb[0].mxu0 %v1114
  %v1772 = vpop.f32.mrb[0].mxu0
  %v1773 = vadd.f32 %v1431, %v1772
  %v1774 = vpop.f32.mrb[0].mxu0
  %1775 = vmatprep.mubr.f32.mxu0 %v1120
  %1776 = vmatmul.mubr.f32.gmra.mrb[0].mxu0 %v1119
  %v1777 = vpop.f32.mrb[0].mxu0
  %v1778 = vadd.f32 %v1431, %v1777
  %v1779 = vpop.f32.mrb[0].mxu0
  %1780 = vmatprep.mubr.f32.mxu0 %v1125
  %1781 = vmatmul.mubr.f32.gmra.mrb[0].mxu0 %v1124
  %v1782 = vpop.f32.mrb[0].mxu0
  %v1783 = vadd.f32 %v1431, %v1782
  %v1784 = vpop.f32.mrb[0].mxu0
  %1785 = vmatprep.mubr.f32.mxu0 %v1130
  %1786 = vmatmul.mubr.f32.gmra.mrb[0].mxu0 %v1129
  %v1787 = vpop.f32.mrb[0].mxu0
  %v1788 = vadd.f32 %v1431, %v1787
  %v1789 = vpop.f32.mrb[0].mxu0
  %1790 = vmatprep.mubr.f32.mxu0 %v1135
  %1791 = vmatmul.mubr.f32.gmra.mrb[0].mxu0 %v1134
  %v1792 = vpop.f32.mrb[0].mxu0
  %v1793 = vadd.f32 %v1431, %v1792
  %v1794 = vpop.f32.mrb[0].mxu0
  %1795 = vmatprep.mubr.f32.mxu0 %v1140
  %1796 = vmatmul.mubr.f32.gmra.mrb[0].mxu0 %v1139
  %v1797 = vpop.f32.mrb[0].mxu0
  %v1798 = vadd.f32 %v1431, %v1797
  %v1799 = vpop.f32.mrb[0].mxu0
  %1800 = vmatprep.mubr.f32.mxu0 %v1145
  %1801 = vmatmul.mubr.f32.gmra.mrb[0].mxu0 %v1144
  %v1802 = vpop.f32.mrb[0].mxu0
  %v1803 = vadd.f32 %v1431, %v1802
  %v1804 = vpop.f32.mrb[0].mxu0
  %1805 = vmatprep.mubr.f32.mxu0 %v1150
  %1806 = vmatmul.mubr.f32.gmra.mrb[0].mxu0 %v1149
  %v1807 = vpop.f32.mrb[0].mxu0
  %v1808 = vadd.f32 %v1431, %v1807
  %v1809 = vpop.f32.mrb[0].mxu0
  %1810 = vmatprep.mubr.f32.mxu0 %v1155
  %1811 = vmatmul.mubr.f32.gmra.mrb[0].mxu0 %v1154
  %v1812 = vpop.f32.mrb[0].mxu0
  %v1813 = vadd.f32 %v1431, %v1812
  %v1814 = vpop.f32.mrb[0].mxu0
  %1815 = vmatprep.mubr.f32.mxu0 %v1160
  %1816 = vmatmul.mubr.f32.gmra.mrb[0].mxu0 %v1159
  %v1817 = vpop.f32.mrb[0].mxu0
  %v1818 = vadd.f32 %v1431, %v1817
  %v1819 = vpop.f32.mrb[0].mxu0
  %1820 = vmatprep.mubr.f32.mxu0 %v1165
  %1821 = vmatmul.mubr.f32.gmra.mrb[0].mxu0 %v1164
  %v1822 = vpop.f32.mrb[0].mxu0
  %v1823 = vadd.f32 %v1431, %v1822
  %v1824 = vpop.f32.mrb[0].mxu0
  %1825 = vmatprep.mubr.f32.mxu0 %v1170
  %1826 = vmatmul.mubr.f32.gmra.mrb[0].mxu0 %v1169
  %v1827 = vpop.f32.mrb[0].mxu0
  %v1828 = vadd.f32 %v1431, %v1827
  %v1829 = vpop.f32.mrb[0].mxu0
  %1830 = vmatprep.mubr.f32.mxu0 %v1175
  %1831 = vmatmul.mubr.f32.gmra.mrb[0].mxu0 %v1174
  %v1832 = vpop.f32.mrb[0].mxu0
  %v1833 = vadd.f32 %v1431, %v1832
  %v1834 = vpop.f32.mrb[0].mxu0
  %1835 = vmatprep.mubr.f32.mxu0 %v1180
  %1836 = vmatmul.mubr.f32.gmra.mrb[0].mxu0 %v1179
  %v1837 = vpop.f32.mrb[0].mxu0
  %v1838 = vadd.f32 %v1431, %v1837
  %v1839 = vpop.f32.mrb[0].mxu0
  %1840 = vmatprep.mubr.f32.mxu0 %v1185
  %1841 = vmatmul.mubr.f32.gmra.mrb[0].mxu0 %v1184
  %v1842 = vpop.f32.mrb[0].mxu0
  %v1843 = vadd.f32 %v1431, %v1842
  %v1844 = vpop.f32.mrb[0].mxu0
  %1845 = vmatprep.mubr.f32.mxu0 %v1190
  %1846 = vmatmul.mubr.f32.gmra.mrb[0].mxu0 %v1189
  %v1847 = vpop.f32.mrb[0].mxu0
  %v1848 = vadd.f32 %v1431, %v1847
  %v1849 = vpop.f32.mrb[0].mxu0
  %1850 = vmatprep.mubr.f32.mxu0 %v1195
  %1851 = vmatmul.mubr.f32.gmra.mrb[0].mxu0 %v1194
  %v1852 = vpop.f32.mrb[0].mxu0
  %v1853 = vadd.f32 %v1431, %v1852
  %v1854 = vpop.f32.mrb[0].mxu0
  %1855 = vmatprep.mubr.f32.mxu0 %v1200
  %1856 = vmatmul.mubr.f32.gmra.mrb[0].mxu0 %v1199
  %v1857 = vpop.f32.mrb[0].mxu0
  %v1858 = vadd.f32 %v1431, %v1857
  %v1859 = vpop.f32.mrb[0].mxu0
  %1860 = vmatprep.mubr.f32.mxu0 %v1205
  %1861 = vmatmul.mubr.f32.gmra.mrb[0].mxu0 %v1204
  %v1862 = vpop.f32.mrb[0].mxu0
  %v1863 = vadd.f32 %v1431, %v1862
  %v1864 = vpop.f32.mrb[0].mxu0
  %1865 = vmatprep.mubr.f32.mxu0 %v1210
  %1866 = vmatmul.mubr.f32.gmra.mrb[0].mxu0 %v1209
  %v1867 = vpop.f32.mrb[0].mxu0
  %v1868 = vadd.f32 %v1431, %v1867
  %v1869 = vpop.f32.mrb[0].mxu0
  %1870 = vmatprep.mubr.f32.mxu0 %v1215
  %1871 = vmatmul.mubr.f32.gmra.mrb[0].mxu0 %v1214
  %v1872 = vpop.f32.mrb[0].mxu0
  %v1873 = vadd.f32 %v1431, %v1872
  %v1874 = vpop.f32.mrb[0].mxu0
  %1875 = vmatprep.mubr.f32.mxu0 %v1220
  %1876 = vmatmul.mubr.f32.gmra.mrb[0].mxu0 %v1219
  %v1877 = vpop.f32.mrb[0].mxu0
  %v1878 = vadd.f32 %v1431, %v1877
  %v1879 = vpop.f32.mrb[0].mxu0
  %1880 = vmatprep.mubr.f32.mxu0 %v1225
  %1881 = vmatmul.mubr.f32.gmra.mrb[0].mxu0 %v1224
  %v1882 = vpop.f32.mrb[0].mxu0
  %v1883 = vadd.f32 %v1431, %v1882
  %v1884 = vpop.f32.mrb[0].mxu0
  %1885 = vmatprep.mubr.f32.mxu0 %v1230
  %1886 = vmatmul.mubr.f32.gmra.mrb[0].mxu0 %v1229
  %v1887 = vpop.f32.mrb[0].mxu0
  %v1888 = vadd.f32 %v1431, %v1887
  %v1889 = vpop.f32.mrb[0].mxu0
  %1890 = vmatprep.mubr.f32.mxu0 %v1235
  %1891 = vmatmul.mubr.f32.gmra.mrb[0].mxu0 %v1234
  %v1892 = vpop.f32.mrb[0].mxu0
  %v1893 = vadd.f32 %v1431, %v1892
  %v1894 = vpop.f32.mrb[0].mxu0
  %1895 = vmatprep.mubr.f32.mxu0 %v1240
  %1896 = vmatmul.mubr.f32.gmra.mrb[0].mxu0 %v1239
  %v1897 = vpop.f32.mrb[0].mxu0
  %v1898 = vadd.f32 %v1431, %v1897
  %v1899 = vpop.f32.mrb[0].mxu0
  %1900 = vmatprep.mubr.f32.mxu0 %v1245
  %1901 = vmatmul.mubr.f32.gmra.mrb[0].mxu0 %v1244
  %v1902 = vpop.f32.mrb[0].mxu0
  %v1903 = vadd.f32 %v1431, %v1902
  %v1904 = vpop.f32.mrb[0].mxu0
  %1905 = vmatprep.mubr.f32.mxu0 %v1250
  %1906 = vmatmul.mubr.f32.gmra.mrb[0].mxu0 %v1249
  %v1907 = vpop.f32.mrb[0].mxu0
  %v1908 = vadd.f32 %v1431, %v1907
  %v1909 = vpop.f32.mrb[0].mxu0
  %1910 = vmatprep.mubr.f32.mxu0 %v1255
  %1911 = vmatmul.mubr.f32.gmra.mrb[0].mxu0 %v1254
  %v1912 = vpop.f32.mrb[0].mxu0
  %v1913 = vadd.f32 %v1431, %v1912
  %v1914 = vpop.f32.mrb[0].mxu0
  %1915 = vmatprep.mubr.f32.mxu0 %v1260
  %1916 = vmatmul.mubr.f32.gmra.mrb[0].mxu0 %v1259
  %v1917 = vpop.f32.mrb[0].mxu0
  %v1918 = vadd.f32 %v1431, %v1917
  %v1919 = vpop.f32.mrb[0].mxu0
  %1920 = vmatprep.mubr.f32.mxu0 %v1265
  %1921 = vmatmul.mubr.f32.gmra.mrb[0].mxu0 %v1264
  %v1922 = vpop.f32.mrb[0].mxu0
  %v1923 = vadd.f32 %v1431, %v1922
  %v1924 = vpop.f32.mrb[0].mxu0
  %1925 = vmatprep.mubr.f32.mxu0 %v1270
  %1926 = vmatmul.mubr.f32.gmra.mrb[0].mxu0 %v1269
  %v1927 = vpop.f32.mrb[0].mxu0
  %v1928 = vadd.f32 %v1431, %v1927
  %v1929 = vpop.f32.mrb[0].mxu0
  %1930 = vmatprep.mubr.f32.mxu0 %v1275
  %1931 = vmatmul.mubr.f32.gmra.mrb[0].mxu0 %v1274
  %v1932 = vpop.f32.mrb[0].mxu0
  %v1933 = vadd.f32 %v1431, %v1932
  %v1934 = vpop.f32.mrb[0].mxu0
  %1935 = vmatprep.mubr.f32.mxu0 %v1280
  %1936 = vmatmul.mubr.f32.gmra.mrb[0].mxu0 %v1279
  %v1937 = vpop.f32.mrb[0].mxu0
  %v1938 = vadd.f32 %v1431, %v1937
  %v1939 = vpop.f32.mrb[0].mxu0
  %1940 = vmatprep.mubr.f32.mxu0 %v1285
  %1941 = vmatmul.mubr.f32.gmra.mrb[0].mxu0 %v1284
  %v1942 = vpop.f32.mrb[0].mxu0
  %v1943 = vadd.f32 %v1431, %v1942
  %v1944 = vpop.f32.mrb[0].mxu0
  %1945 = vmatprep.mubr.f32.mxu0 %v1290
  %1946 = vmatmul.mubr.f32.gmra.mrb[0].mxu0 %v1289
  %v1947 = vpop.f32.mrb[0].mxu0
  %v1948 = vadd.f32 %v1431, %v1947
  %v1949 = vpop.f32.mrb[0].mxu0
  %1950 = vmatprep.mubr.f32.mxu0 %v1295
  %1951 = vmatmul.mubr.f32.gmra.mrb[0].mxu0 %v1294
  %v1952 = vpop.f32.mrb[0].mxu0
  %v1953 = vadd.f32 %v1431, %v1952
  %v1954 = vpop.f32.mrb[0].mxu0
  %1955 = vmatprep.mubr.f32.mxu0 %v1300
  %1956 = vmatmul.mubr.f32.gmra.mrb[0].mxu0 %v1299
  %v1957 = vpop.f32.mrb[0].mxu0
  %v1958 = vadd.f32 %v1431, %v1957
  %v1959 = vpop.f32.mrb[0].mxu0
  %1960 = vmatprep.mubr.f32.mxu0 %v1305
  %1961 = vmatmul.mubr.f32.gmra.mrb[0].mxu0 %v1304
  %v1962 = vpop.f32.mrb[0].mxu0
  %v1963 = vadd.f32 %v1431, %v1962
  %v1964 = vpop.f32.mrb[0].mxu0
  %1965 = vmatprep.mubr.f32.mxu0 %v1310
  %1966 = vmatmul.mubr.f32.gmra.mrb[0].mxu0 %v1309
  %v1967 = vpop.f32.mrb[0].mxu0
  %v1968 = vadd.f32 %v1431, %v1967
  %v1969 = vpop.f32.mrb[0].mxu0
  %1970 = vmatprep.mubr.f32.mxu0 %v1315
  %1971 = vmatmul.mubr.f32.gmra.mrb[0].mxu0 %v1314
  %v1972 = vpop.f32.mrb[0].mxu0
  %v1973 = vadd.f32 %v1431, %v1972
  %v1974 = vpop.f32.mrb[0].mxu0
  %1975 = vmatprep.mubr.f32.mxu0 %v1320
  %1976 = vmatmul.mubr.f32.gmra.mrb[0].mxu0 %v1319
  %v1977 = vpop.f32.mrb[0].mxu0
  %v1978 = vadd.f32 %v1431, %v1977
  %v1979 = vpop.f32.mrb[0].mxu0
  %1980 = vmatprep.mubr.f32.mxu0 %v1325
  %1981 = vmatmul.mubr.f32.gmra.mrb[0].mxu0 %v1324
  %v1982 = vpop.f32.mrb[0].mxu0
  %v1983 = vadd.f32 %v1431, %v1982
  %v1984 = vpop.f32.mrb[0].mxu0
  %1985 = vmatprep.mubr.f32.mxu0 %v1330
  %1986 = vmatmul.mubr.f32.gmra.mrb[0].mxu0 %v1329
  %v1987 = vpop.f32.mrb[0].mxu0
  %v1988 = vadd.f32 %v1431, %v1987
  %v1989 = vpop.f32.mrb[0].mxu0
  %1990 = vmatprep.mubr.f32.mxu0 %v1335
  %1991 = vmatmul.mubr.f32.gmra.mrb[0].mxu0 %v1334
  %v1992 = vpop.f32.mrb[0].mxu0
  %v1993 = vadd.f32 %v1431, %v1992
  %v1994 = vpop.f32.mrb[0].mxu0
  %1995 = vmatprep.mubr.f32.mxu0 %v1340
  %1996 = vmatmul.mubr.f32.gmra.mrb[0].mxu0 %v1339
  %v1997 = vpop.f32.mrb[0].mxu0
  %v1998 = vadd.f32 %v1431, %v1997
  %v1999 = vpop.f32.mrb[0].mxu0
  %2000 = vmatprep.mubr.f32.mxu0 %v1345
  %2001 = vmatmul.mubr.f32.gmra.mrb[0].mxu0 %v1344
  %v2002 = vpop.f32.mrb[0].mxu0
  %v2003 = vadd.f32 %v1431, %v2002
  %v2004 = vpop.f32.mrb[0].mxu0
  %2005 = vmatprep.mubr.f32.mxu0 %v1350
  %2006 = vmatmul.mubr.f32.gmra.mrb[0].mxu0 %v1349
  %v2007 = vpop.f32.mrb[0].mxu0
  %v2008 = vadd.f32 %v1431, %v2007
  %v2009 = vpop.f32.mrb[0].mxu0
  %2010 = vdwg.mxu0
  %2011 = vmatprep.subr.mxu0 0.0
  %2012 = vmatpush1.msra.mxu0 %v1386
  %2013 = vmatprep.subr.mxu0 0.0
  %2014 = vmatpush1.msra.mxu0 %v1387
  %2015 = vmatprep.subr.mxu0 0.0
  %2016 = vmatpush1.msra.mxu0 %v1388
  %2017 = vmatprep.subr.mxu0 0.0
  %2018 = vmatpush1.msra.mxu0 %v1389
  %2019 = vmatprep.subr.mxu0 0.0
  %2020 = vmatpush1.msra.mxu0 %v1390
  %2021 = vmatprep.subr.mxu0 0.0
  %2022 = vmatpush1.msra.mxu0 %v1391
  %2023 = vmatprep.subr.mxu0 0.0
  %2024 = vmatpush1.msra.mxu0 %v1392
  %2025 = vmatprep.subr.mxu0 0.0
  %2026 = vmatpush1.msra.mxu0 %v1393
  %2027 = vmatprep.subr.mxu0 0.0
  %2028 = vmatpush1.msra.mxu0 %v1394
  %2029 = vmatprep.subr.mxu0 0.0
  %2030 = vmatpush1.msra.mxu0 %v1395
  %2031 = vmatprep.subr.mxu0 0.0
  %2032 = vmatpush1.msra.mxu0 %v1396
  %2033 = vmatprep.subr.mxu0 0.0
  %2034 = vmatpush1.msra.mxu0 %v1397
  %2035 = vmatprep.subr.mxu0 0.0
  %2036 = vmatpush1.msra.mxu0 %v1398
  %2037 = vmatprep.subr.mxu0 0.0
  %2038 = vmatpush1.msra.mxu0 %v1399
  %2039 = vmatprep.subr.mxu0 0.0
  %2040 = vmatpush1.msra.mxu0 %v1400
  %2041 = vmatprep.subr.mxu0 0.0
  %2042 = vmatpush1.msra.mxu0 %v1401
  %2043 = vmatprep.subr.mxu0 0.0
  %2044 = vmatpush1.msra.mxu0 %v1402
  %2045 = vmatprep.subr.mxu0 0.0
  %2046 = vmatpush1.msra.mxu0 %v1403
  %2047 = vmatprep.subr.mxu0 0.0
  %2048 = vmatpush1.msra.mxu0 %v1404
  %2049 = vmatprep.subr.mxu0 0.0
  %2050 = vmatpush1.msra.mxu0 %v1405
  %2051 = vmatprep.subr.mxu0 0.0
  %2052 = vmatpush1.msra.mxu0 %v1406
  %2053 = vmatprep.subr.mxu0 0.0
  %2054 = vmatpush1.msra.mxu0 %v1407
  %2055 = vmatprep.subr.mxu0 0.0
  %2056 = vmatpush1.msra.mxu0 %v1408
  %2057 = vmatprep.subr.mxu0 0.0
  %2058 = vmatpush1.msra.mxu0 %v1409
  %2059 = vmatprep.subr.mxu0 0.0
  %2060 = vmatpush1.msra.mxu0 %v1410
  %2061 = vmatprep.subr.mxu0 0.0
  %2062 = vmatpush1.msra.mxu0 %v1411
  %2063 = vmatprep.subr.mxu0 0.0
  %2064 = vmatpush1.msra.mxu0 %v1412
  %2065 = vmatprep.subr.mxu0 0.0
  %2066 = vmatpush1.msra.mxu0 %v1413
  %2067 = vmatprep.subr.mxu0 0.0
  %2068 = vmatpush1.msra.mxu0 %v1414
  %2069 = vmatprep.subr.mxu0 0.0
  %2070 = vmatpush1.msra.mxu0 %v1415
  %2071 = vmatprep.subr.mxu0 0.0
  %2072 = vmatpush1.msra.mxu0 %v1416
  %2073 = vmatprep.subr.mxu0 0.0
  %2074 = vmatpush1.msra.mxu0 %v1417
  %2075 = vmatprep.mubr.f32.mxu0 %v1037
  %2076 = vmatmul.mubr.f32.gmra.mrb[0].mxu0 %v1036
  %v2077 = vpop.f32.mrb[0].mxu0
  %v2078 = vadd.f32 %v1693, %v2077
  %v2079 = vpop.f32.mrb[0].mxu0
  %2080 = vmatprep.mubr.f32.mxu0 %v1042
  %2081 = vmatmul.mubr.f32.gmra.mrb[0].mxu0 %v1041
  %v2082 = vpop.f32.mrb[0].mxu0
  %v2083 = vadd.f32 %v1698, %v2082
  %v2084 = vpop.f32.mrb[0].mxu0
  %2085 = vmatprep.mubr.f32.mxu0 %v1047
  %2086 = vmatmul.mubr.f32.gmra.mrb[0].mxu0 %v1046
  %v2087 = vpop.f32.mrb[0].mxu0
  %v2088 = vadd.f32 %v1703, %v2087
  %v2089 = vpop.f32.mrb[0].mxu0
  %2090 = vmatprep.mubr.f32.mxu0 %v1052
  %2091 = vmatmul.mubr.f32.gmra.mrb[0].mxu0 %v1051
  %v2092 = vpop.f32.mrb[0].mxu0
  %v2093 = vadd.f32 %v1708, %v2092
  %v2094 = vpop.f32.mrb[0].mxu0
  %2095 = vmatprep.mubr.f32.mxu0 %v1057
  %2096 = vmatmul.mubr.f32.gmra.mrb[0].mxu0 %v1056
  %v2097 = vpop.f32.mrb[0].mxu0
  %v2098 = vadd.f32 %v1713, %v2097
  %v2099 = vpop.f32.mrb[0].mxu0
  %2100 = vmatprep.mubr.f32.mxu0 %v1062
  %2101 = vmatmul.mubr.f32.gmra.mrb[0].mxu0 %v1061
  %v2102 = vpop.f32.mrb[0].mxu0
  %v2103 = vadd.f32 %v1718, %v2102
  %v2104 = vpop.f32.mrb[0].mxu0
  %2105 = vmatprep.mubr.f32.mxu0 %v1067
  %2106 = vmatmul.mubr.f32.gmra.mrb[0].mxu0 %v1066
  %v2107 = vpop.f32.mrb[0].mxu0
  %v2108 = vadd.f32 %v1723, %v2107
  %v2109 = vpop.f32.mrb[0].mxu0
  %2110 = vmatprep.mubr.f32.mxu0 %v1072
  %2111 = vmatmul.mubr.f32.gmra.mrb[0].mxu0 %v1071
  %v2112 = vpop.f32.mrb[0].mxu0
  %v2113 = vadd.f32 %v1728, %v2112
  %v2114 = vpop.f32.mrb[0].mxu0
  %2115 = vmatprep.mubr.f32.mxu0 %v1077
  %2116 = vmatmul.mubr.f32.gmra.mrb[0].mxu0 %v1076
  %v2117 = vpop.f32.mrb[0].mxu0
  %v2118 = vadd.f32 %v1733, %v2117
  %v2119 = vpop.f32.mrb[0].mxu0
  %2120 = vmatprep.mubr.f32.mxu0 %v1082
  %2121 = vmatmul.mubr.f32.gmra.mrb[0].mxu0 %v1081
  %v2122 = vpop.f32.mrb[0].mxu0
  %v2123 = vadd.f32 %v1738, %v2122
  %v2124 = vpop.f32.mrb[0].mxu0
  %2125 = vmatprep.mubr.f32.mxu0 %v1087
  %2126 = vmatmul.mubr.f32.gmra.mrb[0].mxu0 %v1086
  %v2127 = vpop.f32.mrb[0].mxu0
  %v2128 = vadd.f32 %v1743, %v2127
  %v2129 = vpop.f32.mrb[0].mxu0
  %2130 = vmatprep.mubr.f32.mxu0 %v1092
  %2131 = vmatmul.mubr.f32.gmra.mrb[0].mxu0 %v1091
  %v2132 = vpop.f32.mrb[0].mxu0
  %v2133 = vadd.f32 %v1748, %v2132
  %v2134 = vpop.f32.mrb[0].mxu0
  %2135 = vmatprep.mubr.f32.mxu0 %v1097
  %2136 = vmatmul.mubr.f32.gmra.mrb[0].mxu0 %v1096
  %v2137 = vpop.f32.mrb[0].mxu0
  %v2138 = vadd.f32 %v1753, %v2137
  %v2139 = vpop.f32.mrb[0].mxu0
  %2140 = vmatprep.mubr.f32.mxu0 %v1102
  %2141 = vmatmul.mubr.f32.gmra.mrb[0].mxu0 %v1101
  %v2142 = vpop.f32.mrb[0].mxu0
  %v2143 = vadd.f32 %v1758, %v2142
  %v2144 = vpop.f32.mrb[0].mxu0
  %2145 = vmatprep.mubr.f32.mxu0 %v1107
  %2146 = vmatmul.mubr.f32.gmra.mrb[0].mxu0 %v1106
  %v2147 = vpop.f32.mrb[0].mxu0
  %v2148 = vadd.f32 %v1763, %v2147
  %v2149 = vpop.f32.mrb[0].mxu0
  %2150 = vmatprep.mubr.f32.mxu0 %v1112
  %2151 = vmatmul.mubr.f32.gmra.mrb[0].mxu0 %v1111
  %v2152 = vpop.f32.mrb[0].mxu0
  %v2153 = vadd.f32 %v1768, %v2152
  %v2154 = vpop.f32.mrb[0].mxu0
  %2155 = vmatprep.mubr.f32.mxu0 %v1117
  %2156 = vmatmul.mubr.f32.gmra.mrb[0].mxu0 %v1116
  %v2157 = vpop.f32.mrb[0].mxu0
  %v2158 = vadd.f32 %v1773, %v2157
  %v2159 = vpop.f32.mrb[0].mxu0
  %2160 = vmatprep.mubr.f32.mxu0 %v1122
  %2161 = vmatmul.mubr.f32.gmra.mrb[0].mxu0 %v1121
  %v2162 = vpop.f32.mrb[0].mxu0
  %v2163 = vadd.f32 %v1778, %v2162
  %v2164 = vpop.f32.mrb[0].mxu0
  %2165 = vmatprep.mubr.f32.mxu0 %v1127
  %2166 = vmatmul.mubr.f32.gmra.mrb[0].mxu0 %v1126
  %v2167 = vpop.f32.mrb[0].mxu0
  %v2168 = vadd.f32 %v1783, %v2167
  %v2169 = vpop.f32.mrb[0].mxu0
  %2170 = vmatprep.mubr.f32.mxu0 %v1132
  %2171 = vmatmul.mubr.f32.gmra.mrb[0].mxu0 %v1131
  %v2172 = vpop.f32.mrb[0].mxu0
  %v2173 = vadd.f32 %v1788, %v2172
  %v2174 = vpop.f32.mrb[0].mxu0
  %2175 = vmatprep.mubr.f32.mxu0 %v1137
  %2176 = vmatmul.mubr.f32.gmra.mrb[0].mxu0 %v1136
  %v2177 = vpop.f32.mrb[0].mxu0
  %v2178 = vadd.f32 %v1793, %v2177
  %v2179 = vpop.f32.mrb[0].mxu0
  %2180 = vmatprep.mubr.f32.mxu0 %v1142
  %2181 = vmatmul.mubr.f32.gmra.mrb[0].mxu0 %v1141
  %v2182 = vpop.f32.mrb[0].mxu0
  %v2183 = vadd.f32 %v1798, %v2182
  %v2184 = vpop.f32.mrb[0].mxu0
  %2185 = vmatprep.mubr.f32.mxu0 %v1147
  %2186 = vmatmul.mubr.f32.gmra.mrb[0].mxu0 %v1146
  %v2187 = vpop.f32.mrb[0].mxu0
  %v2188 = vadd.f32 %v1803, %v2187
  %v2189 = vpop.f32.mrb[0].mxu0
  %2190 = vmatprep.mubr.f32.mxu0 %v1152
  %2191 = vmatmul.mubr.f32.gmra.mrb[0].mxu0 %v1151
  %v2192 = vpop.f32.mrb[0].mxu0
  %v2193 = vadd.f32 %v1808, %v2192
  %v2194 = vpop.f32.mrb[0].mxu0
  %2195 = vmatprep.mubr.f32.mxu0 %v1157
  %2196 = vmatmul.mubr.f32.gmra.mrb[0].mxu0 %v1156
  %v2197 = vpop.f32.mrb[0].mxu0
  %v2198 = vadd.f32 %v1813, %v2197
  %v2199 = vpop.f32.mrb[0].mxu0
  %2200 = vmatprep.mubr.f32.mxu0 %v1162
  %2201 = vmatmul.mubr.f32.gmra.mrb[0].mxu0 %v1161
  %v2202 = vpop.f32.mrb[0].mxu0
  %v2203 = vadd.f32 %v1818, %v2202
  %v2204 = vpop.f32.mrb[0].mxu0
  %2205 = vmatprep.mubr.f32.mxu0 %v1167
  %2206 = vmatmul.mubr.f32.gmra.mrb[0].mxu0 %v1166
  %v2207 = vpop.f32.mrb[0].mxu0
  %v2208 = vadd.f32 %v1823, %v2207
  %v2209 = vpop.f32.mrb[0].mxu0
  %2210 = vmatprep.mubr.f32.mxu0 %v1172
  %2211 = vmatmul.mubr.f32.gmra.mrb[0].mxu0 %v1171
  %v2212 = vpop.f32.mrb[0].mxu0
  %v2213 = vadd.f32 %v1828, %v2212
  %v2214 = vpop.f32.mrb[0].mxu0
  %2215 = vmatprep.mubr.f32.mxu0 %v1177
  %2216 = vmatmul.mubr.f32.gmra.mrb[0].mxu0 %v1176
  %v2217 = vpop.f32.mrb[0].mxu0
  %v2218 = vadd.f32 %v1833, %v2217
  %v2219 = vpop.f32.mrb[0].mxu0
  %2220 = vmatprep.mubr.f32.mxu0 %v1182
  %2221 = vmatmul.mubr.f32.gmra.mrb[0].mxu0 %v1181
  %v2222 = vpop.f32.mrb[0].mxu0
  %v2223 = vadd.f32 %v1838, %v2222
  %v2224 = vpop.f32.mrb[0].mxu0
  %2225 = vmatprep.mubr.f32.mxu0 %v1187
  %2226 = vmatmul.mubr.f32.gmra.mrb[0].mxu0 %v1186
  %v2227 = vpop.f32.mrb[0].mxu0
  %v2228 = vadd.f32 %v1843, %v2227
  %v2229 = vpop.f32.mrb[0].mxu0
  %2230 = vmatprep.mubr.f32.mxu0 %v1192
  %2231 = vmatmul.mubr.f32.gmra.mrb[0].mxu0 %v1191
  %v2232 = vpop.f32.mrb[0].mxu0
  %v2233 = vadd.f32 %v1848, %v2232
  %v2234 = vpop.f32.mrb[0].mxu0
  %2235 = vmatprep.mubr.f32.mxu0 %v1197
  %2236 = vmatmul.mubr.f32.gmra.mrb[0].mxu0 %v1196
  %v2237 = vpop.f32.mrb[0].mxu0
  %v2238 = vadd.f32 %v1853, %v2237
  %v2239 = vpop.f32.mrb[0].mxu0
  %2240 = vmatprep.mubr.f32.mxu0 %v1202
  %2241 = vmatmul.mubr.f32.gmra.mrb[0].mxu0 %v1201
  %v2242 = vpop.f32.mrb[0].mxu0
  %v2243 = vadd.f32 %v1858, %v2242
  %v2244 = vpop.f32.mrb[0].mxu0
  %2245 = vmatprep.mubr.f32.mxu0 %v1207
  %2246 = vmatmul.mubr.f32.gmra.mrb[0].mxu0 %v1206
  %v2247 = vpop.f32.mrb[0].mxu0
  %v2248 = vadd.f32 %v1863, %v2247
  %v2249 = vpop.f32.mrb[0].mxu0
  %2250 = vmatprep.mubr.f32.mxu0 %v1212
  %2251 = vmatmul.mubr.f32.gmra.mrb[0].mxu0 %v1211
  %v2252 = vpop.f32.mrb[0].mxu0
  %v2253 = vadd.f32 %v1868, %v2252
  %v2254 = vpop.f32.mrb[0].mxu0
  %2255 = vmatprep.mubr.f32.mxu0 %v1217
  %2256 = vmatmul.mubr.f32.gmra.mrb[0].mxu0 %v1216
  %v2257 = vpop.f32.mrb[0].mxu0
  %v2258 = vadd.f32 %v1873, %v2257
  %v2259 = vpop.f32.mrb[0].mxu0
  %2260 = vmatprep.mubr.f32.mxu0 %v1222
  %2261 = vmatmul.mubr.f32.gmra.mrb[0].mxu0 %v1221
  %v2262 = vpop.f32.mrb[0].mxu0
  %v2263 = vadd.f32 %v1878, %v2262
  %v2264 = vpop.f32.mrb[0].mxu0
  %2265 = vmatprep.mubr.f32.mxu0 %v1227
  %2266 = vmatmul.mubr.f32.gmra.mrb[0].mxu0 %v1226
  %v2267 = vpop.f32.mrb[0].mxu0
  %v2268 = vadd.f32 %v1883, %v2267
  %v2269 = vpop.f32.mrb[0].mxu0
  %2270 = vmatprep.mubr.f32.mxu0 %v1232
  %2271 = vmatmul.mubr.f32.gmra.mrb[0].mxu0 %v1231
  %v2272 = vpop.f32.mrb[0].mxu0
  %v2273 = vadd.f32 %v1888, %v2272
  %v2274 = vpop.f32.mrb[0].mxu0
  %2275 = vmatprep.mubr.f32.mxu0 %v1237
  %2276 = vmatmul.mubr.f32.gmra.mrb[0].mxu0 %v1236
  %v2277 = vpop.f32.mrb[0].mxu0
  %v2278 = vadd.f32 %v1893, %v2277
  %v2279 = vpop.f32.mrb[0].mxu0
  %2280 = vmatprep.mubr.f32.mxu0 %v1242
  %2281 = vmatmul.mubr.f32.gmra.mrb[0].mxu0 %v1241
  %v2282 = vpop.f32.mrb[0].mxu0
  %v2283 = vadd.f32 %v1898, %v2282
  %v2284 = vpop.f32.mrb[0].mxu0
  %2285 = vmatprep.mubr.f32.mxu0 %v1247
  %2286 = vmatmul.mubr.f32.gmra.mrb[0].mxu0 %v1246
  %v2287 = vpop.f32.mrb[0].mxu0
  %v2288 = vadd.f32 %v1903, %v2287
  %v2289 = vpop.f32.mrb[0].mxu0
  %2290 = vmatprep.mubr.f32.mxu0 %v1252
  %2291 = vmatmul.mubr.f32.gmra.mrb[0].mxu0 %v1251
  %v2292 = vpop.f32.mrb[0].mxu0
  %v2293 = vadd.f32 %v1908, %v2292
  %v2294 = vpop.f32.mrb[0].mxu0
  %2295 = vmatprep.mubr.f32.mxu0 %v1257
  %2296 = vmatmul.mubr.f32.gmra.mrb[0].mxu0 %v1256
  %v2297 = vpop.f32.mrb[0].mxu0
  %v2298 = vadd.f32 %v1913, %v2297
  %v2299 = vpop.f32.mrb[0].mxu0
  %2300 = vmatprep.mubr.f32.mxu0 %v1262
  %2301 = vmatmul.mubr.f32.gmra.mrb[0].mxu0 %v1261
  %v2302 = vpop.f32.mrb[0].mxu0
  %v2303 = vadd.f32 %v1918, %v2302
  %v2304 = vpop.f32.mrb[0].mxu0
  %2305 = vmatprep.mubr.f32.mxu0 %v1267
  %2306 = vmatmul.mubr.f32.gmra.mrb[0].mxu0 %v1266
  %v2307 = vpop.f32.mrb[0].mxu0
  %v2308 = vadd.f32 %v1923, %v2307
  %v2309 = vpop.f32.mrb[0].mxu0
  %2310 = vmatprep.mubr.f32.mxu0 %v1272
  %2311 = vmatmul.mubr.f32.gmra.mrb[0].mxu0 %v1271
  %v2312 = vpop.f32.mrb[0].mxu0
  %v2313 = vadd.f32 %v1928, %v2312
  %v2314 = vpop.f32.mrb[0].mxu0
  %2315 = vmatprep.mubr.f32.mxu0 %v1277
  %2316 = vmatmul.mubr.f32.gmra.mrb[0].mxu0 %v1276
  %v2317 = vpop.f32.mrb[0].mxu0
  %v2318 = vadd.f32 %v1933, %v2317
  %v2319 = vpop.f32.mrb[0].mxu0
  %2320 = vmatprep.mubr.f32.mxu0 %v1282
  %2321 = vmatmul.mubr.f32.gmra.mrb[0].mxu0 %v1281
  %v2322 = vpop.f32.mrb[0].mxu0
  %v2323 = vadd.f32 %v1938, %v2322
  %v2324 = vpop.f32.mrb[0].mxu0
  %2325 = vmatprep.mubr.f32.mxu0 %v1287
  %2326 = vmatmul.mubr.f32.gmra.mrb[0].mxu0 %v1286
  %v2327 = vpop.f32.mrb[0].mxu0
  %v2328 = vadd.f32 %v1943, %v2327
  %v2329 = vpop.f32.mrb[0].mxu0
  %2330 = vmatprep.mubr.f32.mxu0 %v1292
  %2331 = vmatmul.mubr.f32.gmra.mrb[0].mxu0 %v1291
  %v2332 = vpop.f32.mrb[0].mxu0
  %v2333 = vadd.f32 %v1948, %v2332
  %v2334 = vpop.f32.mrb[0].mxu0
  %2335 = vmatprep.mubr.f32.mxu0 %v1297
  %2336 = vmatmul.mubr.f32.gmra.mrb[0].mxu0 %v1296
  %v2337 = vpop.f32.mrb[0].mxu0
  %v2338 = vadd.f32 %v1953, %v2337
  %v2339 = vpop.f32.mrb[0].mxu0
  %2340 = vmatprep.mubr.f32.mxu0 %v1302
  %2341 = vmatmul.mubr.f32.gmra.mrb[0].mxu0 %v1301
  %v2342 = vpop.f32.mrb[0].mxu0
  %v2343 = vadd.f32 %v1958, %v2342
  %v2344 = vpop.f32.mrb[0].mxu0
  %2345 = vmatprep.mubr.f32.mxu0 %v1307
  %2346 = vmatmul.mubr.f32.gmra.mrb[0].mxu0 %v1306
  %v2347 = vpop.f32.mrb[0].mxu0
  %v2348 = vadd.f32 %v1963, %v2347
  %v2349 = vpop.f32.mrb[0].mxu0
  %2350 = vmatprep.mubr.f32.mxu0 %v1312
  %2351 = vmatmul.mubr.f32.gmra.mrb[0].mxu0 %v1311
  %v2352 = vpop.f32.mrb[0].mxu0
  %v2353 = vadd.f32 %v1968, %v2352
  %v2354 = vpop.f32.mrb[0].mxu0
  %2355 = vmatprep.mubr.f32.mxu0 %v1317
  %2356 = vmatmul.mubr.f32.gmra.mrb[0].mxu0 %v1316
  %v2357 = vpop.f32.mrb[0].mxu0
  %v2358 = vadd.f32 %v1973, %v2357
  %v2359 = vpop.f32.mrb[0].mxu0
  %2360 = vmatprep.mubr.f32.mxu0 %v1322
  %2361 = vmatmul.mubr.f32.gmra.mrb[0].mxu0 %v1321
  %v2362 = vpop.f32.mrb[0].mxu0
  %v2363 = vadd.f32 %v1978, %v2362
  %v2364 = vpop.f32.mrb[0].mxu0
  %2365 = vmatprep.mubr.f32.mxu0 %v1327
  %2366 = vmatmul.mubr.f32.gmra.mrb[0].mxu0 %v1326
  %v2367 = vpop.f32.mrb[0].mxu0
  %v2368 = vadd.f32 %v1983, %v2367
  %v2369 = vpop.f32.mrb[0].mxu0
  %2370 = vmatprep.mubr.f32.mxu0 %v1332
  %2371 = vmatmul.mubr.f32.gmra.mrb[0].mxu0 %v1331
  %v2372 = vpop.f32.mrb[0].mxu0
  %v2373 = vadd.f32 %v1988, %v2372
  %v2374 = vpop.f32.mrb[0].mxu0
  %2375 = vmatprep.mubr.f32.mxu0 %v1337
  %2376 = vmatmul.mubr.f32.gmra.mrb[0].mxu0 %v1336
  %v2377 = vpop.f32.mrb[0].mxu0
  %v2378 = vadd.f32 %v1993, %v2377
  %v2379 = vpop.f32.mrb[0].mxu0
  %2380 = vmatprep.mubr.f32.mxu0 %v1342
  %2381 = vmatmul.mubr.f32.gmra.mrb[0].mxu0 %v1341
  %v2382 = vpop.f32.mrb[0].mxu0
  %v2383 = vadd.f32 %v1998, %v2382
  %v2384 = vpop.f32.mrb[0].mxu0
  %2385 = vmatprep.mubr.f32.mxu0 %v1347
  %2386 = vmatmul.mubr.f32.gmra.mrb[0].mxu0 %v1346
  %v2387 = vpop.f32.mrb[0].mxu0
  %v2388 = vadd.f32 %v2003, %v2387
  %v2389 = vpop.f32.mrb[0].mxu0
  %2390 = vmatprep.mubr.f32.mxu0 %v1352
  %2391 = vmatmul.mubr.f32.gmra.mrb[0].mxu0 %v1351
  %v2392 = vpop.f32.mrb[0].mxu0
  %v2393 = vadd.f32 %v2008, %v2392
  %v2394 = vpop.f32.mrb[0].mxu0
  %2395 = vdwg.mxu0
  %2396 = vmatprep.subr.mxu0 0.0
  %2397 = vmatpush1.msra.mxu0 %v1418
  %2398 = vmatprep.subr.mxu0 0.0
  %2399 = vmatpush1.msra.mxu0 %v1419
  %2400 = vmatprep.subr.mxu0 0.0
  %2401 = vmatpush1.msra.mxu0 %v1420
  %2402 = vmatprep.subr.mxu0 0.0
  %2403 = vmatpush1.msra.mxu0 %v1421
  %2404 = vmatprep.subr.mxu0 0.0
  %2405 = vmatpush1.msra.mxu0 %v1422
  %2406 = vmatprep.subr.mxu0 0.0
  %2407 = vmatpush1.msra.mxu0 %v1423
  %2408 = vmatprep.subr.mxu0 0.0
  %2409 = vmatpush1.msra.mxu0 %v1424
  %2410 = vmatprep.subr.mxu0 0.0
  %2411 = vmatpush1.msra.mxu0 %v1425
  %2412 = vmatprep.subr.mxu0 0.0
  %2413 = vmatpush1.msra.mxu0 0.0
  %2414 = vmatprep.subr.mxu0 0.0
  %2415 = vmatpush1.msra.mxu0 0.0
  %2416 = vmatprep.subr.mxu0 0.0
  %2417 = vmatpush1.msra.mxu0 0.0
  %2418 = vmatprep.subr.mxu0 0.0
  %2419 = vmatpush1.msra.mxu0 0.0
  %2420 = vmatprep.subr.mxu0 0.0
  %2421 = vmatpush1.msra.mxu0 0.0
  %2422 = vmatprep.subr.mxu0 0.0
  %2423 = vmatpush1.msra.mxu0 0.0
  %2424 = vmatprep.subr.mxu0 0.0
  %2425 = vmatpush1.msra.mxu0 0.0
  %2426 = vmatprep.subr.mxu0 0.0
  %2427 = vmatpush1.msra.mxu0 0.0
  %2428 = vmatprep.subr.mxu0 0.0
  %2429 = vmatpush1.msra.mxu0 0.0
  %2430 = vmatprep.subr.mxu0 0.0
  %2431 = vmatpush1.msra.mxu0 0.0
  %2432 = vmatprep.subr.mxu0 0.0
  %2433 = vmatpush1.msra.mxu0 0.0
  %2434 = vmatprep.subr.mxu0 0.0
  %2435 = vmatpush1.msra.mxu0 0.0
  %2436 = vmatprep.subr.mxu0 0.0
  %2437 = vmatpush1.msra.mxu0 0.0
  %2438 = vmatprep.subr.mxu0 0.0
  %2439 = vmatpush1.msra.mxu0 0.0
  %2440 = vmatprep.subr.mxu0 0.0
  %2441 = vmatpush1.msra.mxu0 0.0
  %2442 = vmatprep.subr.mxu0 0.0
  %2443 = vmatpush1.msra.mxu0 0.0
  %2444 = vmatprep.subr.mxu0 0.0
  %2445 = vmatpush1.msra.mxu0 0.0
  %2446 = vmatprep.subr.mxu0 0.0
  %2447 = vmatpush1.msra.mxu0 0.0
  %2448 = vmatprep.subr.mxu0 0.0
  %2449 = vmatpush1.msra.mxu0 0.0
  %2450 = vmatprep.subr.mxu0 0.0
  %2451 = vmatpush1.msra.mxu0 0.0
  %2452 = vmatprep.subr.mxu0 0.0
  %2453 = vmatpush1.msra.mxu0 0.0
  %2454 = vmatprep.subr.mxu0 0.0
  %2455 = vmatpush1.msra.mxu0 0.0
  %2456 = vmatprep.subr.mxu0 0.0
  %2457 = vmatpush1.msra.mxu0 0.0
  %2458 = vmatprep.subr.mxu0 0.0
  %2459 = vmatpush1.msra.mxu0 0.0
  %2460 = vmatprep.mubr.f32.mxu0 0.0
  %2461 = vmatmul.mubr.f32.gmra.mrb[0].mxu0 %v1435
  %v2462 = vpop.f32.mrb[0].mxu0
  %v2463 = vadd.f32 %v2078, %v2462
  %v2464 = vpop.f32.mrb[0].mxu0
  %2465 = vmatprep.mubr.f32.mxu0 0.0
  %2466 = vmatmul.mubr.f32.gmra.mrb[0].mxu0 %v1438
  %v2467 = vpop.f32.mrb[0].mxu0
  %v2468 = vadd.f32 %v2083, %v2467
  %v2469 = vpop.f32.mrb[0].mxu0
  %2470 = vmatprep.mubr.f32.mxu0 0.0
  %2471 = vmatmul.mubr.f32.gmra.mrb[0].mxu0 %v1441
  %v2472 = vpop.f32.mrb[0].mxu0
  %v2473 = vadd.f32 %v2088, %v2472
  %v2474 = vpop.f32.mrb[0].mxu0
  %2475 = vmatprep.mubr.f32.mxu0 0.0
  %2476 = vmatmul.mubr.f32.gmra.mrb[0].mxu0 %v1444
  %v2477 = vpop.f32.mrb[0].mxu0
  %v2478 = vadd.f32 %v2093, %v2477
  %v2479 = vpop.f32.mrb[0].mxu0
  %2480 = vmatprep.mubr.f32.mxu0 0.0
  %2481 = vmatmul.mubr.f32.gmra.mrb[0].mxu0 %v1447
  %v2482 = vpop.f32.mrb[0].mxu0
  %v2483 = vadd.f32 %v2098, %v2482
  %v2484 = vpop.f32.mrb[0].mxu0
  %2485 = vmatprep.mubr.f32.mxu0 0.0
  %2486 = vmatmul.mubr.f32.gmra.mrb[0].mxu0 %v1450
  %v2487 = vpop.f32.mrb[0].mxu0
  %v2488 = vadd.f32 %v2103, %v2487
  %v2489 = vpop.f32.mrb[0].mxu0
  %2490 = vmatprep.mubr.f32.mxu0 0.0
  %2491 = vmatmul.mubr.f32.gmra.mrb[0].mxu0 %v1453
  %v2492 = vpop.f32.mrb[0].mxu0
  %v2493 = vadd.f32 %v2108, %v2492
  %v2494 = vpop.f32.mrb[0].mxu0
  %2495 = vmatprep.mubr.f32.mxu0 0.0
  %2496 = vmatmul.mubr.f32.gmra.mrb[0].mxu0 %v1456
  %v2497 = vpop.f32.mrb[0].mxu0
  %v2498 = vadd.f32 %v2113, %v2497
  %v2499 = vpop.f32.mrb[0].mxu0
  %2500 = vmatprep.mubr.f32.mxu0 0.0
  %2501 = vmatmul.mubr.f32.gmra.mrb[0].mxu0 %v1459
  %v2502 = vpop.f32.mrb[0].mxu0
  %v2503 = vadd.f32 %v2118, %v2502
  %v2504 = vpop.f32.mrb[0].mxu0
  %2505 = vmatprep.mubr.f32.mxu0 0.0
  %2506 = vmatmul.mubr.f32.gmra.mrb[0].mxu0 %v1462
  %v2507 = vpop.f32.mrb[0].mxu0
  %v2508 = vadd.f32 %v2123, %v2507
  %v2509 = vpop.f32.mrb[0].mxu0
  %2510 = vmatprep.mubr.f32.mxu0 0.0
  %2511 = vmatmul.mubr.f32.gmra.mrb[0].mxu0 %v1465
  %v2512 = vpop.f32.mrb[0].mxu0
  %v2513 = vadd.f32 %v2128, %v2512
  %v2514 = vpop.f32.mrb[0].mxu0
  %2515 = vmatprep.mubr.f32.mxu0 0.0
  %2516 = vmatmul.mubr.f32.gmra.mrb[0].mxu0 %v1468
  %v2517 = vpop.f32.mrb[0].mxu0
  %v2518 = vadd.f32 %v2133, %v2517
  %v2519 = vpop.f32.mrb[0].mxu0
  %2520 = vmatprep.mubr.f32.mxu0 0.0
  %2521 = vmatmul.mubr.f32.gmra.mrb[0].mxu0 %v1471
  %v2522 = vpop.f32.mrb[0].mxu0
  %v2523 = vadd.f32 %v2138, %v2522
  %v2524 = vpop.f32.mrb[0].mxu0
  %2525 = vmatprep.mubr.f32.mxu0 0.0
  %2526 = vmatmul.mubr.f32.gmra.mrb[0].mxu0 %v1474
  %v2527 = vpop.f32.mrb[0].mxu0
  %v2528 = vadd.f32 %v2143, %v2527
  %v2529 = vpop.f32.mrb[0].mxu0
  %2530 = vmatprep.mubr.f32.mxu0 0.0
  %2531 = vmatmul.mubr.f32.gmra.mrb[0].mxu0 %v1477
  %v2532 = vpop.f32.mrb[0].mxu0
  %v2533 = vadd.f32 %v2148, %v2532
  %v2534 = vpop.f32.mrb[0].mxu0
  %2535 = vmatprep.mubr.f32.mxu0 0.0
  %2536 = vmatmul.mubr.f32.gmra.mrb[0].mxu0 %v1480
  %v2537 = vpop.f32.mrb[0].mxu0
  %v2538 = vadd.f32 %v2153, %v2537
  %v2539 = vpop.f32.mrb[0].mxu0
  %2540 = vmatprep.mubr.f32.mxu0 0.0
  %2541 = vmatmul.mubr.f32.gmra.mrb[0].mxu0 %v1483
  %v2542 = vpop.f32.mrb[0].mxu0
  %v2543 = vadd.f32 %v2158, %v2542
  %v2544 = vpop.f32.mrb[0].mxu0
  %2545 = vmatprep.mubr.f32.mxu0 0.0
  %2546 = vmatmul.mubr.f32.gmra.mrb[0].mxu0 %v1486
  %v2547 = vpop.f32.mrb[0].mxu0
  %v2548 = vadd.f32 %v2163, %v2547
  %v2549 = vpop.f32.mrb[0].mxu0
  %2550 = vmatprep.mubr.f32.mxu0 0.0
  %2551 = vmatmul.mubr.f32.gmra.mrb[0].mxu0 %v1489
  %v2552 = vpop.f32.mrb[0].mxu0
  %v2553 = vadd.f32 %v2168, %v2552
  %v2554 = vpop.f32.mrb[0].mxu0
  %2555 = vmatprep.mubr.f32.mxu0 0.0
  %2556 = vmatmul.mubr.f32.gmra.mrb[0].mxu0 %v1492
  %v2557 = vpop.f32.mrb[0].mxu0
  %v2558 = vadd.f32 %v2173, %v2557
  %v2559 = vpop.f32.mrb[0].mxu0
  %2560 = vmatprep.mubr.f32.mxu0 0.0
  %2561 = vmatmul.mubr.f32.gmra.mrb[0].mxu0 %v1495
  %v2562 = vpop.f32.mrb[0].mxu0
  %v2563 = vadd.f32 %v2178, %v2562
  %v2564 = vpop.f32.mrb[0].mxu0
  %2565 = vmatprep.mubr.f32.mxu0 0.0
  %2566 = vmatmul.mubr.f32.gmra.mrb[0].mxu0 %v1498
  %v2567 = vpop.f32.mrb[0].mxu0
  %v2568 = vadd.f32 %v2183, %v2567
  %v2569 = vpop.f32.mrb[0].mxu0
  %2570 = vmatprep.mubr.f32.mxu0 0.0
  %2571 = vmatmul.mubr.f32.gmra.mrb[0].mxu0 %v1501
  %v2572 = vpop.f32.mrb[0].mxu0
  %v2573 = vadd.f32 %v2188, %v2572
  %v2574 = vpop.f32.mrb[0].mxu0
  %2575 = vmatprep.mubr.f32.mxu0 0.0
  %2576 = vmatmul.mubr.f32.gmra.mrb[0].mxu0 %v1504
  %v2577 = vpop.f32.mrb[0].mxu0
  %v2578 = vadd.f32 %v2193, %v2577
  %v2579 = vpop.f32.mrb[0].mxu0
  %2580 = vmatprep.mubr.f32.mxu0 0.0
  %2581 = vmatmul.mubr.f32.gmra.mrb[0].mxu0 %v1507
  %v2582 = vpop.f32.mrb[0].mxu0
  %v2583 = vadd.f32 %v2198, %v2582
  %v2584 = vpop.f32.mrb[0].mxu0
  %2585 = vmatprep.mubr.f32.mxu0 0.0
  %2586 = vmatmul.mubr.f32.gmra.mrb[0].mxu0 %v1510
  %v2587 = vpop.f32.mrb[0].mxu0
  %v2588 = vadd.f32 %v2203, %v2587
  %v2589 = vpop.f32.mrb[0].mxu0
  %2590 = vmatprep.mubr.f32.mxu0 0.0
  %2591 = vmatmul.mubr.f32.gmra.mrb[0].mxu0 %v1513
  %v2592 = vpop.f32.mrb[0].mxu0
  %v2593 = vadd.f32 %v2208, %v2592
  %v2594 = vpop.f32.mrb[0].mxu0
  %2595 = vmatprep.mubr.f32.mxu0 0.0
  %2596 = vmatmul.mubr.f32.gmra.mrb[0].mxu0 %v1516
  %v2597 = vpop.f32.mrb[0].mxu0
  %v2598 = vadd.f32 %v2213, %v2597
  %v2599 = vpop.f32.mrb[0].mxu0
  %2600 = vmatprep.mubr.f32.mxu0 0.0
  %2601 = vmatmul.mubr.f32.gmra.mrb[0].mxu0 %v1519
  %v2602 = vpop.f32.mrb[0].mxu0
  %v2603 = vadd.f32 %v2218, %v2602
  %v2604 = vpop.f32.mrb[0].mxu0
  %2605 = vmatprep.mubr.f32.mxu0 0.0
  %2606 = vmatmul.mubr.f32.gmra.mrb[0].mxu0 %v1522
  %v2607 = vpop.f32.mrb[0].mxu0
  %v2608 = vadd.f32 %v2223, %v2607
  %v2609 = vpop.f32.mrb[0].mxu0
  %2610 = vmatprep.mubr.f32.mxu0 0.0
  %2611 = vmatmul.mubr.f32.gmra.mrb[0].mxu0 %v1525
  %v2612 = vpop.f32.mrb[0].mxu0
  %v2613 = vadd.f32 %v2228, %v2612
  %v2614 = vpop.f32.mrb[0].mxu0
  %2615 = vmatprep.mubr.f32.mxu0 0.0
  %2616 = vmatmul.mubr.f32.gmra.mrb[0].mxu0 %v1528
  %v2617 = vpop.f32.mrb[0].mxu0
  %v2618 = vadd.f32 %v2233, %v2617
  %v2619 = vpop.f32.mrb[0].mxu0
  %2620 = vmatprep.mubr.f32.mxu0 0.0
  %2621 = vmatmul.mubr.f32.gmra.mrb[0].mxu0 %v1531
  %v2622 = vpop.f32.mrb[0].mxu0
  %v2623 = vadd.f32 %v2238, %v2622
  %v2624 = vpop.f32.mrb[0].mxu0
  %2625 = vmatprep.mubr.f32.mxu0 0.0
  %2626 = vmatmul.mubr.f32.gmra.mrb[0].mxu0 %v1534
  %v2627 = vpop.f32.mrb[0].mxu0
  %v2628 = vadd.f32 %v2243, %v2627
  %v2629 = vpop.f32.mrb[0].mxu0
  %2630 = vmatprep.mubr.f32.mxu0 0.0
  %2631 = vmatmul.mubr.f32.gmra.mrb[0].mxu0 %v1537
  %v2632 = vpop.f32.mrb[0].mxu0
  %v2633 = vadd.f32 %v2248, %v2632
  %v2634 = vpop.f32.mrb[0].mxu0
  %2635 = vmatprep.mubr.f32.mxu0 0.0
  %2636 = vmatmul.mubr.f32.gmra.mrb[0].mxu0 %v1540
  %v2637 = vpop.f32.mrb[0].mxu0
  %v2638 = vadd.f32 %v2253, %v2637
  %v2639 = vpop.f32.mrb[0].mxu0
  %2640 = vmatprep.mubr.f32.mxu0 0.0
  %2641 = vmatmul.mubr.f32.gmra.mrb[0].mxu0 %v1543
  %v2642 = vpop.f32.mrb[0].mxu0
  %v2643 = vadd.f32 %v2258, %v2642
  %v2644 = vpop.f32.mrb[0].mxu0
  %2645 = vmatprep.mubr.f32.mxu0 0.0
  %2646 = vmatmul.mubr.f32.gmra.mrb[0].mxu0 %v1546
  %v2647 = vpop.f32.mrb[0].mxu0
  %v2648 = vadd.f32 %v2263, %v2647
  %v2649 = vpop.f32.mrb[0].mxu0
  %2650 = vmatprep.mubr.f32.mxu0 0.0
  %2651 = vmatmul.mubr.f32.gmra.mrb[0].mxu0 %v1549
  %v2652 = vpop.f32.mrb[0].mxu0
  %v2653 = vadd.f32 %v2268, %v2652
  %v2654 = vpop.f32.mrb[0].mxu0
  %2655 = vmatprep.mubr.f32.mxu0 0.0
  %2656 = vmatmul.mubr.f32.gmra.mrb[0].mxu0 %v1552
  %v2657 = vpop.f32.mrb[0].mxu0
  %v2658 = vadd.f32 %v2273, %v2657
  %v2659 = vpop.f32.mrb[0].mxu0
  %2660 = vmatprep.mubr.f32.mxu0 0.0
  %2661 = vmatmul.mubr.f32.gmra.mrb[0].mxu0 %v1555
  %v2662 = vpop.f32.mrb[0].mxu0
  %v2663 = vadd.f32 %v2278, %v2662
  %v2664 = vpop.f32.mrb[0].mxu0
  %2665 = vmatprep.mubr.f32.mxu0 0.0
  %2666 = vmatmul.mubr.f32.gmra.mrb[0].mxu0 %v1558
  %v2667 = vpop.f32.mrb[0].mxu0
  %v2668 = vadd.f32 %v2283, %v2667
  %v2669 = vpop.f32.mrb[0].mxu0
  %2670 = vmatprep.mubr.f32.mxu0 0.0
  %2671 = vmatmul.mubr.f32.gmra.mrb[0].mxu0 %v1561
  %v2672 = vpop.f32.mrb[0].mxu0
  %v2673 = vadd.f32 %v2288, %v2672
  %v2674 = vpop.f32.mrb[0].mxu0
  %2675 = vmatprep.mubr.f32.mxu0 0.0
  %2676 = vmatmul.mubr.f32.gmra.mrb[0].mxu0 %v1564
  %v2677 = vpop.f32.mrb[0].mxu0
  %v2678 = vadd.f32 %v2293, %v2677
  %v2679 = vpop.f32.mrb[0].mxu0
  %2680 = vmatprep.mubr.f32.mxu0 0.0
  %2681 = vmatmul.mubr.f32.gmra.mrb[0].mxu0 %v1567
  %v2682 = vpop.f32.mrb[0].mxu0
  %v2683 = vadd.f32 %v2298, %v2682
  %v2684 = vpop.f32.mrb[0].mxu0
  %2685 = vmatprep.mubr.f32.mxu0 0.0
  %2686 = vmatmul.mubr.f32.gmra.mrb[0].mxu0 %v1570
  %v2687 = vpop.f32.mrb[0].mxu0
  %v2688 = vadd.f32 %v2303, %v2687
  %v2689 = vpop.f32.mrb[0].mxu0
  %2690 = vmatprep.mubr.f32.mxu0 0.0
  %2691 = vmatmul.mubr.f32.gmra.mrb[0].mxu0 %v1573
  %v2692 = vpop.f32.mrb[0].mxu0
  %v2693 = vadd.f32 %v2308, %v2692
  %v2694 = vpop.f32.mrb[0].mxu0
  %2695 = vmatprep.mubr.f32.mxu0 0.0
  %2696 = vmatmul.mubr.f32.gmra.mrb[0].mxu0 %v1576
  %v2697 = vpop.f32.mrb[0].mxu0
  %v2698 = vadd.f32 %v2313, %v2697
  %v2699 = vpop.f32.mrb[0].mxu0
  %2700 = vmatprep.mubr.f32.mxu0 0.0
  %2701 = vmatmul.mubr.f32.gmra.mrb[0].mxu0 %v1579
  %v2702 = vpop.f32.mrb[0].mxu0
  %v2703 = vadd.f32 %v2318, %v2702
  %v2704 = vpop.f32.mrb[0].mxu0
  %2705 = vmatprep.mubr.f32.mxu0 0.0
  %2706 = vmatmul.mubr.f32.gmra.mrb[0].mxu0 %v1582
  %v2707 = vpop.f32.mrb[0].mxu0
  %v2708 = vadd.f32 %v2323, %v2707
  %v2709 = vpop.f32.mrb[0].mxu0
  %2710 = vmatprep.mubr.f32.mxu0 0.0
  %2711 = vmatmul.mubr.f32.gmra.mrb[0].mxu0 %v1585
  %v2712 = vpop.f32.mrb[0].mxu0
  %v2713 = vadd.f32 %v2328, %v2712
  %v2714 = vpop.f32.mrb[0].mxu0
  %2715 = vmatprep.mubr.f32.mxu0 0.0
  %2716 = vmatmul.mubr.f32.gmra.mrb[0].mxu0 %v1588
  %v2717 = vpop.f32.mrb[0].mxu0
  %v2718 = vadd.f32 %v2333, %v2717
  %v2719 = vpop.f32.mrb[0].mxu0
  %2720 = vmatprep.mubr.f32.mxu0 0.0
  %2721 = vmatmul.mubr.f32.gmra.mrb[0].mxu0 %v1591
  %v2722 = vpop.f32.mrb[0].mxu0
  %v2723 = vadd.f32 %v2338, %v2722
  %v2724 = vpop.f32.mrb[0].mxu0
  %2725 = vmatprep.mubr.f32.mxu0 0.0
  %2726 = vmatmul.mubr.f32.gmra.mrb[0].mxu0 %v1594
  %v2727 = vpop.f32.mrb[0].mxu0
  %v2728 = vadd.f32 %v2343, %v2727
  %v2729 = vpop.f32.mrb[0].mxu0
  %2730 = vmatprep.mubr.f32.mxu0 0.0
  %2731 = vmatmul.mubr.f32.gmra.mrb[0].mxu0 %v1597
  %v2732 = vpop.f32.mrb[0].mxu0
  %v2733 = vadd.f32 %v2348, %v2732
  %v2734 = vpop.f32.mrb[0].mxu0
  %2735 = vmatprep.mubr.f32.mxu0 0.0
  %2736 = vmatmul.mubr.f32.gmra.mrb[0].mxu0 %v1600
  %v2737 = vpop.f32.mrb[0].mxu0
  %v2738 = vadd.f32 %v2353, %v2737
  %v2739 = vpop.f32.mrb[0].mxu0
  %2740 = vmatprep.mubr.f32.mxu0 0.0
  %2741 = vmatmul.mubr.f32.gmra.mrb[0].mxu0 %v1603
  %v2742 = vpop.f32.mrb[0].mxu0
  %v2743 = vadd.f32 %v2358, %v2742
  %v2744 = vpop.f32.mrb[0].mxu0
  %2745 = vmatprep.mubr.f32.mxu0 0.0
  %2746 = vmatmul.mubr.f32.gmra.mrb[0].mxu0 %v1606
  %v2747 = vpop.f32.mrb[0].mxu0
  %v2748 = vadd.f32 %v2363, %v2747
  %v2749 = vpop.f32.mrb[0].mxu0
  %2750 = vmatprep.mubr.f32.mxu0 0.0
  %2751 = vmatmul.mubr.f32.gmra.mrb[0].mxu0 %v1609
  %v2752 = vpop.f32.mrb[0].mxu0
  %v2753 = vadd.f32 %v2368, %v2752
  %v2754 = vpop.f32.mrb[0].mxu0
  %2755 = vmatprep.mubr.f32.mxu0 0.0
  %2756 = vmatmul.mubr.f32.gmra.mrb[0].mxu0 %v1612
  %v2757 = vpop.f32.mrb[0].mxu0
  %v2758 = vadd.f32 %v2373, %v2757
  %v2759 = vpop.f32.mrb[0].mxu0
  %2760 = vmatprep.mubr.f32.mxu0 0.0
  %2761 = vmatmul.mubr.f32.gmra.mrb[0].mxu0 %v1615
  %v2762 = vpop.f32.mrb[0].mxu0
  %v2763 = vadd.f32 %v2378, %v2762
  %v2764 = vpop.f32.mrb[0].mxu0
  %2765 = vmatprep.mubr.f32.mxu0 0.0
  %2766 = vmatmul.mubr.f32.gmra.mrb[0].mxu0 %v1618
  %v2767 = vpop.f32.mrb[0].mxu0
  %v2768 = vadd.f32 %v2383, %v2767
  %v2769 = vpop.f32.mrb[0].mxu0
  %2770 = vmatprep.mubr.f32.mxu0 0.0
  %2771 = vmatmul.mubr.f32.gmra.mrb[0].mxu0 %v1621
  %v2772 = vpop.f32.mrb[0].mxu0
  %v2773 = vadd.f32 %v2388, %v2772
  %v2774 = vpop.f32.mrb[0].mxu0
  %2775 = vmatprep.mubr.f32.mxu0 0.0
  %2776 = vmatmul.mubr.f32.gmra.mrb[0].mxu0 %v1624
  %v2777 = vpop.f32.mrb[0].mxu0
  %v2778 = vadd.f32 %v2393, %v2777
  %v2779 = vpop.f32.mrb[0].mxu0
  %2780 = vdwg.mxu0
  %2781 = vst.msk [vmem:[%s5] sm:$0xff] %vm1433, %v2463
  %2782 = vst.msk [vmem:[%s5 + $0x8] sm:$0xff] %vm1433, %v2468
  %2783 = vst.msk [vmem:[%s5 + $0x10] sm:$0xff] %vm1433, %v2473
  %2784 = vst.msk [vmem:[%s5 + $0x18] sm:$0xff] %vm1433, %v2478
  %2785 = vst.msk [vmem:[%s5 + $0x20] sm:$0xff] %vm1433, %v2483
  %2786 = vst.msk [vmem:[%s5 + $0x28] sm:$0xff] %vm1433, %v2488
  %2787 = vst.msk [vmem:[%s5 + $0x30] sm:$0xff] %vm1433, %v2493
  %2788 = vst.msk [vmem:[%s5 + $0x38] sm:$0xff] %vm1433, %v2498
  %2789 = vst.msk [vmem:[%s5 + $0x40] sm:$0xff] %vm1433, %v2503
  %2790 = vst.msk [vmem:[%s5 + $0x48] sm:$0xff] %vm1433, %v2508
  %2791 = vst.msk [vmem:[%s5 + $0x50] sm:$0xff] %vm1433, %v2513
  %2792 = vst.msk [vmem:[%s5 + $0x58] sm:$0xff] %vm1433, %v2518
  %2793 = vst.msk [vmem:[%s5 + $0x60] sm:$0xff] %vm1433, %v2523
  %2794 = vst.msk [vmem:[%s5 + $0x68] sm:$0xff] %vm1433, %v2528
  %2795 = vst.msk [vmem:[%s5 + $0x70] sm:$0xff] %vm1433, %v2533
  %2796 = vst.msk [vmem:[%s5 + $0x78] sm:$0xff] %vm1433, %v2538
  %2797 = vst.msk [vmem:[%s5 + $0x80] sm:$0xff] %vm1433, %v2543
  %2798 = vst.msk [vmem:[%s5 + $0x88] sm:$0xff] %vm1433, %v2548
  %2799 = vst.msk [vmem:[%s5 + $0x90] sm:$0xff] %vm1433, %v2553
  %2800 = vst.msk [vmem:[%s5 + $0x98] sm:$0xff] %vm1433, %v2558
  %2801 = vst.msk [vmem:[%s5 + $0xa0] sm:$0xff] %vm1433, %v2563
  %2802 = vst.msk [vmem:[%s5 + $0xa8] sm:$0xff] %vm1433, %v2568
  %2803 = vst.msk [vmem:[%s5 + $0xb0] sm:$0xff] %vm1433, %v2573
  %2804 = vst.msk [vmem:[%s5 + $0xb8] sm:$0xff] %vm1433, %v2578
  %2805 = vst.msk [vmem:[%s5 + $0xc0] sm:$0xff] %vm1433, %v2583
  %2806 = vst.msk [vmem:[%s5 + $0xc8] sm:$0xff] %vm1433, %v2588
  %2807 = vst.msk [vmem:[%s5 + $0xd0] sm:$0xff] %vm1433, %v2593
  %2808 = vst.msk [vmem:[%s5 + $0xd8] sm:$0xff] %vm1433, %v2598
  %2809 = vst.msk [vmem:[%s5 + $0xe0] sm:$0xff] %vm1433, %v2603
  %2810 = vst.msk [vmem:[%s5 + $0xe8] sm:$0xff] %vm1433, %v2608
  %2811 = vst.msk [vmem:[%s5 + $0xf0] sm:$0xff] %vm1433, %v2613
  %2812 = vst.msk [vmem:[%s5 + $0xf8] sm:$0xff] %vm1433, %v2618
  %2813 = vst.msk [vmem:[%s5 + $0x100] sm:$0xff] %vm1433, %v2623
  %2814 = vst.msk [vmem:[%s5 + $0x108] sm:$0xff] %vm1433, %v2628
  %2815 = vst.msk [vmem:[%s5 + $0x110] sm:$0xff] %vm1433, %v2633
  %2816 = vst.msk [vmem:[%s5 + $0x118] sm:$0xff] %vm1433, %v2638
  %2817 = vst.msk [vmem:[%s5 + $0x120] sm:$0xff] %vm1433, %v2643
  %2818 = vst.msk [vmem:[%s5 + $0x128] sm:$0xff] %vm1433, %v2648
  %2819 = vst.msk [vmem:[%s5 + $0x130] sm:$0xff] %vm1433, %v2653
  %2820 = vst.msk [vmem:[%s5 + $0x138] sm:$0xff] %vm1433, %v2658
  %2821 = vst.msk [vmem:[%s5 + $0x140] sm:$0xff] %vm1433, %v2663
  %2822 = vst.msk [vmem:[%s5 + $0x148] sm:$0xff] %vm1433, %v2668
  %2823 = vst.msk [vmem:[%s5 + $0x150] sm:$0xff] %vm1433, %v2673
  %2824 = vst.msk [vmem:[%s5 + $0x158] sm:$0xff] %vm1433, %v2678
  %2825 = vst.msk [vmem:[%s5 + $0x160] sm:$0xff] %vm1433, %v2683
  %2826 = vst.msk [vmem:[%s5 + $0x168] sm:$0xff] %vm1433, %v2688
  %2827 = vst.msk [vmem:[%s5 + $0x170] sm:$0xff] %vm1433, %v2693
  %2828 = vst.msk [vmem:[%s5 + $0x178] sm:$0xff] %vm1433, %v2698
  %2829 = vst.msk [vmem:[%s5 + $0x180] sm:$0xff] %vm1433, %v2703
  %2830 = vst.msk [vmem:[%s5 + $0x188] sm:$0xff] %vm1433, %v2708
  %2831 = vst.msk [vmem:[%s5 + $0x190] sm:$0xff] %vm1433, %v2713
  %2832 = vst.msk [vmem:[%s5 + $0x198] sm:$0xff] %vm1433, %v2718
  %2833 = vst.msk [vmem:[%s5 + $0x1a0] sm:$0xff] %vm1433, %v2723
  %2834 = vst.msk [vmem:[%s5 + $0x1a8] sm:$0xff] %vm1433, %v2728
  %2835 = vst.msk [vmem:[%s5 + $0x1b0] sm:$0xff] %vm1433, %v2733
  %2836 = vst.msk [vmem:[%s5 + $0x1b8] sm:$0xff] %vm1433, %v2738
  %2837 = vst.msk [vmem:[%s5 + $0x1c0] sm:$0xff] %vm1433, %v2743
  %2838 = vst.msk [vmem:[%s5 + $0x1c8] sm:$0xff] %vm1433, %v2748
  %2839 = vst.msk [vmem:[%s5 + $0x1d0] sm:$0xff] %vm1433, %v2753
  %2840 = vst.msk [vmem:[%s5 + $0x1d8] sm:$0xff] %vm1433, %v2758
  %2841 = vst.msk [vmem:[%s5 + $0x1e0] sm:$0xff] %vm1433, %v2763
  %2842 = vst.msk [vmem:[%s5 + $0x1e8] sm:$0xff] %vm1433, %v2768
  %2843 = vst.msk [vmem:[%s5 + $0x1f0] sm:$0xff] %vm1433, %v2773
  %2844 = vst.msk [vmem:[%s5 + $0x1f8] sm:$0xff] %vm1433, %v2778
  // Predicated region
  $region22: #{metarn_forward.6} parent=0 // pred_check
    _
  $region23: #{metarn_forward.6} parent=0 // pred_check_branch
    %2846 = sbr.rel (0) target = $region25
  $region24: #{metarn_forward.6} parent=0 // pred_region
    _
  $region25: #{metarn_forward.6} parent=0 // pred_fallthru
    _
  // Predicated region
  $region26: #{metarn_forward.6} parent=0 // pred_check
    _
  $region27: #{metarn_forward.6} parent=0 // pred_check_branch
    %2848 = sbr.rel (0) target = $region29
  $region28: #{metarn_forward.6} parent=0 // pred_region
    _
  $region29: #{metarn_forward.6} parent=0 // pred_fallthru
    _

// kernel: metarn_forward.7
$region0: #{metarn_forward.7}
  #allocation0 [shape = 'u32[]', space=smem, size = 0x4, offset = 0x4, fixed_abs, tag = 'smem constant byte address 0x4 - core index']
  #allocation1 [shape = 'u32[144,128]{1,0:T(1,128)}', space=vmem, size = 0x12000, scoped, tag = 'internal scratch']
  %s0 = inlined_call_operand.vmem [shape: f32[288,576], index: 0, kind: input, shape index: {}]
  %s1 = inlined_call_operand.vmem [shape: f32[576,64], index: 1, kind: input, shape index: {}]
  %s2 = inlined_call_operand.vmem [shape: f32[1,64], index: 2, kind: input, shape index: {}]
  %s3 = inlined_call_operand.vmem [shape: f32[1,576], index: 3, kind: input, shape index: {}]
  %s4 = inlined_call_operand.vmem [shape: f32[1,576], index: 4, kind: input, shape index: {}]
  %s5 = inlined_call_operand.vmem [shape: f32[8,288], index: 5, kind: input, shape index: {}]
  %s6 = inlined_call_operand.hbm [shape: f32[8,64], index: 6, kind: output, shape index: {}]
  %s7 = sld [smem:[#allocation0]]
  $region34: #{metarn_forward.7} parent=0
    _
  %s9 = ssub.s32 1, %s7
  %s10 = scalar_select 0, %s9, %s7
  $region1: #{metarn_forward.7} parent=0
    #allocation2 [shape = 'u8[4096]{0}', space=vmem, size = 0x1000, scoped, tag = 'output window, operand 0, single buffered']
    #allocation3 [shape = 's32[1]{0}', space=sflag, size = 0x4, scoped, tag = 'scoped memory for metarn_forward.7']
    %11 = vsyncpa [#allocation3], 0
    // Predicated region
    $region2: #{metarn_forward.7} parent=1 // pred_check
      _
    $region3: #{metarn_forward.7} parent=1 // pred_check_branch
      %13 = sbr.rel (0) target = $region5
    $region4: #{metarn_forward.7} parent=1 // pred_region
      _
    $region5: #{metarn_forward.7} parent=1 // pred_fallthru
      _
    // Predicated region
    $region6: #{metarn_forward.7} parent=1 // pred_check
      _
    $region7: #{metarn_forward.7} parent=1 // pred_check_branch
      %15 = sbr.rel (0) target = $region9
    $region8: #{metarn_forward.7} parent=1 // pred_region
      _
    $region9: #{metarn_forward.7} parent=1 // pred_fallthru
      _
    // Predicated region
    $region10: #{metarn_forward.7} parent=1 // pred_check
      _
    $region11: #{metarn_forward.7} parent=1 // pred_check_branch
      %17 = sbr.rel (0) target = $region13
    $region12: #{metarn_forward.7} parent=1 // pred_region
      _
    $region13: #{metarn_forward.7} parent=1 // pred_fallthru
      _
    // Predicated region
    $region14: #{metarn_forward.7} parent=1 // pred_check
      _
    $region15: #{metarn_forward.7} parent=1 // pred_check_branch
      %19 = sbr.rel (0) target = $region17
    $region16: #{metarn_forward.7} parent=1 // pred_region
      _
    $region17: #{metarn_forward.7} parent=1 // pred_fallthru
      _
    // Predicated region
    $region18: #{metarn_forward.7} parent=1 // pred_check
      _
    $region19: #{metarn_forward.7} parent=1 // pred_check_branch
      %21 = sbr.rel (0) target = $region21
    $region20: #{metarn_forward.7} parent=1 // pred_region
      _
    $region21: #{metarn_forward.7} parent=1 // pred_fallthru
      _
    // Predicated region
    $region22: #{metarn_forward.7} parent=1 // pred_check
      _
    $region23: #{metarn_forward.7} parent=1 // pred_check_branch
      %23 = sbr.rel (0) target = $region25
    $region24: #{metarn_forward.7} parent=1 // pred_region
      _
    $region25: #{metarn_forward.7} parent=1 // pred_fallthru
      _
    %v24 = vld [vmem:[%s0] sm:$0xff]
    %v25 = vld [vmem:[%s0 + $0x8] sm:$0xff]
    %v26 = vld [vmem:[%s0 + $0x10] sm:$0xff]
    %v27 = vld [vmem:[%s0 + $0x18] sm:$0xff]
    %v28 = vld [vmem:[%s0 + $0x20] sm:$0xff]
    %v29 = vld [vmem:[%s0 + $0x28] sm:$0xff]
    %v30 = vld [vmem:[%s0 + $0x30] sm:$0xff]
    %v31 = vld [vmem:[%s0 + $0x38] sm:$0xff]
    %v32 = vld [vmem:[%s0 + $0x40] sm:$0xff]
    %v33 = vld [vmem:[%s0 + $0x48] sm:$0xff]
    %v34 = vld [vmem:[%s0 + $0x50] sm:$0xff]
    %v35 = vld [vmem:[%s0 + $0x58] sm:$0xff]
    %v36 = vld [vmem:[%s0 + $0x60] sm:$0xff]
    %v37 = vld [vmem:[%s0 + $0x68] sm:$0xff]
    %v38 = vld [vmem:[%s0 + $0x70] sm:$0xff]
    %v39 = vld [vmem:[%s0 + $0x78] sm:$0xff]
    %v40 = vld [vmem:[%s0 + $0x80] sm:$0xff]
    %v41 = vld [vmem:[%s0 + $0x88] sm:$0xff]
    %v42 = vld [vmem:[%s0 + $0x90] sm:$0xff]
    %v43 = vld [vmem:[%s0 + $0x98] sm:$0xff]
    %v44 = vld [vmem:[%s0 + $0xa0] sm:$0xff]
    %v45 = vld [vmem:[%s0 + $0xa8] sm:$0xff]
    %v46 = vld [vmem:[%s0 + $0xb0] sm:$0xff]
    %v47 = vld [vmem:[%s0 + $0xb8] sm:$0xff]
    %v48 = vld [vmem:[%s0 + $0xc0] sm:$0xff]
    %v49 = vld [vmem:[%s0 + $0xc8] sm:$0xff]
    %v50 = vld [vmem:[%s0 + $0xd0] sm:$0xff]
    %v51 = vld [vmem:[%s0 + $0xd8] sm:$0xff]
    %v52 = vld [vmem:[%s0 + $0xe0] sm:$0xff]
    %v53 = vld [vmem:[%s0 + $0xe8] sm:$0xff]
    %v54 = vld [vmem:[%s0 + $0xf0] sm:$0xff]
    %v55 = vld [vmem:[%s0 + $0xf8] sm:$0xff]
    %v56 = vld [vmem:[%s0 + $0x100] sm:$0xff]
    %v57 = vld [vmem:[%s0 + $0x108] sm:$0xff]
    %v58 = vld [vmem:[%s0 + $0x110] sm:$0xff]
    %v59 = vld [vmem:[%s0 + $0x118] sm:$0xff]
    %v60 = vld [vmem:[%s0 + $0x120] sm:$0xff]
    %v61 = vld [vmem:[%s0 + $0x128] sm:$0xff]
    %v62 = vld [vmem:[%s0 + $0x130] sm:$0xff]
    %v63 = vld [vmem:[%s0 + $0x138] sm:$0xff]
    %v64 = vld [vmem:[%s0 + $0x140] sm:$0xff]
    %v65 = vld [vmem:[%s0 + $0x148] sm:$0xff]
    %v66 = vld [vmem:[%s0 + $0x150] sm:$0xff]
    %v67 = vld [vmem:[%s0 + $0x158] sm:$0xff]
    %v68 = vld [vmem:[%s0 + $0x160] sm:$0xff]
    %v69 = vld [vmem:[%s0 + $0x168] sm:$0xff]
    %v70 = vld [vmem:[%s0 + $0x170] sm:$0xff]
    %v71 = vld [vmem:[%s0 + $0x178] sm:$0xff]
    %v72 = vld [vmem:[%s0 + $0x180] sm:$0xff]
    %v73 = vld [vmem:[%s0 + $0x188] sm:$0xff]
    %v74 = vld [vmem:[%s0 + $0x190] sm:$0xff]
    %v75 = vld [vmem:[%s0 + $0x198] sm:$0xff]
    %v76 = vld [vmem:[%s0 + $0x1a0] sm:$0xff]
    %v77 = vld [vmem:[%s0 + $0x1a8] sm:$0xff]
    %v78 = vld [vmem:[%s0 + $0x1b0] sm:$0xff]
    %v79 = vld [vmem:[%s0 + $0x1b8] sm:$0xff]
    %v80 = vld [vmem:[%s0 + $0x1c0] sm:$0xff]
    %v81 = vld [vmem:[%s0 + $0x1c8] sm:$0xff]
    %v82 = vld [vmem:[%s0 + $0x1d0] sm:$0xff]
    %v83 = vld [vmem:[%s0 + $0x1d8] sm:$0xff]
    %v84 = vld [vmem:[%s0 + $0x1e0] sm:$0xff]
    %v85 = vld [vmem:[%s0 + $0x1e8] sm:$0xff]
    %v86 = vld [vmem:[%s0 + $0x1f0] sm:$0xff]
    %v87 = vld [vmem:[%s0 + $0x1f8] sm:$0xff]
    %v88 = vld [vmem:[%s0 + $0x200] sm:$0xff]
    %v89 = vld [vmem:[%s0 + $0x208] sm:$0xff]
    %v90 = vld [vmem:[%s0 + $0x210] sm:$0xff]
    %v91 = vld [vmem:[%s0 + $0x218] sm:$0xff]
    %v92 = vld [vmem:[%s0 + $0x220] sm:$0xff]
    %v93 = vld [vmem:[%s0 + $0x228] sm:$0xff]
    %v94 = vld [vmem:[%s0 + $0x230] sm:$0xff]
    %v95 = vld [vmem:[%s0 + $0x238] sm:$0xff]
    %v96 = vld [vmem:[%s0 + $0x240] sm:$0xff]
    %v97 = vld [vmem:[%s0 + $0x248] sm:$0xff]
    %v98 = vld [vmem:[%s0 + $0x250] sm:$0xff]
    %v99 = vld [vmem:[%s0 + $0x258] sm:$0xff]
    %v100 = vld [vmem:[%s0 + $0x260] sm:$0xff]
    %v101 = vld [vmem:[%s0 + $0x268] sm:$0xff]
    %v102 = vld [vmem:[%s0 + $0x270] sm:$0xff]
    %v103 = vld [vmem:[%s0 + $0x278] sm:$0xff]
    %v104 = vld [vmem:[%s0 + $0x280] sm:$0xff]
    %v105 = vld [vmem:[%s0 + $0x288] sm:$0xff]
    %v106 = vld [vmem:[%s0 + $0x290] sm:$0xff]
    %v107 = vld [vmem:[%s0 + $0x298] sm:$0xff]
    %v108 = vld [vmem:[%s0 + $0x2a0] sm:$0xff]
    %v109 = vld [vmem:[%s0 + $0x2a8] sm:$0xff]
    %v110 = vld [vmem:[%s0 + $0x2b0] sm:$0xff]
    %v111 = vld [vmem:[%s0 + $0x2b8] sm:$0xff]
    %v112 = vld [vmem:[%s0 + $0x2c0] sm:$0xff]
    %v113 = vld [vmem:[%s0 + $0x2c8] sm:$0xff]
    %v114 = vld [vmem:[%s0 + $0x2d0] sm:$0xff]
    %v115 = vld [vmem:[%s0 + $0x2d8] sm:$0xff]
    %v116 = vld [vmem:[%s0 + $0x2e0] sm:$0xff]
    %v117 = vld [vmem:[%s0 + $0x2e8] sm:$0xff]
    %v118 = vld [vmem:[%s0 + $0x2f0] sm:$0xff]
    %v119 = vld [vmem:[%s0 + $0x2f8] sm:$0xff]
    %v120 = vld [vmem:[%s0 + $0x300] sm:$0xff]
    %v121 = vld [vmem:[%s0 + $0x308] sm:$0xff]
    %v122 = vld [vmem:[%s0 + $0x310] sm:$0xff]
    %v123 = vld [vmem:[%s0 + $0x318] sm:$0xff]
    %v124 = vld [vmem:[%s0 + $0x320] sm:$0xff]
    %v125 = vld [vmem:[%s0 + $0x328] sm:$0xff]
    %v126 = vld [vmem:[%s0 + $0x330] sm:$0xff]
    %v127 = vld [vmem:[%s0 + $0x338] sm:$0xff]
    %v128 = vld [vmem:[%s0 + $0x340] sm:$0xff]
    %v129 = vld [vmem:[%s0 + $0x348] sm:$0xff]
    %v130 = vld [vmem:[%s0 + $0x350] sm:$0xff]
    %v131 = vld [vmem:[%s0 + $0x358] sm:$0xff]
    %v132 = vld [vmem:[%s0 + $0x360] sm:$0xff]
    %v133 = vld [vmem:[%s0 + $0x368] sm:$0xff]
    %v134 = vld [vmem:[%s0 + $0x370] sm:$0xff]
    %v135 = vld [vmem:[%s0 + $0x378] sm:$0xff]
    %v136 = vld [vmem:[%s0 + $0x380] sm:$0xff]
    %v137 = vld [vmem:[%s0 + $0x388] sm:$0xff]
    %v138 = vld [vmem:[%s0 + $0x390] sm:$0xff]
    %v139 = vld [vmem:[%s0 + $0x398] sm:$0xff]
    %v140 = vld [vmem:[%s0 + $0x3a0] sm:$0xff]
    %v141 = vld [vmem:[%s0 + $0x3a8] sm:$0xff]
    %v142 = vld [vmem:[%s0 + $0x3b0] sm:$0xff]
    %v143 = vld [vmem:[%s0 + $0x3b8] sm:$0xff]
    %v144 = vld [vmem:[%s0 + $0x3c0] sm:$0xff]
    %v145 = vld [vmem:[%s0 + $0x3c8] sm:$0xff]
    %v146 = vld [vmem:[%s0 + $0x3d0] sm:$0xff]
    %v147 = vld [vmem:[%s0 + $0x3d8] sm:$0xff]
    %v148 = vld [vmem:[%s0 + $0x3e0] sm:$0xff]
    %v149 = vld [vmem:[%s0 + $0x3e8] sm:$0xff]
    %v150 = vld [vmem:[%s0 + $0x3f0] sm:$0xff]
    %v151 = vld [vmem:[%s0 + $0x3f8] sm:$0xff]
    %v152 = vld [vmem:[%s0 + $0x400] sm:$0xff]
    %v153 = vld [vmem:[%s0 + $0x408] sm:$0xff]
    %v154 = vld [vmem:[%s0 + $0x410] sm:$0xff]
    %v155 = vld [vmem:[%s0 + $0x418] sm:$0xff]
    %v156 = vld [vmem:[%s0 + $0x420] sm:$0xff]
    %v157 = vld [vmem:[%s0 + $0x428] sm:$0xff]
    %v158 = vld [vmem:[%s0 + $0x430] sm:$0xff]
    %v159 = vld [vmem:[%s0 + $0x438] sm:$0xff]
    %v160 = vld [vmem:[%s0 + $0x440] sm:$0xff]
    %v161 = vld [vmem:[%s0 + $0x448] sm:$0xff]
    %v162 = vld [vmem:[%s0 + $0x450] sm:$0xff]
    %v163 = vld [vmem:[%s0 + $0x458] sm:$0xff]
    %v164 = vld [vmem:[%s0 + $0x460] sm:$0xff]
    %v165 = vld [vmem:[%s0 + $0x468] sm:$0xff]
    %v166 = vld [vmem:[%s0 + $0x470] sm:$0xff]
    %v167 = vld [vmem:[%s0 + $0x478] sm:$0xff]
    %v168 = vld [vmem:[%s0 + $0x480] sm:$0xff]
    %v169 = vld [vmem:[%s0 + $0x488] sm:$0xff]
    %v170 = vld [vmem:[%s0 + $0x490] sm:$0xff]
    %v171 = vld [vmem:[%s0 + $0x498] sm:$0xff]
    %v172 = vld [vmem:[%s0 + $0x4a0] sm:$0xff]
    %v173 = vld [vmem:[%s0 + $0x4a8] sm:$0xff]
    %v174 = vld [vmem:[%s0 + $0x4b0] sm:$0xff]
    %v175 = vld [vmem:[%s0 + $0x4b8] sm:$0xff]
    %v176 = vld [vmem:[%s0 + $0x4c0] sm:$0xff]
    %v177 = vld [vmem:[%s0 + $0x4c8] sm:$0xff]
    %v178 = vld [vmem:[%s0 + $0x4d0] sm:$0xff]
    %v179 = vld [vmem:[%s0 + $0x4d8] sm:$0xff]
    %v180 = vld [vmem:[%s0 + $0x4e0] sm:$0xff]
    %v181 = vld [vmem:[%s0 + $0x4e8] sm:$0xff]
    %v182 = vld [vmem:[%s0 + $0x4f0] sm:$0xff]
    %v183 = vld [vmem:[%s0 + $0x4f8] sm:$0xff]
    %v184 = vld [vmem:[%s0 + $0x500] sm:$0xff]
    %v185 = vld [vmem:[%s0 + $0x508] sm:$0xff]
    %v186 = vld [vmem:[%s0 + $0x510] sm:$0xff]
    %v187 = vld [vmem:[%s0 + $0x518] sm:$0xff]
    %v188 = vld [vmem:[%s0 + $0x520] sm:$0xff]
    %v189 = vld [vmem:[%s0 + $0x528] sm:$0xff]
    %v190 = vld [vmem:[%s0 + $0x530] sm:$0xff]
    %v191 = vld [vmem:[%s0 + $0x538] sm:$0xff]
    %v192 = vld [vmem:[%s0 + $0x540] sm:$0xff]
    %v193 = vld [vmem:[%s0 + $0x548] sm:$0xff]
    %v194 = vld [vmem:[%s0 + $0x550] sm:$0xff]
    %v195 = vld [vmem:[%s0 + $0x558] sm:$0xff]
    %v196 = vld [vmem:[%s0 + $0x560] sm:$0xff]
    %v197 = vld [vmem:[%s0 + $0x568] sm:$0xff]
    %v198 = vld [vmem:[%s0 + $0x570] sm:$0xff]
    %v199 = vld [vmem:[%s0 + $0x578] sm:$0xff]
    %v200 = vld [vmem:[%s0 + $0x580] sm:$0xff]
    %v201 = vld [vmem:[%s0 + $0x588] sm:$0xff]
    %v202 = vld [vmem:[%s0 + $0x590] sm:$0xff]
    %v203 = vld [vmem:[%s0 + $0x598] sm:$0xff]
    %v204 = vld [vmem:[%s3] sm:$0x1f]
    %v206 = vlaneseq
    %v207 = vshrl.u32 %v206, 7
    %v208 = vsub.s32 0, %v207
    %v209 = vrot.slane %v204, %v208
    %v210 = vlaneseq
    %v211 = vshrl.u32 %v210, 7
    %v212 = vsub.s32 1, %v211
    %v213 = vrot.slane %v204, %v212
    %v214 = vlaneseq
    %v215 = vshrl.u32 %v214, 7
    %v216 = vsub.s32 2, %v215
    %v217 = vrot.slane %v204, %v216
    %v218 = vlaneseq
    %v219 = vshrl.u32 %v218, 7
    %v220 = vsub.s32 3, %v219
    %v221 = vrot.slane %v204, %v220
    %v222 = vlaneseq
    %v223 = vshrl.u32 %v222, 7
    %v224 = vsub.s32 4, %v223
    %v225 = vrot.slane %v204, %v224
    %v231 = vmul.f32 %v24, %v209
    %v232 = vmul.f32 %v25, %v213
    %v233 = vmul.f32 %v26, %v217
    %v234 = vmul.f32 %v27, %v221
    %v235 = vmul.f32 %v28, %v225
    %v236 = vmul.f32 %v29, %v209
    %v237 = vmul.f32 %v30, %v213
    %v238 = vmul.f32 %v31, %v217
    %v239 = vmul.f32 %v32, %v221
    %v240 = vmul.f32 %v33, %v225
    %v241 = vmul.f32 %v34, %v209
    %v242 = vmul.f32 %v35, %v213
    %v243 = vmul.f32 %v36, %v217
    %v244 = vmul.f32 %v37, %v221
    %v245 = vmul.f32 %v38, %v225
    %v246 = vmul.f32 %v39, %v209
    %v247 = vmul.f32 %v40, %v213
    %v248 = vmul.f32 %v41, %v217
    %v249 = vmul.f32 %v42, %v221
    %v250 = vmul.f32 %v43, %v225
    %v251 = vmul.f32 %v44, %v209
    %v252 = vmul.f32 %v45, %v213
    %v253 = vmul.f32 %v46, %v217
    %v254 = vmul.f32 %v47, %v221
    %v255 = vmul.f32 %v48, %v225
    %v256 = vmul.f32 %v49, %v209
    %v257 = vmul.f32 %v50, %v213
    %v258 = vmul.f32 %v51, %v217
    %v259 = vmul.f32 %v52, %v221
    %v260 = vmul.f32 %v53, %v225
    %v261 = vmul.f32 %v54, %v209
    %v262 = vmul.f32 %v55, %v213
    %v263 = vmul.f32 %v56, %v217
    %v264 = vmul.f32 %v57, %v221
    %v265 = vmul.f32 %v58, %v225
    %v266 = vmul.f32 %v59, %v209
    %v267 = vmul.f32 %v60, %v213
    %v268 = vmul.f32 %v61, %v217
    %v269 = vmul.f32 %v62, %v221
    %v270 = vmul.f32 %v63, %v225
    %v271 = vmul.f32 %v64, %v209
    %v272 = vmul.f32 %v65, %v213
    %v273 = vmul.f32 %v66, %v217
    %v274 = vmul.f32 %v67, %v221
    %v275 = vmul.f32 %v68, %v225
    %v276 = vmul.f32 %v69, %v209
    %v277 = vmul.f32 %v70, %v213
    %v278 = vmul.f32 %v71, %v217
    %v279 = vmul.f32 %v72, %v221
    %v280 = vmul.f32 %v73, %v225
    %v281 = vmul.f32 %v74, %v209
    %v282 = vmul.f32 %v75, %v213
    %v283 = vmul.f32 %v76, %v217
    %v284 = vmul.f32 %v77, %v221
    %v285 = vmul.f32 %v78, %v225
    %v286 = vmul.f32 %v79, %v209
    %v287 = vmul.f32 %v80, %v213
    %v288 = vmul.f32 %v81, %v217
    %v289 = vmul.f32 %v82, %v221
    %v290 = vmul.f32 %v83, %v225
    %v291 = vmul.f32 %v84, %v209
    %v292 = vmul.f32 %v85, %v213
    %v293 = vmul.f32 %v86, %v217
    %v294 = vmul.f32 %v87, %v221
    %v295 = vmul.f32 %v88, %v225
    %v296 = vmul.f32 %v89, %v209
    %v297 = vmul.f32 %v90, %v213
    %v298 = vmul.f32 %v91, %v217
    %v299 = vmul.f32 %v92, %v221
    %v300 = vmul.f32 %v93, %v225
    %v301 = vmul.f32 %v94, %v209
    %v302 = vmul.f32 %v95, %v213
    %v303 = vmul.f32 %v96, %v217
    %v304 = vmul.f32 %v97, %v221
    %v305 = vmul.f32 %v98, %v225
    %v306 = vmul.f32 %v99, %v209
    %v307 = vmul.f32 %v100, %v213
    %v308 = vmul.f32 %v101, %v217
    %v309 = vmul.f32 %v102, %v221
    %v310 = vmul.f32 %v103, %v225
    %v311 = vmul.f32 %v104, %v209
    %v312 = vmul.f32 %v105, %v213
    %v313 = vmul.f32 %v106, %v217
    %v314 = vmul.f32 %v107, %v221
    %v315 = vmul.f32 %v108, %v225
    %v316 = vmul.f32 %v109, %v209
    %v317 = vmul.f32 %v110, %v213
    %v318 = vmul.f32 %v111, %v217
    %v319 = vmul.f32 %v112, %v221
    %v320 = vmul.f32 %v113, %v225
    %v321 = vmul.f32 %v114, %v209
    %v322 = vmul.f32 %v115, %v213
    %v323 = vmul.f32 %v116, %v217
    %v324 = vmul.f32 %v117, %v221
    %v325 = vmul.f32 %v118, %v225
    %v326 = vmul.f32 %v119, %v209
    %v327 = vmul.f32 %v120, %v213
    %v328 = vmul.f32 %v121, %v217
    %v329 = vmul.f32 %v122, %v221
    %v330 = vmul.f32 %v123, %v225
    %v331 = vmul.f32 %v124, %v209
    %v332 = vmul.f32 %v125, %v213
    %v333 = vmul.f32 %v126, %v217
    %v334 = vmul.f32 %v127, %v221
    %v335 = vmul.f32 %v128, %v225
    %v336 = vmul.f32 %v129, %v209
    %v337 = vmul.f32 %v130, %v213
    %v338 = vmul.f32 %v131, %v217
    %v339 = vmul.f32 %v132, %v221
    %v340 = vmul.f32 %v133, %v225
    %v341 = vmul.f32 %v134, %v209
    %v342 = vmul.f32 %v135, %v213
    %v343 = vmul.f32 %v136, %v217
    %v344 = vmul.f32 %v137, %v221
    %v345 = vmul.f32 %v138, %v225
    %v346 = vmul.f32 %v139, %v209
    %v347 = vmul.f32 %v140, %v213
    %v348 = vmul.f32 %v141, %v217
    %v349 = vmul.f32 %v142, %v221
    %v350 = vmul.f32 %v143, %v225
    %v351 = vmul.f32 %v144, %v209
    %v352 = vmul.f32 %v145, %v213
    %v353 = vmul.f32 %v146, %v217
    %v354 = vmul.f32 %v147, %v221
    %v355 = vmul.f32 %v148, %v225
    %v356 = vmul.f32 %v149, %v209
    %v357 = vmul.f32 %v150, %v213
    %v358 = vmul.f32 %v151, %v217
    %v359 = vmul.f32 %v152, %v221
    %v360 = vmul.f32 %v153, %v225
    %v361 = vmul.f32 %v154, %v209
    %v362 = vmul.f32 %v155, %v213
    %v363 = vmul.f32 %v156, %v217
    %v364 = vmul.f32 %v157, %v221
    %v365 = vmul.f32 %v158, %v225
    %v366 = vmul.f32 %v159, %v209
    %v367 = vmul.f32 %v160, %v213
    %v368 = vmul.f32 %v161, %v217
    %v369 = vmul.f32 %v162, %v221
    %v370 = vmul.f32 %v163, %v225
    %v371 = vmul.f32 %v164, %v209
    %v372 = vmul.f32 %v165, %v213
    %v373 = vmul.f32 %v166, %v217
    %v374 = vmul.f32 %v167, %v221
    %v375 = vmul.f32 %v168, %v225
    %v376 = vmul.f32 %v169, %v209
    %v377 = vmul.f32 %v170, %v213
    %v378 = vmul.f32 %v171, %v217
    %v379 = vmul.f32 %v172, %v221
    %v380 = vmul.f32 %v173, %v225
    %v381 = vmul.f32 %v174, %v209
    %v382 = vmul.f32 %v175, %v213
    %v383 = vmul.f32 %v176, %v217
    %v384 = vmul.f32 %v177, %v221
    %v385 = vmul.f32 %v178, %v225
    %v386 = vmul.f32 %v179, %v209
    %v387 = vmul.f32 %v180, %v213
    %v388 = vmul.f32 %v181, %v217
    %v389 = vmul.f32 %v182, %v221
    %v390 = vmul.f32 %v183, %v225
    %v391 = vmul.f32 %v184, %v209
    %v392 = vmul.f32 %v185, %v213
    %v393 = vmul.f32 %v186, %v217
    %v394 = vmul.f32 %v187, %v221
    %v395 = vmul.f32 %v188, %v225
    %v396 = vmul.f32 %v189, %v209
    %v397 = vmul.f32 %v190, %v213
    %v398 = vmul.f32 %v191, %v217
    %v399 = vmul.f32 %v192, %v221
    %v400 = vmul.f32 %v193, %v225
    %v401 = vmul.f32 %v194, %v209
    %v402 = vmul.f32 %v195, %v213
    %v403 = vmul.f32 %v196, %v217
    %v404 = vmul.f32 %v197, %v221
    %v405 = vmul.f32 %v198, %v225
    %v406 = vmul.f32 %v199, %v209
    %v407 = vmul.f32 %v200, %v213
    %v408 = vmul.f32 %v201, %v217
    %v409 = vmul.f32 %v202, %v221
    %v410 = vmul.f32 %v203, %v225
    %v411 = vld [vmem:[%s4] sm:$0x1f]
    %v413 = vlaneseq
    %v414 = vshrl.u32 %v413, 7
    %v415 = vsub.s32 0, %v414
    %v416 = vrot.slane %v411, %v415
    %v417 = vlaneseq
    %v418 = vshrl.u32 %v417, 7
    %v419 = vsub.s32 1, %v418
    %v420 = vrot.slane %v411, %v419
    %v421 = vlaneseq
    %v422 = vshrl.u32 %v421, 7
    %v423 = vsub.s32 2, %v422
    %v424 = vrot.slane %v411, %v423
    %v425 = vlaneseq
    %v426 = vshrl.u32 %v425, 7
    %v427 = vsub.s32 3, %v426
    %v428 = vrot.slane %v411, %v427
    %v429 = vlaneseq
    %v430 = vshrl.u32 %v429, 7
    %v431 = vsub.s32 4, %v430
    %v432 = vrot.slane %v411, %v431
    %v438 = vadd.f32 %v231, %v416
    %v439 = vadd.f32 %v232, %v420
    %v440 = vadd.f32 %v233, %v424
    %v441 = vadd.f32 %v234, %v428
    %v442 = vadd.f32 %v235, %v432
    %v443 = vadd.f32 %v236, %v416
    %v444 = vadd.f32 %v237, %v420
    %v445 = vadd.f32 %v238, %v424
    %v446 = vadd.f32 %v239, %v428
    %v447 = vadd.f32 %v240, %v432
    %v448 = vadd.f32 %v241, %v416
    %v449 = vadd.f32 %v242, %v420
    %v450 = vadd.f32 %v243, %v424
    %v451 = vadd.f32 %v244, %v428
    %v452 = vadd.f32 %v245, %v432
    %v453 = vadd.f32 %v246, %v416
    %v454 = vadd.f32 %v247, %v420
    %v455 = vadd.f32 %v248, %v424
    %v456 = vadd.f32 %v249, %v428
    %v457 = vadd.f32 %v250, %v432
    %v458 = vadd.f32 %v251, %v416
    %v459 = vadd.f32 %v252, %v420
    %v460 = vadd.f32 %v253, %v424
    %v461 = vadd.f32 %v254, %v428
    %v462 = vadd.f32 %v255, %v432
    %v463 = vadd.f32 %v256, %v416
    %v464 = vadd.f32 %v257, %v420
    %v465 = vadd.f32 %v258, %v424
    %v466 = vadd.f32 %v259, %v428
    %v467 = vadd.f32 %v260, %v432
    %v468 = vadd.f32 %v261, %v416
    %v469 = vadd.f32 %v262, %v420
    %v470 = vadd.f32 %v263, %v424
    %v471 = vadd.f32 %v264, %v428
    %v472 = vadd.f32 %v265, %v432
    %v473 = vadd.f32 %v266, %v416
    %v474 = vadd.f32 %v267, %v420
    %v475 = vadd.f32 %v268, %v424
    %v476 = vadd.f32 %v269, %v428
    %v477 = vadd.f32 %v270, %v432
    %v478 = vadd.f32 %v271, %v416
    %v479 = vadd.f32 %v272, %v420
    %v480 = vadd.f32 %v273, %v424
    %v481 = vadd.f32 %v274, %v428
    %v482 = vadd.f32 %v275, %v432
    %v483 = vadd.f32 %v276, %v416
    %v484 = vadd.f32 %v277, %v420
    %v485 = vadd.f32 %v278, %v424
    %v486 = vadd.f32 %v279, %v428
    %v487 = vadd.f32 %v280, %v432
    %v488 = vadd.f32 %v281, %v416
    %v489 = vadd.f32 %v282, %v420
    %v490 = vadd.f32 %v283, %v424
    %v491 = vadd.f32 %v284, %v428
    %v492 = vadd.f32 %v285, %v432
    %v493 = vadd.f32 %v286, %v416
    %v494 = vadd.f32 %v287, %v420
    %v495 = vadd.f32 %v288, %v424
    %v496 = vadd.f32 %v289, %v428
    %v497 = vadd.f32 %v290, %v432
    %v498 = vadd.f32 %v291, %v416
    %v499 = vadd.f32 %v292, %v420
    %v500 = vadd.f32 %v293, %v424
    %v501 = vadd.f32 %v294, %v428
    %v502 = vadd.f32 %v295, %v432
    %v503 = vadd.f32 %v296, %v416
    %v504 = vadd.f32 %v297, %v420
    %v505 = vadd.f32 %v298, %v424
    %v506 = vadd.f32 %v299, %v428
    %v507 = vadd.f32 %v300, %v432
    %v508 = vadd.f32 %v301, %v416
    %v509 = vadd.f32 %v302, %v420
    %v510 = vadd.f32 %v303, %v424
    %v511 = vadd.f32 %v304, %v428
    %v512 = vadd.f32 %v305, %v432
    %v513 = vadd.f32 %v306, %v416
    %v514 = vadd.f32 %v307, %v420
    %v515 = vadd.f32 %v308, %v424
    %v516 = vadd.f32 %v309, %v428
    %v517 = vadd.f32 %v310, %v432
    %v518 = vadd.f32 %v311, %v416
    %v519 = vadd.f32 %v312, %v420
    %v520 = vadd.f32 %v313, %v424
    %v521 = vadd.f32 %v314, %v428
    %v522 = vadd.f32 %v315, %v432
    %v523 = vadd.f32 %v316, %v416
    %v524 = vadd.f32 %v317, %v420
    %v525 = vadd.f32 %v318, %v424
    %v526 = vadd.f32 %v319, %v428
    %v527 = vadd.f32 %v320, %v432
    %v528 = vadd.f32 %v321, %v416
    %v529 = vadd.f32 %v322, %v420
    %v530 = vadd.f32 %v323, %v424
    %v531 = vadd.f32 %v324, %v428
    %v532 = vadd.f32 %v325, %v432
    %v533 = vadd.f32 %v326, %v416
    %v534 = vadd.f32 %v327, %v420
    %v535 = vadd.f32 %v328, %v424
    %v536 = vadd.f32 %v329, %v428
    %v537 = vadd.f32 %v330, %v432
    %v538 = vadd.f32 %v331, %v416
    %v539 = vadd.f32 %v332, %v420
    %v540 = vadd.f32 %v333, %v424
    %v541 = vadd.f32 %v334, %v428
    %v542 = vadd.f32 %v335, %v432
    %v543 = vadd.f32 %v336, %v416
    %v544 = vadd.f32 %v337, %v420
    %v545 = vadd.f32 %v338, %v424
    %v546 = vadd.f32 %v339, %v428
    %v547 = vadd.f32 %v340, %v432
    %v548 = vadd.f32 %v341, %v416
    %v549 = vadd.f32 %v342, %v420
    %v550 = vadd.f32 %v343, %v424
    %v551 = vadd.f32 %v344, %v428
    %v552 = vadd.f32 %v345, %v432
    %v553 = vadd.f32 %v346, %v416
    %v554 = vadd.f32 %v347, %v420
    %v555 = vadd.f32 %v348, %v424
    %v556 = vadd.f32 %v349, %v428
    %v557 = vadd.f32 %v350, %v432
    %v558 = vadd.f32 %v351, %v416
    %v559 = vadd.f32 %v352, %v420
    %v560 = vadd.f32 %v353, %v424
    %v561 = vadd.f32 %v354, %v428
    %v562 = vadd.f32 %v355, %v432
    %v563 = vadd.f32 %v356, %v416
    %v564 = vadd.f32 %v357, %v420
    %v565 = vadd.f32 %v358, %v424
    %v566 = vadd.f32 %v359, %v428
    %v567 = vadd.f32 %v360, %v432
    %v568 = vadd.f32 %v361, %v416
    %v569 = vadd.f32 %v362, %v420
    %v570 = vadd.f32 %v363, %v424
    %v571 = vadd.f32 %v364, %v428
    %v572 = vadd.f32 %v365, %v432
    %v573 = vadd.f32 %v366, %v416
    %v574 = vadd.f32 %v367, %v420
    %v575 = vadd.f32 %v368, %v424
    %v576 = vadd.f32 %v369, %v428
    %v577 = vadd.f32 %v370, %v432
    %v578 = vadd.f32 %v371, %v416
    %v579 = vadd.f32 %v372, %v420
    %v580 = vadd.f32 %v373, %v424
    %v581 = vadd.f32 %v374, %v428
    %v582 = vadd.f32 %v375, %v432
    %v583 = vadd.f32 %v376, %v416
    %v584 = vadd.f32 %v377, %v420
    %v585 = vadd.f32 %v378, %v424
    %v586 = vadd.f32 %v379, %v428
    %v587 = vadd.f32 %v380, %v432
    %v588 = vadd.f32 %v381, %v416
    %v589 = vadd.f32 %v382, %v420
    %v590 = vadd.f32 %v383, %v424
    %v591 = vadd.f32 %v384, %v428
    %v592 = vadd.f32 %v385, %v432
    %v593 = vadd.f32 %v386, %v416
    %v594 = vadd.f32 %v387, %v420
    %v595 = vadd.f32 %v388, %v424
    %v596 = vadd.f32 %v389, %v428
    %v597 = vadd.f32 %v390, %v432
    %v598 = vadd.f32 %v391, %v416
    %v599 = vadd.f32 %v392, %v420
    %v600 = vadd.f32 %v393, %v424
    %v601 = vadd.f32 %v394, %v428
    %v602 = vadd.f32 %v395, %v432
    %v603 = vadd.f32 %v396, %v416
    %v604 = vadd.f32 %v397, %v420
    %v605 = vadd.f32 %v398, %v424
    %v606 = vadd.f32 %v399, %v428
    %v607 = vadd.f32 %v400, %v432
    %v608 = vadd.f32 %v401, %v416
    %v609 = vadd.f32 %v402, %v420
    %v610 = vadd.f32 %v403, %v424
    %v611 = vadd.f32 %v404, %v428
    %v612 = vadd.f32 %v405, %v432
    %v613 = vadd.f32 %v406, %v416
    %v614 = vadd.f32 %v407, %v420
    %v615 = vadd.f32 %v408, %v424
    %v616 = vadd.f32 %v409, %v428
    %v617 = vadd.f32 %v410, %v432
    %v618 = vmax.f32 %v438, 0.0
    %v619 = vmax.f32 %v439, 0.0
    %v620 = vmax.f32 %v440, 0.0
    %v621 = vmax.f32 %v441, 0.0
    %v622 = vmax.f32 %v442, 0.0
    %v623 = vmax.f32 %v443, 0.0
    %v624 = vmax.f32 %v444, 0.0
    %v625 = vmax.f32 %v445, 0.0
    %v626 = vmax.f32 %v446, 0.0
    %v627 = vmax.f32 %v447, 0.0
    %v628 = vmax.f32 %v448, 0.0
    %v629 = vmax.f32 %v449, 0.0
    %v630 = vmax.f32 %v450, 0.0
    %v631 = vmax.f32 %v451, 0.0
    %v632 = vmax.f32 %v452, 0.0
    %v633 = vmax.f32 %v453, 0.0
    %v634 = vmax.f32 %v454, 0.0
    %v635 = vmax.f32 %v455, 0.0
    %v636 = vmax.f32 %v456, 0.0
    %v637 = vmax.f32 %v457, 0.0
    %v638 = vmax.f32 %v458, 0.0
    %v639 = vmax.f32 %v459, 0.0
    %v640 = vmax.f32 %v460, 0.0
    %v641 = vmax.f32 %v461, 0.0
    %v642 = vmax.f32 %v462, 0.0
    %v643 = vmax.f32 %v463, 0.0
    %v644 = vmax.f32 %v464, 0.0
    %v645 = vmax.f32 %v465, 0.0
    %v646 = vmax.f32 %v466, 0.0
    %v647 = vmax.f32 %v467, 0.0
    %v648 = vmax.f32 %v468, 0.0
    %v649 = vmax.f32 %v469, 0.0
    %v650 = vmax.f32 %v470, 0.0
    %v651 = vmax.f32 %v471, 0.0
    %v652 = vmax.f32 %v472, 0.0
    %v653 = vmax.f32 %v473, 0.0
    %v654 = vmax.f32 %v474, 0.0
    %v655 = vmax.f32 %v475, 0.0
    %v656 = vmax.f32 %v476, 0.0
    %v657 = vmax.f32 %v477, 0.0
    %v658 = vmax.f32 %v478, 0.0
    %v659 = vmax.f32 %v479, 0.0
    %v660 = vmax.f32 %v480, 0.0
    %v661 = vmax.f32 %v481, 0.0
    %v662 = vmax.f32 %v482, 0.0
    %v663 = vmax.f32 %v483, 0.0
    %v664 = vmax.f32 %v484, 0.0
    %v665 = vmax.f32 %v485, 0.0
    %v666 = vmax.f32 %v486, 0.0
    %v667 = vmax.f32 %v487, 0.0
    %v668 = vmax.f32 %v488, 0.0
    %v669 = vmax.f32 %v489, 0.0
    %v670 = vmax.f32 %v490, 0.0
    %v671 = vmax.f32 %v491, 0.0
    %v672 = vmax.f32 %v492, 0.0
    %v673 = vmax.f32 %v493, 0.0
    %v674 = vmax.f32 %v494, 0.0
    %v675 = vmax.f32 %v495, 0.0
    %v676 = vmax.f32 %v496, 0.0
    %v677 = vmax.f32 %v497, 0.0
    %v678 = vmax.f32 %v498, 0.0
    %v679 = vmax.f32 %v499, 0.0
    %v680 = vmax.f32 %v500, 0.0
    %v681 = vmax.f32 %v501, 0.0
    %v682 = vmax.f32 %v502, 0.0
    %v683 = vmax.f32 %v503, 0.0
    %v684 = vmax.f32 %v504, 0.0
    %v685 = vmax.f32 %v505, 0.0
    %v686 = vmax.f32 %v506, 0.0
    %v687 = vmax.f32 %v507, 0.0
    %v688 = vmax.f32 %v508, 0.0
    %v689 = vmax.f32 %v509, 0.0
    %v690 = vmax.f32 %v510, 0.0
    %v691 = vmax.f32 %v511, 0.0
    %v692 = vmax.f32 %v512, 0.0
    %v693 = vmax.f32 %v513, 0.0
    %v694 = vmax.f32 %v514, 0.0
    %v695 = vmax.f32 %v515, 0.0
    %v696 = vmax.f32 %v516, 0.0
    %v697 = vmax.f32 %v517, 0.0
    %v698 = vmax.f32 %v518, 0.0
    %v699 = vmax.f32 %v519, 0.0
    %v700 = vmax.f32 %v520, 0.0
    %v701 = vmax.f32 %v521, 0.0
    %v702 = vmax.f32 %v522, 0.0
    %v703 = vmax.f32 %v523, 0.0
    %v704 = vmax.f32 %v524, 0.0
    %v705 = vmax.f32 %v525, 0.0
    %v706 = vmax.f32 %v526, 0.0
    %v707 = vmax.f32 %v527, 0.0
    %v708 = vmax.f32 %v528, 0.0
    %v709 = vmax.f32 %v529, 0.0
    %v710 = vmax.f32 %v530, 0.0
    %v711 = vmax.f32 %v531, 0.0
    %v712 = vmax.f32 %v532, 0.0
    %v713 = vmax.f32 %v533, 0.0
    %v714 = vmax.f32 %v534, 0.0
    %v715 = vmax.f32 %v535, 0.0
    %v716 = vmax.f32 %v536, 0.0
    %v717 = vmax.f32 %v537, 0.0
    %v718 = vmax.f32 %v538, 0.0
    %v719 = vmax.f32 %v539, 0.0
    %v720 = vmax.f32 %v540, 0.0
    %v721 = vmax.f32 %v541, 0.0
    %v722 = vmax.f32 %v542, 0.0
    %v723 = vmax.f32 %v543, 0.0
    %v724 = vmax.f32 %v544, 0.0
    %v725 = vmax.f32 %v545, 0.0
    %v726 = vmax.f32 %v546, 0.0
    %v727 = vmax.f32 %v547, 0.0
    %v728 = vmax.f32 %v548, 0.0
    %v729 = vmax.f32 %v549, 0.0
    %v730 = vmax.f32 %v550, 0.0
    %v731 = vmax.f32 %v551, 0.0
    %v732 = vmax.f32 %v552, 0.0
    %v733 = vmax.f32 %v553, 0.0
    %v734 = vmax.f32 %v554, 0.0
    %v735 = vmax.f32 %v555, 0.0
    %v736 = vmax.f32 %v556, 0.0
    %v737 = vmax.f32 %v557, 0.0
    %v738 = vmax.f32 %v558, 0.0
    %v739 = vmax.f32 %v559, 0.0
    %v740 = vmax.f32 %v560, 0.0
    %v741 = vmax.f32 %v561, 0.0
    %v742 = vmax.f32 %v562, 0.0
    %v743 = vmax.f32 %v563, 0.0
    %v744 = vmax.f32 %v564, 0.0
    %v745 = vmax.f32 %v565, 0.0
    %v746 = vmax.f32 %v566, 0.0
    %v747 = vmax.f32 %v567, 0.0
    %v748 = vmax.f32 %v568, 0.0
    %v749 = vmax.f32 %v569, 0.0
    %v750 = vmax.f32 %v570, 0.0
    %v751 = vmax.f32 %v571, 0.0
    %v752 = vmax.f32 %v572, 0.0
    %v753 = vmax.f32 %v573, 0.0
    %v754 = vmax.f32 %v574, 0.0
    %v755 = vmax.f32 %v575, 0.0
    %v756 = vmax.f32 %v576, 0.0
    %v757 = vmax.f32 %v577, 0.0
    %v758 = vmax.f32 %v578, 0.0
    %v759 = vmax.f32 %v579, 0.0
    %v760 = vmax.f32 %v580, 0.0
    %v761 = vmax.f32 %v581, 0.0
    %v762 = vmax.f32 %v582, 0.0
    %v763 = vmax.f32 %v583, 0.0
    %v764 = vmax.f32 %v584, 0.0
    %v765 = vmax.f32 %v585, 0.0
    %v766 = vmax.f32 %v586, 0.0
    %v767 = vmax.f32 %v587, 0.0
    %v768 = vmax.f32 %v588, 0.0
    %v769 = vmax.f32 %v589, 0.0
    %v770 = vmax.f32 %v590, 0.0
    %v771 = vmax.f32 %v591, 0.0
    %v772 = vmax.f32 %v592, 0.0
    %v773 = vmax.f32 %v593, 0.0
    %v774 = vmax.f32 %v594, 0.0
    %v775 = vmax.f32 %v595, 0.0
    %v776 = vmax.f32 %v596, 0.0
    %v777 = vmax.f32 %v597, 0.0
    %v778 = vmax.f32 %v598, 0.0
    %v779 = vmax.f32 %v599, 0.0
    %v780 = vmax.f32 %v600, 0.0
    %v781 = vmax.f32 %v601, 0.0
    %v782 = vmax.f32 %v602, 0.0
    %v783 = vmax.f32 %v603, 0.0
    %v784 = vmax.f32 %v604, 0.0
    %v785 = vmax.f32 %v605, 0.0
    %v786 = vmax.f32 %v606, 0.0
    %v787 = vmax.f32 %v607, 0.0
    %v788 = vmax.f32 %v608, 0.0
    %v789 = vmax.f32 %v609, 0.0
    %v790 = vmax.f32 %v610, 0.0
    %v791 = vmax.f32 %v611, 0.0
    %v792 = vmax.f32 %v612, 0.0
    %v793 = vmax.f32 %v613, 0.0
    %v794 = vmax.f32 %v614, 0.0
    %v795 = vmax.f32 %v615, 0.0
    %v796 = vmax.f32 %v616, 0.0
    %v797 = vmax.f32 %v617, 0.0
    %v798 = vld [vmem:[%s1] sm:$0xff]
    %v799 = vld [vmem:[%s1 + $0x8] sm:$0xff]
    %v800 = vld [vmem:[%s1 + $0x10] sm:$0xff]
    %v801 = vld [vmem:[%s1 + $0x18] sm:$0xff]
    %v802 = vld [vmem:[%s1 + $0x20] sm:$0xff]
    %v803 = vld [vmem:[%s1 + $0x28] sm:$0xff]
    %v804 = vld [vmem:[%s1 + $0x30] sm:$0xff]
    %v805 = vld [vmem:[%s1 + $0x38] sm:$0xff]
    %v806 = vld [vmem:[%s1 + $0x40] sm:$0xff]
    %v807 = vld [vmem:[%s1 + $0x48] sm:$0xff]
    %v808 = vld [vmem:[%s1 + $0x50] sm:$0xff]
    %v809 = vld [vmem:[%s1 + $0x58] sm:$0xff]
    %v810 = vld [vmem:[%s1 + $0x60] sm:$0xff]
    %v811 = vld [vmem:[%s1 + $0x68] sm:$0xff]
    %v812 = vld [vmem:[%s1 + $0x70] sm:$0xff]
    %v813 = vld [vmem:[%s1 + $0x78] sm:$0xff]
    %v814 = vld [vmem:[%s1 + $0x80] sm:$0xff]
    %v815 = vld [vmem:[%s1 + $0x88] sm:$0xff]
    %v816 = vld [vmem:[%s1 + $0x90] sm:$0xff]
    %v817 = vld [vmem:[%s1 + $0x98] sm:$0xff]
    %v818 = vld [vmem:[%s1 + $0xa0] sm:$0xff]
    %v819 = vld [vmem:[%s1 + $0xa8] sm:$0xff]
    %v820 = vld [vmem:[%s1 + $0xb0] sm:$0xff]
    %v821 = vld [vmem:[%s1 + $0xb8] sm:$0xff]
    %v822 = vld [vmem:[%s1 + $0xc0] sm:$0xff]
    %v823 = vld [vmem:[%s1 + $0xc8] sm:$0xff]
    %v824 = vld [vmem:[%s1 + $0xd0] sm:$0xff]
    %v825 = vld [vmem:[%s1 + $0xd8] sm:$0xff]
    %v826 = vld [vmem:[%s1 + $0xe0] sm:$0xff]
    %v827 = vld [vmem:[%s1 + $0xe8] sm:$0xff]
    %v828 = vld [vmem:[%s1 + $0xf0] sm:$0xff]
    %v829 = vld [vmem:[%s1 + $0xf8] sm:$0xff]
    %v830 = vld [vmem:[%s1 + $0x100] sm:$0xff]
    %v831 = vld [vmem:[%s1 + $0x108] sm:$0xff]
    %v832 = vld [vmem:[%s1 + $0x110] sm:$0xff]
    %v833 = vld [vmem:[%s1 + $0x118] sm:$0xff]
    %v834 = vld [vmem:[%s1 + $0x120] sm:$0xff]
    %v835 = vld [vmem:[%s1 + $0x128] sm:$0xff]
    %v836 = vld [vmem:[%s1 + $0x130] sm:$0xff]
    %v837 = vld [vmem:[%s1 + $0x138] sm:$0xff]
    %v838 = vld [vmem:[%s1 + $0x140] sm:$0xff]
    %v839 = vld [vmem:[%s1 + $0x148] sm:$0xff]
    %v840 = vld [vmem:[%s1 + $0x150] sm:$0xff]
    %v841 = vld [vmem:[%s1 + $0x158] sm:$0xff]
    %v842 = vld [vmem:[%s1 + $0x160] sm:$0xff]
    %v843 = vld [vmem:[%s1 + $0x168] sm:$0xff]
    %v844 = vld [vmem:[%s1 + $0x170] sm:$0xff]
    %v845 = vld [vmem:[%s1 + $0x178] sm:$0xff]
    %v846 = vld [vmem:[%s1 + $0x180] sm:$0xff]
    %v847 = vld [vmem:[%s1 + $0x188] sm:$0xff]
    %v848 = vld [vmem:[%s1 + $0x190] sm:$0xff]
    %v849 = vld [vmem:[%s1 + $0x198] sm:$0xff]
    %v850 = vld [vmem:[%s1 + $0x1a0] sm:$0xff]
    %v851 = vld [vmem:[%s1 + $0x1a8] sm:$0xff]
    %v852 = vld [vmem:[%s1 + $0x1b0] sm:$0xff]
    %v853 = vld [vmem:[%s1 + $0x1b8] sm:$0xff]
    %v854 = vld [vmem:[%s1 + $0x1c0] sm:$0xff]
    %v855 = vld [vmem:[%s1 + $0x1c8] sm:$0xff]
    %v856 = vld [vmem:[%s1 + $0x1d0] sm:$0xff]
    %v857 = vld [vmem:[%s1 + $0x1d8] sm:$0xff]
    %v858 = vld [vmem:[%s1 + $0x1e0] sm:$0xff]
    %v859 = vld [vmem:[%s1 + $0x1e8] sm:$0xff]
    %v860 = vld [vmem:[%s1 + $0x1f0] sm:$0xff]
    %v861 = vld [vmem:[%s1 + $0x1f8] sm:$0xff]
    %v862 = vld [vmem:[%s1 + $0x200] sm:$0xff]
    %v863 = vld [vmem:[%s1 + $0x208] sm:$0xff]
    %v864 = vld [vmem:[%s1 + $0x210] sm:$0xff]
    %v865 = vld [vmem:[%s1 + $0x218] sm:$0xff]
    %v866 = vld [vmem:[%s1 + $0x220] sm:$0xff]
    %v867 = vld [vmem:[%s1 + $0x228] sm:$0xff]
    %v868 = vld [vmem:[%s1 + $0x230] sm:$0xff]
    %v869 = vld [vmem:[%s1 + $0x238] sm:$0xff]
    %v870 = vld [vmem:[%s2] sm:$0x1]
    %v872 = vlaneseq
    %v873 = vshrl.u32 %v872, 7
    %v874 = vsub.s32 0, %v873
    %v875 = vrot.slane %v870, %v874
    %vm877 = vcmask 523264
    %v879 = vsel %vm877, %v622, 0
    %v882 = vsel %vm877, %v627, 0
    %v885 = vsel %vm877, %v632, 0
    %v888 = vsel %vm877, %v637, 0
    %v891 = vsel %vm877, %v642, 0
    %v894 = vsel %vm877, %v647, 0
    %v897 = vsel %vm877, %v652, 0
    %v900 = vsel %vm877, %v657, 0
    %v903 = vsel %vm877, %v662, 0
    %v906 = vsel %vm877, %v667, 0
    %v909 = vsel %vm877, %v672, 0
    %v912 = vsel %vm877, %v677, 0
    %v915 = vsel %vm877, %v682, 0
    %v918 = vsel %vm877, %v687, 0
    %v921 = vsel %vm877, %v692, 0
    %v924 = vsel %vm877, %v697, 0
    %v927 = vsel %vm877, %v702, 0
    %v930 = vsel %vm877, %v707, 0
    %v933 = vsel %vm877, %v712, 0
    %v936 = vsel %vm877, %v717, 0
    %v939 = vsel %vm877, %v722, 0
    %v942 = vsel %vm877, %v727, 0
    %v945 = vsel %vm877, %v732, 0
    %v948 = vsel %vm877, %v737, 0
    %v951 = vsel %vm877, %v742, 0
    %v954 = vsel %vm877, %v747, 0
    %v957 = vsel %vm877, %v752, 0
    %v960 = vsel %vm877, %v757, 0
    %v963 = vsel %vm877, %v762, 0
    %v966 = vsel %vm877, %v767, 0
    %v969 = vsel %vm877, %v772, 0
    %v972 = vsel %vm877, %v777, 0
    %v975 = vsel %vm877, %v782, 0
    %v978 = vsel %vm877, %v787, 0
    %v981 = vsel %vm877, %v792, 0
    %v984 = vsel %vm877, %v797, 0
    %986 = vmatprep.subr.mxu0 0.0
    %987 = vmatpush1.msra.mxu0 %v798
    %988 = vmatprep.subr.mxu0 0.0
    %989 = vmatpush1.msra.mxu0 %v799
    %990 = vmatprep.subr.mxu0 0.0
    %991 = vmatpush1.msra.mxu0 %v800
    %992 = vmatprep.subr.mxu0 0.0
    %993 = vmatpush1.msra.mxu0 %v801
    %994 = vmatprep.subr.mxu0 0.0
    %995 = vmatpush1.msra.mxu0 %v802
    %996 = vmatprep.subr.mxu0 0.0
    %997 = vmatpush1.msra.mxu0 %v803
    %998 = vmatprep.subr.mxu0 0.0
    %999 = vmatpush1.msra.mxu0 %v804
    %1000 = vmatprep.subr.mxu0 0.0
    %1001 = vmatpush1.msra.mxu0 %v805
    %1002 = vmatprep.subr.mxu0 0.0
    %1003 = vmatpush1.msra.mxu0 %v806
    %1004 = vmatprep.subr.mxu0 0.0
    %1005 = vmatpush1.msra.mxu0 %v807
    %1006 = vmatprep.subr.mxu0 0.0
    %1007 = vmatpush1.msra.mxu0 %v808
    %1008 = vmatprep.subr.mxu0 0.0
    %1009 = vmatpush1.msra.mxu0 %v809
    %1010 = vmatprep.subr.mxu0 0.0
    %1011 = vmatpush1.msra.mxu0 %v810
    %1012 = vmatprep.subr.mxu0 0.0
    %1013 = vmatpush1.msra.mxu0 %v811
    %1014 = vmatprep.subr.mxu0 0.0
    %1015 = vmatpush1.msra.mxu0 %v812
    %1016 = vmatprep.subr.mxu0 0.0
    %1017 = vmatpush1.msra.mxu0 %v813
    %1018 = vmatprep.subr.mxu0 0.0
    %1019 = vmatpush1.msra.mxu0 %v814
    %1020 = vmatprep.subr.mxu0 0.0
    %1021 = vmatpush1.msra.mxu0 %v815
    %1022 = vmatprep.subr.mxu0 0.0
    %1023 = vmatpush1.msra.mxu0 %v816
    %1024 = vmatprep.subr.mxu0 0.0
    %1025 = vmatpush1.msra.mxu0 %v817
    %1026 = vmatprep.subr.mxu0 0.0
    %1027 = vmatpush1.msra.mxu0 %v818
    %1028 = vmatprep.subr.mxu0 0.0
    %1029 = vmatpush1.msra.mxu0 %v819
    %1030 = vmatprep.subr.mxu0 0.0
    %1031 = vmatpush1.msra.mxu0 %v820
    %1032 = vmatprep.subr.mxu0 0.0
    %1033 = vmatpush1.msra.mxu0 %v821
    %1034 = vmatprep.subr.mxu0 0.0
    %1035 = vmatpush1.msra.mxu0 %v822
    %1036 = vmatprep.subr.mxu0 0.0
    %1037 = vmatpush1.msra.mxu0 %v823
    %1038 = vmatprep.subr.mxu0 0.0
    %1039 = vmatpush1.msra.mxu0 %v824
    %1040 = vmatprep.subr.mxu0 0.0
    %1041 = vmatpush1.msra.mxu0 %v825
    %1042 = vmatprep.subr.mxu0 0.0
    %1043 = vmatpush1.msra.mxu0 %v826
    %1044 = vmatprep.subr.mxu0 0.0
    %1045 = vmatpush1.msra.mxu0 %v827
    %1046 = vmatprep.subr.mxu0 0.0
    %1047 = vmatpush1.msra.mxu0 %v828
    %1048 = vmatprep.subr.mxu0 0.0
    %1049 = vmatpush1.msra.mxu0 %v829
    %1050 = vmatprep.mubr.f32.mxu0 %v619
    %1051 = vmatmul.mubr.f32.gmra.mrb[0].mxu0 %v618
    %v1052 = vpop.f32.mrb[0].mxu0
    %v1053 = vadd.f32 %v875, %v1052
    %v1054 = vpop.f32.mrb[0].mxu0
    %1055 = vmatprep.mubr.f32.mxu0 %v624
    %1056 = vmatmul.mubr.f32.gmra.mrb[0].mxu0 %v623
    %v1057 = vpop.f32.mrb[0].mxu0
    %v1058 = vadd.f32 %v875, %v1057
    %v1059 = vpop.f32.mrb[0].mxu0
    %1060 = vmatprep.mubr.f32.mxu0 %v629
    %1061 = vmatmul.mubr.f32.gmra.mrb[0].mxu0 %v628
    %v1062 = vpop.f32.mrb[0].mxu0
    %v1063 = vadd.f32 %v875, %v1062
    %v1064 = vpop.f32.mrb[0].mxu0
    %1065 = vmatprep.mubr.f32.mxu0 %v634
    %1066 = vmatmul.mubr.f32.gmra.mrb[0].mxu0 %v633
    %v1067 = vpop.f32.mrb[0].mxu0
    %v1068 = vadd.f32 %v875, %v1067
    %v1069 = vpop.f32.mrb[0].mxu0
    %1070 = vmatprep.mubr.f32.mxu0 %v639
    %1071 = vmatmul.mubr.f32.gmra.mrb[0].mxu0 %v638
    %v1072 = vpop.f32.mrb[0].mxu0
    %v1073 = vadd.f32 %v875, %v1072
    %v1074 = vpop.f32.mrb[0].mxu0
    %1075 = vmatprep.mubr.f32.mxu0 %v644
    %1076 = vmatmul.mubr.f32.gmra.mrb[0].mxu0 %v643
    %v1077 = vpop.f32.mrb[0].mxu0
    %v1078 = vadd.f32 %v875, %v1077
    %v1079 = vpop.f32.mrb[0].mxu0
    %1080 = vmatprep.mubr.f32.mxu0 %v649
    %1081 = vmatmul.mubr.f32.gmra.mrb[0].mxu0 %v648
    %v1082 = vpop.f32.mrb[0].mxu0
    %v1083 = vadd.f32 %v875, %v1082
    %v1084 = vpop.f32.mrb[0].mxu0
    %1085 = vmatprep.mubr.f32.mxu0 %v654
    %1086 = vmatmul.mubr.f32.gmra.mrb[0].mxu0 %v653
    %v1087 = vpop.f32.mrb[0].mxu0
    %v1088 = vadd.f32 %v875, %v1087
    %v1089 = vpop.f32.mrb[0].mxu0
    %1090 = vmatprep.mubr.f32.mxu0 %v659
    %1091 = vmatmul.mubr.f32.gmra.mrb[0].mxu0 %v658
    %v1092 = vpop.f32.mrb[0].mxu0
    %v1093 = vadd.f32 %v875, %v1092
    %v1094 = vpop.f32.mrb[0].mxu0
    %1095 = vmatprep.mubr.f32.mxu0 %v664
    %1096 = vmatmul.mubr.f32.gmra.mrb[0].mxu0 %v663
    %v1097 = vpop.f32.mrb[0].mxu0
    %v1098 = vadd.f32 %v875, %v1097
    %v1099 = vpop.f32.mrb[0].mxu0
    %1100 = vmatprep.mubr.f32.mxu0 %v669
    %1101 = vmatmul.mubr.f32.gmra.mrb[0].mxu0 %v668
    %v1102 = vpop.f32.mrb[0].mxu0
    %v1103 = vadd.f32 %v875, %v1102
    %v1104 = vpop.f32.mrb[0].mxu0
    %1105 = vmatprep.mubr.f32.mxu0 %v674
    %1106 = vmatmul.mubr.f32.gmra.mrb[0].mxu0 %v673
    %v1107 = vpop.f32.mrb[0].mxu0
    %v1108 = vadd.f32 %v875, %v1107
    %v1109 = vpop.f32.mrb[0].mxu0
    %1110 = vmatprep.mubr.f32.mxu0 %v679
    %1111 = vmatmul.mubr.f32.gmra.mrb[0].mxu0 %v678
    %v1112 = vpop.f32.mrb[0].mxu0
    %v1113 = vadd.f32 %v875, %v1112
    %v1114 = vpop.f32.mrb[0].mxu0
    %1115 = vmatprep.mubr.f32.mxu0 %v684
    %1116 = vmatmul.mubr.f32.gmra.mrb[0].mxu0 %v683
    %v1117 = vpop.f32.mrb[0].mxu0
    %v1118 = vadd.f32 %v875, %v1117
    %v1119 = vpop.f32.mrb[0].mxu0
    %1120 = vmatprep.mubr.f32.mxu0 %v689
    %1121 = vmatmul.mubr.f32.gmra.mrb[0].mxu0 %v688
    %v1122 = vpop.f32.mrb[0].mxu0
    %v1123 = vadd.f32 %v875, %v1122
    %v1124 = vpop.f32.mrb[0].mxu0
    %1125 = vmatprep.mubr.f32.mxu0 %v694
    %1126 = vmatmul.mubr.f32.gmra.mrb[0].mxu0 %v693
    %v1127 = vpop.f32.mrb[0].mxu0
    %v1128 = vadd.f32 %v875, %v1127
    %v1129 = vpop.f32.mrb[0].mxu0
    %1130 = vmatprep.mubr.f32.mxu0 %v699
    %1131 = vmatmul.mubr.f32.gmra.mrb[0].mxu0 %v698
    %v1132 = vpop.f32.mrb[0].mxu0
    %v1133 = vadd.f32 %v875, %v1132
    %v1134 = vpop.f32.mrb[0].mxu0
    %1135 = vmatprep.mubr.f32.mxu0 %v704
    %1136 = vmatmul.mubr.f32.gmra.mrb[0].mxu0 %v703
    %v1137 = vpop.f32.mrb[0].mxu0
    %v1138 = vadd.f32 %v875, %v1137
    %v1139 = vpop.f32.mrb[0].mxu0
    %1140 = vmatprep.mubr.f32.mxu0 %v709
    %1141 = vmatmul.mubr.f32.gmra.mrb[0].mxu0 %v708
    %v1142 = vpop.f32.mrb[0].mxu0
    %v1143 = vadd.f32 %v875, %v1142
    %v1144 = vpop.f32.mrb[0].mxu0
    %1145 = vmatprep.mubr.f32.mxu0 %v714
    %1146 = vmatmul.mubr.f32.gmra.mrb[0].mxu0 %v713
    %v1147 = vpop.f32.mrb[0].mxu0
    %v1148 = vadd.f32 %v875, %v1147
    %v1149 = vpop.f32.mrb[0].mxu0
    %1150 = vmatprep.mubr.f32.mxu0 %v719
    %1151 = vmatmul.mubr.f32.gmra.mrb[0].mxu0 %v718
    %v1152 = vpop.f32.mrb[0].mxu0
    %v1153 = vadd.f32 %v875, %v1152
    %v1154 = vpop.f32.mrb[0].mxu0
    %1155 = vmatprep.mubr.f32.mxu0 %v724
    %1156 = vmatmul.mubr.f32.gmra.mrb[0].mxu0 %v723
    %v1157 = vpop.f32.mrb[0].mxu0
    %v1158 = vadd.f32 %v875, %v1157
    %v1159 = vpop.f32.mrb[0].mxu0
    %1160 = vmatprep.mubr.f32.mxu0 %v729
    %1161 = vmatmul.mubr.f32.gmra.mrb[0].mxu0 %v728
    %v1162 = vpop.f32.mrb[0].mxu0
    %v1163 = vadd.f32 %v875, %v1162
    %v1164 = vpop.f32.mrb[0].mxu0
    %1165 = vmatprep.mubr.f32.mxu0 %v734
    %1166 = vmatmul.mubr.f32.gmra.mrb[0].mxu0 %v733
    %v1167 = vpop.f32.mrb[0].mxu0
    %v1168 = vadd.f32 %v875, %v1167
    %v1169 = vpop.f32.mrb[0].mxu0
    %1170 = vmatprep.mubr.f32.mxu0 %v739
    %1171 = vmatmul.mubr.f32.gmra.mrb[0].mxu0 %v738
    %v1172 = vpop.f32.mrb[0].mxu0
    %v1173 = vadd.f32 %v875, %v1172
    %v1174 = vpop.f32.mrb[0].mxu0
    %1175 = vmatprep.mubr.f32.mxu0 %v744
    %1176 = vmatmul.mubr.f32.gmra.mrb[0].mxu0 %v743
    %v1177 = vpop.f32.mrb[0].mxu0
    %v1178 = vadd.f32 %v875, %v1177
    %v1179 = vpop.f32.mrb[0].mxu0
    %1180 = vmatprep.mubr.f32.mxu0 %v749
    %1181 = vmatmul.mubr.f32.gmra.mrb[0].mxu0 %v748
    %v1182 = vpop.f32.mrb[0].mxu0
    %v1183 = vadd.f32 %v875, %v1182
    %v1184 = vpop.f32.mrb[0].mxu0
    %1185 = vmatprep.mubr.f32.mxu0 %v754
    %1186 = vmatmul.mubr.f32.gmra.mrb[0].mxu0 %v753
    %v1187 = vpop.f32.mrb[0].mxu0
    %v1188 = vadd.f32 %v875, %v1187
    %v1189 = vpop.f32.mrb[0].mxu0
    %1190 = vmatprep.mubr.f32.mxu0 %v759
    %1191 = vmatmul.mubr.f32.gmra.mrb[0].mxu0 %v758
    %v1192 = vpop.f32.mrb[0].mxu0
    %v1193 = vadd.f32 %v875, %v1192
    %v1194 = vpop.f32.mrb[0].mxu0
    %1195 = vmatprep.mubr.f32.mxu0 %v764
    %1196 = vmatmul.mubr.f32.gmra.mrb[0].mxu0 %v763
    %v1197 = vpop.f32.mrb[0].mxu0
    %v1198 = vadd.f32 %v875, %v1197
    %v1199 = vpop.f32.mrb[0].mxu0
    %1200 = vmatprep.mubr.f32.mxu0 %v769
    %1201 = vmatmul.mubr.f32.gmra.mrb[0].mxu0 %v768
    %v1202 = vpop.f32.mrb[0].mxu0
    %v1203 = vadd.f32 %v875, %v1202
    %v1204 = vpop.f32.mrb[0].mxu0
    %1205 = vmatprep.mubr.f32.mxu0 %v774
    %1206 = vmatmul.mubr.f32.gmra.mrb[0].mxu0 %v773
    %v1207 = vpop.f32.mrb[0].mxu0
    %v1208 = vadd.f32 %v875, %v1207
    %v1209 = vpop.f32.mrb[0].mxu0
    %1210 = vmatprep.mubr.f32.mxu0 %v779
    %1211 = vmatmul.mubr.f32.gmra.mrb[0].mxu0 %v778
    %v1212 = vpop.f32.mrb[0].mxu0
    %v1213 = vadd.f32 %v875, %v1212
    %v1214 = vpop.f32.mrb[0].mxu0
    %1215 = vmatprep.mubr.f32.mxu0 %v784
    %1216 = vmatmul.mubr.f32.gmra.mrb[0].mxu0 %v783
    %v1217 = vpop.f32.mrb[0].mxu0
    %v1218 = vadd.f32 %v875, %v1217
    %v1219 = vpop.f32.mrb[0].mxu0
    %1220 = vmatprep.mubr.f32.mxu0 %v789
    %1221 = vmatmul.mubr.f32.gmra.mrb[0].mxu0 %v788
    %v1222 = vpop.f32.mrb[0].mxu0
    %v1223 = vadd.f32 %v875, %v1222
    %v1224 = vpop.f32.mrb[0].mxu0
    %1225 = vmatprep.mubr.f32.mxu0 %v794
    %1226 = vmatmul.mubr.f32.gmra.mrb[0].mxu0 %v793
    %v1227 = vpop.f32.mrb[0].mxu0
    %v1228 = vadd.f32 %v875, %v1227
    %v1229 = vpop.f32.mrb[0].mxu0
    %1230 = vdwg.mxu0
    %1231 = vmatprep.subr.mxu0 0.0
    %1232 = vmatpush1.msra.mxu0 %v830
    %1233 = vmatprep.subr.mxu0 0.0
    %1234 = vmatpush1.msra.mxu0 %v831
    %1235 = vmatprep.subr.mxu0 0.0
    %1236 = vmatpush1.msra.mxu0 %v832
    %1237 = vmatprep.subr.mxu0 0.0
    %1238 = vmatpush1.msra.mxu0 %v833
    %1239 = vmatprep.subr.mxu0 0.0
    %1240 = vmatpush1.msra.mxu0 %v834
    %1241 = vmatprep.subr.mxu0 0.0
    %1242 = vmatpush1.msra.mxu0 %v835
    %1243 = vmatprep.subr.mxu0 0.0
    %1244 = vmatpush1.msra.mxu0 %v836
    %1245 = vmatprep.subr.mxu0 0.0
    %1246 = vmatpush1.msra.mxu0 %v837
    %1247 = vmatprep.subr.mxu0 0.0
    %1248 = vmatpush1.msra.mxu0 %v838
    %1249 = vmatprep.subr.mxu0 0.0
    %1250 = vmatpush1.msra.mxu0 %v839
    %1251 = vmatprep.subr.mxu0 0.0
    %1252 = vmatpush1.msra.mxu0 %v840
    %1253 = vmatprep.subr.mxu0 0.0
    %1254 = vmatpush1.msra.mxu0 %v841
    %1255 = vmatprep.subr.mxu0 0.0
    %1256 = vmatpush1.msra.mxu0 %v842
    %1257 = vmatprep.subr.mxu0 0.0
    %1258 = vmatpush1.msra.mxu0 %v843
    %1259 = vmatprep.subr.mxu0 0.0
    %1260 = vmatpush1.msra.mxu0 %v844
    %1261 = vmatprep.subr.mxu0 0.0
    %1262 = vmatpush1.msra.mxu0 %v845
    %1263 = vmatprep.subr.mxu0 0.0
    %1264 = vmatpush1.msra.mxu0 %v846
    %1265 = vmatprep.subr.mxu0 0.0
    %1266 = vmatpush1.msra.mxu0 %v847
    %1267 = vmatprep.subr.mxu0 0.0
    %1268 = vmatpush1.msra.mxu0 %v848
    %1269 = vmatprep.subr.mxu0 0.0
    %1270 = vmatpush1.msra.mxu0 %v849
    %1271 = vmatprep.subr.mxu0 0.0
    %1272 = vmatpush1.msra.mxu0 %v850
    %1273 = vmatprep.subr.mxu0 0.0
    %1274 = vmatpush1.msra.mxu0 %v851
    %1275 = vmatprep.subr.mxu0 0.0
    %1276 = vmatpush1.msra.mxu0 %v852
    %1277 = vmatprep.subr.mxu0 0.0
    %1278 = vmatpush1.msra.mxu0 %v853
    %1279 = vmatprep.subr.mxu0 0.0
    %1280 = vmatpush1.msra.mxu0 %v854
    %1281 = vmatprep.subr.mxu0 0.0
    %1282 = vmatpush1.msra.mxu0 %v855
    %1283 = vmatprep.subr.mxu0 0.0
    %1284 = vmatpush1.msra.mxu0 %v856
    %1285 = vmatprep.subr.mxu0 0.0
    %1286 = vmatpush1.msra.mxu0 %v857
    %1287 = vmatprep.subr.mxu0 0.0
    %1288 = vmatpush1.msra.mxu0 %v858
    %1289 = vmatprep.subr.mxu0 0.0
    %1290 = vmatpush1.msra.mxu0 %v859
    %1291 = vmatprep.subr.mxu0 0.0
    %1292 = vmatpush1.msra.mxu0 %v860
    %1293 = vmatprep.subr.mxu0 0.0
    %1294 = vmatpush1.msra.mxu0 %v861
    %1295 = vmatprep.mubr.f32.mxu0 %v621
    %1296 = vmatmul.mubr.f32.gmra.mrb[0].mxu0 %v620
    %v1297 = vpop.f32.mrb[0].mxu0
    %v1298 = vadd.f32 %v1053, %v1297
    %v1299 = vpop.f32.mrb[0].mxu0
    %1300 = vmatprep.mubr.f32.mxu0 %v626
    %1301 = vmatmul.mubr.f32.gmra.mrb[0].mxu0 %v625
    %v1302 = vpop.f32.mrb[0].mxu0
    %v1303 = vadd.f32 %v1058, %v1302
    %v1304 = vpop.f32.mrb[0].mxu0
    %1305 = vmatprep.mubr.f32.mxu0 %v631
    %1306 = vmatmul.mubr.f32.gmra.mrb[0].mxu0 %v630
    %v1307 = vpop.f32.mrb[0].mxu0
    %v1308 = vadd.f32 %v1063, %v1307
    %v1309 = vpop.f32.mrb[0].mxu0
    %1310 = vmatprep.mubr.f32.mxu0 %v636
    %1311 = vmatmul.mubr.f32.gmra.mrb[0].mxu0 %v635
    %v1312 = vpop.f32.mrb[0].mxu0
    %v1313 = vadd.f32 %v1068, %v1312
    %v1314 = vpop.f32.mrb[0].mxu0
    %1315 = vmatprep.mubr.f32.mxu0 %v641
    %1316 = vmatmul.mubr.f32.gmra.mrb[0].mxu0 %v640
    %v1317 = vpop.f32.mrb[0].mxu0
    %v1318 = vadd.f32 %v1073, %v1317
    %v1319 = vpop.f32.mrb[0].mxu0
    %1320 = vmatprep.mubr.f32.mxu0 %v646
    %1321 = vmatmul.mubr.f32.gmra.mrb[0].mxu0 %v645
    %v1322 = vpop.f32.mrb[0].mxu0
    %v1323 = vadd.f32 %v1078, %v1322
    %v1324 = vpop.f32.mrb[0].mxu0
    %1325 = vmatprep.mubr.f32.mxu0 %v651
    %1326 = vmatmul.mubr.f32.gmra.mrb[0].mxu0 %v650
    %v1327 = vpop.f32.mrb[0].mxu0
    %v1328 = vadd.f32 %v1083, %v1327
    %v1329 = vpop.f32.mrb[0].mxu0
    %1330 = vmatprep.mubr.f32.mxu0 %v656
    %1331 = vmatmul.mubr.f32.gmra.mrb[0].mxu0 %v655
    %v1332 = vpop.f32.mrb[0].mxu0
    %v1333 = vadd.f32 %v1088, %v1332
    %v1334 = vpop.f32.mrb[0].mxu0
    %1335 = vmatprep.mubr.f32.mxu0 %v661
    %1336 = vmatmul.mubr.f32.gmra.mrb[0].mxu0 %v660
    %v1337 = vpop.f32.mrb[0].mxu0
    %v1338 = vadd.f32 %v1093, %v1337
    %v1339 = vpop.f32.mrb[0].mxu0
    %1340 = vmatprep.mubr.f32.mxu0 %v666
    %1341 = vmatmul.mubr.f32.gmra.mrb[0].mxu0 %v665
    %v1342 = vpop.f32.mrb[0].mxu0
    %v1343 = vadd.f32 %v1098, %v1342
    %v1344 = vpop.f32.mrb[0].mxu0
    %1345 = vmatprep.mubr.f32.mxu0 %v671
    %1346 = vmatmul.mubr.f32.gmra.mrb[0].mxu0 %v670
    %v1347 = vpop.f32.mrb[0].mxu0
    %v1348 = vadd.f32 %v1103, %v1347
    %v1349 = vpop.f32.mrb[0].mxu0
    %1350 = vmatprep.mubr.f32.mxu0 %v676
    %1351 = vmatmul.mubr.f32.gmra.mrb[0].mxu0 %v675
    %v1352 = vpop.f32.mrb[0].mxu0
    %v1353 = vadd.f32 %v1108, %v1352
    %v1354 = vpop.f32.mrb[0].mxu0
    %1355 = vmatprep.mubr.f32.mxu0 %v681
    %1356 = vmatmul.mubr.f32.gmra.mrb[0].mxu0 %v680
    %v1357 = vpop.f32.mrb[0].mxu0
    %v1358 = vadd.f32 %v1113, %v1357
    %v1359 = vpop.f32.mrb[0].mxu0
    %1360 = vmatprep.mubr.f32.mxu0 %v686
    %1361 = vmatmul.mubr.f32.gmra.mrb[0].mxu0 %v685
    %v1362 = vpop.f32.mrb[0].mxu0
    %v1363 = vadd.f32 %v1118, %v1362
    %v1364 = vpop.f32.mrb[0].mxu0
    %1365 = vmatprep.mubr.f32.mxu0 %v691
    %1366 = vmatmul.mubr.f32.gmra.mrb[0].mxu0 %v690
    %v1367 = vpop.f32.mrb[0].mxu0
    %v1368 = vadd.f32 %v1123, %v1367
    %v1369 = vpop.f32.mrb[0].mxu0
    %1370 = vmatprep.mubr.f32.mxu0 %v696
    %1371 = vmatmul.mubr.f32.gmra.mrb[0].mxu0 %v695
    %v1372 = vpop.f32.mrb[0].mxu0
    %v1373 = vadd.f32 %v1128, %v1372
    %v1374 = vpop.f32.mrb[0].mxu0
    %1375 = vmatprep.mubr.f32.mxu0 %v701
    %1376 = vmatmul.mubr.f32.gmra.mrb[0].mxu0 %v700
    %v1377 = vpop.f32.mrb[0].mxu0
    %v1378 = vadd.f32 %v1133, %v1377
    %v1379 = vpop.f32.mrb[0].mxu0
    %1380 = vmatprep.mubr.f32.mxu0 %v706
    %1381 = vmatmul.mubr.f32.gmra.mrb[0].mxu0 %v705
    %v1382 = vpop.f32.mrb[0].mxu0
    %v1383 = vadd.f32 %v1138, %v1382
    %v1384 = vpop.f32.mrb[0].mxu0
    %1385 = vmatprep.mubr.f32.mxu0 %v711
    %1386 = vmatmul.mubr.f32.gmra.mrb[0].mxu0 %v710
    %v1387 = vpop.f32.mrb[0].mxu0
    %v1388 = vadd.f32 %v1143, %v1387
    %v1389 = vpop.f32.mrb[0].mxu0
    %1390 = vmatprep.mubr.f32.mxu0 %v716
    %1391 = vmatmul.mubr.f32.gmra.mrb[0].mxu0 %v715
    %v1392 = vpop.f32.mrb[0].mxu0
    %v1393 = vadd.f32 %v1148, %v1392
    %v1394 = vpop.f32.mrb[0].mxu0
    %1395 = vmatprep.mubr.f32.mxu0 %v721
    %1396 = vmatmul.mubr.f32.gmra.mrb[0].mxu0 %v720
    %v1397 = vpop.f32.mrb[0].mxu0
    %v1398 = vadd.f32 %v1153, %v1397
    %v1399 = vpop.f32.mrb[0].mxu0
    %1400 = vmatprep.mubr.f32.mxu0 %v726
    %1401 = vmatmul.mubr.f32.gmra.mrb[0].mxu0 %v725
    %v1402 = vpop.f32.mrb[0].mxu0
    %v1403 = vadd.f32 %v1158, %v1402
    %v1404 = vpop.f32.mrb[0].mxu0
    %1405 = vmatprep.mubr.f32.mxu0 %v731
    %1406 = vmatmul.mubr.f32.gmra.mrb[0].mxu0 %v730
    %v1407 = vpop.f32.mrb[0].mxu0
    %v1408 = vadd.f32 %v1163, %v1407
    %v1409 = vpop.f32.mrb[0].mxu0
    %1410 = vmatprep.mubr.f32.mxu0 %v736
    %1411 = vmatmul.mubr.f32.gmra.mrb[0].mxu0 %v735
    %v1412 = vpop.f32.mrb[0].mxu0
    %v1413 = vadd.f32 %v1168, %v1412
    %v1414 = vpop.f32.mrb[0].mxu0
    %1415 = vmatprep.mubr.f32.mxu0 %v741
    %1416 = vmatmul.mubr.f32.gmra.mrb[0].mxu0 %v740
    %v1417 = vpop.f32.mrb[0].mxu0
    %v1418 = vadd.f32 %v1173, %v1417
    %v1419 = vpop.f32.mrb[0].mxu0
    %1420 = vmatprep.mubr.f32.mxu0 %v746
    %1421 = vmatmul.mubr.f32.gmra.mrb[0].mxu0 %v745
    %v1422 = vpop.f32.mrb[0].mxu0
    %v1423 = vadd.f32 %v1178, %v1422
    %v1424 = vpop.f32.mrb[0].mxu0
    %1425 = vmatprep.mubr.f32.mxu0 %v751
    %1426 = vmatmul.mubr.f32.gmra.mrb[0].mxu0 %v750
    %v1427 = vpop.f32.mrb[0].mxu0
    %v1428 = vadd.f32 %v1183, %v1427
    %v1429 = vpop.f32.mrb[0].mxu0
    %1430 = vmatprep.mubr.f32.mxu0 %v756
    %1431 = vmatmul.mubr.f32.gmra.mrb[0].mxu0 %v755
    %v1432 = vpop.f32.mrb[0].mxu0
    %v1433 = vadd.f32 %v1188, %v1432
    %v1434 = vpop.f32.mrb[0].mxu0
    %1435 = vmatprep.mubr.f32.mxu0 %v761
    %1436 = vmatmul.mubr.f32.gmra.mrb[0].mxu0 %v760
    %v1437 = vpop.f32.mrb[0].mxu0
    %v1438 = vadd.f32 %v1193, %v1437
    %v1439 = vpop.f32.mrb[0].mxu0
    %1440 = vmatprep.mubr.f32.mxu0 %v766
    %1441 = vmatmul.mubr.f32.gmra.mrb[0].mxu0 %v765
    %v1442 = vpop.f32.mrb[0].mxu0
    %v1443 = vadd.f32 %v1198, %v1442
    %v1444 = vpop.f32.mrb[0].mxu0
    %1445 = vmatprep.mubr.f32.mxu0 %v771
    %1446 = vmatmul.mubr.f32.gmra.mrb[0].mxu0 %v770
    %v1447 = vpop.f32.mrb[0].mxu0
    %v1448 = vadd.f32 %v1203, %v1447
    %v1449 = vpop.f32.mrb[0].mxu0
    %1450 = vmatprep.mubr.f32.mxu0 %v776
    %1451 = vmatmul.mubr.f32.gmra.mrb[0].mxu0 %v775
    %v1452 = vpop.f32.mrb[0].mxu0
    %v1453 = vadd.f32 %v1208, %v1452
    %v1454 = vpop.f32.mrb[0].mxu0
    %1455 = vmatprep.mubr.f32.mxu0 %v781
    %1456 = vmatmul.mubr.f32.gmra.mrb[0].mxu0 %v780
    %v1457 = vpop.f32.mrb[0].mxu0
    %v1458 = vadd.f32 %v1213, %v1457
    %v1459 = vpop.f32.mrb[0].mxu0
    %1460 = vmatprep.mubr.f32.mxu0 %v786
    %1461 = vmatmul.mubr.f32.gmra.mrb[0].mxu0 %v785
    %v1462 = vpop.f32.mrb[0].mxu0
    %v1463 = vadd.f32 %v1218, %v1462
    %v1464 = vpop.f32.mrb[0].mxu0
    %1465 = vmatprep.mubr.f32.mxu0 %v791
    %1466 = vmatmul.mubr.f32.gmra.mrb[0].mxu0 %v790
    %v1467 = vpop.f32.mrb[0].mxu0
    %v1468 = vadd.f32 %v1223, %v1467
    %v1469 = vpop.f32.mrb[0].mxu0
    %1470 = vmatprep.mubr.f32.mxu0 %v796
    %1471 = vmatmul.mubr.f32.gmra.mrb[0].mxu0 %v795
    %v1472 = vpop.f32.mrb[0].mxu0
    %v1473 = vadd.f32 %v1228, %v1472
    %v1474 = vpop.f32.mrb[0].mxu0
    %1475 = vdwg.mxu0
    %1476 = vmatprep.subr.mxu0 0.0
    %1477 = vmatpush1.msra.mxu0 %v862
    %1478 = vmatprep.subr.mxu0 0.0
    %1479 = vmatpush1.msra.mxu0 %v863
    %1480 = vmatprep.subr.mxu0 0.0
    %1481 = vmatpush1.msra.mxu0 %v864
    %1482 = vmatprep.subr.mxu0 0.0
    %1483 = vmatpush1.msra.mxu0 %v865
    %1484 = vmatprep.subr.mxu0 0.0
    %1485 = vmatpush1.msra.mxu0 %v866
    %1486 = vmatprep.subr.mxu0 0.0
    %1487 = vmatpush1.msra.mxu0 %v867
    %1488 = vmatprep.subr.mxu0 0.0
    %1489 = vmatpush1.msra.mxu0 %v868
    %1490 = vmatprep.subr.mxu0 0.0
    %1491 = vmatpush1.msra.mxu0 %v869
    %1492 = vmatprep.subr.mxu0 0.0
    %1493 = vmatpush1.msra.mxu0 0.0
    %1494 = vmatprep.subr.mxu0 0.0
    %1495 = vmatpush1.msra.mxu0 0.0
    %1496 = vmatprep.subr.mxu0 0.0
    %1497 = vmatpush1.msra.mxu0 0.0
    %1498 = vmatprep.subr.mxu0 0.0
    %1499 = vmatpush1.msra.mxu0 0.0
    %1500 = vmatprep.subr.mxu0 0.0
    %1501 = vmatpush1.msra.mxu0 0.0
    %1502 = vmatprep.subr.mxu0 0.0
    %1503 = vmatpush1.msra.mxu0 0.0
    %1504 = vmatprep.subr.mxu0 0.0
    %1505 = vmatpush1.msra.mxu0 0.0
    %1506 = vmatprep.subr.mxu0 0.0
    %1507 = vmatpush1.msra.mxu0 0.0
    %1508 = vmatprep.subr.mxu0 0.0
    %1509 = vmatpush1.msra.mxu0 0.0
    %1510 = vmatprep.subr.mxu0 0.0
    %1511 = vmatpush1.msra.mxu0 0.0
    %1512 = vmatprep.subr.mxu0 0.0
    %1513 = vmatpush1.msra.mxu0 0.0
    %1514 = vmatprep.subr.mxu0 0.0
    %1515 = vmatpush1.msra.mxu0 0.0
    %1516 = vmatprep.subr.mxu0 0.0
    %1517 = vmatpush1.msra.mxu0 0.0
    %1518 = vmatprep.subr.mxu0 0.0
    %1519 = vmatpush1.msra.mxu0 0.0
    %1520 = vmatprep.subr.mxu0 0.0
    %1521 = vmatpush1.msra.mxu0 0.0
    %1522 = vmatprep.subr.mxu0 0.0
    %1523 = vmatpush1.msra.mxu0 0.0
    %1524 = vmatprep.subr.mxu0 0.0
    %1525 = vmatpush1.msra.mxu0 0.0
    %1526 = vmatprep.subr.mxu0 0.0
    %1527 = vmatpush1.msra.mxu0 0.0
    %1528 = vmatprep.subr.mxu0 0.0
    %1529 = vmatpush1.msra.mxu0 0.0
    %1530 = vmatprep.subr.mxu0 0.0
    %1531 = vmatpush1.msra.mxu0 0.0
    %1532 = vmatprep.subr.mxu0 0.0
    %1533 = vmatpush1.msra.mxu0 0.0
    %1534 = vmatprep.subr.mxu0 0.0
    %1535 = vmatpush1.msra.mxu0 0.0
    %1536 = vmatprep.subr.mxu0 0.0
    %1537 = vmatpush1.msra.mxu0 0.0
    %1538 = vmatprep.subr.mxu0 0.0
    %1539 = vmatpush1.msra.mxu0 0.0
    %1540 = vmatprep.mubr.f32.mxu0 0.0
    %1541 = vmatmul.mubr.f32.gmra.mrb[0].mxu0 %v879
    %v1542 = vpop.f32.mrb[0].mxu0
    %v1543 = vadd.f32 %v1298, %v1542
    %v1544 = vpop.f32.mrb[0].mxu0
    %1545 = vmatprep.mubr.f32.mxu0 0.0
    %1546 = vmatmul.mubr.f32.gmra.mrb[0].mxu0 %v882
    %v1547 = vpop.f32.mrb[0].mxu0
    %v1548 = vadd.f32 %v1303, %v1547
    %v1549 = vpop.f32.mrb[0].mxu0
    %1550 = vmatprep.mubr.f32.mxu0 0.0
    %1551 = vmatmul.mubr.f32.gmra.mrb[0].mxu0 %v885
    %v1552 = vpop.f32.mrb[0].mxu0
    %v1553 = vadd.f32 %v1308, %v1552
    %v1554 = vpop.f32.mrb[0].mxu0
    %1555 = vmatprep.mubr.f32.mxu0 0.0
    %1556 = vmatmul.mubr.f32.gmra.mrb[0].mxu0 %v888
    %v1557 = vpop.f32.mrb[0].mxu0
    %v1558 = vadd.f32 %v1313, %v1557
    %v1559 = vpop.f32.mrb[0].mxu0
    %1560 = vmatprep.mubr.f32.mxu0 0.0
    %1561 = vmatmul.mubr.f32.gmra.mrb[0].mxu0 %v891
    %v1562 = vpop.f32.mrb[0].mxu0
    %v1563 = vadd.f32 %v1318, %v1562
    %v1564 = vpop.f32.mrb[0].mxu0
    %1565 = vmatprep.mubr.f32.mxu0 0.0
    %1566 = vmatmul.mubr.f32.gmra.mrb[0].mxu0 %v894
    %v1567 = vpop.f32.mrb[0].mxu0
    %v1568 = vadd.f32 %v1323, %v1567
    %v1569 = vpop.f32.mrb[0].mxu0
    %1570 = vmatprep.mubr.f32.mxu0 0.0
    %1571 = vmatmul.mubr.f32.gmra.mrb[0].mxu0 %v897
    %v1572 = vpop.f32.mrb[0].mxu0
    %v1573 = vadd.f32 %v1328, %v1572
    %v1574 = vpop.f32.mrb[0].mxu0
    %1575 = vmatprep.mubr.f32.mxu0 0.0
    %1576 = vmatmul.mubr.f32.gmra.mrb[0].mxu0 %v900
    %v1577 = vpop.f32.mrb[0].mxu0
    %v1578 = vadd.f32 %v1333, %v1577
    %v1579 = vpop.f32.mrb[0].mxu0
    %1580 = vmatprep.mubr.f32.mxu0 0.0
    %1581 = vmatmul.mubr.f32.gmra.mrb[0].mxu0 %v903
    %v1582 = vpop.f32.mrb[0].mxu0
    %v1583 = vadd.f32 %v1338, %v1582
    %v1584 = vpop.f32.mrb[0].mxu0
    %1585 = vmatprep.mubr.f32.mxu0 0.0
    %1586 = vmatmul.mubr.f32.gmra.mrb[0].mxu0 %v906
    %v1587 = vpop.f32.mrb[0].mxu0
    %v1588 = vadd.f32 %v1343, %v1587
    %v1589 = vpop.f32.mrb[0].mxu0
    %1590 = vmatprep.mubr.f32.mxu0 0.0
    %1591 = vmatmul.mubr.f32.gmra.mrb[0].mxu0 %v909
    %v1592 = vpop.f32.mrb[0].mxu0
    %v1593 = vadd.f32 %v1348, %v1592
    %v1594 = vpop.f32.mrb[0].mxu0
    %1595 = vmatprep.mubr.f32.mxu0 0.0
    %1596 = vmatmul.mubr.f32.gmra.mrb[0].mxu0 %v912
    %v1597 = vpop.f32.mrb[0].mxu0
    %v1598 = vadd.f32 %v1353, %v1597
    %v1599 = vpop.f32.mrb[0].mxu0
    %1600 = vmatprep.mubr.f32.mxu0 0.0
    %1601 = vmatmul.mubr.f32.gmra.mrb[0].mxu0 %v915
    %v1602 = vpop.f32.mrb[0].mxu0
    %v1603 = vadd.f32 %v1358, %v1602
    %v1604 = vpop.f32.mrb[0].mxu0
    %1605 = vmatprep.mubr.f32.mxu0 0.0
    %1606 = vmatmul.mubr.f32.gmra.mrb[0].mxu0 %v918
    %v1607 = vpop.f32.mrb[0].mxu0
    %v1608 = vadd.f32 %v1363, %v1607
    %v1609 = vpop.f32.mrb[0].mxu0
    %1610 = vmatprep.mubr.f32.mxu0 0.0
    %1611 = vmatmul.mubr.f32.gmra.mrb[0].mxu0 %v921
    %v1612 = vpop.f32.mrb[0].mxu0
    %v1613 = vadd.f32 %v1368, %v1612
    %v1614 = vpop.f32.mrb[0].mxu0
    %1615 = vmatprep.mubr.f32.mxu0 0.0
    %1616 = vmatmul.mubr.f32.gmra.mrb[0].mxu0 %v924
    %v1617 = vpop.f32.mrb[0].mxu0
    %v1618 = vadd.f32 %v1373, %v1617
    %v1619 = vpop.f32.mrb[0].mxu0
    %1620 = vmatprep.mubr.f32.mxu0 0.0
    %1621 = vmatmul.mubr.f32.gmra.mrb[0].mxu0 %v927
    %v1622 = vpop.f32.mrb[0].mxu0
    %v1623 = vadd.f32 %v1378, %v1622
    %v1624 = vpop.f32.mrb[0].mxu0
    %1625 = vmatprep.mubr.f32.mxu0 0.0
    %1626 = vmatmul.mubr.f32.gmra.mrb[0].mxu0 %v930
    %v1627 = vpop.f32.mrb[0].mxu0
    %v1628 = vadd.f32 %v1383, %v1627
    %v1629 = vpop.f32.mrb[0].mxu0
    %1630 = vmatprep.mubr.f32.mxu0 0.0
    %1631 = vmatmul.mubr.f32.gmra.mrb[0].mxu0 %v933
    %v1632 = vpop.f32.mrb[0].mxu0
    %v1633 = vadd.f32 %v1388, %v1632
    %v1634 = vpop.f32.mrb[0].mxu0
    %1635 = vmatprep.mubr.f32.mxu0 0.0
    %1636 = vmatmul.mubr.f32.gmra.mrb[0].mxu0 %v936
    %v1637 = vpop.f32.mrb[0].mxu0
    %v1638 = vadd.f32 %v1393, %v1637
    %v1639 = vpop.f32.mrb[0].mxu0
    %1640 = vmatprep.mubr.f32.mxu0 0.0
    %1641 = vmatmul.mubr.f32.gmra.mrb[0].mxu0 %v939
    %v1642 = vpop.f32.mrb[0].mxu0
    %v1643 = vadd.f32 %v1398, %v1642
    %v1644 = vpop.f32.mrb[0].mxu0
    %1645 = vmatprep.mubr.f32.mxu0 0.0
    %1646 = vmatmul.mubr.f32.gmra.mrb[0].mxu0 %v942
    %v1647 = vpop.f32.mrb[0].mxu0
    %v1648 = vadd.f32 %v1403, %v1647
    %v1649 = vpop.f32.mrb[0].mxu0
    %1650 = vmatprep.mubr.f32.mxu0 0.0
    %1651 = vmatmul.mubr.f32.gmra.mrb[0].mxu0 %v945
    %v1652 = vpop.f32.mrb[0].mxu0
    %v1653 = vadd.f32 %v1408, %v1652
    %v1654 = vpop.f32.mrb[0].mxu0
    %1655 = vmatprep.mubr.f32.mxu0 0.0
    %1656 = vmatmul.mubr.f32.gmra.mrb[0].mxu0 %v948
    %v1657 = vpop.f32.mrb[0].mxu0
    %v1658 = vadd.f32 %v1413, %v1657
    %v1659 = vpop.f32.mrb[0].mxu0
    %1660 = vmatprep.mubr.f32.mxu0 0.0
    %1661 = vmatmul.mubr.f32.gmra.mrb[0].mxu0 %v951
    %v1662 = vpop.f32.mrb[0].mxu0
    %v1663 = vadd.f32 %v1418, %v1662
    %v1664 = vpop.f32.mrb[0].mxu0
    %1665 = vmatprep.mubr.f32.mxu0 0.0
    %1666 = vmatmul.mubr.f32.gmra.mrb[0].mxu0 %v954
    %v1667 = vpop.f32.mrb[0].mxu0
    %v1668 = vadd.f32 %v1423, %v1667
    %v1669 = vpop.f32.mrb[0].mxu0
    %1670 = vmatprep.mubr.f32.mxu0 0.0
    %1671 = vmatmul.mubr.f32.gmra.mrb[0].mxu0 %v957
    %v1672 = vpop.f32.mrb[0].mxu0
    %v1673 = vadd.f32 %v1428, %v1672
    %v1674 = vpop.f32.mrb[0].mxu0
    %1675 = vmatprep.mubr.f32.mxu0 0.0
    %1676 = vmatmul.mubr.f32.gmra.mrb[0].mxu0 %v960
    %v1677 = vpop.f32.mrb[0].mxu0
    %v1678 = vadd.f32 %v1433, %v1677
    %v1679 = vpop.f32.mrb[0].mxu0
    %1680 = vmatprep.mubr.f32.mxu0 0.0
    %1681 = vmatmul.mubr.f32.gmra.mrb[0].mxu0 %v963
    %v1682 = vpop.f32.mrb[0].mxu0
    %v1683 = vadd.f32 %v1438, %v1682
    %v1684 = vpop.f32.mrb[0].mxu0
    %1685 = vmatprep.mubr.f32.mxu0 0.0
    %1686 = vmatmul.mubr.f32.gmra.mrb[0].mxu0 %v966
    %v1687 = vpop.f32.mrb[0].mxu0
    %v1688 = vadd.f32 %v1443, %v1687
    %v1689 = vpop.f32.mrb[0].mxu0
    %1690 = vmatprep.mubr.f32.mxu0 0.0
    %1691 = vmatmul.mubr.f32.gmra.mrb[0].mxu0 %v969
    %v1692 = vpop.f32.mrb[0].mxu0
    %v1693 = vadd.f32 %v1448, %v1692
    %v1694 = vpop.f32.mrb[0].mxu0
    %1695 = vmatprep.mubr.f32.mxu0 0.0
    %1696 = vmatmul.mubr.f32.gmra.mrb[0].mxu0 %v972
    %v1697 = vpop.f32.mrb[0].mxu0
    %v1698 = vadd.f32 %v1453, %v1697
    %v1699 = vpop.f32.mrb[0].mxu0
    %1700 = vmatprep.mubr.f32.mxu0 0.0
    %1701 = vmatmul.mubr.f32.gmra.mrb[0].mxu0 %v975
    %v1702 = vpop.f32.mrb[0].mxu0
    %v1703 = vadd.f32 %v1458, %v1702
    %v1704 = vpop.f32.mrb[0].mxu0
    %1705 = vmatprep.mubr.f32.mxu0 0.0
    %1706 = vmatmul.mubr.f32.gmra.mrb[0].mxu0 %v978
    %v1707 = vpop.f32.mrb[0].mxu0
    %v1708 = vadd.f32 %v1463, %v1707
    %v1709 = vpop.f32.mrb[0].mxu0
    %1710 = vmatprep.mubr.f32.mxu0 0.0
    %1711 = vmatmul.mubr.f32.gmra.mrb[0].mxu0 %v981
    %v1712 = vpop.f32.mrb[0].mxu0
    %v1713 = vadd.f32 %v1468, %v1712
    %v1714 = vpop.f32.mrb[0].mxu0
    %1715 = vmatprep.mubr.f32.mxu0 0.0
    %1716 = vmatmul.mubr.f32.gmra.mrb[0].mxu0 %v984
    %v1717 = vpop.f32.mrb[0].mxu0
    %v1718 = vadd.f32 %v1473, %v1717
    %v1719 = vpop.f32.mrb[0].mxu0
    %1720 = vdwg.mxu0
    %v1721 = vsel %vm877, %v1543, 0.0
    %v1722 = vsel %vm877, %v1548, 0.0
    %v1723 = vadd.f32 %v1721, %v1722
    %v1724 = vsel %vm877, %v1553, 0.0
    %v1725 = vadd.f32 %v1723, %v1724
    %v1726 = vsel %vm877, %v1558, 0.0
    %v1727 = vadd.f32 %v1725, %v1726
    %v1728 = vsel %vm877, %v1563, 0.0
    %v1729 = vadd.f32 %v1727, %v1728
    %v1730 = vsel %vm877, %v1568, 0.0
    %v1731 = vadd.f32 %v1729, %v1730
    %v1732 = vsel %vm877, %v1573, 0.0
    %v1733 = vadd.f32 %v1731, %v1732
    %v1734 = vsel %vm877, %v1578, 0.0
    %v1735 = vadd.f32 %v1733, %v1734
    %v1736 = vsel %vm877, %v1583, 0.0
    %v1737 = vadd.f32 %v1735, %v1736
    %v1738 = vsel %vm877, %v1588, 0.0
    %v1739 = vadd.f32 %v1737, %v1738
    %v1740 = vsel %vm877, %v1593, 0.0
    %v1741 = vadd.f32 %v1739, %v1740
    %v1742 = vsel %vm877, %v1598, 0.0
    %v1743 = vadd.f32 %v1741, %v1742
    %v1744 = vsel %vm877, %v1603, 0.0
    %v1745 = vadd.f32 %v1743, %v1744
    %v1746 = vsel %vm877, %v1608, 0.0
    %v1747 = vadd.f32 %v1745, %v1746
    %v1748 = vsel %vm877, %v1613, 0.0
    %v1749 = vadd.f32 %v1747, %v1748
    %v1750 = vsel %vm877, %v1618, 0.0
    %v1751 = vadd.f32 %v1749, %v1750
    %v1752 = vsel %vm877, %v1623, 0.0
    %v1753 = vadd.f32 %v1751, %v1752
    %v1754 = vsel %vm877, %v1628, 0.0
    %v1755 = vadd.f32 %v1753, %v1754
    %v1756 = vsel %vm877, %v1633, 0.0
    %v1757 = vadd.f32 %v1755, %v1756
    %v1758 = vsel %vm877, %v1638, 0.0
    %v1759 = vadd.f32 %v1757, %v1758
    %v1760 = vsel %vm877, %v1643, 0.0
    %v1761 = vadd.f32 %v1759, %v1760
    %v1762 = vsel %vm877, %v1648, 0.0
    %v1763 = vadd.f32 %v1761, %v1762
    %v1764 = vsel %vm877, %v1653, 0.0
    %v1765 = vadd.f32 %v1763, %v1764
    %v1766 = vsel %vm877, %v1658, 0.0
    %v1767 = vadd.f32 %v1765, %v1766
    %v1768 = vsel %vm877, %v1663, 0.0
    %v1769 = vadd.f32 %v1767, %v1768
    %v1770 = vsel %vm877, %v1668, 0.0
    %v1771 = vadd.f32 %v1769, %v1770
    %v1772 = vsel %vm877, %v1673, 0.0
    %v1773 = vadd.f32 %v1771, %v1772
    %v1774 = vsel %vm877, %v1678, 0.0
    %v1775 = vadd.f32 %v1773, %v1774
    %v1776 = vsel %vm877, %v1683, 0.0
    %v1777 = vadd.f32 %v1775, %v1776
    %v1778 = vsel %vm877, %v1688, 0.0
    %v1779 = vadd.f32 %v1777, %v1778
    %v1780 = vsel %vm877, %v1693, 0.0
    %v1781 = vadd.f32 %v1779, %v1780
    %v1782 = vsel %vm877, %v1698, 0.0
    %v1783 = vadd.f32 %v1781, %v1782
    %v1784 = vsel %vm877, %v1703, 0.0
    %v1785 = vadd.f32 %v1783, %v1784
    %v1786 = vsel %vm877, %v1708, 0.0
    %v1787 = vadd.f32 %v1785, %v1786
    %v1788 = vsel %vm877, %v1713, 0.0
    %v1789 = vadd.f32 %v1787, %v1788
    %v1790 = vsel %vm877, %v1718, 0.0
    %v1791 = vadd.f32 %v1789, %v1790
    %v1792 = vrot.slane %v1791, 4
    %v1793 = vadd.f32 %v1791, %v1792
    %v1794 = vrot.slane %v1793, 2
    %v1795 = vadd.f32 %v1793, %v1794
    %v1796 = vrot.slane %v1795, 1
    %v1797 = vadd.f32 %v1795, %v1796
    %v1798 = vrcp.pop 288.0
    %v1799 = vmul.f32 %v1797, %v1798
    %v1800 = vsub.f32 %v1543, %v1799
    %v1801 = vsub.f32 %v1548, %v1799
    %v1802 = vsub.f32 %v1553, %v1799
    %v1803 = vsub.f32 %v1558, %v1799
    %v1804 = vsub.f32 %v1563, %v1799
    %v1805 = vsub.f32 %v1568, %v1799
    %v1806 = vsub.f32 %v1573, %v1799
    %v1807 = vsub.f32 %v1578, %v1799
    %v1808 = vsub.f32 %v1583, %v1799
    %v1809 = vsub.f32 %v1588, %v1799
    %v1810 = vsub.f32 %v1593, %v1799
    %v1811 = vsub.f32 %v1598, %v1799
    %v1812 = vsub.f32 %v1603, %v1799
    %v1813 = vsub.f32 %v1608, %v1799
    %v1814 = vsub.f32 %v1613, %v1799
    %v1815 = vsub.f32 %v1618, %v1799
    %v1816 = vsub.f32 %v1623, %v1799
    %v1817 = vsub.f32 %v1628, %v1799
    %v1818 = vsub.f32 %v1633, %v1799
    %v1819 = vsub.f32 %v1638, %v1799
    %v1820 = vsub.f32 %v1643, %v1799
    %v1821 = vsub.f32 %v1648, %v1799
    %v1822 = vsub.f32 %v1653, %v1799
    %v1823 = vsub.f32 %v1658, %v1799
    %v1824 = vsub.f32 %v1663, %v1799
    %v1825 = vsub.f32 %v1668, %v1799
    %v1826 = vsub.f32 %v1673, %v1799
    %v1827 = vsub.f32 %v1678, %v1799
    %v1828 = vsub.f32 %v1683, %v1799
    %v1829 = vsub.f32 %v1688, %v1799
    %v1830 = vsub.f32 %v1693, %v1799
    %v1831 = vsub.f32 %v1698, %v1799
    %v1832 = vsub.f32 %v1703, %v1799
    %v1833 = vsub.f32 %v1708, %v1799
    %v1834 = vsub.f32 %v1713, %v1799
    %v1835 = vsub.f32 %v1718, %v1799
    %v1836 = vmul.f32 %v1800, %v1800
    %v1837 = vmul.f32 %v1801, %v1801
    %v1838 = vmul.f32 %v1802, %v1802
    %v1839 = vmul.f32 %v1803, %v1803
    %v1840 = vmul.f32 %v1804, %v1804
    %v1841 = vmul.f32 %v1805, %v1805
    %v1842 = vmul.f32 %v1806, %v1806
    %v1843 = vmul.f32 %v1807, %v1807
    %v1844 = vmul.f32 %v1808, %v1808
    %v1845 = vmul.f32 %v1809, %v1809
    %v1846 = vmul.f32 %v1810, %v1810
    %v1847 = vmul.f32 %v1811, %v1811
    %v1848 = vmul.f32 %v1812, %v1812
    %v1849 = vmul.f32 %v1813, %v1813
    %v1850 = vmul.f32 %v1814, %v1814
    %v1851 = vmul.f32 %v1815, %v1815
    %v1852 = vmul.f32 %v1816, %v1816
    %v1853 = vmul.f32 %v1817, %v1817
    %v1854 = vmul.f32 %v1818, %v1818
    %v1855 = vmul.f32 %v1819, %v1819
    %v1856 = vmul.f32 %v1820, %v1820
    %v1857 = vmul.f32 %v1821, %v1821
    %v1858 = vmul.f32 %v1822, %v1822
    %v1859 = vmul.f32 %v1823, %v1823
    %v1860 = vmul.f32 %v1824, %v1824
    %v1861 = vmul.f32 %v1825, %v1825
    %v1862 = vmul.f32 %v1826, %v1826
    %v1863 = vmul.f32 %v1827, %v1827
    %v1864 = vmul.f32 %v1828, %v1828
    %v1865 = vmul.f32 %v1829, %v1829
    %v1866 = vmul.f32 %v1830, %v1830
    %v1867 = vmul.f32 %v1831, %v1831
    %v1868 = vmul.f32 %v1832, %v1832
    %v1869 = vmul.f32 %v1833, %v1833
    %v1870 = vmul.f32 %v1834, %v1834
    %v1871 = vmul.f32 %v1835, %v1835
    %v1872 = vsel %vm877, %v1836, 0.0
    %v1873 = vsel %vm877, %v1837, 0.0
    %v1874 = vadd.f32 %v1872, %v1873
    %v1875 = vsel %vm877, %v1838, 0.0
    %v1876 = vadd.f32 %v1874, %v1875
    %v1877 = vsel %vm877, %v1839, 0.0
    %v1878 = vadd.f32 %v1876, %v1877
    %v1879 = vsel %vm877, %v1840, 0.0
    %v1880 = vadd.f32 %v1878, %v1879
    %v1881 = vsel %vm877, %v1841, 0.0
    %v1882 = vadd.f32 %v1880, %v1881
    %v1883 = vsel %vm877, %v1842, 0.0
    %v1884 = vadd.f32 %v1882, %v1883
    %v1885 = vsel %vm877, %v1843, 0.0
    %v1886 = vadd.f32 %v1884, %v1885
    %v1887 = vsel %vm877, %v1844, 0.0
    %v1888 = vadd.f32 %v1886, %v1887
    %v1889 = vsel %vm877, %v1845, 0.0
    %v1890 = vadd.f32 %v1888, %v1889
    %v1891 = vsel %vm877, %v1846, 0.0
    %v1892 = vadd.f32 %v1890, %v1891
    %v1893 = vsel %vm877, %v1847, 0.0
    %v1894 = vadd.f32 %v1892, %v1893
    %v1895 = vsel %vm877, %v1848, 0.0
    %v1896 = vadd.f32 %v1894, %v1895
    %v1897 = vsel %vm877, %v1849, 0.0
    %v1898 = vadd.f32 %v1896, %v1897
    %v1899 = vsel %vm877, %v1850, 0.0
    %v1900 = vadd.f32 %v1898, %v1899
    %v1901 = vsel %vm877, %v1851, 0.0
    %v1902 = vadd.f32 %v1900, %v1901
    %v1903 = vsel %vm877, %v1852, 0.0
    %v1904 = vadd.f32 %v1902, %v1903
    %v1905 = vsel %vm877, %v1853, 0.0
    %v1906 = vadd.f32 %v1904, %v1905
    %v1907 = vsel %vm877, %v1854, 0.0
    %v1908 = vadd.f32 %v1906, %v1907
    %v1909 = vsel %vm877, %v1855, 0.0
    %v1910 = vadd.f32 %v1908, %v1909
    %v1911 = vsel %vm877, %v1856, 0.0
    %v1912 = vadd.f32 %v1910, %v1911
    %v1913 = vsel %vm877, %v1857, 0.0
    %v1914 = vadd.f32 %v1912, %v1913
    %v1915 = vsel %vm877, %v1858, 0.0
    %v1916 = vadd.f32 %v1914, %v1915
    %v1917 = vsel %vm877, %v1859, 0.0
    %v1918 = vadd.f32 %v1916, %v1917
    %v1919 = vsel %vm877, %v1860, 0.0
    %v1920 = vadd.f32 %v1918, %v1919
    %v1921 = vsel %vm877, %v1861, 0.0
    %v1922 = vadd.f32 %v1920, %v1921
    %v1923 = vsel %vm877, %v1862, 0.0
    %v1924 = vadd.f32 %v1922, %v1923
    %v1925 = vsel %vm877, %v1863, 0.0
    %v1926 = vadd.f32 %v1924, %v1925
    %v1927 = vsel %vm877, %v1864, 0.0
    %v1928 = vadd.f32 %v1926, %v1927
    %v1929 = vsel %vm877, %v1865, 0.0
    %v1930 = vadd.f32 %v1928, %v1929
    %v1931 = vsel %vm877, %v1866, 0.0
    %v1932 = vadd.f32 %v1930, %v1931
    %v1933 = vsel %vm877, %v1867, 0.0
    %v1934 = vadd.f32 %v1932, %v1933
    %v1935 = vsel %vm877, %v1868, 0.0
    %v1936 = vadd.f32 %v1934, %v1935
    %v1937 = vsel %vm877, %v1869, 0.0
    %v1938 = vadd.f32 %v1936, %v1937
    %v1939 = vsel %vm877, %v1870, 0.0
    %v1940 = vadd.f32 %v1938, %v1939
    %v1941 = vsel %vm877, %v1871, 0.0
    %v1942 = vadd.f32 %v1940, %v1941
    %v1943 = vrot.slane %v1942, 4
    %v1944 = vadd.f32 %v1942, %v1943
    %v1945 = vrot.slane %v1944, 2
    %v1946 = vadd.f32 %v1944, %v1945
    %v1947 = vrot.slane %v1946, 1
    %v1948 = vadd.f32 %v1946, %v1947
    %v1949 = vmul.f32 %v1948, %v1798
    %v1950 = vadd.f32 %v1949, 1e-05
    %v1951 = vrsqrt.pop %v1950
    %v1952 = vmul.f32 %v1800, %v1951
    %v1953 = vmul.f32 %v1801, %v1951
    %v1954 = vmul.f32 %v1802, %v1951
    %v1955 = vmul.f32 %v1803, %v1951
    %v1956 = vmul.f32 %v1804, %v1951
    %v1957 = vmul.f32 %v1805, %v1951
    %v1958 = vmul.f32 %v1806, %v1951
    %v1959 = vmul.f32 %v1807, %v1951
    %v1960 = vmul.f32 %v1808, %v1951
    %v1961 = vmul.f32 %v1809, %v1951
    %v1962 = vmul.f32 %v1810, %v1951
    %v1963 = vmul.f32 %v1811, %v1951
    %v1964 = vmul.f32 %v1812, %v1951
    %v1965 = vmul.f32 %v1813, %v1951
    %v1966 = vmul.f32 %v1814, %v1951
    %v1967 = vmul.f32 %v1815, %v1951
    %v1968 = vmul.f32 %v1816, %v1951
    %v1969 = vmul.f32 %v1817, %v1951
    %v1970 = vmul.f32 %v1818, %v1951
    %v1971 = vmul.f32 %v1819, %v1951
    %v1972 = vmul.f32 %v1820, %v1951
    %v1973 = vmul.f32 %v1821, %v1951
    %v1974 = vmul.f32 %v1822, %v1951
    %v1975 = vmul.f32 %v1823, %v1951
    %v1976 = vmul.f32 %v1824, %v1951
    %v1977 = vmul.f32 %v1825, %v1951
    %v1978 = vmul.f32 %v1826, %v1951
    %v1979 = vmul.f32 %v1827, %v1951
    %v1980 = vmul.f32 %v1828, %v1951
    %v1981 = vmul.f32 %v1829, %v1951
    %v1982 = vmul.f32 %v1830, %v1951
    %v1983 = vmul.f32 %v1831, %v1951
    %v1984 = vmul.f32 %v1832, %v1951
    %v1985 = vmul.f32 %v1833, %v1951
    %v1986 = vmul.f32 %v1834, %v1951
    %v1987 = vmul.f32 %v1835, %v1951
    %v1988 = vmax.f32 %v1952, 0.0
    %v1989 = vmax.f32 %v1953, 0.0
    %v1990 = vmax.f32 %v1954, 0.0
    %v1991 = vmax.f32 %v1955, 0.0
    %v1992 = vmax.f32 %v1956, 0.0
    %v1993 = vmax.f32 %v1957, 0.0
    %v1994 = vmax.f32 %v1958, 0.0
    %v1995 = vmax.f32 %v1959, 0.0
    %v1996 = vmax.f32 %v1960, 0.0
    %v1997 = vmax.f32 %v1961, 0.0
    %v1998 = vmax.f32 %v1962, 0.0
    %v1999 = vmax.f32 %v1963, 0.0
    %v2000 = vmax.f32 %v1964, 0.0
    %v2001 = vmax.f32 %v1965, 0.0
    %v2002 = vmax.f32 %v1966, 0.0
    %v2003 = vmax.f32 %v1967, 0.0
    %v2004 = vmax.f32 %v1968, 0.0
    %v2005 = vmax.f32 %v1969, 0.0
    %v2006 = vmax.f32 %v1970, 0.0
    %v2007 = vmax.f32 %v1971, 0.0
    %v2008 = vmax.f32 %v1972, 0.0
    %v2009 = vmax.f32 %v1973, 0.0
    %v2010 = vmax.f32 %v1974, 0.0
    %v2011 = vmax.f32 %v1975, 0.0
    %v2012 = vmax.f32 %v1976, 0.0
    %v2013 = vmax.f32 %v1977, 0.0
    %v2014 = vmax.f32 %v1978, 0.0
    %v2015 = vmax.f32 %v1979, 0.0
    %v2016 = vmax.f32 %v1980, 0.0
    %v2017 = vmax.f32 %v1981, 0.0
    %v2018 = vmax.f32 %v1982, 0.0
    %v2019 = vmax.f32 %v1983, 0.0
    %v2020 = vmax.f32 %v1984, 0.0
    %v2021 = vmax.f32 %v1985, 0.0
    %v2022 = vmax.f32 %v1986, 0.0
    %v2023 = vmax.f32 %v1987, 0.0
    %v2024 = vld [vmem:[%s5] sm:$0xff]
    %v2025 = vld [vmem:[%s5 + $0x8] sm:$0xff]
    %v2026 = vld [vmem:[%s5 + $0x10] sm:$0xff]
    %vm2027 = vcmask 261120
    %v2029 = vsel %vm2027, %v2026, 0
    %2031 = vmatprep.subr.mxu0 0.0
    %2032 = vmatpush1.msra.mxu0 %v1988
    %2033 = vmatprep.subr.mxu0 0.0
    %2034 = vmatpush1.msra.mxu0 %v1989
    %2035 = vmatprep.subr.mxu0 0.0
    %2036 = vmatpush1.msra.mxu0 %v1990
    %2037 = vmatprep.subr.mxu0 0.0
    %2038 = vmatpush1.msra.mxu0 %v1991
    %2039 = vmatprep.subr.mxu0 0.0
    %2040 = vmatpush1.msra.mxu0 %v1992
    %2041 = vmatprep.subr.mxu0 0.0
    %2042 = vmatpush1.msra.mxu0 %v1993
    %2043 = vmatprep.subr.mxu0 0.0
    %2044 = vmatpush1.msra.mxu0 %v1994
    %2045 = vmatprep.subr.mxu0 0.0
    %2046 = vmatpush1.msra.mxu0 %v1995
    %2047 = vmatprep.subr.mxu0 0.0
    %2048 = vmatpush1.msra.mxu0 %v1996
    %2049 = vmatprep.subr.mxu0 0.0
    %2050 = vmatpush1.msra.mxu0 %v1997
    %2051 = vmatprep.subr.mxu0 0.0
    %2052 = vmatpush1.msra.mxu0 %v1998
    %2053 = vmatprep.subr.mxu0 0.0
    %2054 = vmatpush1.msra.mxu0 %v1999
    %2055 = vmatprep.subr.mxu0 0.0
    %2056 = vmatpush1.msra.mxu0 %v2000
    %2057 = vmatprep.subr.mxu0 0.0
    %2058 = vmatpush1.msra.mxu0 %v2001
    %2059 = vmatprep.subr.mxu0 0.0
    %2060 = vmatpush1.msra.mxu0 %v2002
    %2061 = vmatprep.subr.mxu0 0.0
    %2062 = vmatpush1.msra.mxu0 %v2003
    %2063 = vmatprep.subr.mxu0 0.0
    %2064 = vmatpush1.msra.mxu0 %v2004
    %2065 = vmatprep.subr.mxu0 0.0
    %2066 = vmatpush1.msra.mxu0 %v2005
    %2067 = vmatprep.subr.mxu0 0.0
    %2068 = vmatpush1.msra.mxu0 %v2006
    %2069 = vmatprep.subr.mxu0 0.0
    %2070 = vmatpush1.msra.mxu0 %v2007
    %2071 = vmatprep.subr.mxu0 0.0
    %2072 = vmatpush1.msra.mxu0 %v2008
    %2073 = vmatprep.subr.mxu0 0.0
    %2074 = vmatpush1.msra.mxu0 %v2009
    %2075 = vmatprep.subr.mxu0 0.0
    %2076 = vmatpush1.msra.mxu0 %v2010
    %2077 = vmatprep.subr.mxu0 0.0
    %2078 = vmatpush1.msra.mxu0 %v2011
    %2079 = vmatprep.subr.mxu0 0.0
    %2080 = vmatpush1.msra.mxu0 %v2012
    %2081 = vmatprep.subr.mxu0 0.0
    %2082 = vmatpush1.msra.mxu0 %v2013
    %2083 = vmatprep.subr.mxu0 0.0
    %2084 = vmatpush1.msra.mxu0 %v2014
    %2085 = vmatprep.subr.mxu0 0.0
    %2086 = vmatpush1.msra.mxu0 %v2015
    %2087 = vmatprep.subr.mxu0 0.0
    %2088 = vmatpush1.msra.mxu0 %v2016
    %2089 = vmatprep.subr.mxu0 0.0
    %2090 = vmatpush1.msra.mxu0 %v2017
    %2091 = vmatprep.subr.mxu0 0.0
    %2092 = vmatpush1.msra.mxu0 %v2018
    %2093 = vmatprep.subr.mxu0 0.0
    %2094 = vmatpush1.msra.mxu0 %v2019
    %2095 = vmatprep.mubr.f32.mxu0 %v2025
    %2096 = vmatmul.mubr.f32.gmra.mrb[0].mxu0 %v2024
    %v2097 = vpop.f32.mrb[0].mxu0
    %v2098 = vadd.f32 0.0, %v2097
    %v2099 = vpop.f32.mrb[0].mxu0
    %2100 = vdwg.mxu0
    %2101 = vmatprep.subr.mxu0 0.0
    %2102 = vmatpush1.msra.mxu0 %v2020
    %2103 = vmatprep.subr.mxu0 0.0
    %2104 = vmatpush1.msra.mxu0 %v2021
    %2105 = vmatprep.subr.mxu0 0.0
    %2106 = vmatpush1.msra.mxu0 %v2022
    %2107 = vmatprep.subr.mxu0 0.0
    %2108 = vmatpush1.msra.mxu0 %v2023
    %2109 = vmatprep.subr.mxu0 0.0
    %2110 = vmatpush1.msra.mxu0 0.0
    %2111 = vmatprep.subr.mxu0 0.0
    %2112 = vmatpush1.msra.mxu0 0.0
    %2113 = vmatprep.subr.mxu0 0.0
    %2114 = vmatpush1.msra.mxu0 0.0
    %2115 = vmatprep.subr.mxu0 0.0
    %2116 = vmatpush1.msra.mxu0 0.0
    %2117 = vmatprep.subr.mxu0 0.0
    %2118 = vmatpush1.msra.mxu0 0.0
    %2119 = vmatprep.subr.mxu0 0.0
    %2120 = vmatpush1.msra.mxu0 0.0
    %2121 = vmatprep.subr.mxu0 0.0
    %2122 = vmatpush1.msra.mxu0 0.0
    %2123 = vmatprep.subr.mxu0 0.0
    %2124 = vmatpush1.msra.mxu0 0.0
    %2125 = vmatprep.subr.mxu0 0.0
    %2126 = vmatpush1.msra.mxu0 0.0
    %2127 = vmatprep.subr.mxu0 0.0
    %2128 = vmatpush1.msra.mxu0 0.0
    %2129 = vmatprep.subr.mxu0 0.0
    %2130 = vmatpush1.msra.mxu0 0.0
    %2131 = vmatprep.subr.mxu0 0.0
    %2132 = vmatpush1.msra.mxu0 0.0
    %2133 = vmatprep.subr.mxu0 0.0
    %2134 = vmatpush1.msra.mxu0 0.0
    %2135 = vmatprep.subr.mxu0 0.0
    %2136 = vmatpush1.msra.mxu0 0.0
    %2137 = vmatprep.subr.mxu0 0.0
    %2138 = vmatpush1.msra.mxu0 0.0
    %2139 = vmatprep.subr.mxu0 0.0
    %2140 = vmatpush1.msra.mxu0 0.0
    %2141 = vmatprep.subr.mxu0 0.0
    %2142 = vmatpush1.msra.mxu0 0.0
    %2143 = vmatprep.subr.mxu0 0.0
    %2144 = vmatpush1.msra.mxu0 0.0
    %2145 = vmatprep.subr.mxu0 0.0
    %2146 = vmatpush1.msra.mxu0 0.0
    %2147 = vmatprep.subr.mxu0 0.0
    %2148 = vmatpush1.msra.mxu0 0.0
    %2149 = vmatprep.subr.mxu0 0.0
    %2150 = vmatpush1.msra.mxu0 0.0
    %2151 = vmatprep.subr.mxu0 0.0
    %2152 = vmatpush1.msra.mxu0 0.0
    %2153 = vmatprep.subr.mxu0 0.0
    %2154 = vmatpush1.msra.mxu0 0.0
    %2155 = vmatprep.subr.mxu0 0.0
    %2156 = vmatpush1.msra.mxu0 0.0
    %2157 = vmatprep.subr.mxu0 0.0
    %2158 = vmatpush1.msra.mxu0 0.0
    %2159 = vmatprep.subr.mxu0 0.0
    %2160 = vmatpush1.msra.mxu0 0.0
    %2161 = vmatprep.subr.mxu0 0.0
    %2162 = vmatpush1.msra.mxu0 0.0
    %2163 = vmatprep.subr.mxu0 0.0
    %2164 = vmatpush1.msra.mxu0 0.0
    %2165 = vmatprep.mubr.f32.mxu0 0.0
    %2166 = vmatmul.mubr.f32.gmra.mrb[0].mxu0 %v2029
    %v2167 = vpop.f32.mrb[0].mxu0
    %v2168 = vadd.f32 %v2098, %v2167
    %v2169 = vpop.f32.mrb[0].mxu0
    %2170 = vdwg.mxu0
    %v2171 = vmul.f32 %v2168, 0.04
    %2172 = vst.msk [vmem:[#allocation2] sm:$0xff] %vm877, %v2171
    // Predicated region
    $region26: #{metarn_forward.7} parent=1 // pred_check
      _
    $region27: #{metarn_forward.7} parent=1 // pred_check_branch
      %2174 = sbr.rel (0) target = $region29
    $region28: #{metarn_forward.7} parent=1 // pred_region
      %s2176 = ssub.s32 128, 128
      %2177 = vsyncadd [#allocation3], %s2176
      %s2179 = sshll.u32 [#allocation2], 4
      %s2180 = int_to_ptr.vmem [resolvable:$true] %s2179
      %2182 = dma.vmem_to_hbm [thread:$0]  %s2180, 128, %s6, [#allocation3]
    $region29: #{metarn_forward.7} parent=1 // pred_fallthru
      _
    // Predicated region
    $region30: #{metarn_forward.7} parent=1 // pred_check
      _
    $region31: #{metarn_forward.7} parent=1 // pred_check_branch
      %2184 = sbr.rel (0) target = $region33
    $region32: #{metarn_forward.7} parent=1 // pred_region
      %2185 = dma.done [#allocation3], 128
    $region33: #{metarn_forward.7} parent=1 // pred_fallthru
      _
    %2186 = vsyncpa [#allocation3], 1

</llo_original>
